<compile_context>
chip_gen: v7x
topology: tpu7x:2x2x1
jax: 0.10.0
libtpu: 0.0.40
codegen_flags: <defaults>
</compile_context>

<pallas_src>
import functools

import jax
import jax.numpy as jnp
from jax.experimental import pallas as pl
from jax.experimental.pallas import tpu as pltpu

CP = 128          # padded channel width (TPU lane dim)
CONV1_K = 32      # conv1 im2col contraction: 9 taps * 3 ch = 27 -> pad to 32
FC1_N = 512       # fc1 out 500 -> 512
FC2_N = 128       # fc2 out 10  -> 128


def _pick_image_block(n):
    """Images per conv grid step (amortize per-step overhead, larger DMAs)."""
    for b in (8, 4, 2, 1):
        if n % b == 0:
            return b
    return 1


def _row_chunk(h, w):
    """Image rows per in-kernel chunk: ~128 matmul rows so the f32 accumulator
    stays in vregs across all 9 tap dots (review item 1)."""
    ch = min(h, max(2, 128 // w))
    assert h % ch == 0 and ch % 2 == 0, (h, w, ch)
    return ch


# ----------------------------------------------------------------------------
# Shared epilogue: 2x2 / stride-2 max pool of one row chunk + lane-dense store
# ----------------------------------------------------------------------------
def _pool2x2_store(z, o_ref, scr_ref, b, out_row0, W):
    # z: (ch*W, CP) f32 post-ReLU conv rows for `ch` image rows of image `b`.
    rows, cp = z.shape
    ch = rows // W
    # vertical pairs: leading-dim split only (W % 8 == 0 -> layout preserving)
    z4 = z.reshape(ch // 2, 2, W, cp)
    v = jnp.maximum(z4[:, 0], z4[:, 1]).reshape((ch // 2) * W, cp)
    # horizontal pairs: stride-2 sublane reads from a small VMEM scratch
    scr_ref[...] = v
    npr = (ch // 2) * (W // 2)
    pooled = jnp.maximum(scr_ref[pl.ds(0, npr, 2), :],
                         scr_ref[pl.ds(1, npr, 2), :])
    # aligned (multiple-of-8 offset), lane-dense store of this chunk's output rows
    o_ref[b, pl.ds(out_row0, npr), :] = pooled.astype(o_ref.dtype)


# ----------------------------------------------------------------------------
# Kernel 1: conv1 as im2col matmul (K=32) + bias + ReLU + 2x2 max-pool
# ----------------------------------------------------------------------------
def _conv1_kernel(a_ref, w_ref, b_ref, o_ref, scr_ref, *, H, W, ch):
    # a_ref: (B, H*W, 32) bf16 im2col rows (row = h*W + w, feature = tap*3 + c)
    # w_ref: (32, CP) bf16 ; b_ref: (1, CP) f32 ; o_ref: (B, (H//2)*(W//2), CP) f32
    B = a_ref.shape[0]
    Wo = W // 2
    w = w_ref[...]          # hoisted: (32,128) bf16, ~2 vregs
    bias = b_ref[...]

    @pl.loop(0, B)                               # loop over images in this block
    def _per_image(b):
        for h0 in range(0, H, ch):               # static row-chunk loop
            patch = a_ref[b, pl.ds(h0 * W, ch * W), :]
            acc = jnp.dot(patch, w, preferred_element_type=jnp.float32)
            z = jnp.maximum(acc + bias, 0.0)
            _pool2x2_store(z, o_ref, scr_ref, b, (h0 // 2) * Wo, W)


def conv1_im2col_relu_pool(col, w, b, *, H, W):
    N, M, K = col.shape
    Ho, Wo = H // 2, W // 2
    cp = w.shape[1]
    bn = _pick_image_block(N)
    ch = _row_chunk(H, W)
    return pl.pallas_call(
        functools.partial(_conv1_kernel, H=H, W=W, ch=ch),
        out_shape=jax.ShapeDtypeStruct((N, Ho * Wo, cp), jnp.float32),
        grid=(N // bn,),
        in_specs=[
            pl.BlockSpec((bn, M, K), lambda i: (i, 0, 0)),
            pl.BlockSpec((K, cp), lambda i: (0, 0)),
            pl.BlockSpec((1, cp), lambda i: (0, 0)),
        ],
        out_specs=pl.BlockSpec((bn, Ho * Wo, cp), lambda i: (i, 0, 0)),
        scratch_shapes=[pltpu.VMEM(((ch // 2) * W, cp), jnp.float32)],
        compiler_params=pltpu.CompilerParams(dimension_semantics=("parallel",)),
        cost_estimate=pl.CostEstimate(
            flops=2 * N * M * K * cp, transcendentals=0,
            bytes_accessed=col.size * 2 + w.size * 2 + b.size * 4
                           + N * Ho * Wo * cp * 4),
    )(col, w, b)


# ----------------------------------------------------------------------------
# Kernel 2: fused 3x3 conv (pad=1) + bias + ReLU + 2x2 max-pool, chunked taps
# ----------------------------------------------------------------------------
def _conv3x3_kernel(x_ref, w_ref, b_ref, o_ref, scr_ref, *, H, W, ch):
    # x_ref: (B, H+2, W+2, C) f32 spatially pre-padded NHWC
    # w_ref: (9, C, CP) bf16 tap-major (t = kh*3 + kw) ; b_ref: (1, CP) f32
    # o_ref: (B, (H//2)*(W//2), CP)
    B = x_ref.shape[0]
    C = x_ref.shape[3]
    Wo = W // 2
    bias = b_ref[...]

    @pl.loop(0, B)                               # loop over images in this block
    def _per_image(b):
        for h0 in range(0, H, ch):               # static row-chunk loop
            rows = ch * W
            acc = None                           # vreg-resident f32 accumulator
            for t in range(9):                   # 9 shifted K=C dots
                kh, kw = divmod(t, 3)
                p = x_ref[b, pl.ds(h0 + kh, ch), pl.ds(kw, W), :]   # (ch, W, C) f32
                p = p.reshape(rows, C).astype(jnp.bfloat16)         # aligned reshape
                d = jnp.dot(p, w_ref[t], preferred_element_type=jnp.float32)
                acc = d if acc is None else acc + d
            z = jnp.maximum(acc + bias, 0.0)     # bias + ReLU (f32, one pass)
            _pool2x2_store(z, o_ref, scr_ref, b, (h0 // 2) * Wo, W)


def conv3x3_relu_pool(xpad, w9, b, *, out_dtype):
    N, Hp, Wp, C = xpad.shape
    H, W = Hp - 2, Wp - 2
    Ho, Wo = H // 2, W // 2
    cp = w9.shape[-1]
    bn = _pick_image_block(N)
    ch = _row_chunk(H, W)
    return pl.pallas_call(
        functools.partial(_conv3x3_kernel, H=H, W=W, ch=ch),
        out_shape=jax.ShapeDtypeStruct((N, Ho * Wo, cp), out_dtype),
        grid=(N // bn,),
        in_specs=[
            pl.BlockSpec((bn, Hp, Wp, C), lambda i: (i, 0, 0, 0)),
            pl.BlockSpec((9, C, cp), lambda i: (0, 0, 0)),
            pl.BlockSpec((1, cp), lambda i: (0, 0)),
        ],
        out_specs=pl.BlockSpec((bn, Ho * Wo, cp), lambda i: (i, 0, 0)),
        scratch_shapes=[pltpu.VMEM(((ch // 2) * W, cp), jnp.float32)],
        compiler_params=pltpu.CompilerParams(dimension_semantics=("parallel",)),
        cost_estimate=pl.CostEstimate(
            flops=2 * N * H * W * 9 * C * cp, transcendentals=0,
            bytes_accessed=xpad.size * 4 + w9.size * 2 + b.size * 4
                           + N * Ho * Wo * cp * jnp.dtype(out_dtype).itemsize),
    )(xpad, w9, b)


# ----------------------------------------------------------------------------
# Kernel 3: fused matmul + bias + ReLU, tiled over M (parallel grid)
# ----------------------------------------------------------------------------
def _matmul_bias_relu_kernel(a_ref, w_ref, b_ref, o_ref):
    acc = jnp.dot(a_ref[...], w_ref[...], preferred_element_type=jnp.float32)
    o_ref[...] = jnp.maximum(acc + b_ref[...], 0.0).astype(o_ref.dtype)


def matmul_bias_relu(a, w, b2, *, out_dtype=jnp.float32, tile_m=256):
    """relu(a @ w + b).  a:(M,K) bf16, w:(K,N) bf16 with K,N % 128 == 0, b2:(1,N) f32."""
    M, K = a.shape
    N = w.shape[1]
    assert N % 128 == 0 and K % 128 == 0
    if M <= tile_m:
        tm, mp = M, M
    else:
        tm = tile_m
        mp = pl.cdiv(M, tm) * tm
        if mp != M:
            a = jnp.pad(a, ((0, mp - M), (0, 0)))
    out = pl.pallas_call(
        _matmul_bias_relu_kernel,
        out_shape=jax.ShapeDtypeStruct((mp, N), out_dtype),
        grid=(mp // tm,),
        in_specs=[
            pl.BlockSpec((tm, K), lambda i: (i, 0)),
            pl.BlockSpec((K, N), lambda i: (0, 0)),
            pl.BlockSpec((1, N), lambda i: (0, 0)),
        ],
        out_specs=pl.BlockSpec((tm, N), lambda i: (i, 0)),
        compiler_params=pltpu.CompilerParams(dimension_semantics=("parallel",)),
        cost_estimate=pl.CostEstimate(
            flops=2 * mp * K * N, transcendentals=0,
            bytes_accessed=mp * K * 2 + K * N * 2 + N * 4
                           + mp * N * jnp.dtype(out_dtype).itemsize),
    )(a, w, b2)
    return out if mp == M else out[:M]


# ----------------------------------------------------------------------------
# Wrapper-side im2col for conv1 only (tiny; makes conv1 a dense K=32 matmul)
# ----------------------------------------------------------------------------
def im2col_3x3(x_nhwc):
    """3x3 'same' patches for conv1: (N,H,W,3) -> (N, H*W, 32) bf16.
    Feature order = (kh*3 + kw)*Cin + c, zero-padded 27 -> 32 (matches conv1_w)."""
    N, H, W, C = x_nhwc.shape
    xp = jnp.pad(x_nhwc.astype(jnp.bfloat16), ((0, 0), (1, 1), (1, 1), (0, 0)))
    taps = [xp[:, kh:kh + H, kw:kw + W, :] for kh in range(3) for kw in range(3)]
    col = jnp.concatenate(taps, axis=-1)                             # (N, H, W, 27)
    col = jnp.pad(col, ((0, 0), (0, 0), (0, 0), (0, CONV1_K - 9 * C)))
    return col.reshape(N, H * W, CONV1_K)


# ----------------------------------------------------------------------------
# Parameters: logical (PyTorch-style) init + one-time kernel-layout preprocessing
# ----------------------------------------------------------------------------
def _uniform(key, shape, fan_in):
    bound = 1.0 / jnp.sqrt(float(fan_in))
    return jax.random.uniform(key, shape, jnp.float32, -bound, bound)


def init_params(seed=0):
    """Logical params: conv weights HWIO, fc weights (in, out); fc1 rows follow
    PyTorch's NCHW flatten order (c*16 + h*4 + w), like the reference module."""
    keys = jax.random.split(jax.random.PRNGKey(seed), 10)
    p = {}
    p["conv1_w"] = _uniform(keys[0], (3, 3, 3, 16), 3 * 3 * 3)
    p["conv1_b"] = _uniform(keys[1], (16,), 3 * 3 * 3)
    p["conv2_w"] = _uniform(keys[2], (3, 3, 16, 32), 3 * 3 * 16)
    p["conv2_b"] = _uniform(keys[3], (32,), 3 * 3 * 16)
    p["conv3_w"] = _uniform(keys[4], (3, 3, 32, 64), 3 * 3 * 32)
    p["conv3_b"] = _uniform(keys[5], (64,), 3 * 3 * 32)
    p["fc1_w"] = _uniform(keys[6], (64 * 4 * 4, 500), 64 * 4 * 4)
    p["fc1_b"] = _uniform(keys[7], (500,), 64 * 4 * 4)
    p["fc2_w"] = _uniform(keys[8], (500, 10), 500)
    p["fc2_b"] = _uniform(keys[9], (10,), 500)
    return p


def prepare_params(p):
    """One-time packing: pad to lane multiples, permute fc1 rows for the NHWC
    padded-channel flatten order, pack conv weights tap-major, cast to bf16."""
    def pad_to(x, shape):
        return jnp.pad(x, [(0, s - d) for d, s in zip(x.shape, shape)])

    q = {}
    # conv1: HWIO (3,3,3,16) -> (27,16) -> (32,128) bf16 (matches im2col feature order)
    w1 = p["conv1_w"].reshape(27, 16)
    q["conv1_w"] = pad_to(w1, (CONV1_K, CP)).astype(jnp.bfloat16)
    q["conv1_b"] = pad_to(p["conv1_b"], (CP,)).reshape(1, CP).astype(jnp.float32)

    # conv2/conv3: HWIO -> tap-major (9, Cin_pad=128, 128) bf16; bias -> (1,128) f32
    for name in ("conv2", "conv3"):
        w = pad_to(p[f"{name}_w"], (3, 3, CP, CP)).reshape(9, CP, CP)
        q[f"{name}_w"] = w.astype(jnp.bfloat16)
        q[f"{name}_b"] = pad_to(p[f"{name}_b"], (CP,)).reshape(1, CP).astype(jnp.float32)

    # fc1: repack rows from PyTorch NCHW-flatten order (c*16 + h*4 + w) to the
    # kernel's NHWC-with-padded-channels order ((h*4 + w)*128 + c); pad 500->512.
    wf = p["fc1_w"].reshape(64, 4, 4, 500).transpose(1, 2, 0, 3)      # (h, w, c, out)
    wf = pad_to(wf, (4, 4, CP, FC1_N)).reshape(4 * 4 * CP, FC1_N)
    q["fc1_w"] = wf.astype(jnp.bfloat16)
    q["fc1_b"] = pad_to(p["fc1_b"], (FC1_N,)).reshape(1, FC1_N).astype(jnp.float32)

    # fc2: pad K 500->512 (padded fc1 outputs are exactly 0) and N 10->128.
    q["fc2_w"] = pad_to(p["fc2_w"], (FC1_N, FC2_N)).astype(jnp.bfloat16)
    q["fc2_b"] = pad_to(p["fc2_b"], (FC2_N,)).reshape(1, FC2_N).astype(jnp.float32)
    return q


# ----------------------------------------------------------------------------
# Forward pass (mirrors Net.forward)
# ----------------------------------------------------------------------------
@jax.jit
def net_forward(params, x_nchw):
    N = x_nchw.shape[0]
    # NCHW (PyTorch) -> NHWC (lane = channels)
    x = jnp.transpose(x_nchw, (0, 2, 3, 1))                           # (N, 32, 32, 3)

    # conv1 + ReLU + pool  (im2col in wrapper, single K=32 dot per chunk in-kernel)
    col = im2col_3x3(x)                                               # (N, 1024, 32) bf16
    y = conv1_im2col_relu_pool(col, params["conv1_w"], params["conv1_b"], H=32, W=32)
    y = y.reshape(N, 16, 16, CP)                                      # (N,16,16,128) f32

    # conv2 + ReLU + pool
    y = jnp.pad(y, ((0, 0), (1, 1), (1, 1), (0, 0)))                  # spatial halo
    y = conv3x3_relu_pool(y, params["conv2_w"], params["conv2_b"],
                          out_dtype=jnp.float32)                      # (N, 64, 128) f32
    y = y.reshape(N, 8, 8, CP)

    # conv3 + ReLU + pool (bf16 output: consumed directly by fc1's MXU dot)
    y = jnp.pad(y, ((0, 0), (1, 1), (1, 1), (0, 0)))
    y = conv3x3_relu_pool(y, params["conv3_w"], params["conv3_b"],
                          out_dtype=jnp.bfloat16)                     # (N, 16, 128) bf16

    # Flatten in NHWC(+padded-channel) order; fc1_w rows were pre-permuted to match.
    a = y.reshape(N, 4 * 4 * CP)                                      # (N, 2048) bf16

    # dropout -> identity (eval semantics)
    a = matmul_bias_relu(a, params["fc1_w"], params["fc1_b"],
                         out_dtype=jnp.bfloat16)                      # (N, 512) bf16
    # dropout -> identity (eval semantics)
    logits = matmul_bias_relu(a, params["fc2_w"], params["fc2_b"],
                              out_dtype=jnp.float32)                  # (N, 128) f32
    return logits[:, :10]                                             # ReLU'd logits (per spec)


if __name__ == "__main__":
    key = jax.random.PRNGKey(0)
    # fc1 expects 64*4*4 features => spatial must be 32x32 (CIFAR size).
    x = jax.random.normal(key, (2, 3, 32, 32), dtype=jnp.float32)

    params = prepare_params(init_params(seed=0))
    out = jax.block_until_ready(net_forward(params, x))

    assert out.shape == (2, 10), out.shape
    assert out.dtype == jnp.float32
    assert bool(jnp.all(jnp.isfinite(out)))
    print("KERNEL_OK")
</pallas_src>

<mosaic_0001>
module attributes {stable_mosaic.version = 11 : i64} {
  func.func @_conv1_kernel(%arg0: i32, %arg1: memref<2x1024x32xbf16, #tpu.memory_space<vmem>>, %arg2: memref<32x128xbf16, #tpu.memory_space<vmem>>, %arg3: memref<1x128xf32, #tpu.memory_space<vmem>>, %arg4: memref<2x256x128xf32, #tpu.memory_space<vmem>>, %arg5: memref<64x128xf32, #tpu.memory_space<vmem>>) attributes {dimension_semantics = [#tpu.dimension_semantics<parallel>], iteration_bounds = array<i64: 1>, scalar_prefetch = 0 : i64, scratch_operands = 1 : i64, tpu.core_type = #tpu.core_type<tc>, window_params = [{transform_indices = @transform_0, window_bounds = array<i64: 2, 1024, 32>}, {pipeline_mode = #tpu.pipeline_mode<synchronous>, transform_indices = @transform_1, window_bounds = array<i64: 32, 128>}, {pipeline_mode = #tpu.pipeline_mode<synchronous>, transform_indices = @transform_2, window_bounds = array<i64: 1, 128>}, {transform_indices = @transform_3, window_bounds = array<i64: 2, 256, 128>}]} {
    %c0 = arith.constant 0 : index
    %c0_0 = arith.constant 0 : index
    %0 = vector.load %arg2[%c0, %c0_0] : memref<32x128xbf16, #tpu.memory_space<vmem>>, vector<32x128xbf16>
    %c0_1 = arith.constant 0 : index
    %c0_2 = arith.constant 0 : index
    %1 = vector.load %arg3[%c0_1, %c0_2] : memref<1x128xf32, #tpu.memory_space<vmem>>, vector<1x128xf32>
    %c0_i32 = arith.constant 0 : i32
    %c2_i32 = arith.constant 2 : i32
    %2 = arith.addi %c0_i32, %c2_i32 : i32
    %c1_i32 = arith.constant 1 : i32
    scf.for %arg6 = %c0_i32 to %2 step %c1_i32  : i32 {
      %c1_i32_4 = arith.constant 1 : i32
      %3 = arith.muli %arg6, %c1_i32_4 : i32
      %c0_i32_5 = arith.constant 0 : i32
      %4 = arith.addi %c0_i32_5, %3 : i32
      %5 = arith.index_cast %4 : i32 to index
      %c0_6 = arith.constant 0 : index
      %c0_7 = arith.constant 0 : index
      %6 = vector.load %arg1[%5, %c0_6, %c0_7] : memref<2x1024x32xbf16, #tpu.memory_space<vmem>>, vector<1x128x32xbf16>
      %7 = vector.shape_cast %6 : vector<1x128x32xbf16> to vector<128x32xbf16>
      %cst = arith.constant dense<0.000000e+00> : vector<128x128xf32>
      %8 = tpu.matmul %7, %0, %cst {dimension_numbers = #tpu.dot_dimension_numbers<[1], [0], [0], [1], [0, 0, 1, 1], [], []>} : vector<128x32xbf16>, vector<32x128xbf16>, vector<128x128xf32> -> vector<128x128xf32>
      %9 = vector.broadcast %1 : vector<1x128xf32> to vector<128x128xf32>
      %10 = arith.addf %8, %9 : vector<128x128xf32>
      %cst_8 = arith.constant 0.000000e+00 : f32
      %11 = vector.broadcast %cst_8 : f32 to vector<128x128xf32>
      %12 = arith.maximumf %10, %11 : vector<128x128xf32>
      %13 = vector.shape_cast %12 : vector<128x128xf32> to vector<2x2x32x128xf32>
      %14 = vector.extract_strided_slice %13 {offsets = [0, 0, 0, 0], sizes = [2, 1, 32, 128], strides = [1, 1, 1, 1]} : vector<2x2x32x128xf32> to vector<2x1x32x128xf32>
      %15 = vector.shape_cast %14 : vector<2x1x32x128xf32> to vector<2x32x128xf32>
      %16 = vector.extract_strided_slice %13 {offsets = [0, 1, 0, 0], sizes = [2, 1, 32, 128], strides = [1, 1, 1, 1]} : vector<2x2x32x128xf32> to vector<2x1x32x128xf32>
      %17 = vector.shape_cast %16 : vector<2x1x32x128xf32> to vector<2x32x128xf32>
      %18 = arith.maximumf %15, %17 : vector<2x32x128xf32>
      %19 = vector.shape_cast %18 : vector<2x32x128xf32> to vector<64x128xf32>
      %c0_9 = arith.constant 0 : index
      %c0_10 = arith.constant 0 : index
      %20 = vector.load %arg5[%c0_9, %c0_10] : memref<64x128xf32, #tpu.memory_space<vmem>>, vector<64x128xf32>
      tpu.vector_store %arg5[%c0_9, %c0_10], %19 {strides = array<i32>} : memref<64x128xf32, #tpu.memory_space<vmem>>, vector<64x128xf32>,
      %c0_11 = arith.constant 0 : index
      %c0_12 = arith.constant 0 : index
      %21 = tpu.strided_load %arg5[%c0_11, %c0_12] {strides = array<i32: 2, 1>} : memref<64x128xf32, #tpu.memory_space<vmem>>, vector<32x128xf32>
      %c1 = arith.constant 1 : index
      %c0_13 = arith.constant 0 : index
      %22 = tpu.strided_load %arg5[%c1, %c0_13] {strides = array<i32: 2, 1>} : memref<64x128xf32, #tpu.memory_space<vmem>>, vector<32x128xf32>
      %23 = arith.maximumf %21, %22 : vector<32x128xf32>
      %24 = arith.index_cast %4 : i32 to index
      %c0_14 = arith.constant 0 : index
      %c0_15 = arith.constant 0 : index
      %25 = vector.load %arg4[%24, %c0_14, %c0_15] : memref<2x256x128xf32, #tpu.memory_space<vmem>>, vector<1x32x128xf32>
      %26 = vector.shape_cast %25 : vector<1x32x128xf32> to vector<32x128xf32>
      %27 = vector.shape_cast %23 : vector<32x128xf32> to vector<1x32x128xf32>
      tpu.vector_store %arg4[%24, %c0_14, %c0_15], %27 {strides = array<i32>} : memref<2x256x128xf32, #tpu.memory_space<vmem>>, vector<1x32x128xf32>,
      %28 = arith.index_cast %4 : i32 to index
      %c128 = arith.constant 128 : index
      %c0_16 = arith.constant 0 : index
      %29 = vector.load %arg1[%28, %c128, %c0_16] : memref<2x1024x32xbf16, #tpu.memory_space<vmem>>, vector<1x128x32xbf16>
      %30 = vector.shape_cast %29 : vector<1x128x32xbf16> to vector<128x32xbf16>
      %cst_17 = arith.constant dense<0.000000e+00> : vector<128x128xf32>
      %31 = tpu.matmul %30, %0, %cst_17 {dimension_numbers = #tpu.dot_dimension_numbers<[1], [0], [0], [1], [0, 0, 1, 1], [], []>} : vector<128x32xbf16>, vector<32x128xbf16>, vector<128x128xf32> -> vector<128x128xf32>
      %32 = vector.broadcast %1 : vector<1x128xf32> to vector<128x128xf32>
      %33 = arith.addf %31, %32 : vector<128x128xf32>
      %cst_18 = arith.constant 0.000000e+00 : f32
      %34 = vector.broadcast %cst_18 : f32 to vector<128x128xf32>
      %35 = arith.maximumf %33, %34 : vector<128x128xf32>
      %36 = vector.shape_cast %35 : vector<128x128xf32> to vector<2x2x32x128xf32>
      %37 = vector.extract_strided_slice %36 {offsets = [0, 0, 0, 0], sizes = [2, 1, 32, 128], strides = [1, 1, 1, 1]} : vector<2x2x32x128xf32> to vector<2x1x32x128xf32>
      %38 = vector.shape_cast %37 : vector<2x1x32x128xf32> to vector<2x32x128xf32>
      %39 = vector.extract_strided_slice %36 {offsets = [0, 1, 0, 0], sizes = [2, 1, 32, 128], strides = [1, 1, 1, 1]} : vector<2x2x32x128xf32> to vector<2x1x32x128xf32>
      %40 = vector.shape_cast %39 : vector<2x1x32x128xf32> to vector<2x32x128xf32>
      %41 = arith.maximumf %38, %40 : vector<2x32x128xf32>
      %42 = vector.shape_cast %41 : vector<2x32x128xf32> to vector<64x128xf32>
      %c0_19 = arith.constant 0 : index
      %c0_20 = arith.constant 0 : index
      %43 = vector.load %arg5[%c0_19, %c0_20] : memref<64x128xf32, #tpu.memory_space<vmem>>, vector<64x128xf32>
      tpu.vector_store %arg5[%c0_19, %c0_20], %42 {strides = array<i32>} : memref<64x128xf32, #tpu.memory_space<vmem>>, vector<64x128xf32>,
      %c0_21 = arith.constant 0 : index
      %c0_22 = arith.constant 0 : index
      %44 = tpu.strided_load %arg5[%c0_21, %c0_22] {strides = array<i32: 2, 1>} : memref<64x128xf32, #tpu.memory_space<vmem>>, vector<32x128xf32>
      %c1_23 = arith.constant 1 : index
      %c0_24 = arith.constant 0 : index
      %45 = tpu.strided_load %arg5[%c1_23, %c0_24] {strides = array<i32: 2, 1>} : memref<64x128xf32, #tpu.memory_space<vmem>>, vector<32x128xf32>
      %46 = arith.maximumf %44, %45 : vector<32x128xf32>
      %47 = arith.index_cast %4 : i32 to index
      %c32 = arith.constant 32 : index
      %c0_25 = arith.constant 0 : index
      %48 = vector.load %arg4[%47, %c32, %c0_25] : memref<2x256x128xf32, #tpu.memory_space<vmem>>, vector<1x32x128xf32>
      %49 = vector.shape_cast %48 : vector<1x32x128xf32> to vector<32x128xf32>
      %50 = vector.shape_cast %46 : vector<32x128xf32> to vector<1x32x128xf32>
      tpu.vector_store %arg4[%47, %c32, %c0_25], %50 {strides = array<i32>} : memref<2x256x128xf32, #tpu.memory_space<vmem>>, vector<1x32x128xf32>,
      %51 = arith.index_cast %4 : i32 to index
      %c256 = arith.constant 256 : index
      %c0_26 = arith.constant 0 : index
      %52 = vector.load %arg1[%51, %c256, %c0_26] : memref<2x1024x32xbf16, #tpu.memory_space<vmem>>, vector<1x128x32xbf16>
      %53 = vector.shape_cast %52 : vector<1x128x32xbf16> to vector<128x32xbf16>
      %cst_27 = arith.constant dense<0.000000e+00> : vector<128x128xf32>
      %54 = tpu.matmul %53, %0, %cst_27 {dimension_numbers = #tpu.dot_dimension_numbers<[1], [0], [0], [1], [0, 0, 1, 1], [], []>} : vector<128x32xbf16>, vector<32x128xbf16>, vector<128x128xf32> -> vector<128x128xf32>
      %55 = vector.broadcast %1 : vector<1x128xf32> to vector<128x128xf32>
      %56 = arith.addf %54, %55 : vector<128x128xf32>
      %cst_28 = arith.constant 0.000000e+00 : f32
      %57 = vector.broadcast %cst_28 : f32 to vector<128x128xf32>
      %58 = arith.maximumf %56, %57 : vector<128x128xf32>
      %59 = vector.shape_cast %58 : vector<128x128xf32> to vector<2x2x32x128xf32>
      %60 = vector.extract_strided_slice %59 {offsets = [0, 0, 0, 0], sizes = [2, 1, 32, 128], strides = [1, 1, 1, 1]} : vector<2x2x32x128xf32> to vector<2x1x32x128xf32>
      %61 = vector.shape_cast %60 : vector<2x1x32x128xf32> to vector<2x32x128xf32>
      %62 = vector.extract_strided_slice %59 {offsets = [0, 1, 0, 0], sizes = [2, 1, 32, 128], strides = [1, 1, 1, 1]} : vector<2x2x32x128xf32> to vector<2x1x32x128xf32>
      %63 = vector.shape_cast %62 : vector<2x1x32x128xf32> to vector<2x32x128xf32>
      %64 = arith.maximumf %61, %63 : vector<2x32x128xf32>
      %65 = vector.shape_cast %64 : vector<2x32x128xf32> to vector<64x128xf32>
      %c0_29 = arith.constant 0 : index
      %c0_30 = arith.constant 0 : index
      %66 = vector.load %arg5[%c0_29, %c0_30] : memref<64x128xf32, #tpu.memory_space<vmem>>, vector<64x128xf32>
      tpu.vector_store %arg5[%c0_29, %c0_30], %65 {strides = array<i32>} : memref<64x128xf32, #tpu.memory_space<vmem>>, vector<64x128xf32>,
      %c0_31 = arith.constant 0 : index
      %c0_32 = arith.constant 0 : index
      %67 = tpu.strided_load %arg5[%c0_31, %c0_32] {strides = array<i32: 2, 1>} : memref<64x128xf32, #tpu.memory_space<vmem>>, vector<32x128xf32>
      %c1_33 = arith.constant 1 : index
      %c0_34 = arith.constant 0 : index
      %68 = tpu.strided_load %arg5[%c1_33, %c0_34] {strides = array<i32: 2, 1>} : memref<64x128xf32, #tpu.memory_space<vmem>>, vector<32x128xf32>
      %69 = arith.maximumf %67, %68 : vector<32x128xf32>
      %70 = arith.index_cast %4 : i32 to index
      %c64 = arith.constant 64 : index
      %c0_35 = arith.constant 0 : index
      %71 = vector.load %arg4[%70, %c64, %c0_35] : memref<2x256x128xf32, #tpu.memory_space<vmem>>, vector<1x32x128xf32>
      %72 = vector.shape_cast %71 : vector<1x32x128xf32> to vector<32x128xf32>
      %73 = vector.shape_cast %69 : vector<32x128xf32> to vector<1x32x128xf32>
      tpu.vector_store %arg4[%70, %c64, %c0_35], %73 {strides = array<i32>} : memref<2x256x128xf32, #tpu.memory_space<vmem>>, vector<1x32x128xf32>,
      %74 = arith.index_cast %4 : i32 to index
      %c384 = arith.constant 384 : index
      %c0_36 = arith.constant 0 : index
      %75 = vector.load %arg1[%74, %c384, %c0_36] : memref<2x1024x32xbf16, #tpu.memory_space<vmem>>, vector<1x128x32xbf16>
      %76 = vector.shape_cast %75 : vector<1x128x32xbf16> to vector<128x32xbf16>
      %cst_37 = arith.constant dense<0.000000e+00> : vector<128x128xf32>
      %77 = tpu.matmul %76, %0, %cst_37 {dimension_numbers = #tpu.dot_dimension_numbers<[1], [0], [0], [1], [0, 0, 1, 1], [], []>} : vector<128x32xbf16>, vector<32x128xbf16>, vector<128x128xf32> -> vector<128x128xf32>
      %78 = vector.broadcast %1 : vector<1x128xf32> to vector<128x128xf32>
      %79 = arith.addf %77, %78 : vector<128x128xf32>
      %cst_38 = arith.constant 0.000000e+00 : f32
      %80 = vector.broadcast %cst_38 : f32 to vector<128x128xf32>
      %81 = arith.maximumf %79, %80 : vector<128x128xf32>
      %82 = vector.shape_cast %81 : vector<128x128xf32> to vector<2x2x32x128xf32>
      %83 = vector.extract_strided_slice %82 {offsets = [0, 0, 0, 0], sizes = [2, 1, 32, 128], strides = [1, 1, 1, 1]} : vector<2x2x32x128xf32> to vector<2x1x32x128xf32>
      %84 = vector.shape_cast %83 : vector<2x1x32x128xf32> to vector<2x32x128xf32>
      %85 = vector.extract_strided_slice %82 {offsets = [0, 1, 0, 0], sizes = [2, 1, 32, 128], strides = [1, 1, 1, 1]} : vector<2x2x32x128xf32> to vector<2x1x32x128xf32>
      %86 = vector.shape_cast %85 : vector<2x1x32x128xf32> to vector<2x32x128xf32>
      %87 = arith.maximumf %84, %86 : vector<2x32x128xf32>
      %88 = vector.shape_cast %87 : vector<2x32x128xf32> to vector<64x128xf32>
      %c0_39 = arith.constant 0 : index
      %c0_40 = arith.constant 0 : index
      %89 = vector.load %arg5[%c0_39, %c0_40] : memref<64x128xf32, #tpu.memory_space<vmem>>, vector<64x128xf32>
      tpu.vector_store %arg5[%c0_39, %c0_40], %88 {strides = array<i32>} : memref<64x128xf32, #tpu.memory_space<vmem>>, vector<64x128xf32>,
      %c0_41 = arith.constant 0 : index
      %c0_42 = arith.constant 0 : index
      %90 = tpu.strided_load %arg5[%c0_41, %c0_42] {strides = array<i32: 2, 1>} : memref<64x128xf32, #tpu.memory_space<vmem>>, vector<32x128xf32>
      %c1_43 = arith.constant 1 : index
      %c0_44 = arith.constant 0 : index
      %91 = tpu.strided_load %arg5[%c1_43, %c0_44] {strides = array<i32: 2, 1>} : memref<64x128xf32, #tpu.memory_space<vmem>>, vector<32x128xf32>
      %92 = arith.maximumf %90, %91 : vector<32x128xf32>
      %93 = arith.index_cast %4 : i32 to index
      %c96 = arith.constant 96 : index
      %c0_45 = arith.constant 0 : index
      %94 = vector.load %arg4[%93, %c96, %c0_45] : memref<2x256x128xf32, #tpu.memory_space<vmem>>, vector<1x32x128xf32>
      %95 = vector.shape_cast %94 : vector<1x32x128xf32> to vector<32x128xf32>
      %96 = vector.shape_cast %92 : vector<32x128xf32> to vector<1x32x128xf32>
      tpu.vector_store %arg4[%93, %c96, %c0_45], %96 {strides = array<i32>} : memref<2x256x128xf32, #tpu.memory_space<vmem>>, vector<1x32x128xf32>,
      %97 = arith.index_cast %4 : i32 to index
      %c512 = arith.constant 512 : index
      %c0_46 = arith.constant 0 : index
      %98 = vector.load %arg1[%97, %c512, %c0_46] : memref<2x1024x32xbf16, #tpu.memory_space<vmem>>, vector<1x128x32xbf16>
      %99 = vector.shape_cast %98 : vector<1x128x32xbf16> to vector<128x32xbf16>
      %cst_47 = arith.constant dense<0.000000e+00> : vector<128x128xf32>
      %100 = tpu.matmul %99, %0, %cst_47 {dimension_numbers = #tpu.dot_dimension_numbers<[1], [0], [0], [1], [0, 0, 1, 1], [], []>} : vector<128x32xbf16>, vector<32x128xbf16>, vector<128x128xf32> -> vector<128x128xf32>
      %101 = vector.broadcast %1 : vector<1x128xf32> to vector<128x128xf32>
      %102 = arith.addf %100, %101 : vector<128x128xf32>
      %cst_48 = arith.constant 0.000000e+00 : f32
      %103 = vector.broadcast %cst_48 : f32 to vector<128x128xf32>
      %104 = arith.maximumf %102, %103 : vector<128x128xf32>
      %105 = vector.shape_cast %104 : vector<128x128xf32> to vector<2x2x32x128xf32>
      %106 = vector.extract_strided_slice %105 {offsets = [0, 0, 0, 0], sizes = [2, 1, 32, 128], strides = [1, 1, 1, 1]} : vector<2x2x32x128xf32> to vector<2x1x32x128xf32>
      %107 = vector.shape_cast %106 : vector<2x1x32x128xf32> to vector<2x32x128xf32>
      %108 = vector.extract_strided_slice %105 {offsets = [0, 1, 0, 0], sizes = [2, 1, 32, 128], strides = [1, 1, 1, 1]} : vector<2x2x32x128xf32> to vector<2x1x32x128xf32>
      %109 = vector.shape_cast %108 : vector<2x1x32x128xf32> to vector<2x32x128xf32>
      %110 = arith.maximumf %107, %109 : vector<2x32x128xf32>
      %111 = vector.shape_cast %110 : vector<2x32x128xf32> to vector<64x128xf32>
      %c0_49 = arith.constant 0 : index
      %c0_50 = arith.constant 0 : index
      %112 = vector.load %arg5[%c0_49, %c0_50] : memref<64x128xf32, #tpu.memory_space<vmem>>, vector<64x128xf32>
      tpu.vector_store %arg5[%c0_49, %c0_50], %111 {strides = array<i32>} : memref<64x128xf32, #tpu.memory_space<vmem>>, vector<64x128xf32>,
      %c0_51 = arith.constant 0 : index
      %c0_52 = arith.constant 0 : index
      %113 = tpu.strided_load %arg5[%c0_51, %c0_52] {strides = array<i32: 2, 1>} : memref<64x128xf32, #tpu.memory_space<vmem>>, vector<32x128xf32>
      %c1_53 = arith.constant 1 : index
      %c0_54 = arith.constant 0 : index
      %114 = tpu.strided_load %arg5[%c1_53, %c0_54] {strides = array<i32: 2, 1>} : memref<64x128xf32, #tpu.memory_space<vmem>>, vector<32x128xf32>
      %115 = arith.maximumf %113, %114 : vector<32x128xf32>
      %116 = arith.index_cast %4 : i32 to index
      %c128_55 = arith.constant 128 : index
      %c0_56 = arith.constant 0 : index
      %117 = vector.load %arg4[%116, %c128_55, %c0_56] : memref<2x256x128xf32, #tpu.memory_space<vmem>>, vector<1x32x128xf32>
      %118 = vector.shape_cast %117 : vector<1x32x128xf32> to vector<32x128xf32>
      %119 = vector.shape_cast %115 : vector<32x128xf32> to vector<1x32x128xf32>
      tpu.vector_store %arg4[%116, %c128_55, %c0_56], %119 {strides = array<i32>} : memref<2x256x128xf32, #tpu.memory_space<vmem>>, vector<1x32x128xf32>,
      %120 = arith.index_cast %4 : i32 to index
      %c640 = arith.constant 640 : index
      %c0_57 = arith.constant 0 : index
      %121 = vector.load %arg1[%120, %c640, %c0_57] : memref<2x1024x32xbf16, #tpu.memory_space<vmem>>, vector<1x128x32xbf16>
      %122 = vector.shape_cast %121 : vector<1x128x32xbf16> to vector<128x32xbf16>
      %cst_58 = arith.constant dense<0.000000e+00> : vector<128x128xf32>
      %123 = tpu.matmul %122, %0, %cst_58 {dimension_numbers = #tpu.dot_dimension_numbers<[1], [0], [0], [1], [0, 0, 1, 1], [], []>} : vector<128x32xbf16>, vector<32x128xbf16>, vector<128x128xf32> -> vector<128x128xf32>
      %124 = vector.broadcast %1 : vector<1x128xf32> to vector<128x128xf32>
      %125 = arith.addf %123, %124 : vector<128x128xf32>
      %cst_59 = arith.constant 0.000000e+00 : f32
      %126 = vector.broadcast %cst_59 : f32 to vector<128x128xf32>
      %127 = arith.maximumf %125, %126 : vector<128x128xf32>
      %128 = vector.shape_cast %127 : vector<128x128xf32> to vector<2x2x32x128xf32>
      %129 = vector.extract_strided_slice %128 {offsets = [0, 0, 0, 0], sizes = [2, 1, 32, 128], strides = [1, 1, 1, 1]} : vector<2x2x32x128xf32> to vector<2x1x32x128xf32>
      %130 = vector.shape_cast %129 : vector<2x1x32x128xf32> to vector<2x32x128xf32>
      %131 = vector.extract_strided_slice %128 {offsets = [0, 1, 0, 0], sizes = [2, 1, 32, 128], strides = [1, 1, 1, 1]} : vector<2x2x32x128xf32> to vector<2x1x32x128xf32>
      %132 = vector.shape_cast %131 : vector<2x1x32x128xf32> to vector<2x32x128xf32>
      %133 = arith.maximumf %130, %132 : vector<2x32x128xf32>
      %134 = vector.shape_cast %133 : vector<2x32x128xf32> to vector<64x128xf32>
      %c0_60 = arith.constant 0 : index
      %c0_61 = arith.constant 0 : index
      %135 = vector.load %arg5[%c0_60, %c0_61] : memref<64x128xf32, #tpu.memory_space<vmem>>, vector<64x128xf32>
      tpu.vector_store %arg5[%c0_60, %c0_61], %134 {strides = array<i32>} : memref<64x128xf32, #tpu.memory_space<vmem>>, vector<64x128xf32>,
      %c0_62 = arith.constant 0 : index
      %c0_63 = arith.constant 0 : index
      %136 = tpu.strided_load %arg5[%c0_62, %c0_63] {strides = array<i32: 2, 1>} : memref<64x128xf32, #tpu.memory_space<vmem>>, vector<32x128xf32>
      %c1_64 = arith.constant 1 : index
      %c0_65 = arith.constant 0 : index
      %137 = tpu.strided_load %arg5[%c1_64, %c0_65] {strides = array<i32: 2, 1>} : memref<64x128xf32, #tpu.memory_space<vmem>>, vector<32x128xf32>
      %138 = arith.maximumf %136, %137 : vector<32x128xf32>
      %139 = arith.index_cast %4 : i32 to index
      %c160 = arith.constant 160 : index
      %c0_66 = arith.constant 0 : index
      %140 = vector.load %arg4[%139, %c160, %c0_66] : memref<2x256x128xf32, #tpu.memory_space<vmem>>, vector<1x32x128xf32>
      %141 = vector.shape_cast %140 : vector<1x32x128xf32> to vector<32x128xf32>
      %142 = vector.shape_cast %138 : vector<32x128xf32> to vector<1x32x128xf32>
      tpu.vector_store %arg4[%139, %c160, %c0_66], %142 {strides = array<i32>} : memref<2x256x128xf32, #tpu.memory_space<vmem>>, vector<1x32x128xf32>,
      %143 = arith.index_cast %4 : i32 to index
      %c768 = arith.constant 768 : index
      %c0_67 = arith.constant 0 : index
      %144 = vector.load %arg1[%143, %c768, %c0_67] : memref<2x1024x32xbf16, #tpu.memory_space<vmem>>, vector<1x128x32xbf16>
      %145 = vector.shape_cast %144 : vector<1x128x32xbf16> to vector<128x32xbf16>
      %cst_68 = arith.constant dense<0.000000e+00> : vector<128x128xf32>
      %146 = tpu.matmul %145, %0, %cst_68 {dimension_numbers = #tpu.dot_dimension_numbers<[1], [0], [0], [1], [0, 0, 1, 1], [], []>} : vector<128x32xbf16>, vector<32x128xbf16>, vector<128x128xf32> -> vector<128x128xf32>
      %147 = vector.broadcast %1 : vector<1x128xf32> to vector<128x128xf32>
      %148 = arith.addf %146, %147 : vector<128x128xf32>
      %cst_69 = arith.constant 0.000000e+00 : f32
      %149 = vector.broadcast %cst_69 : f32 to vector<128x128xf32>
      %150 = arith.maximumf %148, %149 : vector<128x128xf32>
      %151 = vector.shape_cast %150 : vector<128x128xf32> to vector<2x2x32x128xf32>
      %152 = vector.extract_strided_slice %151 {offsets = [0, 0, 0, 0], sizes = [2, 1, 32, 128], strides = [1, 1, 1, 1]} : vector<2x2x32x128xf32> to vector<2x1x32x128xf32>
      %153 = vector.shape_cast %152 : vector<2x1x32x128xf32> to vector<2x32x128xf32>
      %154 = vector.extract_strided_slice %151 {offsets = [0, 1, 0, 0], sizes = [2, 1, 32, 128], strides = [1, 1, 1, 1]} : vector<2x2x32x128xf32> to vector<2x1x32x128xf32>
      %155 = vector.shape_cast %154 : vector<2x1x32x128xf32> to vector<2x32x128xf32>
      %156 = arith.maximumf %153, %155 : vector<2x32x128xf32>
      %157 = vector.shape_cast %156 : vector<2x32x128xf32> to vector<64x128xf32>
      %c0_70 = arith.constant 0 : index
      %c0_71 = arith.constant 0 : index
      %158 = vector.load %arg5[%c0_70, %c0_71] : memref<64x128xf32, #tpu.memory_space<vmem>>, vector<64x128xf32>
      tpu.vector_store %arg5[%c0_70, %c0_71], %157 {strides = array<i32>} : memref<64x128xf32, #tpu.memory_space<vmem>>, vector<64x128xf32>,
      %c0_72 = arith.constant 0 : index
      %c0_73 = arith.constant 0 : index
      %159 = tpu.strided_load %arg5[%c0_72, %c0_73] {strides = array<i32: 2, 1>} : memref<64x128xf32, #tpu.memory_space<vmem>>, vector<32x128xf32>
      %c1_74 = arith.constant 1 : index
      %c0_75 = arith.constant 0 : index
      %160 = tpu.strided_load %arg5[%c1_74, %c0_75] {strides = array<i32: 2, 1>} : memref<64x128xf32, #tpu.memory_space<vmem>>, vector<32x128xf32>
      %161 = arith.maximumf %159, %160 : vector<32x128xf32>
      %162 = arith.index_cast %4 : i32 to index
      %c192 = arith.constant 192 : index
      %c0_76 = arith.constant 0 : index
      %163 = vector.load %arg4[%162, %c192, %c0_76] : memref<2x256x128xf32, #tpu.memory_space<vmem>>, vector<1x32x128xf32>
      %164 = vector.shape_cast %163 : vector<1x32x128xf32> to vector<32x128xf32>
      %165 = vector.shape_cast %161 : vector<32x128xf32> to vector<1x32x128xf32>
      tpu.vector_store %arg4[%162, %c192, %c0_76], %165 {strides = array<i32>} : memref<2x256x128xf32, #tpu.memory_space<vmem>>, vector<1x32x128xf32>,
      %166 = arith.index_cast %4 : i32 to index
      %c896 = arith.constant 896 : index
      %c0_77 = arith.constant 0 : index
      %167 = vector.load %arg1[%166, %c896, %c0_77] : memref<2x1024x32xbf16, #tpu.memory_space<vmem>>, vector<1x128x32xbf16>
      %168 = vector.shape_cast %167 : vector<1x128x32xbf16> to vector<128x32xbf16>
      %cst_78 = arith.constant dense<0.000000e+00> : vector<128x128xf32>
      %169 = tpu.matmul %168, %0, %cst_78 {dimension_numbers = #tpu.dot_dimension_numbers<[1], [0], [0], [1], [0, 0, 1, 1], [], []>} : vector<128x32xbf16>, vector<32x128xbf16>, vector<128x128xf32> -> vector<128x128xf32>
      %170 = vector.broadcast %1 : vector<1x128xf32> to vector<128x128xf32>
      %171 = arith.addf %169, %170 : vector<128x128xf32>
      %cst_79 = arith.constant 0.000000e+00 : f32
      %172 = vector.broadcast %cst_79 : f32 to vector<128x128xf32>
      %173 = arith.maximumf %171, %172 : vector<128x128xf32>
      %174 = vector.shape_cast %173 : vector<128x128xf32> to vector<2x2x32x128xf32>
      %175 = vector.extract_strided_slice %174 {offsets = [0, 0, 0, 0], sizes = [2, 1, 32, 128], strides = [1, 1, 1, 1]} : vector<2x2x32x128xf32> to vector<2x1x32x128xf32>
      %176 = vector.shape_cast %175 : vector<2x1x32x128xf32> to vector<2x32x128xf32>
      %177 = vector.extract_strided_slice %174 {offsets = [0, 1, 0, 0], sizes = [2, 1, 32, 128], strides = [1, 1, 1, 1]} : vector<2x2x32x128xf32> to vector<2x1x32x128xf32>
      %178 = vector.shape_cast %177 : vector<2x1x32x128xf32> to vector<2x32x128xf32>
      %179 = arith.maximumf %176, %178 : vector<2x32x128xf32>
      %180 = vector.shape_cast %179 : vector<2x32x128xf32> to vector<64x128xf32>
      %c0_80 = arith.constant 0 : index
      %c0_81 = arith.constant 0 : index
      %181 = vector.load %arg5[%c0_80, %c0_81] : memref<64x128xf32, #tpu.memory_space<vmem>>, vector<64x128xf32>
      tpu.vector_store %arg5[%c0_80, %c0_81], %180 {strides = array<i32>} : memref<64x128xf32, #tpu.memory_space<vmem>>, vector<64x128xf32>,
      %c0_82 = arith.constant 0 : index
      %c0_83 = arith.constant 0 : index
      %182 = tpu.strided_load %arg5[%c0_82, %c0_83] {strides = array<i32: 2, 1>} : memref<64x128xf32, #tpu.memory_space<vmem>>, vector<32x128xf32>
      %c1_84 = arith.constant 1 : index
      %c0_85 = arith.constant 0 : index
      %183 = tpu.strided_load %arg5[%c1_84, %c0_85] {strides = array<i32: 2, 1>} : memref<64x128xf32, #tpu.memory_space<vmem>>, vector<32x128xf32>
      %184 = arith.maximumf %182, %183 : vector<32x128xf32>
      %185 = arith.index_cast %4 : i32 to index
      %c224 = arith.constant 224 : index
      %c0_86 = arith.constant 0 : index
      %186 = vector.load %arg4[%185, %c224, %c0_86] : memref<2x256x128xf32, #tpu.memory_space<vmem>>, vector<1x32x128xf32>
      %187 = vector.shape_cast %186 : vector<1x32x128xf32> to vector<32x128xf32>
      %188 = vector.shape_cast %184 : vector<32x128xf32> to vector<1x32x128xf32>
      tpu.vector_store %arg4[%185, %c224, %c0_86], %188 {strides = array<i32>} : memref<2x256x128xf32, #tpu.memory_space<vmem>>, vector<1x32x128xf32>,
    }
    %c2_i32_3 = arith.constant 2 : i32
    return
  }
  func.func @transform_0(%arg0: i32) -> (i32, i32, i32) {
    %c0_i32 = arith.constant 0 : i32
    %c0_i32_0 = arith.constant 0 : i32
    %c0_i32_1 = arith.constant 0 : i32
    return %arg0, %c0_i32, %c0_i32_0 : i32, i32, i32
  }
  func.func @transform_1(%arg0: i32) -> (i32, i32) {
    %c0_i32 = arith.constant 0 : i32
    %c0_i32_0 = arith.constant 0 : i32
    %c0_i32_1 = arith.constant 0 : i32
    return %c0_i32, %c0_i32_0 : i32, i32
  }
  func.func @transform_2(%arg0: i32) -> (i32, i32) {
    %c0_i32 = arith.constant 0 : i32
    %c0_i32_0 = arith.constant 0 : i32
    %c0_i32_1 = arith.constant 0 : i32
    return %c0_i32, %c0_i32_0 : i32, i32
  }
  func.func @transform_3(%arg0: i32) -> (i32, i32, i32) {
    %c0_i32 = arith.constant 0 : i32
    %c0_i32_0 = arith.constant 0 : i32
    %c0_i32_1 = arith.constant 0 : i32
    return %arg0, %c0_i32, %c0_i32_0 : i32, i32, i32
  }
}

module attributes {stable_mosaic.version = 11 : i64} {
  func.func @_conv3x3_kernel(%arg0: i32, %arg1: memref<2x18x18x128xf32, #tpu.memory_space<vmem>>, %arg2: memref<9x128x128xbf16, #tpu.memory_space<vmem>>, %arg3: memref<1x128xf32, #tpu.memory_space<vmem>>, %arg4: memref<2x64x128xf32, #tpu.memory_space<vmem>>, %arg5: memref<64x128xf32, #tpu.memory_space<vmem>>) attributes {dimension_semantics = [#tpu.dimension_semantics<parallel>], iteration_bounds = array<i64: 1>, scalar_prefetch = 0 : i64, scratch_operands = 1 : i64, tpu.core_type = #tpu.core_type<tc>, window_params = [{transform_indices = @transform_0, window_bounds = array<i64: 2, 18, 18, 128>}, {pipeline_mode = #tpu.pipeline_mode<synchronous>, transform_indices = @transform_1, window_bounds = array<i64: 9, 128, 128>}, {pipeline_mode = #tpu.pipeline_mode<synchronous>, transform_indices = @transform_2, window_bounds = array<i64: 1, 128>}, {transform_indices = @transform_3, window_bounds = array<i64: 2, 64, 128>}]} {
    %c0 = arith.constant 0 : index
    %c0_0 = arith.constant 0 : index
    %0 = vector.load %arg3[%c0, %c0_0] : memref<1x128xf32, #tpu.memory_space<vmem>>, vector<1x128xf32>
    %c0_i32 = arith.constant 0 : i32
    %c2_i32 = arith.constant 2 : i32
    %1 = arith.addi %c0_i32, %c2_i32 : i32
    %c1_i32 = arith.constant 1 : i32
    scf.for %arg6 = %c0_i32 to %1 step %c1_i32  : i32 {
      %c1_i32_2 = arith.constant 1 : i32
      %2 = arith.muli %arg6, %c1_i32_2 : i32
      %c0_i32_3 = arith.constant 0 : i32
      %3 = arith.addi %c0_i32_3, %2 : i32
      %4 = arith.index_cast %3 : i32 to index
      %c0_4 = arith.constant 0 : index
      %c0_5 = arith.constant 0 : index
      %c0_6 = arith.constant 0 : index
      %5 = vector.load %arg1[%4, %c0_4, %c0_5, %c0_6] : memref<2x18x18x128xf32, #tpu.memory_space<vmem>>, vector<1x8x16x128xf32>
      %6 = vector.shape_cast %5 : vector<1x8x16x128xf32> to vector<8x16x128xf32>
      %7 = vector.shape_cast %6 : vector<8x16x128xf32> to vector<128x128xf32>
      %8 = arith.truncf %7 : vector<128x128xf32> to vector<128x128xbf16>
      %c0_7 = arith.constant 0 : index
      %c0_8 = arith.constant 0 : index
      %c0_9 = arith.constant 0 : index
      %9 = vector.load %arg2[%c0_7, %c0_8, %c0_9] : memref<9x128x128xbf16, #tpu.memory_space<vmem>>, vector<1x128x128xbf16>
      %10 = vector.shape_cast %9 : vector<1x128x128xbf16> to vector<128x128xbf16>
      %cst = arith.constant dense<0.000000e+00> : vector<128x128xf32>
      %11 = tpu.matmul %8, %10, %cst {dimension_numbers = #tpu.dot_dimension_numbers<[1], [0], [0], [1], [0, 0, 1, 1], [], []>} : vector<128x128xbf16>, vector<128x128xbf16>, vector<128x128xf32> -> vector<128x128xf32>
      %12 = arith.index_cast %3 : i32 to index
      %c0_10 = arith.constant 0 : index
      %c1 = arith.constant 1 : index
      %c0_11 = arith.constant 0 : index
      %13 = vector.load %arg1[%12, %c0_10, %c1, %c0_11] : memref<2x18x18x128xf32, #tpu.memory_space<vmem>>, vector<1x8x16x128xf32>
      %14 = vector.shape_cast %13 : vector<1x8x16x128xf32> to vector<8x16x128xf32>
      %15 = vector.shape_cast %14 : vector<8x16x128xf32> to vector<128x128xf32>
      %16 = arith.truncf %15 : vector<128x128xf32> to vector<128x128xbf16>
      %c1_12 = arith.constant 1 : index
      %c0_13 = arith.constant 0 : index
      %c0_14 = arith.constant 0 : index
      %17 = vector.load %arg2[%c1_12, %c0_13, %c0_14] : memref<9x128x128xbf16, #tpu.memory_space<vmem>>, vector<1x128x128xbf16>
      %18 = vector.shape_cast %17 : vector<1x128x128xbf16> to vector<128x128xbf16>
      %cst_15 = arith.constant dense<0.000000e+00> : vector<128x128xf32>
      %19 = tpu.matmul %16, %18, %cst_15 {dimension_numbers = #tpu.dot_dimension_numbers<[1], [0], [0], [1], [0, 0, 1, 1], [], []>} : vector<128x128xbf16>, vector<128x128xbf16>, vector<128x128xf32> -> vector<128x128xf32>
      %20 = arith.addf %11, %19 : vector<128x128xf32>
      %21 = arith.index_cast %3 : i32 to index
      %c0_16 = arith.constant 0 : index
      %c2 = arith.constant 2 : index
      %c0_17 = arith.constant 0 : index
      %22 = vector.load %arg1[%21, %c0_16, %c2, %c0_17] : memref<2x18x18x128xf32, #tpu.memory_space<vmem>>, vector<1x8x16x128xf32>
      %23 = vector.shape_cast %22 : vector<1x8x16x128xf32> to vector<8x16x128xf32>
      %24 = vector.shape_cast %23 : vector<8x16x128xf32> to vector<128x128xf32>
      %25 = arith.truncf %24 : vector<128x128xf32> to vector<128x128xbf16>
      %c2_18 = arith.constant 2 : index
      %c0_19 = arith.constant 0 : index
      %c0_20 = arith.constant 0 : index
      %26 = vector.load %arg2[%c2_18, %c0_19, %c0_20] : memref<9x128x128xbf16, #tpu.memory_space<vmem>>, vector<1x128x128xbf16>
      %27 = vector.shape_cast %26 : vector<1x128x128xbf16> to vector<128x128xbf16>
      %cst_21 = arith.constant dense<0.000000e+00> : vector<128x128xf32>
      %28 = tpu.matmul %25, %27, %cst_21 {dimension_numbers = #tpu.dot_dimension_numbers<[1], [0], [0], [1], [0, 0, 1, 1], [], []>} : vector<128x128xbf16>, vector<128x128xbf16>, vector<128x128xf32> -> vector<128x128xf32>
      %29 = arith.addf %20, %28 : vector<128x128xf32>
      %30 = arith.index_cast %3 : i32 to index
      %c1_22 = arith.constant 1 : index
      %c0_23 = arith.constant 0 : index
      %c0_24 = arith.constant 0 : index
      %31 = vector.load %arg1[%30, %c1_22, %c0_23, %c0_24] : memref<2x18x18x128xf32, #tpu.memory_space<vmem>>, vector<1x8x16x128xf32>
      %32 = vector.shape_cast %31 : vector<1x8x16x128xf32> to vector<8x16x128xf32>
      %33 = vector.shape_cast %32 : vector<8x16x128xf32> to vector<128x128xf32>
      %34 = arith.truncf %33 : vector<128x128xf32> to vector<128x128xbf16>
      %c3 = arith.constant 3 : index
      %c0_25 = arith.constant 0 : index
      %c0_26 = arith.constant 0 : index
      %35 = vector.load %arg2[%c3, %c0_25, %c0_26] : memref<9x128x128xbf16, #tpu.memory_space<vmem>>, vector<1x128x128xbf16>
      %36 = vector.shape_cast %35 : vector<1x128x128xbf16> to vector<128x128xbf16>
      %cst_27 = arith.constant dense<0.000000e+00> : vector<128x128xf32>
      %37 = tpu.matmul %34, %36, %cst_27 {dimension_numbers = #tpu.dot_dimension_numbers<[1], [0], [0], [1], [0, 0, 1, 1], [], []>} : vector<128x128xbf16>, vector<128x128xbf16>, vector<128x128xf32> -> vector<128x128xf32>
      %38 = arith.addf %29, %37 : vector<128x128xf32>
      %39 = arith.index_cast %3 : i32 to index
      %c1_28 = arith.constant 1 : index
      %c1_29 = arith.constant 1 : index
      %c0_30 = arith.constant 0 : index
      %40 = vector.load %arg1[%39, %c1_28, %c1_29, %c0_30] : memref<2x18x18x128xf32, #tpu.memory_space<vmem>>, vector<1x8x16x128xf32>
      %41 = vector.shape_cast %40 : vector<1x8x16x128xf32> to vector<8x16x128xf32>
      %42 = vector.shape_cast %41 : vector<8x16x128xf32> to vector<128x128xf32>
      %43 = arith.truncf %42 : vector<128x128xf32> to vector<128x128xbf16>
      %c4 = arith.constant 4 : index
      %c0_31 = arith.constant 0 : index
      %c0_32 = arith.constant 0 : index
      %44 = vector.load %arg2[%c4, %c0_31, %c0_32] : memref<9x128x128xbf16, #tpu.memory_space<vmem>>, vector<1x128x128xbf16>
      %45 = vector.shape_cast %44 : vector<1x128x128xbf16> to vector<128x128xbf16>
      %cst_33 = arith.constant dense<0.000000e+00> : vector<128x128xf32>
      %46 = tpu.matmul %43, %45, %cst_33 {dimension_numbers = #tpu.dot_dimension_numbers<[1], [0], [0], [1], [0, 0, 1, 1], [], []>} : vector<128x128xbf16>, vector<128x128xbf16>, vector<128x128xf32> -> vector<128x128xf32>
      %47 = arith.addf %38, %46 : vector<128x128xf32>
      %48 = arith.index_cast %3 : i32 to index
      %c1_34 = arith.constant 1 : index
      %c2_35 = arith.constant 2 : index
      %c0_36 = arith.constant 0 : index
      %49 = vector.load %arg1[%48, %c1_34, %c2_35, %c0_36] : memref<2x18x18x128xf32, #tpu.memory_space<vmem>>, vector<1x8x16x128xf32>
      %50 = vector.shape_cast %49 : vector<1x8x16x128xf32> to vector<8x16x128xf32>
      %51 = vector.shape_cast %50 : vector<8x16x128xf32> to vector<128x128xf32>
      %52 = arith.truncf %51 : vector<128x128xf32> to vector<128x128xbf16>
      %c5 = arith.constant 5 : index
      %c0_37 = arith.constant 0 : index
      %c0_38 = arith.constant 0 : index
      %53 = vector.load %arg2[%c5, %c0_37, %c0_38] : memref<9x128x128xbf16, #tpu.memory_space<vmem>>, vector<1x128x128xbf16>
      %54 = vector.shape_cast %53 : vector<1x128x128xbf16> to vector<128x128xbf16>
      %cst_39 = arith.constant dense<0.000000e+00> : vector<128x128xf32>
      %55 = tpu.matmul %52, %54, %cst_39 {dimension_numbers = #tpu.dot_dimension_numbers<[1], [0], [0], [1], [0, 0, 1, 1], [], []>} : vector<128x128xbf16>, vector<128x128xbf16>, vector<128x128xf32> -> vector<128x128xf32>
      %56 = arith.addf %47, %55 : vector<128x128xf32>
      %57 = arith.index_cast %3 : i32 to index
      %c2_40 = arith.constant 2 : index
      %c0_41 = arith.constant 0 : index
      %c0_42 = arith.constant 0 : index
      %58 = vector.load %arg1[%57, %c2_40, %c0_41, %c0_42] : memref<2x18x18x128xf32, #tpu.memory_space<vmem>>, vector<1x8x16x128xf32>
      %59 = vector.shape_cast %58 : vector<1x8x16x128xf32> to vector<8x16x128xf32>
      %60 = vector.shape_cast %59 : vector<8x16x128xf32> to vector<128x128xf32>
      %61 = arith.truncf %60 : vector<128x128xf32> to vector<128x128xbf16>
      %c6 = arith.constant 6 : index
      %c0_43 = arith.constant 0 : index
      %c0_44 = arith.constant 0 : index
      %62 = vector.load %arg2[%c6, %c0_43, %c0_44] : memref<9x128x128xbf16, #tpu.memory_space<vmem>>, vector<1x128x128xbf16>
      %63 = vector.shape_cast %62 : vector<1x128x128xbf16> to vector<128x128xbf16>
      %cst_45 = arith.constant dense<0.000000e+00> : vector<128x128xf32>
      %64 = tpu.matmul %61, %63, %cst_45 {dimension_numbers = #tpu.dot_dimension_numbers<[1], [0], [0], [1], [0, 0, 1, 1], [], []>} : vector<128x128xbf16>, vector<128x128xbf16>, vector<128x128xf32> -> vector<128x128xf32>
      %65 = arith.addf %56, %64 : vector<128x128xf32>
      %66 = arith.index_cast %3 : i32 to index
      %c2_46 = arith.constant 2 : index
      %c1_47 = arith.constant 1 : index
      %c0_48 = arith.constant 0 : index
      %67 = vector.load %arg1[%66, %c2_46, %c1_47, %c0_48] : memref<2x18x18x128xf32, #tpu.memory_space<vmem>>, vector<1x8x16x128xf32>
      %68 = vector.shape_cast %67 : vector<1x8x16x128xf32> to vector<8x16x128xf32>
      %69 = vector.shape_cast %68 : vector<8x16x128xf32> to vector<128x128xf32>
      %70 = arith.truncf %69 : vector<128x128xf32> to vector<128x128xbf16>
      %c7 = arith.constant 7 : index
      %c0_49 = arith.constant 0 : index
      %c0_50 = arith.constant 0 : index
      %71 = vector.load %arg2[%c7, %c0_49, %c0_50] : memref<9x128x128xbf16, #tpu.memory_space<vmem>>, vector<1x128x128xbf16>
      %72 = vector.shape_cast %71 : vector<1x128x128xbf16> to vector<128x128xbf16>
      %cst_51 = arith.constant dense<0.000000e+00> : vector<128x128xf32>
      %73 = tpu.matmul %70, %72, %cst_51 {dimension_numbers = #tpu.dot_dimension_numbers<[1], [0], [0], [1], [0, 0, 1, 1], [], []>} : vector<128x128xbf16>, vector<128x128xbf16>, vector<128x128xf32> -> vector<128x128xf32>
      %74 = arith.addf %65, %73 : vector<128x128xf32>
      %75 = arith.index_cast %3 : i32 to index
      %c2_52 = arith.constant 2 : index
      %c2_53 = arith.constant 2 : index
      %c0_54 = arith.constant 0 : index
      %76 = vector.load %arg1[%75, %c2_52, %c2_53, %c0_54] : memref<2x18x18x128xf32, #tpu.memory_space<vmem>>, vector<1x8x16x128xf32>
      %77 = vector.shape_cast %76 : vector<1x8x16x128xf32> to vector<8x16x128xf32>
      %78 = vector.shape_cast %77 : vector<8x16x128xf32> to vector<128x128xf32>
      %79 = arith.truncf %78 : vector<128x128xf32> to vector<128x128xbf16>
      %c8 = arith.constant 8 : index
      %c0_55 = arith.constant 0 : index
      %c0_56 = arith.constant 0 : index
      %80 = vector.load %arg2[%c8, %c0_55, %c0_56] : memref<9x128x128xbf16, #tpu.memory_space<vmem>>, vector<1x128x128xbf16>
      %81 = vector.shape_cast %80 : vector<1x128x128xbf16> to vector<128x128xbf16>
      %cst_57 = arith.constant dense<0.000000e+00> : vector<128x128xf32>
      %82 = tpu.matmul %79, %81, %cst_57 {dimension_numbers = #tpu.dot_dimension_numbers<[1], [0], [0], [1], [0, 0, 1, 1], [], []>} : vector<128x128xbf16>, vector<128x128xbf16>, vector<128x128xf32> -> vector<128x128xf32>
      %83 = arith.addf %74, %82 : vector<128x128xf32>
      %84 = vector.broadcast %0 : vector<1x128xf32> to vector<128x128xf32>
      %85 = arith.addf %83, %84 : vector<128x128xf32>
      %cst_58 = arith.constant 0.000000e+00 : f32
      %86 = vector.broadcast %cst_58 : f32 to vector<128x128xf32>
      %87 = arith.maximumf %85, %86 : vector<128x128xf32>
      %88 = vector.shape_cast %87 : vector<128x128xf32> to vector<4x2x16x128xf32>
      %89 = vector.extract_strided_slice %88 {offsets = [0, 0, 0, 0], sizes = [4, 1, 16, 128], strides = [1, 1, 1, 1]} : vector<4x2x16x128xf32> to vector<4x1x16x128xf32>
      %90 = vector.shape_cast %89 : vector<4x1x16x128xf32> to vector<4x16x128xf32>
      %91 = vector.extract_strided_slice %88 {offsets = [0, 1, 0, 0], sizes = [4, 1, 16, 128], strides = [1, 1, 1, 1]} : vector<4x2x16x128xf32> to vector<4x1x16x128xf32>
      %92 = vector.shape_cast %91 : vector<4x1x16x128xf32> to vector<4x16x128xf32>
      %93 = arith.maximumf %90, %92 : vector<4x16x128xf32>
      %94 = vector.shape_cast %93 : vector<4x16x128xf32> to vector<64x128xf32>
      %c0_59 = arith.constant 0 : index
      %c0_60 = arith.constant 0 : index
      %95 = vector.load %arg5[%c0_59, %c0_60] : memref<64x128xf32, #tpu.memory_space<vmem>>, vector<64x128xf32>
      tpu.vector_store %arg5[%c0_59, %c0_60], %94 {strides = array<i32>} : memref<64x128xf32, #tpu.memory_space<vmem>>, vector<64x128xf32>,
      %c0_61 = arith.constant 0 : index
      %c0_62 = arith.constant 0 : index
      %96 = tpu.strided_load %arg5[%c0_61, %c0_62] {strides = array<i32: 2, 1>} : memref<64x128xf32, #tpu.memory_space<vmem>>, vector<32x128xf32>
      %c1_63 = arith.constant 1 : index
      %c0_64 = arith.constant 0 : index
      %97 = tpu.strided_load %arg5[%c1_63, %c0_64] {strides = array<i32: 2, 1>} : memref<64x128xf32, #tpu.memory_space<vmem>>, vector<32x128xf32>
      %98 = arith.maximumf %96, %97 : vector<32x128xf32>
      %99 = arith.index_cast %3 : i32 to index
      %c0_65 = arith.constant 0 : index
      %c0_66 = arith.constant 0 : index
      %100 = vector.load %arg4[%99, %c0_65, %c0_66] : memref<2x64x128xf32, #tpu.memory_space<vmem>>, vector<1x32x128xf32>
      %101 = vector.shape_cast %100 : vector<1x32x128xf32> to vector<32x128xf32>
      %102 = vector.shape_cast %98 : vector<32x128xf32> to vector<1x32x128xf32>
      tpu.vector_store %arg4[%99, %c0_65, %c0_66], %102 {strides = array<i32>} : memref<2x64x128xf32, #tpu.memory_space<vmem>>, vector<1x32x128xf32>,
      %103 = arith.index_cast %3 : i32 to index
      %c8_67 = arith.constant 8 : index
      %c0_68 = arith.constant 0 : index
      %c0_69 = arith.constant 0 : index
      %104 = vector.load %arg1[%103, %c8_67, %c0_68, %c0_69] : memref<2x18x18x128xf32, #tpu.memory_space<vmem>>, vector<1x8x16x128xf32>
      %105 = vector.shape_cast %104 : vector<1x8x16x128xf32> to vector<8x16x128xf32>
      %106 = vector.shape_cast %105 : vector<8x16x128xf32> to vector<128x128xf32>
      %107 = arith.truncf %106 : vector<128x128xf32> to vector<128x128xbf16>
      %c0_70 = arith.constant 0 : index
      %c0_71 = arith.constant 0 : index
      %c0_72 = arith.constant 0 : index
      %108 = vector.load %arg2[%c0_70, %c0_71, %c0_72] : memref<9x128x128xbf16, #tpu.memory_space<vmem>>, vector<1x128x128xbf16>
      %109 = vector.shape_cast %108 : vector<1x128x128xbf16> to vector<128x128xbf16>
      %cst_73 = arith.constant dense<0.000000e+00> : vector<128x128xf32>
      %110 = tpu.matmul %107, %109, %cst_73 {dimension_numbers = #tpu.dot_dimension_numbers<[1], [0], [0], [1], [0, 0, 1, 1], [], []>} : vector<128x128xbf16>, vector<128x128xbf16>, vector<128x128xf32> -> vector<128x128xf32>
      %111 = arith.index_cast %3 : i32 to index
      %c8_74 = arith.constant 8 : index
      %c1_75 = arith.constant 1 : index
      %c0_76 = arith.constant 0 : index
      %112 = vector.load %arg1[%111, %c8_74, %c1_75, %c0_76] : memref<2x18x18x128xf32, #tpu.memory_space<vmem>>, vector<1x8x16x128xf32>
      %113 = vector.shape_cast %112 : vector<1x8x16x128xf32> to vector<8x16x128xf32>
      %114 = vector.shape_cast %113 : vector<8x16x128xf32> to vector<128x128xf32>
      %115 = arith.truncf %114 : vector<128x128xf32> to vector<128x128xbf16>
      %c1_77 = arith.constant 1 : index
      %c0_78 = arith.constant 0 : index
      %c0_79 = arith.constant 0 : index
      %116 = vector.load %arg2[%c1_77, %c0_78, %c0_79] : memref<9x128x128xbf16, #tpu.memory_space<vmem>>, vector<1x128x128xbf16>
      %117 = vector.shape_cast %116 : vector<1x128x128xbf16> to vector<128x128xbf16>
      %cst_80 = arith.constant dense<0.000000e+00> : vector<128x128xf32>
      %118 = tpu.matmul %115, %117, %cst_80 {dimension_numbers = #tpu.dot_dimension_numbers<[1], [0], [0], [1], [0, 0, 1, 1], [], []>} : vector<128x128xbf16>, vector<128x128xbf16>, vector<128x128xf32> -> vector<128x128xf32>
      %119 = arith.addf %110, %118 : vector<128x128xf32>
      %120 = arith.index_cast %3 : i32 to index
      %c8_81 = arith.constant 8 : index
      %c2_82 = arith.constant 2 : index
      %c0_83 = arith.constant 0 : index
      %121 = vector.load %arg1[%120, %c8_81, %c2_82, %c0_83] : memref<2x18x18x128xf32, #tpu.memory_space<vmem>>, vector<1x8x16x128xf32>
      %122 = vector.shape_cast %121 : vector<1x8x16x128xf32> to vector<8x16x128xf32>
      %123 = vector.shape_cast %122 : vector<8x16x128xf32> to vector<128x128xf32>
      %124 = arith.truncf %123 : vector<128x128xf32> to vector<128x128xbf16>
      %c2_84 = arith.constant 2 : index
      %c0_85 = arith.constant 0 : index
      %c0_86 = arith.constant 0 : index
      %125 = vector.load %arg2[%c2_84, %c0_85, %c0_86] : memref<9x128x128xbf16, #tpu.memory_space<vmem>>, vector<1x128x128xbf16>
      %126 = vector.shape_cast %125 : vector<1x128x128xbf16> to vector<128x128xbf16>
      %cst_87 = arith.constant dense<0.000000e+00> : vector<128x128xf32>
      %127 = tpu.matmul %124, %126, %cst_87 {dimension_numbers = #tpu.dot_dimension_numbers<[1], [0], [0], [1], [0, 0, 1, 1], [], []>} : vector<128x128xbf16>, vector<128x128xbf16>, vector<128x128xf32> -> vector<128x128xf32>
      %128 = arith.addf %119, %127 : vector<128x128xf32>
      %129 = arith.index_cast %3 : i32 to index
      %c9 = arith.constant 9 : index
      %c0_88 = arith.constant 0 : index
      %c0_89 = arith.constant 0 : index
      %130 = vector.load %arg1[%129, %c9, %c0_88, %c0_89] : memref<2x18x18x128xf32, #tpu.memory_space<vmem>>, vector<1x8x16x128xf32>
      %131 = vector.shape_cast %130 : vector<1x8x16x128xf32> to vector<8x16x128xf32>
      %132 = vector.shape_cast %131 : vector<8x16x128xf32> to vector<128x128xf32>
      %133 = arith.truncf %132 : vector<128x128xf32> to vector<128x128xbf16>
      %c3_90 = arith.constant 3 : index
      %c0_91 = arith.constant 0 : index
      %c0_92 = arith.constant 0 : index
      %134 = vector.load %arg2[%c3_90, %c0_91, %c0_92] : memref<9x128x128xbf16, #tpu.memory_space<vmem>>, vector<1x128x128xbf16>
      %135 = vector.shape_cast %134 : vector<1x128x128xbf16> to vector<128x128xbf16>
      %cst_93 = arith.constant dense<0.000000e+00> : vector<128x128xf32>
      %136 = tpu.matmul %133, %135, %cst_93 {dimension_numbers = #tpu.dot_dimension_numbers<[1], [0], [0], [1], [0, 0, 1, 1], [], []>} : vector<128x128xbf16>, vector<128x128xbf16>, vector<128x128xf32> -> vector<128x128xf32>
      %137 = arith.addf %128, %136 : vector<128x128xf32>
      %138 = arith.index_cast %3 : i32 to index
      %c9_94 = arith.constant 9 : index
      %c1_95 = arith.constant 1 : index
      %c0_96 = arith.constant 0 : index
      %139 = vector.load %arg1[%138, %c9_94, %c1_95, %c0_96] : memref<2x18x18x128xf32, #tpu.memory_space<vmem>>, vector<1x8x16x128xf32>
      %140 = vector.shape_cast %139 : vector<1x8x16x128xf32> to vector<8x16x128xf32>
      %141 = vector.shape_cast %140 : vector<8x16x128xf32> to vector<128x128xf32>
      %142 = arith.truncf %141 : vector<128x128xf32> to vector<128x128xbf16>
      %c4_97 = arith.constant 4 : index
      %c0_98 = arith.constant 0 : index
      %c0_99 = arith.constant 0 : index
      %143 = vector.load %arg2[%c4_97, %c0_98, %c0_99] : memref<9x128x128xbf16, #tpu.memory_space<vmem>>, vector<1x128x128xbf16>
      %144 = vector.shape_cast %143 : vector<1x128x128xbf16> to vector<128x128xbf16>
      %cst_100 = arith.constant dense<0.000000e+00> : vector<128x128xf32>
      %145 = tpu.matmul %142, %144, %cst_100 {dimension_numbers = #tpu.dot_dimension_numbers<[1], [0], [0], [1], [0, 0, 1, 1], [], []>} : vector<128x128xbf16>, vector<128x128xbf16>, vector<128x128xf32> -> vector<128x128xf32>
      %146 = arith.addf %137, %145 : vector<128x128xf32>
      %147 = arith.index_cast %3 : i32 to index
      %c9_101 = arith.constant 9 : index
      %c2_102 = arith.constant 2 : index
      %c0_103 = arith.constant 0 : index
      %148 = vector.load %arg1[%147, %c9_101, %c2_102, %c0_103] : memref<2x18x18x128xf32, #tpu.memory_space<vmem>>, vector<1x8x16x128xf32>
      %149 = vector.shape_cast %148 : vector<1x8x16x128xf32> to vector<8x16x128xf32>
      %150 = vector.shape_cast %149 : vector<8x16x128xf32> to vector<128x128xf32>
      %151 = arith.truncf %150 : vector<128x128xf32> to vector<128x128xbf16>
      %c5_104 = arith.constant 5 : index
      %c0_105 = arith.constant 0 : index
      %c0_106 = arith.constant 0 : index
      %152 = vector.load %arg2[%c5_104, %c0_105, %c0_106] : memref<9x128x128xbf16, #tpu.memory_space<vmem>>, vector<1x128x128xbf16>
      %153 = vector.shape_cast %152 : vector<1x128x128xbf16> to vector<128x128xbf16>
      %cst_107 = arith.constant dense<0.000000e+00> : vector<128x128xf32>
      %154 = tpu.matmul %151, %153, %cst_107 {dimension_numbers = #tpu.dot_dimension_numbers<[1], [0], [0], [1], [0, 0, 1, 1], [], []>} : vector<128x128xbf16>, vector<128x128xbf16>, vector<128x128xf32> -> vector<128x128xf32>
      %155 = arith.addf %146, %154 : vector<128x128xf32>
      %156 = arith.index_cast %3 : i32 to index
      %c10 = arith.constant 10 : index
      %c0_108 = arith.constant 0 : index
      %c0_109 = arith.constant 0 : index
      %157 = vector.load %arg1[%156, %c10, %c0_108, %c0_109] : memref<2x18x18x128xf32, #tpu.memory_space<vmem>>, vector<1x8x16x128xf32>
      %158 = vector.shape_cast %157 : vector<1x8x16x128xf32> to vector<8x16x128xf32>
      %159 = vector.shape_cast %158 : vector<8x16x128xf32> to vector<128x128xf32>
      %160 = arith.truncf %159 : vector<128x128xf32> to vector<128x128xbf16>
      %c6_110 = arith.constant 6 : index
      %c0_111 = arith.constant 0 : index
      %c0_112 = arith.constant 0 : index
      %161 = vector.load %arg2[%c6_110, %c0_111, %c0_112] : memref<9x128x128xbf16, #tpu.memory_space<vmem>>, vector<1x128x128xbf16>
      %162 = vector.shape_cast %161 : vector<1x128x128xbf16> to vector<128x128xbf16>
      %cst_113 = arith.constant dense<0.000000e+00> : vector<128x128xf32>
      %163 = tpu.matmul %160, %162, %cst_113 {dimension_numbers = #tpu.dot_dimension_numbers<[1], [0], [0], [1], [0, 0, 1, 1], [], []>} : vector<128x128xbf16>, vector<128x128xbf16>, vector<128x128xf32> -> vector<128x128xf32>
      %164 = arith.addf %155, %163 : vector<128x128xf32>
      %165 = arith.index_cast %3 : i32 to index
      %c10_114 = arith.constant 10 : index
      %c1_115 = arith.constant 1 : index
      %c0_116 = arith.constant 0 : index
      %166 = vector.load %arg1[%165, %c10_114, %c1_115, %c0_116] : memref<2x18x18x128xf32, #tpu.memory_space<vmem>>, vector<1x8x16x128xf32>
      %167 = vector.shape_cast %166 : vector<1x8x16x128xf32> to vector<8x16x128xf32>
      %168 = vector.shape_cast %167 : vector<8x16x128xf32> to vector<128x128xf32>
      %169 = arith.truncf %168 : vector<128x128xf32> to vector<128x128xbf16>
      %c7_117 = arith.constant 7 : index
      %c0_118 = arith.constant 0 : index
      %c0_119 = arith.constant 0 : index
      %170 = vector.load %arg2[%c7_117, %c0_118, %c0_119] : memref<9x128x128xbf16, #tpu.memory_space<vmem>>, vector<1x128x128xbf16>
      %171 = vector.shape_cast %170 : vector<1x128x128xbf16> to vector<128x128xbf16>
      %cst_120 = arith.constant dense<0.000000e+00> : vector<128x128xf32>
      %172 = tpu.matmul %169, %171, %cst_120 {dimension_numbers = #tpu.dot_dimension_numbers<[1], [0], [0], [1], [0, 0, 1, 1], [], []>} : vector<128x128xbf16>, vector<128x128xbf16>, vector<128x128xf32> -> vector<128x128xf32>
      %173 = arith.addf %164, %172 : vector<128x128xf32>
      %174 = arith.index_cast %3 : i32 to index
      %c10_121 = arith.constant 10 : index
      %c2_122 = arith.constant 2 : index
      %c0_123 = arith.constant 0 : index
      %175 = vector.load %arg1[%174, %c10_121, %c2_122, %c0_123] : memref<2x18x18x128xf32, #tpu.memory_space<vmem>>, vector<1x8x16x128xf32>
      %176 = vector.shape_cast %175 : vector<1x8x16x128xf32> to vector<8x16x128xf32>
      %177 = vector.shape_cast %176 : vector<8x16x128xf32> to vector<128x128xf32>
      %178 = arith.truncf %177 : vector<128x128xf32> to vector<128x128xbf16>
      %c8_124 = arith.constant 8 : index
      %c0_125 = arith.constant 0 : index
      %c0_126 = arith.constant 0 : index
      %179 = vector.load %arg2[%c8_124, %c0_125, %c0_126] : memref<9x128x128xbf16, #tpu.memory_space<vmem>>, vector<1x128x128xbf16>
      %180 = vector.shape_cast %179 : vector<1x128x128xbf16> to vector<128x128xbf16>
      %cst_127 = arith.constant dense<0.000000e+00> : vector<128x128xf32>
      %181 = tpu.matmul %178, %180, %cst_127 {dimension_numbers = #tpu.dot_dimension_numbers<[1], [0], [0], [1], [0, 0, 1, 1], [], []>} : vector<128x128xbf16>, vector<128x128xbf16>, vector<128x128xf32> -> vector<128x128xf32>
      %182 = arith.addf %173, %181 : vector<128x128xf32>
      %183 = vector.broadcast %0 : vector<1x128xf32> to vector<128x128xf32>
      %184 = arith.addf %182, %183 : vector<128x128xf32>
      %cst_128 = arith.constant 0.000000e+00 : f32
      %185 = vector.broadcast %cst_128 : f32 to vector<128x128xf32>
      %186 = arith.maximumf %184, %185 : vector<128x128xf32>
      %187 = vector.shape_cast %186 : vector<128x128xf32> to vector<4x2x16x128xf32>
      %188 = vector.extract_strided_slice %187 {offsets = [0, 0, 0, 0], sizes = [4, 1, 16, 128], strides = [1, 1, 1, 1]} : vector<4x2x16x128xf32> to vector<4x1x16x128xf32>
      %189 = vector.shape_cast %188 : vector<4x1x16x128xf32> to vector<4x16x128xf32>
      %190 = vector.extract_strided_slice %187 {offsets = [0, 1, 0, 0], sizes = [4, 1, 16, 128], strides = [1, 1, 1, 1]} : vector<4x2x16x128xf32> to vector<4x1x16x128xf32>
      %191 = vector.shape_cast %190 : vector<4x1x16x128xf32> to vector<4x16x128xf32>
      %192 = arith.maximumf %189, %191 : vector<4x16x128xf32>
      %193 = vector.shape_cast %192 : vector<4x16x128xf32> to vector<64x128xf32>
      %c0_129 = arith.constant 0 : index
      %c0_130 = arith.constant 0 : index
      %194 = vector.load %arg5[%c0_129, %c0_130] : memref<64x128xf32, #tpu.memory_space<vmem>>, vector<64x128xf32>
      tpu.vector_store %arg5[%c0_129, %c0_130], %193 {strides = array<i32>} : memref<64x128xf32, #tpu.memory_space<vmem>>, vector<64x128xf32>,
      %c0_131 = arith.constant 0 : index
      %c0_132 = arith.constant 0 : index
      %195 = tpu.strided_load %arg5[%c0_131, %c0_132] {strides = array<i32: 2, 1>} : memref<64x128xf32, #tpu.memory_space<vmem>>, vector<32x128xf32>
      %c1_133 = arith.constant 1 : index
      %c0_134 = arith.constant 0 : index
      %196 = tpu.strided_load %arg5[%c1_133, %c0_134] {strides = array<i32: 2, 1>} : memref<64x128xf32, #tpu.memory_space<vmem>>, vector<32x128xf32>
      %197 = arith.maximumf %195, %196 : vector<32x128xf32>
      %198 = arith.index_cast %3 : i32 to index
      %c32 = arith.constant 32 : index
      %c0_135 = arith.constant 0 : index
      %199 = vector.load %arg4[%198, %c32, %c0_135] : memref<2x64x128xf32, #tpu.memory_space<vmem>>, vector<1x32x128xf32>
      %200 = vector.shape_cast %199 : vector<1x32x128xf32> to vector<32x128xf32>
      %201 = vector.shape_cast %197 : vector<32x128xf32> to vector<1x32x128xf32>
      tpu.vector_store %arg4[%198, %c32, %c0_135], %201 {strides = array<i32>} : memref<2x64x128xf32, #tpu.memory_space<vmem>>, vector<1x32x128xf32>,
    }
    %c2_i32_1 = arith.constant 2 : i32
    return
  }
  func.func @transform_0(%arg0: i32) -> (i32, i32, i32, i32) {
    %c0_i32 = arith.constant 0 : i32
    %c0_i32_0 = arith.constant 0 : i32
    %c0_i32_1 = arith.constant 0 : i32
    %c0_i32_2 = arith.constant 0 : i32
    return %arg0, %c0_i32, %c0_i32_0, %c0_i32_1 : i32, i32, i32, i32
  }
  func.func @transform_1(%arg0: i32) -> (i32, i32, i32) {
    %c0_i32 = arith.constant 0 : i32
    %c0_i32_0 = arith.constant 0 : i32
    %c0_i32_1 = arith.constant 0 : i32
    %c0_i32_2 = arith.constant 0 : i32
    return %c0_i32, %c0_i32_0, %c0_i32_1 : i32, i32, i32
  }
  func.func @transform_2(%arg0: i32) -> (i32, i32) {
    %c0_i32 = arith.constant 0 : i32
    %c0_i32_0 = arith.constant 0 : i32
    %c0_i32_1 = arith.constant 0 : i32
    return %c0_i32, %c0_i32_0 : i32, i32
  }
  func.func @transform_3(%arg0: i32) -> (i32, i32, i32) {
    %c0_i32 = arith.constant 0 : i32
    %c0_i32_0 = arith.constant 0 : i32
    %c0_i32_1 = arith.constant 0 : i32
    return %arg0, %c0_i32, %c0_i32_0 : i32, i32, i32
  }
}

module attributes {stable_mosaic.version = 11 : i64} {
  func.func @_conv3x3_kernel(%arg0: i32, %arg1: memref<2x10x10x128xf32, #tpu.memory_space<vmem>>, %arg2: memref<9x128x128xbf16, #tpu.memory_space<vmem>>, %arg3: memref<1x128xf32, #tpu.memory_space<vmem>>, %arg4: memref<2x16x128xbf16, #tpu.memory_space<vmem>>, %arg5: memref<32x128xf32, #tpu.memory_space<vmem>>) attributes {dimension_semantics = [#tpu.dimension_semantics<parallel>], iteration_bounds = array<i64: 1>, scalar_prefetch = 0 : i64, scratch_operands = 1 : i64, tpu.core_type = #tpu.core_type<tc>, window_params = [{transform_indices = @transform_0, window_bounds = array<i64: 2, 10, 10, 128>}, {pipeline_mode = #tpu.pipeline_mode<synchronous>, transform_indices = @transform_1, window_bounds = array<i64: 9, 128, 128>}, {pipeline_mode = #tpu.pipeline_mode<synchronous>, transform_indices = @transform_2, window_bounds = array<i64: 1, 128>}, {transform_indices = @transform_3, window_bounds = array<i64: 2, 16, 128>}]} {
    %c0 = arith.constant 0 : index
    %c0_0 = arith.constant 0 : index
    %0 = vector.load %arg3[%c0, %c0_0] : memref<1x128xf32, #tpu.memory_space<vmem>>, vector<1x128xf32>
    %c0_i32 = arith.constant 0 : i32
    %c2_i32 = arith.constant 2 : i32
    %1 = arith.addi %c0_i32, %c2_i32 : i32
    %c1_i32 = arith.constant 1 : i32
    scf.for %arg6 = %c0_i32 to %1 step %c1_i32  : i32 {
      %c1_i32_2 = arith.constant 1 : i32
      %2 = arith.muli %arg6, %c1_i32_2 : i32
      %c0_i32_3 = arith.constant 0 : i32
      %3 = arith.addi %c0_i32_3, %2 : i32
      %4 = arith.index_cast %3 : i32 to index
      %c0_4 = arith.constant 0 : index
      %c0_5 = arith.constant 0 : index
      %c0_6 = arith.constant 0 : index
      %5 = vector.load %arg1[%4, %c0_4, %c0_5, %c0_6] : memref<2x10x10x128xf32, #tpu.memory_space<vmem>>, vector<1x8x8x128xf32>
      %6 = vector.shape_cast %5 : vector<1x8x8x128xf32> to vector<8x8x128xf32>
      %7 = vector.shape_cast %6 : vector<8x8x128xf32> to vector<64x128xf32>
      %8 = arith.truncf %7 : vector<64x128xf32> to vector<64x128xbf16>
      %c0_7 = arith.constant 0 : index
      %c0_8 = arith.constant 0 : index
      %c0_9 = arith.constant 0 : index
      %9 = vector.load %arg2[%c0_7, %c0_8, %c0_9] : memref<9x128x128xbf16, #tpu.memory_space<vmem>>, vector<1x128x128xbf16>
      %10 = vector.shape_cast %9 : vector<1x128x128xbf16> to vector<128x128xbf16>
      %cst = arith.constant dense<0.000000e+00> : vector<64x128xf32>
      %11 = tpu.matmul %8, %10, %cst {dimension_numbers = #tpu.dot_dimension_numbers<[1], [0], [0], [1], [0, 0, 1, 1], [], []>} : vector<64x128xbf16>, vector<128x128xbf16>, vector<64x128xf32> -> vector<64x128xf32>
      %12 = arith.index_cast %3 : i32 to index
      %c0_10 = arith.constant 0 : index
      %c1 = arith.constant 1 : index
      %c0_11 = arith.constant 0 : index
      %13 = vector.load %arg1[%12, %c0_10, %c1, %c0_11] : memref<2x10x10x128xf32, #tpu.memory_space<vmem>>, vector<1x8x8x128xf32>
      %14 = vector.shape_cast %13 : vector<1x8x8x128xf32> to vector<8x8x128xf32>
      %15 = vector.shape_cast %14 : vector<8x8x128xf32> to vector<64x128xf32>
      %16 = arith.truncf %15 : vector<64x128xf32> to vector<64x128xbf16>
      %c1_12 = arith.constant 1 : index
      %c0_13 = arith.constant 0 : index
      %c0_14 = arith.constant 0 : index
      %17 = vector.load %arg2[%c1_12, %c0_13, %c0_14] : memref<9x128x128xbf16, #tpu.memory_space<vmem>>, vector<1x128x128xbf16>
      %18 = vector.shape_cast %17 : vector<1x128x128xbf16> to vector<128x128xbf16>
      %cst_15 = arith.constant dense<0.000000e+00> : vector<64x128xf32>
      %19 = tpu.matmul %16, %18, %cst_15 {dimension_numbers = #tpu.dot_dimension_numbers<[1], [0], [0], [1], [0, 0, 1, 1], [], []>} : vector<64x128xbf16>, vector<128x128xbf16>, vector<64x128xf32> -> vector<64x128xf32>
      %20 = arith.addf %11, %19 : vector<64x128xf32>
      %21 = arith.index_cast %3 : i32 to index
      %c0_16 = arith.constant 0 : index
      %c2 = arith.constant 2 : index
      %c0_17 = arith.constant 0 : index
      %22 = vector.load %arg1[%21, %c0_16, %c2, %c0_17] : memref<2x10x10x128xf32, #tpu.memory_space<vmem>>, vector<1x8x8x128xf32>
      %23 = vector.shape_cast %22 : vector<1x8x8x128xf32> to vector<8x8x128xf32>
      %24 = vector.shape_cast %23 : vector<8x8x128xf32> to vector<64x128xf32>
      %25 = arith.truncf %24 : vector<64x128xf32> to vector<64x128xbf16>
      %c2_18 = arith.constant 2 : index
      %c0_19 = arith.constant 0 : index
      %c0_20 = arith.constant 0 : index
      %26 = vector.load %arg2[%c2_18, %c0_19, %c0_20] : memref<9x128x128xbf16, #tpu.memory_space<vmem>>, vector<1x128x128xbf16>
      %27 = vector.shape_cast %26 : vector<1x128x128xbf16> to vector<128x128xbf16>
      %cst_21 = arith.constant dense<0.000000e+00> : vector<64x128xf32>
      %28 = tpu.matmul %25, %27, %cst_21 {dimension_numbers = #tpu.dot_dimension_numbers<[1], [0], [0], [1], [0, 0, 1, 1], [], []>} : vector<64x128xbf16>, vector<128x128xbf16>, vector<64x128xf32> -> vector<64x128xf32>
      %29 = arith.addf %20, %28 : vector<64x128xf32>
      %30 = arith.index_cast %3 : i32 to index
      %c1_22 = arith.constant 1 : index
      %c0_23 = arith.constant 0 : index
      %c0_24 = arith.constant 0 : index
      %31 = vector.load %arg1[%30, %c1_22, %c0_23, %c0_24] : memref<2x10x10x128xf32, #tpu.memory_space<vmem>>, vector<1x8x8x128xf32>
      %32 = vector.shape_cast %31 : vector<1x8x8x128xf32> to vector<8x8x128xf32>
      %33 = vector.shape_cast %32 : vector<8x8x128xf32> to vector<64x128xf32>
      %34 = arith.truncf %33 : vector<64x128xf32> to vector<64x128xbf16>
      %c3 = arith.constant 3 : index
      %c0_25 = arith.constant 0 : index
      %c0_26 = arith.constant 0 : index
      %35 = vector.load %arg2[%c3, %c0_25, %c0_26] : memref<9x128x128xbf16, #tpu.memory_space<vmem>>, vector<1x128x128xbf16>
      %36 = vector.shape_cast %35 : vector<1x128x128xbf16> to vector<128x128xbf16>
      %cst_27 = arith.constant dense<0.000000e+00> : vector<64x128xf32>
      %37 = tpu.matmul %34, %36, %cst_27 {dimension_numbers = #tpu.dot_dimension_numbers<[1], [0], [0], [1], [0, 0, 1, 1], [], []>} : vector<64x128xbf16>, vector<128x128xbf16>, vector<64x128xf32> -> vector<64x128xf32>
      %38 = arith.addf %29, %37 : vector<64x128xf32>
      %39 = arith.index_cast %3 : i32 to index
      %c1_28 = arith.constant 1 : index
      %c1_29 = arith.constant 1 : index
      %c0_30 = arith.constant 0 : index
      %40 = vector.load %arg1[%39, %c1_28, %c1_29, %c0_30] : memref<2x10x10x128xf32, #tpu.memory_space<vmem>>, vector<1x8x8x128xf32>
      %41 = vector.shape_cast %40 : vector<1x8x8x128xf32> to vector<8x8x128xf32>
      %42 = vector.shape_cast %41 : vector<8x8x128xf32> to vector<64x128xf32>
      %43 = arith.truncf %42 : vector<64x128xf32> to vector<64x128xbf16>
      %c4 = arith.constant 4 : index
      %c0_31 = arith.constant 0 : index
      %c0_32 = arith.constant 0 : index
      %44 = vector.load %arg2[%c4, %c0_31, %c0_32] : memref<9x128x128xbf16, #tpu.memory_space<vmem>>, vector<1x128x128xbf16>
      %45 = vector.shape_cast %44 : vector<1x128x128xbf16> to vector<128x128xbf16>
      %cst_33 = arith.constant dense<0.000000e+00> : vector<64x128xf32>
      %46 = tpu.matmul %43, %45, %cst_33 {dimension_numbers = #tpu.dot_dimension_numbers<[1], [0], [0], [1], [0, 0, 1, 1], [], []>} : vector<64x128xbf16>, vector<128x128xbf16>, vector<64x128xf32> -> vector<64x128xf32>
      %47 = arith.addf %38, %46 : vector<64x128xf32>
      %48 = arith.index_cast %3 : i32 to index
      %c1_34 = arith.constant 1 : index
      %c2_35 = arith.constant 2 : index
      %c0_36 = arith.constant 0 : index
      %49 = vector.load %arg1[%48, %c1_34, %c2_35, %c0_36] : memref<2x10x10x128xf32, #tpu.memory_space<vmem>>, vector<1x8x8x128xf32>
      %50 = vector.shape_cast %49 : vector<1x8x8x128xf32> to vector<8x8x128xf32>
      %51 = vector.shape_cast %50 : vector<8x8x128xf32> to vector<64x128xf32>
      %52 = arith.truncf %51 : vector<64x128xf32> to vector<64x128xbf16>
      %c5 = arith.constant 5 : index
      %c0_37 = arith.constant 0 : index
      %c0_38 = arith.constant 0 : index
      %53 = vector.load %arg2[%c5, %c0_37, %c0_38] : memref<9x128x128xbf16, #tpu.memory_space<vmem>>, vector<1x128x128xbf16>
      %54 = vector.shape_cast %53 : vector<1x128x128xbf16> to vector<128x128xbf16>
      %cst_39 = arith.constant dense<0.000000e+00> : vector<64x128xf32>
      %55 = tpu.matmul %52, %54, %cst_39 {dimension_numbers = #tpu.dot_dimension_numbers<[1], [0], [0], [1], [0, 0, 1, 1], [], []>} : vector<64x128xbf16>, vector<128x128xbf16>, vector<64x128xf32> -> vector<64x128xf32>
      %56 = arith.addf %47, %55 : vector<64x128xf32>
      %57 = arith.index_cast %3 : i32 to index
      %c2_40 = arith.constant 2 : index
      %c0_41 = arith.constant 0 : index
      %c0_42 = arith.constant 0 : index
      %58 = vector.load %arg1[%57, %c2_40, %c0_41, %c0_42] : memref<2x10x10x128xf32, #tpu.memory_space<vmem>>, vector<1x8x8x128xf32>
      %59 = vector.shape_cast %58 : vector<1x8x8x128xf32> to vector<8x8x128xf32>
      %60 = vector.shape_cast %59 : vector<8x8x128xf32> to vector<64x128xf32>
      %61 = arith.truncf %60 : vector<64x128xf32> to vector<64x128xbf16>
      %c6 = arith.constant 6 : index
      %c0_43 = arith.constant 0 : index
      %c0_44 = arith.constant 0 : index
      %62 = vector.load %arg2[%c6, %c0_43, %c0_44] : memref<9x128x128xbf16, #tpu.memory_space<vmem>>, vector<1x128x128xbf16>
      %63 = vector.shape_cast %62 : vector<1x128x128xbf16> to vector<128x128xbf16>
      %cst_45 = arith.constant dense<0.000000e+00> : vector<64x128xf32>
      %64 = tpu.matmul %61, %63, %cst_45 {dimension_numbers = #tpu.dot_dimension_numbers<[1], [0], [0], [1], [0, 0, 1, 1], [], []>} : vector<64x128xbf16>, vector<128x128xbf16>, vector<64x128xf32> -> vector<64x128xf32>
      %65 = arith.addf %56, %64 : vector<64x128xf32>
      %66 = arith.index_cast %3 : i32 to index
      %c2_46 = arith.constant 2 : index
      %c1_47 = arith.constant 1 : index
      %c0_48 = arith.constant 0 : index
      %67 = vector.load %arg1[%66, %c2_46, %c1_47, %c0_48] : memref<2x10x10x128xf32, #tpu.memory_space<vmem>>, vector<1x8x8x128xf32>
      %68 = vector.shape_cast %67 : vector<1x8x8x128xf32> to vector<8x8x128xf32>
      %69 = vector.shape_cast %68 : vector<8x8x128xf32> to vector<64x128xf32>
      %70 = arith.truncf %69 : vector<64x128xf32> to vector<64x128xbf16>
      %c7 = arith.constant 7 : index
      %c0_49 = arith.constant 0 : index
      %c0_50 = arith.constant 0 : index
      %71 = vector.load %arg2[%c7, %c0_49, %c0_50] : memref<9x128x128xbf16, #tpu.memory_space<vmem>>, vector<1x128x128xbf16>
      %72 = vector.shape_cast %71 : vector<1x128x128xbf16> to vector<128x128xbf16>
      %cst_51 = arith.constant dense<0.000000e+00> : vector<64x128xf32>
      %73 = tpu.matmul %70, %72, %cst_51 {dimension_numbers = #tpu.dot_dimension_numbers<[1], [0], [0], [1], [0, 0, 1, 1], [], []>} : vector<64x128xbf16>, vector<128x128xbf16>, vector<64x128xf32> -> vector<64x128xf32>
      %74 = arith.addf %65, %73 : vector<64x128xf32>
      %75 = arith.index_cast %3 : i32 to index
      %c2_52 = arith.constant 2 : index
      %c2_53 = arith.constant 2 : index
      %c0_54 = arith.constant 0 : index
      %76 = vector.load %arg1[%75, %c2_52, %c2_53, %c0_54] : memref<2x10x10x128xf32, #tpu.memory_space<vmem>>, vector<1x8x8x128xf32>
      %77 = vector.shape_cast %76 : vector<1x8x8x128xf32> to vector<8x8x128xf32>
      %78 = vector.shape_cast %77 : vector<8x8x128xf32> to vector<64x128xf32>
      %79 = arith.truncf %78 : vector<64x128xf32> to vector<64x128xbf16>
      %c8 = arith.constant 8 : index
      %c0_55 = arith.constant 0 : index
      %c0_56 = arith.constant 0 : index
      %80 = vector.load %arg2[%c8, %c0_55, %c0_56] : memref<9x128x128xbf16, #tpu.memory_space<vmem>>, vector<1x128x128xbf16>
      %81 = vector.shape_cast %80 : vector<1x128x128xbf16> to vector<128x128xbf16>
      %cst_57 = arith.constant dense<0.000000e+00> : vector<64x128xf32>
      %82 = tpu.matmul %79, %81, %cst_57 {dimension_numbers = #tpu.dot_dimension_numbers<[1], [0], [0], [1], [0, 0, 1, 1], [], []>} : vector<64x128xbf16>, vector<128x128xbf16>, vector<64x128xf32> -> vector<64x128xf32>
      %83 = arith.addf %74, %82 : vector<64x128xf32>
      %84 = vector.broadcast %0 : vector<1x128xf32> to vector<64x128xf32>
      %85 = arith.addf %83, %84 : vector<64x128xf32>
      %cst_58 = arith.constant 0.000000e+00 : f32
      %86 = vector.broadcast %cst_58 : f32 to vector<64x128xf32>
      %87 = arith.maximumf %85, %86 : vector<64x128xf32>
      %88 = vector.shape_cast %87 : vector<64x128xf32> to vector<4x2x8x128xf32>
      %89 = vector.extract_strided_slice %88 {offsets = [0, 0, 0, 0], sizes = [4, 1, 8, 128], strides = [1, 1, 1, 1]} : vector<4x2x8x128xf32> to vector<4x1x8x128xf32>
      %90 = vector.shape_cast %89 : vector<4x1x8x128xf32> to vector<4x8x128xf32>
      %91 = vector.extract_strided_slice %88 {offsets = [0, 1, 0, 0], sizes = [4, 1, 8, 128], strides = [1, 1, 1, 1]} : vector<4x2x8x128xf32> to vector<4x1x8x128xf32>
      %92 = vector.shape_cast %91 : vector<4x1x8x128xf32> to vector<4x8x128xf32>
      %93 = arith.maximumf %90, %92 : vector<4x8x128xf32>
      %94 = vector.shape_cast %93 : vector<4x8x128xf32> to vector<32x128xf32>
      %c0_59 = arith.constant 0 : index
      %c0_60 = arith.constant 0 : index
      %95 = vector.load %arg5[%c0_59, %c0_60] : memref<32x128xf32, #tpu.memory_space<vmem>>, vector<32x128xf32>
      tpu.vector_store %arg5[%c0_59, %c0_60], %94 {strides = array<i32>} : memref<32x128xf32, #tpu.memory_space<vmem>>, vector<32x128xf32>,
      %c0_61 = arith.constant 0 : index
      %c0_62 = arith.constant 0 : index
      %96 = tpu.strided_load %arg5[%c0_61, %c0_62] {strides = array<i32: 2, 1>} : memref<32x128xf32, #tpu.memory_space<vmem>>, vector<16x128xf32>
      %c1_63 = arith.constant 1 : index
      %c0_64 = arith.constant 0 : index
      %97 = tpu.strided_load %arg5[%c1_63, %c0_64] {strides = array<i32: 2, 1>} : memref<32x128xf32, #tpu.memory_space<vmem>>, vector<16x128xf32>
      %98 = arith.maximumf %96, %97 : vector<16x128xf32>
      %99 = arith.truncf %98 : vector<16x128xf32> to vector<16x128xbf16>
      %100 = arith.index_cast %3 : i32 to index
      %c0_65 = arith.constant 0 : index
      %c0_66 = arith.constant 0 : index
      %101 = vector.load %arg4[%100, %c0_65, %c0_66] : memref<2x16x128xbf16, #tpu.memory_space<vmem>>, vector<1x16x128xbf16>
      %102 = vector.shape_cast %101 : vector<1x16x128xbf16> to vector<16x128xbf16>
      %103 = vector.shape_cast %99 : vector<16x128xbf16> to vector<1x16x128xbf16>
      tpu.vector_store %arg4[%100, %c0_65, %c0_66], %103 {strides = array<i32>} : memref<2x16x128xbf16, #tpu.memory_space<vmem>>, vector<1x16x128xbf16>,
    }
    %c2_i32_1 = arith.constant 2 : i32
    return
  }
  func.func @transform_0(%arg0: i32) -> (i32, i32, i32, i32) {
    %c0_i32 = arith.constant 0 : i32
    %c0_i32_0 = arith.constant 0 : i32
    %c0_i32_1 = arith.constant 0 : i32
    %c0_i32_2 = arith.constant 0 : i32
    return %arg0, %c0_i32, %c0_i32_0, %c0_i32_1 : i32, i32, i32, i32
  }
  func.func @transform_1(%arg0: i32) -> (i32, i32, i32) {
    %c0_i32 = arith.constant 0 : i32
    %c0_i32_0 = arith.constant 0 : i32
    %c0_i32_1 = arith.constant 0 : i32
    %c0_i32_2 = arith.constant 0 : i32
    return %c0_i32, %c0_i32_0, %c0_i32_1 : i32, i32, i32
  }
  func.func @transform_2(%arg0: i32) -> (i32, i32) {
    %c0_i32 = arith.constant 0 : i32
    %c0_i32_0 = arith.constant 0 : i32
    %c0_i32_1 = arith.constant 0 : i32
    return %c0_i32, %c0_i32_0 : i32, i32
  }
  func.func @transform_3(%arg0: i32) -> (i32, i32, i32) {
    %c0_i32 = arith.constant 0 : i32
    %c0_i32_0 = arith.constant 0 : i32
    %c0_i32_1 = arith.constant 0 : i32
    return %arg0, %c0_i32, %c0_i32_0 : i32, i32, i32
  }
}

module attributes {stable_mosaic.version = 11 : i64} {
  func.func @_matmul_bias_relu_kernel(%arg0: i32, %arg1: memref<2x2048xbf16, #tpu.memory_space<vmem>>, %arg2: memref<2048x512xbf16, #tpu.memory_space<vmem>>, %arg3: memref<1x512xf32, #tpu.memory_space<vmem>>, %arg4: memref<2x512xbf16, #tpu.memory_space<vmem>>) attributes {dimension_semantics = [#tpu.dimension_semantics<parallel>], iteration_bounds = array<i64: 1>, scalar_prefetch = 0 : i64, scratch_operands = 0 : i64, tpu.core_type = #tpu.core_type<tc>, window_params = [{transform_indices = @transform_0, window_bounds = array<i64: 2, 2048>}, {pipeline_mode = #tpu.pipeline_mode<synchronous>, transform_indices = @transform_1, window_bounds = array<i64: 2048, 512>}, {pipeline_mode = #tpu.pipeline_mode<synchronous>, transform_indices = @transform_2, window_bounds = array<i64: 1, 512>}, {transform_indices = @transform_3, window_bounds = array<i64: 2, 512>}]} {
    %c0 = arith.constant 0 : index
    %c0_0 = arith.constant 0 : index
    %0 = vector.load %arg1[%c0, %c0_0] : memref<2x2048xbf16, #tpu.memory_space<vmem>>, vector<2x2048xbf16>
    %c0_1 = arith.constant 0 : index
    %c0_2 = arith.constant 0 : index
    %1 = vector.load %arg2[%c0_1, %c0_2] : memref<2048x512xbf16, #tpu.memory_space<vmem>>, vector<2048x512xbf16>
    %cst = arith.constant dense<0.000000e+00> : vector<2x512xf32>
    %2 = tpu.matmul %0, %1, %cst {dimension_numbers = #tpu.dot_dimension_numbers<[1], [0], [0], [1], [0, 0, 1, 1], [], []>} : vector<2x2048xbf16>, vector<2048x512xbf16>, vector<2x512xf32> -> vector<2x512xf32>
    %c0_3 = arith.constant 0 : index
    %c0_4 = arith.constant 0 : index
    %3 = vector.load %arg3[%c0_3, %c0_4] : memref<1x512xf32, #tpu.memory_space<vmem>>, vector<1x512xf32>
    %4 = vector.broadcast %3 : vector<1x512xf32> to vector<2x512xf32>
    %5 = arith.addf %2, %4 : vector<2x512xf32>
    %cst_5 = arith.constant 0.000000e+00 : f32
    %6 = vector.broadcast %cst_5 : f32 to vector<2x512xf32>
    %7 = arith.maximumf %5, %6 : vector<2x512xf32>
    %8 = arith.truncf %7 : vector<2x512xf32> to vector<2x512xbf16>
    %c0_6 = arith.constant 0 : index
    %c0_7 = arith.constant 0 : index
    %9 = vector.load %arg4[%c0_6, %c0_7] : memref<2x512xbf16, #tpu.memory_space<vmem>>, vector<2x512xbf16>
    tpu.vector_store %arg4[%c0_6, %c0_7], %8 {strides = array<i32>} : memref<2x512xbf16, #tpu.memory_space<vmem>>, vector<2x512xbf16>,
    return
  }
  func.func @transform_0(%arg0: i32) -> (i32, i32) {
    %c0_i32 = arith.constant 0 : i32
    %c0_i32_0 = arith.constant 0 : i32
    return %arg0, %c0_i32 : i32, i32
  }
  func.func @transform_1(%arg0: i32) -> (i32, i32) {
    %c0_i32 = arith.constant 0 : i32
    %c0_i32_0 = arith.constant 0 : i32
    %c0_i32_1 = arith.constant 0 : i32
    return %c0_i32, %c0_i32_0 : i32, i32
  }
  func.func @transform_2(%arg0: i32) -> (i32, i32) {
    %c0_i32 = arith.constant 0 : i32
    %c0_i32_0 = arith.constant 0 : i32
    %c0_i32_1 = arith.constant 0 : i32
    return %c0_i32, %c0_i32_0 : i32, i32
  }
  func.func @transform_3(%arg0: i32) -> (i32, i32) {
    %c0_i32 = arith.constant 0 : i32
    %c0_i32_0 = arith.constant 0 : i32
    return %arg0, %c0_i32 : i32, i32
  }
}

module attributes {stable_mosaic.version = 11 : i64} {
  func.func @_matmul_bias_relu_kernel(%arg0: i32, %arg1: memref<2x512xbf16, #tpu.memory_space<vmem>>, %arg2: memref<512x128xbf16, #tpu.memory_space<vmem>>, %arg3: memref<1x128xf32, #tpu.memory_space<vmem>>, %arg4: memref<2x128xf32, #tpu.memory_space<vmem>>) attributes {dimension_semantics = [#tpu.dimension_semantics<parallel>], iteration_bounds = array<i64: 1>, scalar_prefetch = 0 : i64, scratch_operands = 0 : i64, tpu.core_type = #tpu.core_type<tc>, window_params = [{transform_indices = @transform_0, window_bounds = array<i64: 2, 512>}, {pipeline_mode = #tpu.pipeline_mode<synchronous>, transform_indices = @transform_1, window_bounds = array<i64: 512, 128>}, {pipeline_mode = #tpu.pipeline_mode<synchronous>, transform_indices = @transform_2, window_bounds = array<i64: 1, 128>}, {transform_indices = @transform_3, window_bounds = array<i64: 2, 128>}]} {
    %c0 = arith.constant 0 : index
    %c0_0 = arith.constant 0 : index
    %0 = vector.load %arg1[%c0, %c0_0] : memref<2x512xbf16, #tpu.memory_space<vmem>>, vector<2x512xbf16>
    %c0_1 = arith.constant 0 : index
    %c0_2 = arith.constant 0 : index
    %1 = vector.load %arg2[%c0_1, %c0_2] : memref<512x128xbf16, #tpu.memory_space<vmem>>, vector<512x128xbf16>
    %cst = arith.constant dense<0.000000e+00> : vector<2x128xf32>
    %2 = tpu.matmul %0, %1, %cst {dimension_numbers = #tpu.dot_dimension_numbers<[1], [0], [0], [1], [0, 0, 1, 1], [], []>} : vector<2x512xbf16>, vector<512x128xbf16>, vector<2x128xf32> -> vector<2x128xf32>
    %c0_3 = arith.constant 0 : index
    %c0_4 = arith.constant 0 : index
    %3 = vector.load %arg3[%c0_3, %c0_4] : memref<1x128xf32, #tpu.memory_space<vmem>>, vector<1x128xf32>
    %4 = vector.broadcast %3 : vector<1x128xf32> to vector<2x128xf32>
    %5 = arith.addf %2, %4 : vector<2x128xf32>
    %cst_5 = arith.constant 0.000000e+00 : f32
    %6 = vector.broadcast %cst_5 : f32 to vector<2x128xf32>
    %7 = arith.maximumf %5, %6 : vector<2x128xf32>
    %c0_6 = arith.constant 0 : index
    %c0_7 = arith.constant 0 : index
    %8 = vector.load %arg4[%c0_6, %c0_7] : memref<2x128xf32, #tpu.memory_space<vmem>>, vector<2x128xf32>
    tpu.vector_store %arg4[%c0_6, %c0_7], %7 {strides = array<i32>} : memref<2x128xf32, #tpu.memory_space<vmem>>, vector<2x128xf32>,
    return
  }
  func.func @transform_0(%arg0: i32) -> (i32, i32) {
    %c0_i32 = arith.constant 0 : i32
    %c0_i32_0 = arith.constant 0 : i32
    return %arg0, %c0_i32 : i32, i32
  }
  func.func @transform_1(%arg0: i32) -> (i32, i32) {
    %c0_i32 = arith.constant 0 : i32
    %c0_i32_0 = arith.constant 0 : i32
    %c0_i32_1 = arith.constant 0 : i32
    return %c0_i32, %c0_i32_0 : i32, i32
  }
  func.func @transform_2(%arg0: i32) -> (i32, i32) {
    %c0_i32 = arith.constant 0 : i32
    %c0_i32_0 = arith.constant 0 : i32
    %c0_i32_1 = arith.constant 0 : i32
    return %c0_i32, %c0_i32_0 : i32, i32
  }
  func.func @transform_3(%arg0: i32) -> (i32, i32) {
    %c0_i32 = arith.constant 0 : i32
    %c0_i32_0 = arith.constant 0 : i32
    return %arg0, %c0_i32 : i32, i32
  }
}

</mosaic_0001>

<llo_original>
// kernel: net_forward.5
$region0: #{net_forward.5}
  #allocation0 [shape = 'u32[]', space=smem, size = 0x4, offset = 0x4, fixed_abs, tag = 'smem constant byte address 0x4 - core index']
  #allocation1 [shape = 'u32[144,128]{1,0:T(1,128)}', space=vmem, size = 0x12000, scoped, tag = 'internal scratch']
  #allocation2 [shape = 'f32[64,128]{1,0:T(8,128)}', space=vmem, size = 0x8000, scoped, tag = 'scratch operand']
  %s0 = inlined_call_operand.vmem [shape: bf16[2,1024,32], index: 0, kind: input, shape index: {}]
  %s1 = inlined_call_operand.vmem [shape: bf16[32,128], index: 1, kind: input, shape index: {}]
  %s2 = inlined_call_operand.vmem [shape: f32[1,128], index: 2, kind: input, shape index: {}]
  %s3 = inlined_call_operand.vmem [shape: f32[2,256,128], index: 3, kind: output, shape index: {}]
  %s4 = sld [smem:[#allocation0]]
  $region29: #{net_forward.5} parent=0
    _
  %s6 = ssub.s32 1, %s4
  %s7 = scalar_select 0, %s6, %s4
  // Predicated region
  $region2: #{net_forward.5} parent=0 // pred_check
    _
  $region3: #{net_forward.5} parent=0 // pred_check_branch
    %9 = sbr.rel (0) target = $region5
  $region4: #{net_forward.5} parent=0 // pred_region
    _
  $region5: #{net_forward.5} parent=0 // pred_fallthru
    _
  // Predicated region
  $region6: #{net_forward.5} parent=0 // pred_check
    _
  $region7: #{net_forward.5} parent=0 // pred_check_branch
    %11 = sbr.rel (0) target = $region9
  $region8: #{net_forward.5} parent=0 // pred_region
    _
  $region9: #{net_forward.5} parent=0 // pred_fallthru
    _
  // Predicated region
  $region10: #{net_forward.5} parent=0 // pred_check
    _
  $region11: #{net_forward.5} parent=0 // pred_check_branch
    %13 = sbr.rel (0) target = $region13
  $region12: #{net_forward.5} parent=0 // pred_region
    _
  $region13: #{net_forward.5} parent=0 // pred_fallthru
    _
  %v15 = vld [vmem:[%s1] sm:$0xf]
  %v16 = vld [vmem:[%s1 + $0x4] sm:$0xf]
  %v17 = vld [vmem:[%s1 + $0x8] sm:$0xf]
  %v18 = vld [vmem:[%s1 + $0xc] sm:$0xf]
  %v19 = vld [vmem:[%s2] sm:$0x1]
  loop: start=0, step=1, limit=2
  $region14: #{net_forward.5} parent=0 // loop_pre_header
    _
  $region15: #{net_forward.5} parent=0 // loop_header
    %s21 = sphi 0, %s25
    %p22 = scmp.ge.s32.totalorder %s21, 2
  $region16: #{net_forward.5} parent=0 // loop_header_branch
    %24 = sbr.rel (%p22) target = $region20
  $region17: #{net_forward.5} parent=0 // loop_body
    %s26 = smul.u32 %s21, 128
    %s27 = smul.addr %s26, 4
    %s28 = scalar_lea.vmem %s0, %s27
    %v29 = vld [vmem:[%s28] sm:$0xf]
    %v30 = vld [vmem:[%s28 + $0x4] sm:$0xf]
    %v31 = vld [vmem:[%s28 + $0x8] sm:$0xf]
    %v32 = vld [vmem:[%s28 + $0xc] sm:$0xf]
    %v33 = vld [vmem:[%s28 + $0x10] sm:$0xf]
    %v34 = vld [vmem:[%s28 + $0x14] sm:$0xf]
    %v35 = vld [vmem:[%s28 + $0x18] sm:$0xf]
    %v36 = vld [vmem:[%s28 + $0x1c] sm:$0xf]
    %v37 = vld [vmem:[%s28 + $0x20] sm:$0xf]
    %v38 = vld [vmem:[%s28 + $0x24] sm:$0xf]
    %v39 = vld [vmem:[%s28 + $0x28] sm:$0xf]
    %v40 = vld [vmem:[%s28 + $0x2c] sm:$0xf]
    %v41 = vld [vmem:[%s28 + $0x30] sm:$0xf]
    %v42 = vld [vmem:[%s28 + $0x34] sm:$0xf]
    %v43 = vld [vmem:[%s28 + $0x38] sm:$0xf]
    %v44 = vld [vmem:[%s28 + $0x3c] sm:$0xf]
    %v46 = vlaneseq
    %v47 = vshrl.u32 %v46, 7
    %v48 = vsub.s32 0, %v47
    %v49 = vrot.slane %v19, %v48
    %v67 = vunpack.c.l.b16 %v29
    %v68 = vunpack.c.l.b16 %v30
    %v69 = vunpack.c.l.b16 %v31
    %v70 = vunpack.c.l.b16 %v32
    %v71 = vunpack.c.l.b16 %v33
    %v72 = vunpack.c.l.b16 %v34
    %v73 = vunpack.c.l.b16 %v35
    %v74 = vunpack.c.l.b16 %v36
    %v75 = vunpack.c.l.b16 %v37
    %v76 = vunpack.c.l.b16 %v38
    %v77 = vunpack.c.l.b16 %v39
    %v78 = vunpack.c.l.b16 %v40
    %v79 = vunpack.c.l.b16 %v41
    %v80 = vunpack.c.l.b16 %v42
    %v81 = vunpack.c.l.b16 %v43
    %v82 = vunpack.c.l.b16 %v44
    %v83 = vpack.c.b16 %v68, %v67
    %v84 = vpack.c.b16 %v70, %v69
    %v85 = vpack.c.b16 %v72, %v71
    %v86 = vpack.c.b16 %v74, %v73
    %v87 = vpack.c.b16 %v76, %v75
    %v88 = vpack.c.b16 %v78, %v77
    %v89 = vpack.c.b16 %v80, %v79
    %v90 = vpack.c.b16 %v82, %v81
    %v95 = vunpack.c.l.b16 %v15
    %v96 = vunpack.c.l.b16 %v16
    %v97 = vunpack.c.l.b16 %v17
    %v98 = vunpack.c.l.b16 %v18
    %v99 = vpack.c.b16 %v96, %v95
    %v100 = vpack.c.b16 %v98, %v97
    %vm103 = vcmask 261120
    %v105 = vsel %vm103, %v83, 0
    %v108 = vsel %vm103, %v84, 0
    %v111 = vsel %vm103, %v85, 0
    %v114 = vsel %vm103, %v86, 0
    %v117 = vsel %vm103, %v87, 0
    %v120 = vsel %vm103, %v88, 0
    %v123 = vsel %vm103, %v89, 0
    %v126 = vsel %vm103, %v90, 0
    %128 = vmatprep.subr.bf16.mxu0 0
    %129 = vmatpush1.bf16.msra.mxu0 %v99
    %130 = vmatprep.subr.bf16.mxu0 0
    %131 = vmatpush1.bf16.msra.mxu0 %v100
    %132 = vmatprep.subr.bf16.mxu0 0
    %133 = vmatpush1.bf16.msra.mxu0 0
    %134 = vmatprep.subr.bf16.mxu0 0
    %135 = vmatpush1.bf16.msra.mxu0 0
    %136 = vmatprep.subr.bf16.mxu0 0
    %137 = vmatpush1.bf16.msra.mxu0 0
    %138 = vmatprep.subr.bf16.mxu0 0
    %139 = vmatpush1.bf16.msra.mxu0 0
    %140 = vmatprep.subr.bf16.mxu0 0
    %141 = vmatpush1.bf16.msra.mxu0 0
    %142 = vmatprep.subr.bf16.mxu0 0
    %143 = vmatpush1.bf16.msra.mxu0 0
    %144 = vmatprep.subr.bf16.mxu0 0
    %145 = vmatpush1.bf16.msra.mxu0 0
    %146 = vmatprep.subr.bf16.mxu0 0
    %147 = vmatpush1.bf16.msra.mxu0 0
    %148 = vmatprep.subr.bf16.mxu0 0
    %149 = vmatpush1.bf16.msra.mxu0 0
    %150 = vmatprep.subr.bf16.mxu0 0
    %151 = vmatpush1.bf16.msra.mxu0 0
    %152 = vmatprep.subr.bf16.mxu0 0
    %153 = vmatpush1.bf16.msra.mxu0 0
    %154 = vmatprep.subr.bf16.mxu0 0
    %155 = vmatpush1.bf16.msra.mxu0 0
    %156 = vmatprep.subr.bf16.mxu0 0
    %157 = vmatpush1.bf16.msra.mxu0 0
    %158 = vmatprep.subr.bf16.mxu0 0
    %159 = vmatpush1.bf16.msra.mxu0 0
    %160 = vmatprep.mubr.bf16.mxu0 0
    %161 = vmatmul.mubr.bf16.gmra.mrb[0].mxu0 %v105
    %v162 = vpop.f32.mrb[0].mxu0
    %v163 = vadd.f32 %v49, %v162
    %v164 = vpop.f32.mrb[0].mxu0
    %v165 = vpop.f32.mrb[0].mxu0
    %v166 = vadd.f32 %v49, %v165
    %v167 = vpop.f32.mrb[0].mxu0
    %168 = vmatprep.mubr.bf16.mxu0 0
    %169 = vmatmul.mubr.bf16.gmra.mrb[0].mxu0 %v108
    %v170 = vpop.f32.mrb[0].mxu0
    %v171 = vadd.f32 %v49, %v170
    %v172 = vpop.f32.mrb[0].mxu0
    %v173 = vpop.f32.mrb[0].mxu0
    %v174 = vadd.f32 %v49, %v173
    %v175 = vpop.f32.mrb[0].mxu0
    %176 = vmatprep.mubr.bf16.mxu0 0
    %177 = vmatmul.mubr.bf16.gmra.mrb[0].mxu0 %v111
    %v178 = vpop.f32.mrb[0].mxu0
    %v179 = vadd.f32 %v49, %v178
    %v180 = vpop.f32.mrb[0].mxu0
    %v181 = vpop.f32.mrb[0].mxu0
    %v182 = vadd.f32 %v49, %v181
    %v183 = vpop.f32.mrb[0].mxu0
    %184 = vmatprep.mubr.bf16.mxu0 0
    %185 = vmatmul.mubr.bf16.gmra.mrb[0].mxu0 %v114
    %v186 = vpop.f32.mrb[0].mxu0
    %v187 = vadd.f32 %v49, %v186
    %v188 = vpop.f32.mrb[0].mxu0
    %v189 = vpop.f32.mrb[0].mxu0
    %v190 = vadd.f32 %v49, %v189
    %v191 = vpop.f32.mrb[0].mxu0
    %192 = vmatprep.mubr.bf16.mxu0 0
    %193 = vmatmul.mubr.bf16.gmra.mrb[0].mxu0 %v117
    %v194 = vpop.f32.mrb[0].mxu0
    %v195 = vadd.f32 %v49, %v194
    %v196 = vpop.f32.mrb[0].mxu0
    %v197 = vpop.f32.mrb[0].mxu0
    %v198 = vadd.f32 %v49, %v197
    %v199 = vpop.f32.mrb[0].mxu0
    %200 = vmatprep.mubr.bf16.mxu0 0
    %201 = vmatmul.mubr.bf16.gmra.mrb[0].mxu0 %v120
    %v202 = vpop.f32.mrb[0].mxu0
    %v203 = vadd.f32 %v49, %v202
    %v204 = vpop.f32.mrb[0].mxu0
    %v205 = vpop.f32.mrb[0].mxu0
    %v206 = vadd.f32 %v49, %v205
    %v207 = vpop.f32.mrb[0].mxu0
    %208 = vmatprep.mubr.bf16.mxu0 0
    %209 = vmatmul.mubr.bf16.gmra.mrb[0].mxu0 %v123
    %v210 = vpop.f32.mrb[0].mxu0
    %v211 = vadd.f32 %v49, %v210
    %v212 = vpop.f32.mrb[0].mxu0
    %v213 = vpop.f32.mrb[0].mxu0
    %v214 = vadd.f32 %v49, %v213
    %v215 = vpop.f32.mrb[0].mxu0
    %216 = vmatprep.mubr.bf16.mxu0 0
    %217 = vmatmul.mubr.bf16.gmra.mrb[0].mxu0 %v126
    %v218 = vpop.f32.mrb[0].mxu0
    %v219 = vadd.f32 %v49, %v218
    %v220 = vpop.f32.mrb[0].mxu0
    %v221 = vpop.f32.mrb[0].mxu0
    %v222 = vadd.f32 %v49, %v221
    %v223 = vpop.f32.mrb[0].mxu0
    %224 = vdwg.mxu0
    %v225 = vmax.f32 %v163, 0.0
    %v226 = vmax.f32 %v166, 0.0
    %v227 = vmax.f32 %v171, 0.0
    %v228 = vmax.f32 %v174, 0.0
    %v229 = vmax.f32 %v179, 0.0
    %v230 = vmax.f32 %v182, 0.0
    %v231 = vmax.f32 %v187, 0.0
    %v232 = vmax.f32 %v190, 0.0
    %v233 = vmax.f32 %v195, 0.0
    %v234 = vmax.f32 %v198, 0.0
    %v235 = vmax.f32 %v203, 0.0
    %v236 = vmax.f32 %v206, 0.0
    %v237 = vmax.f32 %v211, 0.0
    %v238 = vmax.f32 %v214, 0.0
    %v239 = vmax.f32 %v219, 0.0
    %v240 = vmax.f32 %v222, 0.0
    %v241 = vmax.f32 %v225, %v229
    %v242 = vmax.f32 %v226, %v230
    %v243 = vmax.f32 %v227, %v231
    %v244 = vmax.f32 %v228, %v232
    %v245 = vmax.f32 %v233, %v237
    %v246 = vmax.f32 %v234, %v238
    %v247 = vmax.f32 %v235, %v239
    %v248 = vmax.f32 %v236, %v240
    %249 = vst [vmem:[#allocation2] sm:$0xff] %v241
    %250 = vst [vmem:[#allocation2 + $0x8] sm:$0xff] %v242
    %251 = vst [vmem:[#allocation2 + $0x10] sm:$0xff] %v243
    %252 = vst [vmem:[#allocation2 + $0x18] sm:$0xff] %v244
    %253 = vst [vmem:[#allocation2 + $0x20] sm:$0xff] %v245
    %254 = vst [vmem:[#allocation2 + $0x28] sm:$0xff] %v246
    %255 = vst [vmem:[#allocation2 + $0x30] sm:$0xff] %v247
    %256 = vst [vmem:[#allocation2 + $0x38] sm:$0xff] %v248
    %v257 = vld [vmem:[#allocation2] ss:$2 sm:$0xff]
    %s258 = scalar_lea.vmem [#allocation2], 16
    %v259 = vld [vmem:[%s258] ss:$2 sm:$0xff]
    %s260 = scalar_lea.vmem [#allocation2], 32
    %v261 = vld [vmem:[%s260] ss:$2 sm:$0xff]
    %s262 = scalar_lea.vmem [#allocation2], 48
    %v263 = vld [vmem:[%s262] ss:$2 sm:$0xff]
    %s264 = scalar_lea.vmem [#allocation2], 1
    %v265 = vld [vmem:[%s264] ss:$2 sm:$0xff]
    %s266 = scalar_lea.vmem [#allocation2], 17
    %v267 = vld [vmem:[%s266] ss:$2 sm:$0xff]
    %s268 = scalar_lea.vmem [#allocation2], 33
    %v269 = vld [vmem:[%s268] ss:$2 sm:$0xff]
    %s270 = scalar_lea.vmem [#allocation2], 49
    %v271 = vld [vmem:[%s270] ss:$2 sm:$0xff]
    %v272 = vmax.f32 %v257, %v265
    %v273 = vmax.f32 %v259, %v267
    %v274 = vmax.f32 %v261, %v269
    %v275 = vmax.f32 %v263, %v271
    %s276 = smul.u32 %s21, 256
    %s277 = scalar_lea.vmem %s3, %s276
    %278 = vst [vmem:[%s277] sm:$0xff] %v272
    %279 = vst [vmem:[%s277 + $0x8] sm:$0xff] %v273
    %280 = vst [vmem:[%s277 + $0x10] sm:$0xff] %v274
    %281 = vst [vmem:[%s277 + $0x18] sm:$0xff] %v275
    %v282 = vld [vmem:[%s28 + $0x40] sm:$0xf]
    %v283 = vld [vmem:[%s28 + $0x44] sm:$0xf]
    %v284 = vld [vmem:[%s28 + $0x48] sm:$0xf]
    %v285 = vld [vmem:[%s28 + $0x4c] sm:$0xf]
    %v286 = vld [vmem:[%s28 + $0x50] sm:$0xf]
    %v287 = vld [vmem:[%s28 + $0x54] sm:$0xf]
    %v288 = vld [vmem:[%s28 + $0x58] sm:$0xf]
    %v289 = vld [vmem:[%s28 + $0x5c] sm:$0xf]
    %v290 = vld [vmem:[%s28 + $0x60] sm:$0xf]
    %v291 = vld [vmem:[%s28 + $0x64] sm:$0xf]
    %v292 = vld [vmem:[%s28 + $0x68] sm:$0xf]
    %v293 = vld [vmem:[%s28 + $0x6c] sm:$0xf]
    %v294 = vld [vmem:[%s28 + $0x70] sm:$0xf]
    %v295 = vld [vmem:[%s28 + $0x74] sm:$0xf]
    %v296 = vld [vmem:[%s28 + $0x78] sm:$0xf]
    %v297 = vld [vmem:[%s28 + $0x7c] sm:$0xf]
    %v314 = vunpack.c.l.b16 %v282
    %v315 = vunpack.c.l.b16 %v283
    %v316 = vunpack.c.l.b16 %v284
    %v317 = vunpack.c.l.b16 %v285
    %v318 = vunpack.c.l.b16 %v286
    %v319 = vunpack.c.l.b16 %v287
    %v320 = vunpack.c.l.b16 %v288
    %v321 = vunpack.c.l.b16 %v289
    %v322 = vunpack.c.l.b16 %v290
    %v323 = vunpack.c.l.b16 %v291
    %v324 = vunpack.c.l.b16 %v292
    %v325 = vunpack.c.l.b16 %v293
    %v326 = vunpack.c.l.b16 %v294
    %v327 = vunpack.c.l.b16 %v295
    %v328 = vunpack.c.l.b16 %v296
    %v329 = vunpack.c.l.b16 %v297
    %v330 = vpack.c.b16 %v315, %v314
    %v331 = vpack.c.b16 %v317, %v316
    %v332 = vpack.c.b16 %v319, %v318
    %v333 = vpack.c.b16 %v321, %v320
    %v334 = vpack.c.b16 %v323, %v322
    %v335 = vpack.c.b16 %v325, %v324
    %v336 = vpack.c.b16 %v327, %v326
    %v337 = vpack.c.b16 %v329, %v328
    %v339 = vsel %vm103, %v330, 0
    %v342 = vsel %vm103, %v331, 0
    %v345 = vsel %vm103, %v332, 0
    %v348 = vsel %vm103, %v333, 0
    %v351 = vsel %vm103, %v334, 0
    %v354 = vsel %vm103, %v335, 0
    %v357 = vsel %vm103, %v336, 0
    %v360 = vsel %vm103, %v337, 0
    %362 = vmatprep.subr.bf16.mxu0 0
    %363 = vmatpush1.bf16.msra.mxu0 %v99
    %364 = vmatprep.subr.bf16.mxu0 0
    %365 = vmatpush1.bf16.msra.mxu0 %v100
    %366 = vmatprep.subr.bf16.mxu0 0
    %367 = vmatpush1.bf16.msra.mxu0 0
    %368 = vmatprep.subr.bf16.mxu0 0
    %369 = vmatpush1.bf16.msra.mxu0 0
    %370 = vmatprep.subr.bf16.mxu0 0
    %371 = vmatpush1.bf16.msra.mxu0 0
    %372 = vmatprep.subr.bf16.mxu0 0
    %373 = vmatpush1.bf16.msra.mxu0 0
    %374 = vmatprep.subr.bf16.mxu0 0
    %375 = vmatpush1.bf16.msra.mxu0 0
    %376 = vmatprep.subr.bf16.mxu0 0
    %377 = vmatpush1.bf16.msra.mxu0 0
    %378 = vmatprep.subr.bf16.mxu0 0
    %379 = vmatpush1.bf16.msra.mxu0 0
    %380 = vmatprep.subr.bf16.mxu0 0
    %381 = vmatpush1.bf16.msra.mxu0 0
    %382 = vmatprep.subr.bf16.mxu0 0
    %383 = vmatpush1.bf16.msra.mxu0 0
    %384 = vmatprep.subr.bf16.mxu0 0
    %385 = vmatpush1.bf16.msra.mxu0 0
    %386 = vmatprep.subr.bf16.mxu0 0
    %387 = vmatpush1.bf16.msra.mxu0 0
    %388 = vmatprep.subr.bf16.mxu0 0
    %389 = vmatpush1.bf16.msra.mxu0 0
    %390 = vmatprep.subr.bf16.mxu0 0
    %391 = vmatpush1.bf16.msra.mxu0 0
    %392 = vmatprep.subr.bf16.mxu0 0
    %393 = vmatpush1.bf16.msra.mxu0 0
    %394 = vmatprep.mubr.bf16.mxu0 0
    %395 = vmatmul.mubr.bf16.gmra.mrb[0].mxu0 %v339
    %v396 = vpop.f32.mrb[0].mxu0
    %v397 = vadd.f32 %v49, %v396
    %v398 = vpop.f32.mrb[0].mxu0
    %v399 = vpop.f32.mrb[0].mxu0
    %v400 = vadd.f32 %v49, %v399
    %v401 = vpop.f32.mrb[0].mxu0
    %402 = vmatprep.mubr.bf16.mxu0 0
    %403 = vmatmul.mubr.bf16.gmra.mrb[0].mxu0 %v342
    %v404 = vpop.f32.mrb[0].mxu0
    %v405 = vadd.f32 %v49, %v404
    %v406 = vpop.f32.mrb[0].mxu0
    %v407 = vpop.f32.mrb[0].mxu0
    %v408 = vadd.f32 %v49, %v407
    %v409 = vpop.f32.mrb[0].mxu0
    %410 = vmatprep.mubr.bf16.mxu0 0
    %411 = vmatmul.mubr.bf16.gmra.mrb[0].mxu0 %v345
    %v412 = vpop.f32.mrb[0].mxu0
    %v413 = vadd.f32 %v49, %v412
    %v414 = vpop.f32.mrb[0].mxu0
    %v415 = vpop.f32.mrb[0].mxu0
    %v416 = vadd.f32 %v49, %v415
    %v417 = vpop.f32.mrb[0].mxu0
    %418 = vmatprep.mubr.bf16.mxu0 0
    %419 = vmatmul.mubr.bf16.gmra.mrb[0].mxu0 %v348
    %v420 = vpop.f32.mrb[0].mxu0
    %v421 = vadd.f32 %v49, %v420
    %v422 = vpop.f32.mrb[0].mxu0
    %v423 = vpop.f32.mrb[0].mxu0
    %v424 = vadd.f32 %v49, %v423
    %v425 = vpop.f32.mrb[0].mxu0
    %426 = vmatprep.mubr.bf16.mxu0 0
    %427 = vmatmul.mubr.bf16.gmra.mrb[0].mxu0 %v351
    %v428 = vpop.f32.mrb[0].mxu0
    %v429 = vadd.f32 %v49, %v428
    %v430 = vpop.f32.mrb[0].mxu0
    %v431 = vpop.f32.mrb[0].mxu0
    %v432 = vadd.f32 %v49, %v431
    %v433 = vpop.f32.mrb[0].mxu0
    %434 = vmatprep.mubr.bf16.mxu0 0
    %435 = vmatmul.mubr.bf16.gmra.mrb[0].mxu0 %v354
    %v436 = vpop.f32.mrb[0].mxu0
    %v437 = vadd.f32 %v49, %v436
    %v438 = vpop.f32.mrb[0].mxu0
    %v439 = vpop.f32.mrb[0].mxu0
    %v440 = vadd.f32 %v49, %v439
    %v441 = vpop.f32.mrb[0].mxu0
    %442 = vmatprep.mubr.bf16.mxu0 0
    %443 = vmatmul.mubr.bf16.gmra.mrb[0].mxu0 %v357
    %v444 = vpop.f32.mrb[0].mxu0
    %v445 = vadd.f32 %v49, %v444
    %v446 = vpop.f32.mrb[0].mxu0
    %v447 = vpop.f32.mrb[0].mxu0
    %v448 = vadd.f32 %v49, %v447
    %v449 = vpop.f32.mrb[0].mxu0
    %450 = vmatprep.mubr.bf16.mxu0 0
    %451 = vmatmul.mubr.bf16.gmra.mrb[0].mxu0 %v360
    %v452 = vpop.f32.mrb[0].mxu0
    %v453 = vadd.f32 %v49, %v452
    %v454 = vpop.f32.mrb[0].mxu0
    %v455 = vpop.f32.mrb[0].mxu0
    %v456 = vadd.f32 %v49, %v455
    %v457 = vpop.f32.mrb[0].mxu0
    %458 = vdwg.mxu0
    %v459 = vmax.f32 %v397, 0.0
    %v460 = vmax.f32 %v400, 0.0
    %v461 = vmax.f32 %v405, 0.0
    %v462 = vmax.f32 %v408, 0.0
    %v463 = vmax.f32 %v413, 0.0
    %v464 = vmax.f32 %v416, 0.0
    %v465 = vmax.f32 %v421, 0.0
    %v466 = vmax.f32 %v424, 0.0
    %v467 = vmax.f32 %v429, 0.0
    %v468 = vmax.f32 %v432, 0.0
    %v469 = vmax.f32 %v437, 0.0
    %v470 = vmax.f32 %v440, 0.0
    %v471 = vmax.f32 %v445, 0.0
    %v472 = vmax.f32 %v448, 0.0
    %v473 = vmax.f32 %v453, 0.0
    %v474 = vmax.f32 %v456, 0.0
    %v475 = vmax.f32 %v459, %v463
    %v476 = vmax.f32 %v460, %v464
    %v477 = vmax.f32 %v461, %v465
    %v478 = vmax.f32 %v462, %v466
    %v479 = vmax.f32 %v467, %v471
    %v480 = vmax.f32 %v468, %v472
    %v481 = vmax.f32 %v469, %v473
    %v482 = vmax.f32 %v470, %v474
    %483 = vst [vmem:[#allocation2] sm:$0xff] %v475
    %484 = vst [vmem:[#allocation2 + $0x8] sm:$0xff] %v476
    %485 = vst [vmem:[#allocation2 + $0x10] sm:$0xff] %v477
    %486 = vst [vmem:[#allocation2 + $0x18] sm:$0xff] %v478
    %487 = vst [vmem:[#allocation2 + $0x20] sm:$0xff] %v479
    %488 = vst [vmem:[#allocation2 + $0x28] sm:$0xff] %v480
    %489 = vst [vmem:[#allocation2 + $0x30] sm:$0xff] %v481
    %490 = vst [vmem:[#allocation2 + $0x38] sm:$0xff] %v482
    %v491 = vld [vmem:[#allocation2] ss:$2 sm:$0xff]
    %v492 = vld [vmem:[%s258] ss:$2 sm:$0xff]
    %v493 = vld [vmem:[%s260] ss:$2 sm:$0xff]
    %v494 = vld [vmem:[%s262] ss:$2 sm:$0xff]
    %v495 = vld [vmem:[%s264] ss:$2 sm:$0xff]
    %v496 = vld [vmem:[%s266] ss:$2 sm:$0xff]
    %v497 = vld [vmem:[%s268] ss:$2 sm:$0xff]
    %v498 = vld [vmem:[%s270] ss:$2 sm:$0xff]
    %v499 = vmax.f32 %v491, %v495
    %v500 = vmax.f32 %v492, %v496
    %v501 = vmax.f32 %v493, %v497
    %v502 = vmax.f32 %v494, %v498
    %503 = vst [vmem:[%s277 + $0x20] sm:$0xff] %v499
    %504 = vst [vmem:[%s277 + $0x28] sm:$0xff] %v500
    %505 = vst [vmem:[%s277 + $0x30] sm:$0xff] %v501
    %506 = vst [vmem:[%s277 + $0x38] sm:$0xff] %v502
    %v507 = vld [vmem:[%s28 + $0x80] sm:$0xf]
    %v508 = vld [vmem:[%s28 + $0x84] sm:$0xf]
    %v509 = vld [vmem:[%s28 + $0x88] sm:$0xf]
    %v510 = vld [vmem:[%s28 + $0x8c] sm:$0xf]
    %v511 = vld [vmem:[%s28 + $0x90] sm:$0xf]
    %v512 = vld [vmem:[%s28 + $0x94] sm:$0xf]
    %v513 = vld [vmem:[%s28 + $0x98] sm:$0xf]
    %v514 = vld [vmem:[%s28 + $0x9c] sm:$0xf]
    %v515 = vld [vmem:[%s28 + $0xa0] sm:$0xf]
    %v516 = vld [vmem:[%s28 + $0xa4] sm:$0xf]
    %v517 = vld [vmem:[%s28 + $0xa8] sm:$0xf]
    %v518 = vld [vmem:[%s28 + $0xac] sm:$0xf]
    %v519 = vld [vmem:[%s28 + $0xb0] sm:$0xf]
    %v520 = vld [vmem:[%s28 + $0xb4] sm:$0xf]
    %v521 = vld [vmem:[%s28 + $0xb8] sm:$0xf]
    %v522 = vld [vmem:[%s28 + $0xbc] sm:$0xf]
    %v539 = vunpack.c.l.b16 %v507
    %v540 = vunpack.c.l.b16 %v508
    %v541 = vunpack.c.l.b16 %v509
    %v542 = vunpack.c.l.b16 %v510
    %v543 = vunpack.c.l.b16 %v511
    %v544 = vunpack.c.l.b16 %v512
    %v545 = vunpack.c.l.b16 %v513
    %v546 = vunpack.c.l.b16 %v514
    %v547 = vunpack.c.l.b16 %v515
    %v548 = vunpack.c.l.b16 %v516
    %v549 = vunpack.c.l.b16 %v517
    %v550 = vunpack.c.l.b16 %v518
    %v551 = vunpack.c.l.b16 %v519
    %v552 = vunpack.c.l.b16 %v520
    %v553 = vunpack.c.l.b16 %v521
    %v554 = vunpack.c.l.b16 %v522
    %v555 = vpack.c.b16 %v540, %v539
    %v556 = vpack.c.b16 %v542, %v541
    %v557 = vpack.c.b16 %v544, %v543
    %v558 = vpack.c.b16 %v546, %v545
    %v559 = vpack.c.b16 %v548, %v547
    %v560 = vpack.c.b16 %v550, %v549
    %v561 = vpack.c.b16 %v552, %v551
    %v562 = vpack.c.b16 %v554, %v553
    %v564 = vsel %vm103, %v555, 0
    %v567 = vsel %vm103, %v556, 0
    %v570 = vsel %vm103, %v557, 0
    %v573 = vsel %vm103, %v558, 0
    %v576 = vsel %vm103, %v559, 0
    %v579 = vsel %vm103, %v560, 0
    %v582 = vsel %vm103, %v561, 0
    %v585 = vsel %vm103, %v562, 0
    %587 = vmatprep.subr.bf16.mxu0 0
    %588 = vmatpush1.bf16.msra.mxu0 %v99
    %589 = vmatprep.subr.bf16.mxu0 0
    %590 = vmatpush1.bf16.msra.mxu0 %v100
    %591 = vmatprep.subr.bf16.mxu0 0
    %592 = vmatpush1.bf16.msra.mxu0 0
    %593 = vmatprep.subr.bf16.mxu0 0
    %594 = vmatpush1.bf16.msra.mxu0 0
    %595 = vmatprep.subr.bf16.mxu0 0
    %596 = vmatpush1.bf16.msra.mxu0 0
    %597 = vmatprep.subr.bf16.mxu0 0
    %598 = vmatpush1.bf16.msra.mxu0 0
    %599 = vmatprep.subr.bf16.mxu0 0
    %600 = vmatpush1.bf16.msra.mxu0 0
    %601 = vmatprep.subr.bf16.mxu0 0
    %602 = vmatpush1.bf16.msra.mxu0 0
    %603 = vmatprep.subr.bf16.mxu0 0
    %604 = vmatpush1.bf16.msra.mxu0 0
    %605 = vmatprep.subr.bf16.mxu0 0
    %606 = vmatpush1.bf16.msra.mxu0 0
    %607 = vmatprep.subr.bf16.mxu0 0
    %608 = vmatpush1.bf16.msra.mxu0 0
    %609 = vmatprep.subr.bf16.mxu0 0
    %610 = vmatpush1.bf16.msra.mxu0 0
    %611 = vmatprep.subr.bf16.mxu0 0
    %612 = vmatpush1.bf16.msra.mxu0 0
    %613 = vmatprep.subr.bf16.mxu0 0
    %614 = vmatpush1.bf16.msra.mxu0 0
    %615 = vmatprep.subr.bf16.mxu0 0
    %616 = vmatpush1.bf16.msra.mxu0 0
    %617 = vmatprep.subr.bf16.mxu0 0
    %618 = vmatpush1.bf16.msra.mxu0 0
    %619 = vmatprep.mubr.bf16.mxu0 0
    %620 = vmatmul.mubr.bf16.gmra.mrb[0].mxu0 %v564
    %v621 = vpop.f32.mrb[0].mxu0
    %v622 = vadd.f32 %v49, %v621
    %v623 = vpop.f32.mrb[0].mxu0
    %v624 = vpop.f32.mrb[0].mxu0
    %v625 = vadd.f32 %v49, %v624
    %v626 = vpop.f32.mrb[0].mxu0
    %627 = vmatprep.mubr.bf16.mxu0 0
    %628 = vmatmul.mubr.bf16.gmra.mrb[0].mxu0 %v567
    %v629 = vpop.f32.mrb[0].mxu0
    %v630 = vadd.f32 %v49, %v629
    %v631 = vpop.f32.mrb[0].mxu0
    %v632 = vpop.f32.mrb[0].mxu0
    %v633 = vadd.f32 %v49, %v632
    %v634 = vpop.f32.mrb[0].mxu0
    %635 = vmatprep.mubr.bf16.mxu0 0
    %636 = vmatmul.mubr.bf16.gmra.mrb[0].mxu0 %v570
    %v637 = vpop.f32.mrb[0].mxu0
    %v638 = vadd.f32 %v49, %v637
    %v639 = vpop.f32.mrb[0].mxu0
    %v640 = vpop.f32.mrb[0].mxu0
    %v641 = vadd.f32 %v49, %v640
    %v642 = vpop.f32.mrb[0].mxu0
    %643 = vmatprep.mubr.bf16.mxu0 0
    %644 = vmatmul.mubr.bf16.gmra.mrb[0].mxu0 %v573
    %v645 = vpop.f32.mrb[0].mxu0
    %v646 = vadd.f32 %v49, %v645
    %v647 = vpop.f32.mrb[0].mxu0
    %v648 = vpop.f32.mrb[0].mxu0
    %v649 = vadd.f32 %v49, %v648
    %v650 = vpop.f32.mrb[0].mxu0
    %651 = vmatprep.mubr.bf16.mxu0 0
    %652 = vmatmul.mubr.bf16.gmra.mrb[0].mxu0 %v576
    %v653 = vpop.f32.mrb[0].mxu0
    %v654 = vadd.f32 %v49, %v653
    %v655 = vpop.f32.mrb[0].mxu0
    %v656 = vpop.f32.mrb[0].mxu0
    %v657 = vadd.f32 %v49, %v656
    %v658 = vpop.f32.mrb[0].mxu0
    %659 = vmatprep.mubr.bf16.mxu0 0
    %660 = vmatmul.mubr.bf16.gmra.mrb[0].mxu0 %v579
    %v661 = vpop.f32.mrb[0].mxu0
    %v662 = vadd.f32 %v49, %v661
    %v663 = vpop.f32.mrb[0].mxu0
    %v664 = vpop.f32.mrb[0].mxu0
    %v665 = vadd.f32 %v49, %v664
    %v666 = vpop.f32.mrb[0].mxu0
    %667 = vmatprep.mubr.bf16.mxu0 0
    %668 = vmatmul.mubr.bf16.gmra.mrb[0].mxu0 %v582
    %v669 = vpop.f32.mrb[0].mxu0
    %v670 = vadd.f32 %v49, %v669
    %v671 = vpop.f32.mrb[0].mxu0
    %v672 = vpop.f32.mrb[0].mxu0
    %v673 = vadd.f32 %v49, %v672
    %v674 = vpop.f32.mrb[0].mxu0
    %675 = vmatprep.mubr.bf16.mxu0 0
    %676 = vmatmul.mubr.bf16.gmra.mrb[0].mxu0 %v585
    %v677 = vpop.f32.mrb[0].mxu0
    %v678 = vadd.f32 %v49, %v677
    %v679 = vpop.f32.mrb[0].mxu0
    %v680 = vpop.f32.mrb[0].mxu0
    %v681 = vadd.f32 %v49, %v680
    %v682 = vpop.f32.mrb[0].mxu0
    %683 = vdwg.mxu0
    %v684 = vmax.f32 %v622, 0.0
    %v685 = vmax.f32 %v625, 0.0
    %v686 = vmax.f32 %v630, 0.0
    %v687 = vmax.f32 %v633, 0.0
    %v688 = vmax.f32 %v638, 0.0
    %v689 = vmax.f32 %v641, 0.0
    %v690 = vmax.f32 %v646, 0.0
    %v691 = vmax.f32 %v649, 0.0
    %v692 = vmax.f32 %v654, 0.0
    %v693 = vmax.f32 %v657, 0.0
    %v694 = vmax.f32 %v662, 0.0
    %v695 = vmax.f32 %v665, 0.0
    %v696 = vmax.f32 %v670, 0.0
    %v697 = vmax.f32 %v673, 0.0
    %v698 = vmax.f32 %v678, 0.0
    %v699 = vmax.f32 %v681, 0.0
    %v700 = vmax.f32 %v684, %v688
    %v701 = vmax.f32 %v685, %v689
    %v702 = vmax.f32 %v686, %v690
    %v703 = vmax.f32 %v687, %v691
    %v704 = vmax.f32 %v692, %v696
    %v705 = vmax.f32 %v693, %v697
    %v706 = vmax.f32 %v694, %v698
    %v707 = vmax.f32 %v695, %v699
    %708 = vst [vmem:[#allocation2] sm:$0xff] %v700
    %709 = vst [vmem:[#allocation2 + $0x8] sm:$0xff] %v701
    %710 = vst [vmem:[#allocation2 + $0x10] sm:$0xff] %v702
    %711 = vst [vmem:[#allocation2 + $0x18] sm:$0xff] %v703
    %712 = vst [vmem:[#allocation2 + $0x20] sm:$0xff] %v704
    %713 = vst [vmem:[#allocation2 + $0x28] sm:$0xff] %v705
    %714 = vst [vmem:[#allocation2 + $0x30] sm:$0xff] %v706
    %715 = vst [vmem:[#allocation2 + $0x38] sm:$0xff] %v707
    %v716 = vld [vmem:[#allocation2] ss:$2 sm:$0xff]
    %v717 = vld [vmem:[%s258] ss:$2 sm:$0xff]
    %v718 = vld [vmem:[%s260] ss:$2 sm:$0xff]
    %v719 = vld [vmem:[%s262] ss:$2 sm:$0xff]
    %v720 = vld [vmem:[%s264] ss:$2 sm:$0xff]
    %v721 = vld [vmem:[%s266] ss:$2 sm:$0xff]
    %v722 = vld [vmem:[%s268] ss:$2 sm:$0xff]
    %v723 = vld [vmem:[%s270] ss:$2 sm:$0xff]
    %v724 = vmax.f32 %v716, %v720
    %v725 = vmax.f32 %v717, %v721
    %v726 = vmax.f32 %v718, %v722
    %v727 = vmax.f32 %v719, %v723
    %728 = vst [vmem:[%s277 + $0x40] sm:$0xff] %v724
    %729 = vst [vmem:[%s277 + $0x48] sm:$0xff] %v725
    %730 = vst [vmem:[%s277 + $0x50] sm:$0xff] %v726
    %731 = vst [vmem:[%s277 + $0x58] sm:$0xff] %v727
    %v732 = vld [vmem:[%s28 + $0xc0] sm:$0xf]
    %v733 = vld [vmem:[%s28 + $0xc4] sm:$0xf]
    %v734 = vld [vmem:[%s28 + $0xc8] sm:$0xf]
    %v735 = vld [vmem:[%s28 + $0xcc] sm:$0xf]
    %v736 = vld [vmem:[%s28 + $0xd0] sm:$0xf]
    %v737 = vld [vmem:[%s28 + $0xd4] sm:$0xf]
    %v738 = vld [vmem:[%s28 + $0xd8] sm:$0xf]
    %v739 = vld [vmem:[%s28 + $0xdc] sm:$0xf]
    %v740 = vld [vmem:[%s28 + $0xe0] sm:$0xf]
    %v741 = vld [vmem:[%s28 + $0xe4] sm:$0xf]
    %v742 = vld [vmem:[%s28 + $0xe8] sm:$0xf]
    %v743 = vld [vmem:[%s28 + $0xec] sm:$0xf]
    %v744 = vld [vmem:[%s28 + $0xf0] sm:$0xf]
    %v745 = vld [vmem:[%s28 + $0xf4] sm:$0xf]
    %v746 = vld [vmem:[%s28 + $0xf8] sm:$0xf]
    %v747 = vld [vmem:[%s28 + $0xfc] sm:$0xf]
    %v764 = vunpack.c.l.b16 %v732
    %v765 = vunpack.c.l.b16 %v733
    %v766 = vunpack.c.l.b16 %v734
    %v767 = vunpack.c.l.b16 %v735
    %v768 = vunpack.c.l.b16 %v736
    %v769 = vunpack.c.l.b16 %v737
    %v770 = vunpack.c.l.b16 %v738
    %v771 = vunpack.c.l.b16 %v739
    %v772 = vunpack.c.l.b16 %v740
    %v773 = vunpack.c.l.b16 %v741
    %v774 = vunpack.c.l.b16 %v742
    %v775 = vunpack.c.l.b16 %v743
    %v776 = vunpack.c.l.b16 %v744
    %v777 = vunpack.c.l.b16 %v745
    %v778 = vunpack.c.l.b16 %v746
    %v779 = vunpack.c.l.b16 %v747
    %v780 = vpack.c.b16 %v765, %v764
    %v781 = vpack.c.b16 %v767, %v766
    %v782 = vpack.c.b16 %v769, %v768
    %v783 = vpack.c.b16 %v771, %v770
    %v784 = vpack.c.b16 %v773, %v772
    %v785 = vpack.c.b16 %v775, %v774
    %v786 = vpack.c.b16 %v777, %v776
    %v787 = vpack.c.b16 %v779, %v778
    %v789 = vsel %vm103, %v780, 0
    %v792 = vsel %vm103, %v781, 0
    %v795 = vsel %vm103, %v782, 0
    %v798 = vsel %vm103, %v783, 0
    %v801 = vsel %vm103, %v784, 0
    %v804 = vsel %vm103, %v785, 0
    %v807 = vsel %vm103, %v786, 0
    %v810 = vsel %vm103, %v787, 0
    %812 = vmatprep.subr.bf16.mxu0 0
    %813 = vmatpush1.bf16.msra.mxu0 %v99
    %814 = vmatprep.subr.bf16.mxu0 0
    %815 = vmatpush1.bf16.msra.mxu0 %v100
    %816 = vmatprep.subr.bf16.mxu0 0
    %817 = vmatpush1.bf16.msra.mxu0 0
    %818 = vmatprep.subr.bf16.mxu0 0
    %819 = vmatpush1.bf16.msra.mxu0 0
    %820 = vmatprep.subr.bf16.mxu0 0
    %821 = vmatpush1.bf16.msra.mxu0 0
    %822 = vmatprep.subr.bf16.mxu0 0
    %823 = vmatpush1.bf16.msra.mxu0 0
    %824 = vmatprep.subr.bf16.mxu0 0
    %825 = vmatpush1.bf16.msra.mxu0 0
    %826 = vmatprep.subr.bf16.mxu0 0
    %827 = vmatpush1.bf16.msra.mxu0 0
    %828 = vmatprep.subr.bf16.mxu0 0
    %829 = vmatpush1.bf16.msra.mxu0 0
    %830 = vmatprep.subr.bf16.mxu0 0
    %831 = vmatpush1.bf16.msra.mxu0 0
    %832 = vmatprep.subr.bf16.mxu0 0
    %833 = vmatpush1.bf16.msra.mxu0 0
    %834 = vmatprep.subr.bf16.mxu0 0
    %835 = vmatpush1.bf16.msra.mxu0 0
    %836 = vmatprep.subr.bf16.mxu0 0
    %837 = vmatpush1.bf16.msra.mxu0 0
    %838 = vmatprep.subr.bf16.mxu0 0
    %839 = vmatpush1.bf16.msra.mxu0 0
    %840 = vmatprep.subr.bf16.mxu0 0
    %841 = vmatpush1.bf16.msra.mxu0 0
    %842 = vmatprep.subr.bf16.mxu0 0
    %843 = vmatpush1.bf16.msra.mxu0 0
    %844 = vmatprep.mubr.bf16.mxu0 0
    %845 = vmatmul.mubr.bf16.gmra.mrb[0].mxu0 %v789
    %v846 = vpop.f32.mrb[0].mxu0
    %v847 = vadd.f32 %v49, %v846
    %v848 = vpop.f32.mrb[0].mxu0
    %v849 = vpop.f32.mrb[0].mxu0
    %v850 = vadd.f32 %v49, %v849
    %v851 = vpop.f32.mrb[0].mxu0
    %852 = vmatprep.mubr.bf16.mxu0 0
    %853 = vmatmul.mubr.bf16.gmra.mrb[0].mxu0 %v792
    %v854 = vpop.f32.mrb[0].mxu0
    %v855 = vadd.f32 %v49, %v854
    %v856 = vpop.f32.mrb[0].mxu0
    %v857 = vpop.f32.mrb[0].mxu0
    %v858 = vadd.f32 %v49, %v857
    %v859 = vpop.f32.mrb[0].mxu0
    %860 = vmatprep.mubr.bf16.mxu0 0
    %861 = vmatmul.mubr.bf16.gmra.mrb[0].mxu0 %v795
    %v862 = vpop.f32.mrb[0].mxu0
    %v863 = vadd.f32 %v49, %v862
    %v864 = vpop.f32.mrb[0].mxu0
    %v865 = vpop.f32.mrb[0].mxu0
    %v866 = vadd.f32 %v49, %v865
    %v867 = vpop.f32.mrb[0].mxu0
    %868 = vmatprep.mubr.bf16.mxu0 0
    %869 = vmatmul.mubr.bf16.gmra.mrb[0].mxu0 %v798
    %v870 = vpop.f32.mrb[0].mxu0
    %v871 = vadd.f32 %v49, %v870
    %v872 = vpop.f32.mrb[0].mxu0
    %v873 = vpop.f32.mrb[0].mxu0
    %v874 = vadd.f32 %v49, %v873
    %v875 = vpop.f32.mrb[0].mxu0
    %876 = vmatprep.mubr.bf16.mxu0 0
    %877 = vmatmul.mubr.bf16.gmra.mrb[0].mxu0 %v801
    %v878 = vpop.f32.mrb[0].mxu0
    %v879 = vadd.f32 %v49, %v878
    %v880 = vpop.f32.mrb[0].mxu0
    %v881 = vpop.f32.mrb[0].mxu0
    %v882 = vadd.f32 %v49, %v881
    %v883 = vpop.f32.mrb[0].mxu0
    %884 = vmatprep.mubr.bf16.mxu0 0
    %885 = vmatmul.mubr.bf16.gmra.mrb[0].mxu0 %v804
    %v886 = vpop.f32.mrb[0].mxu0
    %v887 = vadd.f32 %v49, %v886
    %v888 = vpop.f32.mrb[0].mxu0
    %v889 = vpop.f32.mrb[0].mxu0
    %v890 = vadd.f32 %v49, %v889
    %v891 = vpop.f32.mrb[0].mxu0
    %892 = vmatprep.mubr.bf16.mxu0 0
    %893 = vmatmul.mubr.bf16.gmra.mrb[0].mxu0 %v807
    %v894 = vpop.f32.mrb[0].mxu0
    %v895 = vadd.f32 %v49, %v894
    %v896 = vpop.f32.mrb[0].mxu0
    %v897 = vpop.f32.mrb[0].mxu0
    %v898 = vadd.f32 %v49, %v897
    %v899 = vpop.f32.mrb[0].mxu0
    %900 = vmatprep.mubr.bf16.mxu0 0
    %901 = vmatmul.mubr.bf16.gmra.mrb[0].mxu0 %v810
    %v902 = vpop.f32.mrb[0].mxu0
    %v903 = vadd.f32 %v49, %v902
    %v904 = vpop.f32.mrb[0].mxu0
    %v905 = vpop.f32.mrb[0].mxu0
    %v906 = vadd.f32 %v49, %v905
    %v907 = vpop.f32.mrb[0].mxu0
    %908 = vdwg.mxu0
    %v909 = vmax.f32 %v847, 0.0
    %v910 = vmax.f32 %v850, 0.0
    %v911 = vmax.f32 %v855, 0.0
    %v912 = vmax.f32 %v858, 0.0
    %v913 = vmax.f32 %v863, 0.0
    %v914 = vmax.f32 %v866, 0.0
    %v915 = vmax.f32 %v871, 0.0
    %v916 = vmax.f32 %v874, 0.0
    %v917 = vmax.f32 %v879, 0.0
    %v918 = vmax.f32 %v882, 0.0
    %v919 = vmax.f32 %v887, 0.0
    %v920 = vmax.f32 %v890, 0.0
    %v921 = vmax.f32 %v895, 0.0
    %v922 = vmax.f32 %v898, 0.0
    %v923 = vmax.f32 %v903, 0.0
    %v924 = vmax.f32 %v906, 0.0
    %v925 = vmax.f32 %v909, %v913
    %v926 = vmax.f32 %v910, %v914
    %v927 = vmax.f32 %v911, %v915
    %v928 = vmax.f32 %v912, %v916
    %v929 = vmax.f32 %v917, %v921
    %v930 = vmax.f32 %v918, %v922
    %v931 = vmax.f32 %v919, %v923
    %v932 = vmax.f32 %v920, %v924
    %933 = vst [vmem:[#allocation2] sm:$0xff] %v925
    %934 = vst [vmem:[#allocation2 + $0x8] sm:$0xff] %v926
    %935 = vst [vmem:[#allocation2 + $0x10] sm:$0xff] %v927
    %936 = vst [vmem:[#allocation2 + $0x18] sm:$0xff] %v928
    %937 = vst [vmem:[#allocation2 + $0x20] sm:$0xff] %v929
    %938 = vst [vmem:[#allocation2 + $0x28] sm:$0xff] %v930
    %939 = vst [vmem:[#allocation2 + $0x30] sm:$0xff] %v931
    %940 = vst [vmem:[#allocation2 + $0x38] sm:$0xff] %v932
    %v941 = vld [vmem:[#allocation2] ss:$2 sm:$0xff]
    %v942 = vld [vmem:[%s258] ss:$2 sm:$0xff]
    %v943 = vld [vmem:[%s260] ss:$2 sm:$0xff]
    %v944 = vld [vmem:[%s262] ss:$2 sm:$0xff]
    %v945 = vld [vmem:[%s264] ss:$2 sm:$0xff]
    %v946 = vld [vmem:[%s266] ss:$2 sm:$0xff]
    %v947 = vld [vmem:[%s268] ss:$2 sm:$0xff]
    %v948 = vld [vmem:[%s270] ss:$2 sm:$0xff]
    %v949 = vmax.f32 %v941, %v945
    %v950 = vmax.f32 %v942, %v946
    %v951 = vmax.f32 %v943, %v947
    %v952 = vmax.f32 %v944, %v948
    %953 = vst [vmem:[%s277 + $0x60] sm:$0xff] %v949
    %954 = vst [vmem:[%s277 + $0x68] sm:$0xff] %v950
    %955 = vst [vmem:[%s277 + $0x70] sm:$0xff] %v951
    %956 = vst [vmem:[%s277 + $0x78] sm:$0xff] %v952
    %v957 = vld [vmem:[%s28 + $0x100] sm:$0xf]
    %v958 = vld [vmem:[%s28 + $0x104] sm:$0xf]
    %v959 = vld [vmem:[%s28 + $0x108] sm:$0xf]
    %v960 = vld [vmem:[%s28 + $0x10c] sm:$0xf]
    %v961 = vld [vmem:[%s28 + $0x110] sm:$0xf]
    %v962 = vld [vmem:[%s28 + $0x114] sm:$0xf]
    %v963 = vld [vmem:[%s28 + $0x118] sm:$0xf]
    %v964 = vld [vmem:[%s28 + $0x11c] sm:$0xf]
    %v965 = vld [vmem:[%s28 + $0x120] sm:$0xf]
    %v966 = vld [vmem:[%s28 + $0x124] sm:$0xf]
    %v967 = vld [vmem:[%s28 + $0x128] sm:$0xf]
    %v968 = vld [vmem:[%s28 + $0x12c] sm:$0xf]
    %v969 = vld [vmem:[%s28 + $0x130] sm:$0xf]
    %v970 = vld [vmem:[%s28 + $0x134] sm:$0xf]
    %v971 = vld [vmem:[%s28 + $0x138] sm:$0xf]
    %v972 = vld [vmem:[%s28 + $0x13c] sm:$0xf]
    %v989 = vunpack.c.l.b16 %v957
    %v990 = vunpack.c.l.b16 %v958
    %v991 = vunpack.c.l.b16 %v959
    %v992 = vunpack.c.l.b16 %v960
    %v993 = vunpack.c.l.b16 %v961
    %v994 = vunpack.c.l.b16 %v962
    %v995 = vunpack.c.l.b16 %v963
    %v996 = vunpack.c.l.b16 %v964
    %v997 = vunpack.c.l.b16 %v965
    %v998 = vunpack.c.l.b16 %v966
    %v999 = vunpack.c.l.b16 %v967
    %v1000 = vunpack.c.l.b16 %v968
    %v1001 = vunpack.c.l.b16 %v969
    %v1002 = vunpack.c.l.b16 %v970
    %v1003 = vunpack.c.l.b16 %v971
    %v1004 = vunpack.c.l.b16 %v972
    %v1005 = vpack.c.b16 %v990, %v989
    %v1006 = vpack.c.b16 %v992, %v991
    %v1007 = vpack.c.b16 %v994, %v993
    %v1008 = vpack.c.b16 %v996, %v995
    %v1009 = vpack.c.b16 %v998, %v997
    %v1010 = vpack.c.b16 %v1000, %v999
    %v1011 = vpack.c.b16 %v1002, %v1001
    %v1012 = vpack.c.b16 %v1004, %v1003
    %v1014 = vsel %vm103, %v1005, 0
    %v1017 = vsel %vm103, %v1006, 0
    %v1020 = vsel %vm103, %v1007, 0
    %v1023 = vsel %vm103, %v1008, 0
    %v1026 = vsel %vm103, %v1009, 0
    %v1029 = vsel %vm103, %v1010, 0
    %v1032 = vsel %vm103, %v1011, 0
    %v1035 = vsel %vm103, %v1012, 0
    %1037 = vmatprep.subr.bf16.mxu0 0
    %1038 = vmatpush1.bf16.msra.mxu0 %v99
    %1039 = vmatprep.subr.bf16.mxu0 0
    %1040 = vmatpush1.bf16.msra.mxu0 %v100
    %1041 = vmatprep.subr.bf16.mxu0 0
    %1042 = vmatpush1.bf16.msra.mxu0 0
    %1043 = vmatprep.subr.bf16.mxu0 0
    %1044 = vmatpush1.bf16.msra.mxu0 0
    %1045 = vmatprep.subr.bf16.mxu0 0
    %1046 = vmatpush1.bf16.msra.mxu0 0
    %1047 = vmatprep.subr.bf16.mxu0 0
    %1048 = vmatpush1.bf16.msra.mxu0 0
    %1049 = vmatprep.subr.bf16.mxu0 0
    %1050 = vmatpush1.bf16.msra.mxu0 0
    %1051 = vmatprep.subr.bf16.mxu0 0
    %1052 = vmatpush1.bf16.msra.mxu0 0
    %1053 = vmatprep.subr.bf16.mxu0 0
    %1054 = vmatpush1.bf16.msra.mxu0 0
    %1055 = vmatprep.subr.bf16.mxu0 0
    %1056 = vmatpush1.bf16.msra.mxu0 0
    %1057 = vmatprep.subr.bf16.mxu0 0
    %1058 = vmatpush1.bf16.msra.mxu0 0
    %1059 = vmatprep.subr.bf16.mxu0 0
    %1060 = vmatpush1.bf16.msra.mxu0 0
    %1061 = vmatprep.subr.bf16.mxu0 0
    %1062 = vmatpush1.bf16.msra.mxu0 0
    %1063 = vmatprep.subr.bf16.mxu0 0
    %1064 = vmatpush1.bf16.msra.mxu0 0
    %1065 = vmatprep.subr.bf16.mxu0 0
    %1066 = vmatpush1.bf16.msra.mxu0 0
    %1067 = vmatprep.subr.bf16.mxu0 0
    %1068 = vmatpush1.bf16.msra.mxu0 0
    %1069 = vmatprep.mubr.bf16.mxu0 0
    %1070 = vmatmul.mubr.bf16.gmra.mrb[0].mxu0 %v1014
    %v1071 = vpop.f32.mrb[0].mxu0
    %v1072 = vadd.f32 %v49, %v1071
    %v1073 = vpop.f32.mrb[0].mxu0
    %v1074 = vpop.f32.mrb[0].mxu0
    %v1075 = vadd.f32 %v49, %v1074
    %v1076 = vpop.f32.mrb[0].mxu0
    %1077 = vmatprep.mubr.bf16.mxu0 0
    %1078 = vmatmul.mubr.bf16.gmra.mrb[0].mxu0 %v1017
    %v1079 = vpop.f32.mrb[0].mxu0
    %v1080 = vadd.f32 %v49, %v1079
    %v1081 = vpop.f32.mrb[0].mxu0
    %v1082 = vpop.f32.mrb[0].mxu0
    %v1083 = vadd.f32 %v49, %v1082
    %v1084 = vpop.f32.mrb[0].mxu0
    %1085 = vmatprep.mubr.bf16.mxu0 0
    %1086 = vmatmul.mubr.bf16.gmra.mrb[0].mxu0 %v1020
    %v1087 = vpop.f32.mrb[0].mxu0
    %v1088 = vadd.f32 %v49, %v1087
    %v1089 = vpop.f32.mrb[0].mxu0
    %v1090 = vpop.f32.mrb[0].mxu0
    %v1091 = vadd.f32 %v49, %v1090
    %v1092 = vpop.f32.mrb[0].mxu0
    %1093 = vmatprep.mubr.bf16.mxu0 0
    %1094 = vmatmul.mubr.bf16.gmra.mrb[0].mxu0 %v1023
    %v1095 = vpop.f32.mrb[0].mxu0
    %v1096 = vadd.f32 %v49, %v1095
    %v1097 = vpop.f32.mrb[0].mxu0
    %v1098 = vpop.f32.mrb[0].mxu0
    %v1099 = vadd.f32 %v49, %v1098
    %v1100 = vpop.f32.mrb[0].mxu0
    %1101 = vmatprep.mubr.bf16.mxu0 0
    %1102 = vmatmul.mubr.bf16.gmra.mrb[0].mxu0 %v1026
    %v1103 = vpop.f32.mrb[0].mxu0
    %v1104 = vadd.f32 %v49, %v1103
    %v1105 = vpop.f32.mrb[0].mxu0
    %v1106 = vpop.f32.mrb[0].mxu0
    %v1107 = vadd.f32 %v49, %v1106
    %v1108 = vpop.f32.mrb[0].mxu0
    %1109 = vmatprep.mubr.bf16.mxu0 0
    %1110 = vmatmul.mubr.bf16.gmra.mrb[0].mxu0 %v1029
    %v1111 = vpop.f32.mrb[0].mxu0
    %v1112 = vadd.f32 %v49, %v1111
    %v1113 = vpop.f32.mrb[0].mxu0
    %v1114 = vpop.f32.mrb[0].mxu0
    %v1115 = vadd.f32 %v49, %v1114
    %v1116 = vpop.f32.mrb[0].mxu0
    %1117 = vmatprep.mubr.bf16.mxu0 0
    %1118 = vmatmul.mubr.bf16.gmra.mrb[0].mxu0 %v1032
    %v1119 = vpop.f32.mrb[0].mxu0
    %v1120 = vadd.f32 %v49, %v1119
    %v1121 = vpop.f32.mrb[0].mxu0
    %v1122 = vpop.f32.mrb[0].mxu0
    %v1123 = vadd.f32 %v49, %v1122
    %v1124 = vpop.f32.mrb[0].mxu0
    %1125 = vmatprep.mubr.bf16.mxu0 0
    %1126 = vmatmul.mubr.bf16.gmra.mrb[0].mxu0 %v1035
    %v1127 = vpop.f32.mrb[0].mxu0
    %v1128 = vadd.f32 %v49, %v1127
    %v1129 = vpop.f32.mrb[0].mxu0
    %v1130 = vpop.f32.mrb[0].mxu0
    %v1131 = vadd.f32 %v49, %v1130
    %v1132 = vpop.f32.mrb[0].mxu0
    %1133 = vdwg.mxu0
    %v1134 = vmax.f32 %v1072, 0.0
    %v1135 = vmax.f32 %v1075, 0.0
    %v1136 = vmax.f32 %v1080, 0.0
    %v1137 = vmax.f32 %v1083, 0.0
    %v1138 = vmax.f32 %v1088, 0.0
    %v1139 = vmax.f32 %v1091, 0.0
    %v1140 = vmax.f32 %v1096, 0.0
    %v1141 = vmax.f32 %v1099, 0.0
    %v1142 = vmax.f32 %v1104, 0.0
    %v1143 = vmax.f32 %v1107, 0.0
    %v1144 = vmax.f32 %v1112, 0.0
    %v1145 = vmax.f32 %v1115, 0.0
    %v1146 = vmax.f32 %v1120, 0.0
    %v1147 = vmax.f32 %v1123, 0.0
    %v1148 = vmax.f32 %v1128, 0.0
    %v1149 = vmax.f32 %v1131, 0.0
    %v1150 = vmax.f32 %v1134, %v1138
    %v1151 = vmax.f32 %v1135, %v1139
    %v1152 = vmax.f32 %v1136, %v1140
    %v1153 = vmax.f32 %v1137, %v1141
    %v1154 = vmax.f32 %v1142, %v1146
    %v1155 = vmax.f32 %v1143, %v1147
    %v1156 = vmax.f32 %v1144, %v1148
    %v1157 = vmax.f32 %v1145, %v1149
    %1158 = vst [vmem:[#allocation2] sm:$0xff] %v1150
    %1159 = vst [vmem:[#allocation2 + $0x8] sm:$0xff] %v1151
    %1160 = vst [vmem:[#allocation2 + $0x10] sm:$0xff] %v1152
    %1161 = vst [vmem:[#allocation2 + $0x18] sm:$0xff] %v1153
    %1162 = vst [vmem:[#allocation2 + $0x20] sm:$0xff] %v1154
    %1163 = vst [vmem:[#allocation2 + $0x28] sm:$0xff] %v1155
    %1164 = vst [vmem:[#allocation2 + $0x30] sm:$0xff] %v1156
    %1165 = vst [vmem:[#allocation2 + $0x38] sm:$0xff] %v1157
    %v1166 = vld [vmem:[#allocation2] ss:$2 sm:$0xff]
    %v1167 = vld [vmem:[%s258] ss:$2 sm:$0xff]
    %v1168 = vld [vmem:[%s260] ss:$2 sm:$0xff]
    %v1169 = vld [vmem:[%s262] ss:$2 sm:$0xff]
    %v1170 = vld [vmem:[%s264] ss:$2 sm:$0xff]
    %v1171 = vld [vmem:[%s266] ss:$2 sm:$0xff]
    %v1172 = vld [vmem:[%s268] ss:$2 sm:$0xff]
    %v1173 = vld [vmem:[%s270] ss:$2 sm:$0xff]
    %v1174 = vmax.f32 %v1166, %v1170
    %v1175 = vmax.f32 %v1167, %v1171
    %v1176 = vmax.f32 %v1168, %v1172
    %v1177 = vmax.f32 %v1169, %v1173
    %1178 = vst [vmem:[%s277 + $0x80] sm:$0xff] %v1174
    %1179 = vst [vmem:[%s277 + $0x88] sm:$0xff] %v1175
    %1180 = vst [vmem:[%s277 + $0x90] sm:$0xff] %v1176
    %1181 = vst [vmem:[%s277 + $0x98] sm:$0xff] %v1177
    %v1182 = vld [vmem:[%s28 + $0x140] sm:$0xf]
    %v1183 = vld [vmem:[%s28 + $0x144] sm:$0xf]
    %v1184 = vld [vmem:[%s28 + $0x148] sm:$0xf]
    %v1185 = vld [vmem:[%s28 + $0x14c] sm:$0xf]
    %v1186 = vld [vmem:[%s28 + $0x150] sm:$0xf]
    %v1187 = vld [vmem:[%s28 + $0x154] sm:$0xf]
    %v1188 = vld [vmem:[%s28 + $0x158] sm:$0xf]
    %v1189 = vld [vmem:[%s28 + $0x15c] sm:$0xf]
    %v1190 = vld [vmem:[%s28 + $0x160] sm:$0xf]
    %v1191 = vld [vmem:[%s28 + $0x164] sm:$0xf]
    %v1192 = vld [vmem:[%s28 + $0x168] sm:$0xf]
    %v1193 = vld [vmem:[%s28 + $0x16c] sm:$0xf]
    %v1194 = vld [vmem:[%s28 + $0x170] sm:$0xf]
    %v1195 = vld [vmem:[%s28 + $0x174] sm:$0xf]
    %v1196 = vld [vmem:[%s28 + $0x178] sm:$0xf]
    %v1197 = vld [vmem:[%s28 + $0x17c] sm:$0xf]
    %v1214 = vunpack.c.l.b16 %v1182
    %v1215 = vunpack.c.l.b16 %v1183
    %v1216 = vunpack.c.l.b16 %v1184
    %v1217 = vunpack.c.l.b16 %v1185
    %v1218 = vunpack.c.l.b16 %v1186
    %v1219 = vunpack.c.l.b16 %v1187
    %v1220 = vunpack.c.l.b16 %v1188
    %v1221 = vunpack.c.l.b16 %v1189
    %v1222 = vunpack.c.l.b16 %v1190
    %v1223 = vunpack.c.l.b16 %v1191
    %v1224 = vunpack.c.l.b16 %v1192
    %v1225 = vunpack.c.l.b16 %v1193
    %v1226 = vunpack.c.l.b16 %v1194
    %v1227 = vunpack.c.l.b16 %v1195
    %v1228 = vunpack.c.l.b16 %v1196
    %v1229 = vunpack.c.l.b16 %v1197
    %v1230 = vpack.c.b16 %v1215, %v1214
    %v1231 = vpack.c.b16 %v1217, %v1216
    %v1232 = vpack.c.b16 %v1219, %v1218
    %v1233 = vpack.c.b16 %v1221, %v1220
    %v1234 = vpack.c.b16 %v1223, %v1222
    %v1235 = vpack.c.b16 %v1225, %v1224
    %v1236 = vpack.c.b16 %v1227, %v1226
    %v1237 = vpack.c.b16 %v1229, %v1228
    %v1239 = vsel %vm103, %v1230, 0
    %v1242 = vsel %vm103, %v1231, 0
    %v1245 = vsel %vm103, %v1232, 0
    %v1248 = vsel %vm103, %v1233, 0
    %v1251 = vsel %vm103, %v1234, 0
    %v1254 = vsel %vm103, %v1235, 0
    %v1257 = vsel %vm103, %v1236, 0
    %v1260 = vsel %vm103, %v1237, 0
    %1262 = vmatprep.subr.bf16.mxu0 0
    %1263 = vmatpush1.bf16.msra.mxu0 %v99
    %1264 = vmatprep.subr.bf16.mxu0 0
    %1265 = vmatpush1.bf16.msra.mxu0 %v100
    %1266 = vmatprep.subr.bf16.mxu0 0
    %1267 = vmatpush1.bf16.msra.mxu0 0
    %1268 = vmatprep.subr.bf16.mxu0 0
    %1269 = vmatpush1.bf16.msra.mxu0 0
    %1270 = vmatprep.subr.bf16.mxu0 0
    %1271 = vmatpush1.bf16.msra.mxu0 0
    %1272 = vmatprep.subr.bf16.mxu0 0
    %1273 = vmatpush1.bf16.msra.mxu0 0
    %1274 = vmatprep.subr.bf16.mxu0 0
    %1275 = vmatpush1.bf16.msra.mxu0 0
    %1276 = vmatprep.subr.bf16.mxu0 0
    %1277 = vmatpush1.bf16.msra.mxu0 0
    %1278 = vmatprep.subr.bf16.mxu0 0
    %1279 = vmatpush1.bf16.msra.mxu0 0
    %1280 = vmatprep.subr.bf16.mxu0 0
    %1281 = vmatpush1.bf16.msra.mxu0 0
    %1282 = vmatprep.subr.bf16.mxu0 0
    %1283 = vmatpush1.bf16.msra.mxu0 0
    %1284 = vmatprep.subr.bf16.mxu0 0
    %1285 = vmatpush1.bf16.msra.mxu0 0
    %1286 = vmatprep.subr.bf16.mxu0 0
    %1287 = vmatpush1.bf16.msra.mxu0 0
    %1288 = vmatprep.subr.bf16.mxu0 0
    %1289 = vmatpush1.bf16.msra.mxu0 0
    %1290 = vmatprep.subr.bf16.mxu0 0
    %1291 = vmatpush1.bf16.msra.mxu0 0
    %1292 = vmatprep.subr.bf16.mxu0 0
    %1293 = vmatpush1.bf16.msra.mxu0 0
    %1294 = vmatprep.mubr.bf16.mxu0 0
    %1295 = vmatmul.mubr.bf16.gmra.mrb[0].mxu0 %v1239
    %v1296 = vpop.f32.mrb[0].mxu0
    %v1297 = vadd.f32 %v49, %v1296
    %v1298 = vpop.f32.mrb[0].mxu0
    %v1299 = vpop.f32.mrb[0].mxu0
    %v1300 = vadd.f32 %v49, %v1299
    %v1301 = vpop.f32.mrb[0].mxu0
    %1302 = vmatprep.mubr.bf16.mxu0 0
    %1303 = vmatmul.mubr.bf16.gmra.mrb[0].mxu0 %v1242
    %v1304 = vpop.f32.mrb[0].mxu0
    %v1305 = vadd.f32 %v49, %v1304
    %v1306 = vpop.f32.mrb[0].mxu0
    %v1307 = vpop.f32.mrb[0].mxu0
    %v1308 = vadd.f32 %v49, %v1307
    %v1309 = vpop.f32.mrb[0].mxu0
    %1310 = vmatprep.mubr.bf16.mxu0 0
    %1311 = vmatmul.mubr.bf16.gmra.mrb[0].mxu0 %v1245
    %v1312 = vpop.f32.mrb[0].mxu0
    %v1313 = vadd.f32 %v49, %v1312
    %v1314 = vpop.f32.mrb[0].mxu0
    %v1315 = vpop.f32.mrb[0].mxu0
    %v1316 = vadd.f32 %v49, %v1315
    %v1317 = vpop.f32.mrb[0].mxu0
    %1318 = vmatprep.mubr.bf16.mxu0 0
    %1319 = vmatmul.mubr.bf16.gmra.mrb[0].mxu0 %v1248
    %v1320 = vpop.f32.mrb[0].mxu0
    %v1321 = vadd.f32 %v49, %v1320
    %v1322 = vpop.f32.mrb[0].mxu0
    %v1323 = vpop.f32.mrb[0].mxu0
    %v1324 = vadd.f32 %v49, %v1323
    %v1325 = vpop.f32.mrb[0].mxu0
    %1326 = vmatprep.mubr.bf16.mxu0 0
    %1327 = vmatmul.mubr.bf16.gmra.mrb[0].mxu0 %v1251
    %v1328 = vpop.f32.mrb[0].mxu0
    %v1329 = vadd.f32 %v49, %v1328
    %v1330 = vpop.f32.mrb[0].mxu0
    %v1331 = vpop.f32.mrb[0].mxu0
    %v1332 = vadd.f32 %v49, %v1331
    %v1333 = vpop.f32.mrb[0].mxu0
    %1334 = vmatprep.mubr.bf16.mxu0 0
    %1335 = vmatmul.mubr.bf16.gmra.mrb[0].mxu0 %v1254
    %v1336 = vpop.f32.mrb[0].mxu0
    %v1337 = vadd.f32 %v49, %v1336
    %v1338 = vpop.f32.mrb[0].mxu0
    %v1339 = vpop.f32.mrb[0].mxu0
    %v1340 = vadd.f32 %v49, %v1339
    %v1341 = vpop.f32.mrb[0].mxu0
    %1342 = vmatprep.mubr.bf16.mxu0 0
    %1343 = vmatmul.mubr.bf16.gmra.mrb[0].mxu0 %v1257
    %v1344 = vpop.f32.mrb[0].mxu0
    %v1345 = vadd.f32 %v49, %v1344
    %v1346 = vpop.f32.mrb[0].mxu0
    %v1347 = vpop.f32.mrb[0].mxu0
    %v1348 = vadd.f32 %v49, %v1347
    %v1349 = vpop.f32.mrb[0].mxu0
    %1350 = vmatprep.mubr.bf16.mxu0 0
    %1351 = vmatmul.mubr.bf16.gmra.mrb[0].mxu0 %v1260
    %v1352 = vpop.f32.mrb[0].mxu0
    %v1353 = vadd.f32 %v49, %v1352
    %v1354 = vpop.f32.mrb[0].mxu0
    %v1355 = vpop.f32.mrb[0].mxu0
    %v1356 = vadd.f32 %v49, %v1355
    %v1357 = vpop.f32.mrb[0].mxu0
    %1358 = vdwg.mxu0
    %v1359 = vmax.f32 %v1297, 0.0
    %v1360 = vmax.f32 %v1300, 0.0
    %v1361 = vmax.f32 %v1305, 0.0
    %v1362 = vmax.f32 %v1308, 0.0
    %v1363 = vmax.f32 %v1313, 0.0
    %v1364 = vmax.f32 %v1316, 0.0
    %v1365 = vmax.f32 %v1321, 0.0
    %v1366 = vmax.f32 %v1324, 0.0
    %v1367 = vmax.f32 %v1329, 0.0
    %v1368 = vmax.f32 %v1332, 0.0
    %v1369 = vmax.f32 %v1337, 0.0
    %v1370 = vmax.f32 %v1340, 0.0
    %v1371 = vmax.f32 %v1345, 0.0
    %v1372 = vmax.f32 %v1348, 0.0
    %v1373 = vmax.f32 %v1353, 0.0
    %v1374 = vmax.f32 %v1356, 0.0
    %v1375 = vmax.f32 %v1359, %v1363
    %v1376 = vmax.f32 %v1360, %v1364
    %v1377 = vmax.f32 %v1361, %v1365
    %v1378 = vmax.f32 %v1362, %v1366
    %v1379 = vmax.f32 %v1367, %v1371
    %v1380 = vmax.f32 %v1368, %v1372
    %v1381 = vmax.f32 %v1369, %v1373
    %v1382 = vmax.f32 %v1370, %v1374
    %1383 = vst [vmem:[#allocation2] sm:$0xff] %v1375
    %1384 = vst [vmem:[#allocation2 + $0x8] sm:$0xff] %v1376
    %1385 = vst [vmem:[#allocation2 + $0x10] sm:$0xff] %v1377
    %1386 = vst [vmem:[#allocation2 + $0x18] sm:$0xff] %v1378
    %1387 = vst [vmem:[#allocation2 + $0x20] sm:$0xff] %v1379
    %1388 = vst [vmem:[#allocation2 + $0x28] sm:$0xff] %v1380
    %1389 = vst [vmem:[#allocation2 + $0x30] sm:$0xff] %v1381
    %1390 = vst [vmem:[#allocation2 + $0x38] sm:$0xff] %v1382
    %v1391 = vld [vmem:[#allocation2] ss:$2 sm:$0xff]
    %v1392 = vld [vmem:[%s258] ss:$2 sm:$0xff]
    %v1393 = vld [vmem:[%s260] ss:$2 sm:$0xff]
    %v1394 = vld [vmem:[%s262] ss:$2 sm:$0xff]
    %v1395 = vld [vmem:[%s264] ss:$2 sm:$0xff]
    %v1396 = vld [vmem:[%s266] ss:$2 sm:$0xff]
    %v1397 = vld [vmem:[%s268] ss:$2 sm:$0xff]
    %v1398 = vld [vmem:[%s270] ss:$2 sm:$0xff]
    %v1399 = vmax.f32 %v1391, %v1395
    %v1400 = vmax.f32 %v1392, %v1396
    %v1401 = vmax.f32 %v1393, %v1397
    %v1402 = vmax.f32 %v1394, %v1398
    %1403 = vst [vmem:[%s277 + $0xa0] sm:$0xff] %v1399
    %1404 = vst [vmem:[%s277 + $0xa8] sm:$0xff] %v1400
    %1405 = vst [vmem:[%s277 + $0xb0] sm:$0xff] %v1401
    %1406 = vst [vmem:[%s277 + $0xb8] sm:$0xff] %v1402
    %v1407 = vld [vmem:[%s28 + $0x180] sm:$0xf]
    %v1408 = vld [vmem:[%s28 + $0x184] sm:$0xf]
    %v1409 = vld [vmem:[%s28 + $0x188] sm:$0xf]
    %v1410 = vld [vmem:[%s28 + $0x18c] sm:$0xf]
    %v1411 = vld [vmem:[%s28 + $0x190] sm:$0xf]
    %v1412 = vld [vmem:[%s28 + $0x194] sm:$0xf]
    %v1413 = vld [vmem:[%s28 + $0x198] sm:$0xf]
    %v1414 = vld [vmem:[%s28 + $0x19c] sm:$0xf]
    %v1415 = vld [vmem:[%s28 + $0x1a0] sm:$0xf]
    %v1416 = vld [vmem:[%s28 + $0x1a4] sm:$0xf]
    %v1417 = vld [vmem:[%s28 + $0x1a8] sm:$0xf]
    %v1418 = vld [vmem:[%s28 + $0x1ac] sm:$0xf]
    %v1419 = vld [vmem:[%s28 + $0x1b0] sm:$0xf]
    %v1420 = vld [vmem:[%s28 + $0x1b4] sm:$0xf]
    %v1421 = vld [vmem:[%s28 + $0x1b8] sm:$0xf]
    %v1422 = vld [vmem:[%s28 + $0x1bc] sm:$0xf]
    %v1439 = vunpack.c.l.b16 %v1407
    %v1440 = vunpack.c.l.b16 %v1408
    %v1441 = vunpack.c.l.b16 %v1409
    %v1442 = vunpack.c.l.b16 %v1410
    %v1443 = vunpack.c.l.b16 %v1411
    %v1444 = vunpack.c.l.b16 %v1412
    %v1445 = vunpack.c.l.b16 %v1413
    %v1446 = vunpack.c.l.b16 %v1414
    %v1447 = vunpack.c.l.b16 %v1415
    %v1448 = vunpack.c.l.b16 %v1416
    %v1449 = vunpack.c.l.b16 %v1417
    %v1450 = vunpack.c.l.b16 %v1418
    %v1451 = vunpack.c.l.b16 %v1419
    %v1452 = vunpack.c.l.b16 %v1420
    %v1453 = vunpack.c.l.b16 %v1421
    %v1454 = vunpack.c.l.b16 %v1422
    %v1455 = vpack.c.b16 %v1440, %v1439
    %v1456 = vpack.c.b16 %v1442, %v1441
    %v1457 = vpack.c.b16 %v1444, %v1443
    %v1458 = vpack.c.b16 %v1446, %v1445
    %v1459 = vpack.c.b16 %v1448, %v1447
    %v1460 = vpack.c.b16 %v1450, %v1449
    %v1461 = vpack.c.b16 %v1452, %v1451
    %v1462 = vpack.c.b16 %v1454, %v1453
    %v1464 = vsel %vm103, %v1455, 0
    %v1467 = vsel %vm103, %v1456, 0
    %v1470 = vsel %vm103, %v1457, 0
    %v1473 = vsel %vm103, %v1458, 0
    %v1476 = vsel %vm103, %v1459, 0
    %v1479 = vsel %vm103, %v1460, 0
    %v1482 = vsel %vm103, %v1461, 0
    %v1485 = vsel %vm103, %v1462, 0
    %1487 = vmatprep.subr.bf16.mxu0 0
    %1488 = vmatpush1.bf16.msra.mxu0 %v99
    %1489 = vmatprep.subr.bf16.mxu0 0
    %1490 = vmatpush1.bf16.msra.mxu0 %v100
    %1491 = vmatprep.subr.bf16.mxu0 0
    %1492 = vmatpush1.bf16.msra.mxu0 0
    %1493 = vmatprep.subr.bf16.mxu0 0
    %1494 = vmatpush1.bf16.msra.mxu0 0
    %1495 = vmatprep.subr.bf16.mxu0 0
    %1496 = vmatpush1.bf16.msra.mxu0 0
    %1497 = vmatprep.subr.bf16.mxu0 0
    %1498 = vmatpush1.bf16.msra.mxu0 0
    %1499 = vmatprep.subr.bf16.mxu0 0
    %1500 = vmatpush1.bf16.msra.mxu0 0
    %1501 = vmatprep.subr.bf16.mxu0 0
    %1502 = vmatpush1.bf16.msra.mxu0 0
    %1503 = vmatprep.subr.bf16.mxu0 0
    %1504 = vmatpush1.bf16.msra.mxu0 0
    %1505 = vmatprep.subr.bf16.mxu0 0
    %1506 = vmatpush1.bf16.msra.mxu0 0
    %1507 = vmatprep.subr.bf16.mxu0 0
    %1508 = vmatpush1.bf16.msra.mxu0 0
    %1509 = vmatprep.subr.bf16.mxu0 0
    %1510 = vmatpush1.bf16.msra.mxu0 0
    %1511 = vmatprep.subr.bf16.mxu0 0
    %1512 = vmatpush1.bf16.msra.mxu0 0
    %1513 = vmatprep.subr.bf16.mxu0 0
    %1514 = vmatpush1.bf16.msra.mxu0 0
    %1515 = vmatprep.subr.bf16.mxu0 0
    %1516 = vmatpush1.bf16.msra.mxu0 0
    %1517 = vmatprep.subr.bf16.mxu0 0
    %1518 = vmatpush1.bf16.msra.mxu0 0
    %1519 = vmatprep.mubr.bf16.mxu0 0
    %1520 = vmatmul.mubr.bf16.gmra.mrb[0].mxu0 %v1464
    %v1521 = vpop.f32.mrb[0].mxu0
    %v1522 = vadd.f32 %v49, %v1521
    %v1523 = vpop.f32.mrb[0].mxu0
    %v1524 = vpop.f32.mrb[0].mxu0
    %v1525 = vadd.f32 %v49, %v1524
    %v1526 = vpop.f32.mrb[0].mxu0
    %1527 = vmatprep.mubr.bf16.mxu0 0
    %1528 = vmatmul.mubr.bf16.gmra.mrb[0].mxu0 %v1467
    %v1529 = vpop.f32.mrb[0].mxu0
    %v1530 = vadd.f32 %v49, %v1529
    %v1531 = vpop.f32.mrb[0].mxu0
    %v1532 = vpop.f32.mrb[0].mxu0
    %v1533 = vadd.f32 %v49, %v1532
    %v1534 = vpop.f32.mrb[0].mxu0
    %1535 = vmatprep.mubr.bf16.mxu0 0
    %1536 = vmatmul.mubr.bf16.gmra.mrb[0].mxu0 %v1470
    %v1537 = vpop.f32.mrb[0].mxu0
    %v1538 = vadd.f32 %v49, %v1537
    %v1539 = vpop.f32.mrb[0].mxu0
    %v1540 = vpop.f32.mrb[0].mxu0
    %v1541 = vadd.f32 %v49, %v1540
    %v1542 = vpop.f32.mrb[0].mxu0
    %1543 = vmatprep.mubr.bf16.mxu0 0
    %1544 = vmatmul.mubr.bf16.gmra.mrb[0].mxu0 %v1473
    %v1545 = vpop.f32.mrb[0].mxu0
    %v1546 = vadd.f32 %v49, %v1545
    %v1547 = vpop.f32.mrb[0].mxu0
    %v1548 = vpop.f32.mrb[0].mxu0
    %v1549 = vadd.f32 %v49, %v1548
    %v1550 = vpop.f32.mrb[0].mxu0
    %1551 = vmatprep.mubr.bf16.mxu0 0
    %1552 = vmatmul.mubr.bf16.gmra.mrb[0].mxu0 %v1476
    %v1553 = vpop.f32.mrb[0].mxu0
    %v1554 = vadd.f32 %v49, %v1553
    %v1555 = vpop.f32.mrb[0].mxu0
    %v1556 = vpop.f32.mrb[0].mxu0
    %v1557 = vadd.f32 %v49, %v1556
    %v1558 = vpop.f32.mrb[0].mxu0
    %1559 = vmatprep.mubr.bf16.mxu0 0
    %1560 = vmatmul.mubr.bf16.gmra.mrb[0].mxu0 %v1479
    %v1561 = vpop.f32.mrb[0].mxu0
    %v1562 = vadd.f32 %v49, %v1561
    %v1563 = vpop.f32.mrb[0].mxu0
    %v1564 = vpop.f32.mrb[0].mxu0
    %v1565 = vadd.f32 %v49, %v1564
    %v1566 = vpop.f32.mrb[0].mxu0
    %1567 = vmatprep.mubr.bf16.mxu0 0
    %1568 = vmatmul.mubr.bf16.gmra.mrb[0].mxu0 %v1482
    %v1569 = vpop.f32.mrb[0].mxu0
    %v1570 = vadd.f32 %v49, %v1569
    %v1571 = vpop.f32.mrb[0].mxu0
    %v1572 = vpop.f32.mrb[0].mxu0
    %v1573 = vadd.f32 %v49, %v1572
    %v1574 = vpop.f32.mrb[0].mxu0
    %1575 = vmatprep.mubr.bf16.mxu0 0
    %1576 = vmatmul.mubr.bf16.gmra.mrb[0].mxu0 %v1485
    %v1577 = vpop.f32.mrb[0].mxu0
    %v1578 = vadd.f32 %v49, %v1577
    %v1579 = vpop.f32.mrb[0].mxu0
    %v1580 = vpop.f32.mrb[0].mxu0
    %v1581 = vadd.f32 %v49, %v1580
    %v1582 = vpop.f32.mrb[0].mxu0
    %1583 = vdwg.mxu0
    %v1584 = vmax.f32 %v1522, 0.0
    %v1585 = vmax.f32 %v1525, 0.0
    %v1586 = vmax.f32 %v1530, 0.0
    %v1587 = vmax.f32 %v1533, 0.0
    %v1588 = vmax.f32 %v1538, 0.0
    %v1589 = vmax.f32 %v1541, 0.0
    %v1590 = vmax.f32 %v1546, 0.0
    %v1591 = vmax.f32 %v1549, 0.0
    %v1592 = vmax.f32 %v1554, 0.0
    %v1593 = vmax.f32 %v1557, 0.0
    %v1594 = vmax.f32 %v1562, 0.0
    %v1595 = vmax.f32 %v1565, 0.0
    %v1596 = vmax.f32 %v1570, 0.0
    %v1597 = vmax.f32 %v1573, 0.0
    %v1598 = vmax.f32 %v1578, 0.0
    %v1599 = vmax.f32 %v1581, 0.0
    %v1600 = vmax.f32 %v1584, %v1588
    %v1601 = vmax.f32 %v1585, %v1589
    %v1602 = vmax.f32 %v1586, %v1590
    %v1603 = vmax.f32 %v1587, %v1591
    %v1604 = vmax.f32 %v1592, %v1596
    %v1605 = vmax.f32 %v1593, %v1597
    %v1606 = vmax.f32 %v1594, %v1598
    %v1607 = vmax.f32 %v1595, %v1599
    %1608 = vst [vmem:[#allocation2] sm:$0xff] %v1600
    %1609 = vst [vmem:[#allocation2 + $0x8] sm:$0xff] %v1601
    %1610 = vst [vmem:[#allocation2 + $0x10] sm:$0xff] %v1602
    %1611 = vst [vmem:[#allocation2 + $0x18] sm:$0xff] %v1603
    %1612 = vst [vmem:[#allocation2 + $0x20] sm:$0xff] %v1604
    %1613 = vst [vmem:[#allocation2 + $0x28] sm:$0xff] %v1605
    %1614 = vst [vmem:[#allocation2 + $0x30] sm:$0xff] %v1606
    %1615 = vst [vmem:[#allocation2 + $0x38] sm:$0xff] %v1607
    %v1616 = vld [vmem:[#allocation2] ss:$2 sm:$0xff]
    %v1617 = vld [vmem:[%s258] ss:$2 sm:$0xff]
    %v1618 = vld [vmem:[%s260] ss:$2 sm:$0xff]
    %v1619 = vld [vmem:[%s262] ss:$2 sm:$0xff]
    %v1620 = vld [vmem:[%s264] ss:$2 sm:$0xff]
    %v1621 = vld [vmem:[%s266] ss:$2 sm:$0xff]
    %v1622 = vld [vmem:[%s268] ss:$2 sm:$0xff]
    %v1623 = vld [vmem:[%s270] ss:$2 sm:$0xff]
    %v1624 = vmax.f32 %v1616, %v1620
    %v1625 = vmax.f32 %v1617, %v1621
    %v1626 = vmax.f32 %v1618, %v1622
    %v1627 = vmax.f32 %v1619, %v1623
    %1628 = vst [vmem:[%s277 + $0xc0] sm:$0xff] %v1624
    %1629 = vst [vmem:[%s277 + $0xc8] sm:$0xff] %v1625
    %1630 = vst [vmem:[%s277 + $0xd0] sm:$0xff] %v1626
    %1631 = vst [vmem:[%s277 + $0xd8] sm:$0xff] %v1627
    %v1632 = vld [vmem:[%s28 + $0x1c0] sm:$0xf]
    %v1633 = vld [vmem:[%s28 + $0x1c4] sm:$0xf]
    %v1634 = vld [vmem:[%s28 + $0x1c8] sm:$0xf]
    %v1635 = vld [vmem:[%s28 + $0x1cc] sm:$0xf]
    %v1636 = vld [vmem:[%s28 + $0x1d0] sm:$0xf]
    %v1637 = vld [vmem:[%s28 + $0x1d4] sm:$0xf]
    %v1638 = vld [vmem:[%s28 + $0x1d8] sm:$0xf]
    %v1639 = vld [vmem:[%s28 + $0x1dc] sm:$0xf]
    %v1640 = vld [vmem:[%s28 + $0x1e0] sm:$0xf]
    %v1641 = vld [vmem:[%s28 + $0x1e4] sm:$0xf]
    %v1642 = vld [vmem:[%s28 + $0x1e8] sm:$0xf]
    %v1643 = vld [vmem:[%s28 + $0x1ec] sm:$0xf]
    %v1644 = vld [vmem:[%s28 + $0x1f0] sm:$0xf]
    %v1645 = vld [vmem:[%s28 + $0x1f4] sm:$0xf]
    %v1646 = vld [vmem:[%s28 + $0x1f8] sm:$0xf]
    %v1647 = vld [vmem:[%s28 + $0x1fc] sm:$0xf]
    %v1664 = vunpack.c.l.b16 %v1632
    %v1665 = vunpack.c.l.b16 %v1633
    %v1666 = vunpack.c.l.b16 %v1634
    %v1667 = vunpack.c.l.b16 %v1635
    %v1668 = vunpack.c.l.b16 %v1636
    %v1669 = vunpack.c.l.b16 %v1637
    %v1670 = vunpack.c.l.b16 %v1638
    %v1671 = vunpack.c.l.b16 %v1639
    %v1672 = vunpack.c.l.b16 %v1640
    %v1673 = vunpack.c.l.b16 %v1641
    %v1674 = vunpack.c.l.b16 %v1642
    %v1675 = vunpack.c.l.b16 %v1643
    %v1676 = vunpack.c.l.b16 %v1644
    %v1677 = vunpack.c.l.b16 %v1645
    %v1678 = vunpack.c.l.b16 %v1646
    %v1679 = vunpack.c.l.b16 %v1647
    %v1680 = vpack.c.b16 %v1665, %v1664
    %v1681 = vpack.c.b16 %v1667, %v1666
    %v1682 = vpack.c.b16 %v1669, %v1668
    %v1683 = vpack.c.b16 %v1671, %v1670
    %v1684 = vpack.c.b16 %v1673, %v1672
    %v1685 = vpack.c.b16 %v1675, %v1674
    %v1686 = vpack.c.b16 %v1677, %v1676
    %v1687 = vpack.c.b16 %v1679, %v1678
    %v1689 = vsel %vm103, %v1680, 0
    %v1692 = vsel %vm103, %v1681, 0
    %v1695 = vsel %vm103, %v1682, 0
    %v1698 = vsel %vm103, %v1683, 0
    %v1701 = vsel %vm103, %v1684, 0
    %v1704 = vsel %vm103, %v1685, 0
    %v1707 = vsel %vm103, %v1686, 0
    %v1710 = vsel %vm103, %v1687, 0
    %1712 = vmatprep.subr.bf16.mxu0 0
    %1713 = vmatpush1.bf16.msra.mxu0 %v99
    %1714 = vmatprep.subr.bf16.mxu0 0
    %1715 = vmatpush1.bf16.msra.mxu0 %v100
    %1716 = vmatprep.subr.bf16.mxu0 0
    %1717 = vmatpush1.bf16.msra.mxu0 0
    %1718 = vmatprep.subr.bf16.mxu0 0
    %1719 = vmatpush1.bf16.msra.mxu0 0
    %1720 = vmatprep.subr.bf16.mxu0 0
    %1721 = vmatpush1.bf16.msra.mxu0 0
    %1722 = vmatprep.subr.bf16.mxu0 0
    %1723 = vmatpush1.bf16.msra.mxu0 0
    %1724 = vmatprep.subr.bf16.mxu0 0
    %1725 = vmatpush1.bf16.msra.mxu0 0
    %1726 = vmatprep.subr.bf16.mxu0 0
    %1727 = vmatpush1.bf16.msra.mxu0 0
    %1728 = vmatprep.subr.bf16.mxu0 0
    %1729 = vmatpush1.bf16.msra.mxu0 0
    %1730 = vmatprep.subr.bf16.mxu0 0
    %1731 = vmatpush1.bf16.msra.mxu0 0
    %1732 = vmatprep.subr.bf16.mxu0 0
    %1733 = vmatpush1.bf16.msra.mxu0 0
    %1734 = vmatprep.subr.bf16.mxu0 0
    %1735 = vmatpush1.bf16.msra.mxu0 0
    %1736 = vmatprep.subr.bf16.mxu0 0
    %1737 = vmatpush1.bf16.msra.mxu0 0
    %1738 = vmatprep.subr.bf16.mxu0 0
    %1739 = vmatpush1.bf16.msra.mxu0 0
    %1740 = vmatprep.subr.bf16.mxu0 0
    %1741 = vmatpush1.bf16.msra.mxu0 0
    %1742 = vmatprep.subr.bf16.mxu0 0
    %1743 = vmatpush1.bf16.msra.mxu0 0
    %1744 = vmatprep.mubr.bf16.mxu0 0
    %1745 = vmatmul.mubr.bf16.gmra.mrb[0].mxu0 %v1689
    %v1746 = vpop.f32.mrb[0].mxu0
    %v1747 = vadd.f32 %v49, %v1746
    %v1748 = vpop.f32.mrb[0].mxu0
    %v1749 = vpop.f32.mrb[0].mxu0
    %v1750 = vadd.f32 %v49, %v1749
    %v1751 = vpop.f32.mrb[0].mxu0
    %1752 = vmatprep.mubr.bf16.mxu0 0
    %1753 = vmatmul.mubr.bf16.gmra.mrb[0].mxu0 %v1692
    %v1754 = vpop.f32.mrb[0].mxu0
    %v1755 = vadd.f32 %v49, %v1754
    %v1756 = vpop.f32.mrb[0].mxu0
    %v1757 = vpop.f32.mrb[0].mxu0
    %v1758 = vadd.f32 %v49, %v1757
    %v1759 = vpop.f32.mrb[0].mxu0
    %1760 = vmatprep.mubr.bf16.mxu0 0
    %1761 = vmatmul.mubr.bf16.gmra.mrb[0].mxu0 %v1695
    %v1762 = vpop.f32.mrb[0].mxu0
    %v1763 = vadd.f32 %v49, %v1762
    %v1764 = vpop.f32.mrb[0].mxu0
    %v1765 = vpop.f32.mrb[0].mxu0
    %v1766 = vadd.f32 %v49, %v1765
    %v1767 = vpop.f32.mrb[0].mxu0
    %1768 = vmatprep.mubr.bf16.mxu0 0
    %1769 = vmatmul.mubr.bf16.gmra.mrb[0].mxu0 %v1698
    %v1770 = vpop.f32.mrb[0].mxu0
    %v1771 = vadd.f32 %v49, %v1770
    %v1772 = vpop.f32.mrb[0].mxu0
    %v1773 = vpop.f32.mrb[0].mxu0
    %v1774 = vadd.f32 %v49, %v1773
    %v1775 = vpop.f32.mrb[0].mxu0
    %1776 = vmatprep.mubr.bf16.mxu0 0
    %1777 = vmatmul.mubr.bf16.gmra.mrb[0].mxu0 %v1701
    %v1778 = vpop.f32.mrb[0].mxu0
    %v1779 = vadd.f32 %v49, %v1778
    %v1780 = vpop.f32.mrb[0].mxu0
    %v1781 = vpop.f32.mrb[0].mxu0
    %v1782 = vadd.f32 %v49, %v1781
    %v1783 = vpop.f32.mrb[0].mxu0
    %1784 = vmatprep.mubr.bf16.mxu0 0
    %1785 = vmatmul.mubr.bf16.gmra.mrb[0].mxu0 %v1704
    %v1786 = vpop.f32.mrb[0].mxu0
    %v1787 = vadd.f32 %v49, %v1786
    %v1788 = vpop.f32.mrb[0].mxu0
    %v1789 = vpop.f32.mrb[0].mxu0
    %v1790 = vadd.f32 %v49, %v1789
    %v1791 = vpop.f32.mrb[0].mxu0
    %1792 = vmatprep.mubr.bf16.mxu0 0
    %1793 = vmatmul.mubr.bf16.gmra.mrb[0].mxu0 %v1707
    %v1794 = vpop.f32.mrb[0].mxu0
    %v1795 = vadd.f32 %v49, %v1794
    %v1796 = vpop.f32.mrb[0].mxu0
    %v1797 = vpop.f32.mrb[0].mxu0
    %v1798 = vadd.f32 %v49, %v1797
    %v1799 = vpop.f32.mrb[0].mxu0
    %1800 = vmatprep.mubr.bf16.mxu0 0
    %1801 = vmatmul.mubr.bf16.gmra.mrb[0].mxu0 %v1710
    %v1802 = vpop.f32.mrb[0].mxu0
    %v1803 = vadd.f32 %v49, %v1802
    %v1804 = vpop.f32.mrb[0].mxu0
    %v1805 = vpop.f32.mrb[0].mxu0
    %v1806 = vadd.f32 %v49, %v1805
    %v1807 = vpop.f32.mrb[0].mxu0
    %1808 = vdwg.mxu0
    %v1809 = vmax.f32 %v1747, 0.0
    %v1810 = vmax.f32 %v1750, 0.0
    %v1811 = vmax.f32 %v1755, 0.0
    %v1812 = vmax.f32 %v1758, 0.0
    %v1813 = vmax.f32 %v1763, 0.0
    %v1814 = vmax.f32 %v1766, 0.0
    %v1815 = vmax.f32 %v1771, 0.0
    %v1816 = vmax.f32 %v1774, 0.0
    %v1817 = vmax.f32 %v1779, 0.0
    %v1818 = vmax.f32 %v1782, 0.0
    %v1819 = vmax.f32 %v1787, 0.0
    %v1820 = vmax.f32 %v1790, 0.0
    %v1821 = vmax.f32 %v1795, 0.0
    %v1822 = vmax.f32 %v1798, 0.0
    %v1823 = vmax.f32 %v1803, 0.0
    %v1824 = vmax.f32 %v1806, 0.0
    %v1825 = vmax.f32 %v1809, %v1813
    %v1826 = vmax.f32 %v1810, %v1814
    %v1827 = vmax.f32 %v1811, %v1815
    %v1828 = vmax.f32 %v1812, %v1816
    %v1829 = vmax.f32 %v1817, %v1821
    %v1830 = vmax.f32 %v1818, %v1822
    %v1831 = vmax.f32 %v1819, %v1823
    %v1832 = vmax.f32 %v1820, %v1824
    %1833 = vst [vmem:[#allocation2] sm:$0xff] %v1825
    %1834 = vst [vmem:[#allocation2 + $0x8] sm:$0xff] %v1826
    %1835 = vst [vmem:[#allocation2 + $0x10] sm:$0xff] %v1827
    %1836 = vst [vmem:[#allocation2 + $0x18] sm:$0xff] %v1828
    %1837 = vst [vmem:[#allocation2 + $0x20] sm:$0xff] %v1829
    %1838 = vst [vmem:[#allocation2 + $0x28] sm:$0xff] %v1830
    %1839 = vst [vmem:[#allocation2 + $0x30] sm:$0xff] %v1831
    %1840 = vst [vmem:[#allocation2 + $0x38] sm:$0xff] %v1832
    %v1841 = vld [vmem:[#allocation2] ss:$2 sm:$0xff]
    %v1842 = vld [vmem:[%s258] ss:$2 sm:$0xff]
    %v1843 = vld [vmem:[%s260] ss:$2 sm:$0xff]
    %v1844 = vld [vmem:[%s262] ss:$2 sm:$0xff]
    %v1845 = vld [vmem:[%s264] ss:$2 sm:$0xff]
    %v1846 = vld [vmem:[%s266] ss:$2 sm:$0xff]
    %v1847 = vld [vmem:[%s268] ss:$2 sm:$0xff]
    %v1848 = vld [vmem:[%s270] ss:$2 sm:$0xff]
    %v1849 = vmax.f32 %v1841, %v1845
    %v1850 = vmax.f32 %v1842, %v1846
    %v1851 = vmax.f32 %v1843, %v1847
    %v1852 = vmax.f32 %v1844, %v1848
    %1853 = vst [vmem:[%s277 + $0xe0] sm:$0xff] %v1849
    %1854 = vst [vmem:[%s277 + $0xe8] sm:$0xff] %v1850
    %1855 = vst [vmem:[%s277 + $0xf0] sm:$0xff] %v1851
    %1856 = vst [vmem:[%s277 + $0xf8] sm:$0xff] %v1852
  $region18: #{net_forward.5} parent=0 // loop_footer
    %s25 = sadd.s32 1, %s21
  $region19: #{net_forward.5} parent=0 // loop_footer_branch
    %20 = sbr.rel target = $region15
  $region20: #{net_forward.5} parent=0 // loop_exit
    _
  // Predicated region
  $region21: #{net_forward.5} parent=0 // pred_check
    _
  $region22: #{net_forward.5} parent=0 // pred_check_branch
    %1858 = sbr.rel (0) target = $region24
  $region23: #{net_forward.5} parent=0 // pred_region
    _
  $region24: #{net_forward.5} parent=0 // pred_fallthru
    _
  // Predicated region
  $region25: #{net_forward.5} parent=0 // pred_check
    _
  $region26: #{net_forward.5} parent=0 // pred_check_branch
    %1860 = sbr.rel (0) target = $region28
  $region27: #{net_forward.5} parent=0 // pred_region
    _
  $region28: #{net_forward.5} parent=0 // pred_fallthru
    _

// kernel: net_forward.7
$region0: #{net_forward.7}
  #allocation0 [shape = 'u32[]', space=smem, size = 0x4, offset = 0x4, fixed_abs, tag = 'smem constant byte address 0x4 - core index']
  #allocation1 [shape = 'u32[144,128]{1,0:T(1,128)}', space=vmem, size = 0x12000, scoped, tag = 'internal scratch']
  #allocation2 [shape = 'f32[32,128]{1,0:T(8,128)}', space=vmem, size = 0x4000, scoped, tag = 'scratch operand']
  %s0 = inlined_call_operand.vmem [shape: f32[2,10,10,128], index: 0, kind: input, shape index: {}]
  %s1 = inlined_call_operand.vmem [shape: bf16[9,128,128], index: 1, kind: input, shape index: {}]
  %s2 = inlined_call_operand.vmem [shape: f32[1,128], index: 2, kind: input, shape index: {}]
  %s3 = inlined_call_operand.vmem [shape: bf16[2,16,128], index: 3, kind: output, shape index: {}]
  %s4 = sld [smem:[#allocation0]]
  $region29: #{net_forward.7} parent=0
    _
  %s6 = ssub.s32 1, %s4
  %s7 = scalar_select 0, %s6, %s4
  // Predicated region
  $region2: #{net_forward.7} parent=0 // pred_check
    _
  $region3: #{net_forward.7} parent=0 // pred_check_branch
    %9 = sbr.rel (0) target = $region5
  $region4: #{net_forward.7} parent=0 // pred_region
    _
  $region5: #{net_forward.7} parent=0 // pred_fallthru
    _
  // Predicated region
  $region6: #{net_forward.7} parent=0 // pred_check
    _
  $region7: #{net_forward.7} parent=0 // pred_check_branch
    %11 = sbr.rel (0) target = $region9
  $region8: #{net_forward.7} parent=0 // pred_region
    _
  $region9: #{net_forward.7} parent=0 // pred_fallthru
    _
  // Predicated region
  $region10: #{net_forward.7} parent=0 // pred_check
    _
  $region11: #{net_forward.7} parent=0 // pred_check_branch
    %13 = sbr.rel (0) target = $region13
  $region12: #{net_forward.7} parent=0 // pred_region
    _
  $region13: #{net_forward.7} parent=0 // pred_fallthru
    _
  %v15 = vld [vmem:[%s2] sm:$0x1]
  loop: start=0, step=1, limit=2
  $region14: #{net_forward.7} parent=0 // loop_pre_header
    _
  $region15: #{net_forward.7} parent=0 // loop_header
    %s17 = sphi 0, %s21
    %p18 = scmp.ge.s32.totalorder %s17, 2
  $region16: #{net_forward.7} parent=0 // loop_header_branch
    %20 = sbr.rel (%p18) target = $region20
  $region17: #{net_forward.7} parent=0 // loop_body
    %s22 = smul.u32 %s17, 160
    %s23 = scalar_lea.vmem %s0, %s22
    %v24 = vld [vmem:[%s23] sm:$0xff]
    %v25 = vld [vmem:[%s23 + $0x10] sm:$0xff]
    %v26 = vld [vmem:[%s23 + $0x20] sm:$0xff]
    %v27 = vld [vmem:[%s23 + $0x30] sm:$0xff]
    %v28 = vld [vmem:[%s23 + $0x40] sm:$0xff]
    %v29 = vld [vmem:[%s23 + $0x50] sm:$0xff]
    %v30 = vld [vmem:[%s23 + $0x60] sm:$0xff]
    %v31 = vld [vmem:[%s23 + $0x70] sm:$0xff]
    %v32 = vpack.c.bf16 %v25, %v24
    %v33 = vpack.c.bf16 %v27, %v26
    %v34 = vpack.c.bf16 %v29, %v28
    %v35 = vpack.c.bf16 %v31, %v30
    %v36 = vld [vmem:[%s1] sm:$0xf]
    %v37 = vld [vmem:[%s1 + $0x4] sm:$0xf]
    %v38 = vld [vmem:[%s1 + $0x8] sm:$0xf]
    %v39 = vld [vmem:[%s1 + $0xc] sm:$0xf]
    %v40 = vld [vmem:[%s1 + $0x10] sm:$0xf]
    %v41 = vld [vmem:[%s1 + $0x14] sm:$0xf]
    %v42 = vld [vmem:[%s1 + $0x18] sm:$0xf]
    %v43 = vld [vmem:[%s1 + $0x1c] sm:$0xf]
    %v44 = vld [vmem:[%s1 + $0x20] sm:$0xf]
    %v45 = vld [vmem:[%s1 + $0x24] sm:$0xf]
    %v46 = vld [vmem:[%s1 + $0x28] sm:$0xf]
    %v47 = vld [vmem:[%s1 + $0x2c] sm:$0xf]
    %v48 = vld [vmem:[%s1 + $0x30] sm:$0xf]
    %v49 = vld [vmem:[%s1 + $0x34] sm:$0xf]
    %v50 = vld [vmem:[%s1 + $0x38] sm:$0xf]
    %v51 = vld [vmem:[%s1 + $0x3c] sm:$0xf]
    %v52 = vld [vmem:[%s23 + $0x1] sm:$0xff]
    %v53 = vld [vmem:[%s23 + $0x11] sm:$0xff]
    %v54 = vld [vmem:[%s23 + $0x21] sm:$0xff]
    %v55 = vld [vmem:[%s23 + $0x31] sm:$0xff]
    %v56 = vld [vmem:[%s23 + $0x41] sm:$0xff]
    %v57 = vld [vmem:[%s23 + $0x51] sm:$0xff]
    %v58 = vld [vmem:[%s23 + $0x61] sm:$0xff]
    %v59 = vld [vmem:[%s23 + $0x71] sm:$0xff]
    %v60 = vpack.c.bf16 %v53, %v52
    %v61 = vpack.c.bf16 %v55, %v54
    %v62 = vpack.c.bf16 %v57, %v56
    %v63 = vpack.c.bf16 %v59, %v58
    %s64 = scalar_lea.vmem %s1, 64
    %v65 = vld [vmem:[%s64] sm:$0xf]
    %v66 = vld [vmem:[%s64 + $0x4] sm:$0xf]
    %v67 = vld [vmem:[%s64 + $0x8] sm:$0xf]
    %v68 = vld [vmem:[%s64 + $0xc] sm:$0xf]
    %v69 = vld [vmem:[%s64 + $0x10] sm:$0xf]
    %v70 = vld [vmem:[%s64 + $0x14] sm:$0xf]
    %v71 = vld [vmem:[%s64 + $0x18] sm:$0xf]
    %v72 = vld [vmem:[%s64 + $0x1c] sm:$0xf]
    %v73 = vld [vmem:[%s64 + $0x20] sm:$0xf]
    %v74 = vld [vmem:[%s64 + $0x24] sm:$0xf]
    %v75 = vld [vmem:[%s64 + $0x28] sm:$0xf]
    %v76 = vld [vmem:[%s64 + $0x2c] sm:$0xf]
    %v77 = vld [vmem:[%s64 + $0x30] sm:$0xf]
    %v78 = vld [vmem:[%s64 + $0x34] sm:$0xf]
    %v79 = vld [vmem:[%s64 + $0x38] sm:$0xf]
    %v80 = vld [vmem:[%s64 + $0x3c] sm:$0xf]
    %v97 = vunpack.c.l.b16 %v65
    %v98 = vunpack.c.l.b16 %v66
    %v99 = vunpack.c.l.b16 %v67
    %v100 = vunpack.c.l.b16 %v68
    %v101 = vunpack.c.l.b16 %v69
    %v102 = vunpack.c.l.b16 %v70
    %v103 = vunpack.c.l.b16 %v71
    %v104 = vunpack.c.l.b16 %v72
    %v105 = vunpack.c.l.b16 %v73
    %v106 = vunpack.c.l.b16 %v74
    %v107 = vunpack.c.l.b16 %v75
    %v108 = vunpack.c.l.b16 %v76
    %v109 = vunpack.c.l.b16 %v77
    %v110 = vunpack.c.l.b16 %v78
    %v111 = vunpack.c.l.b16 %v79
    %v112 = vunpack.c.l.b16 %v80
    %v113 = vpack.c.b16 %v98, %v97
    %v114 = vpack.c.b16 %v100, %v99
    %v115 = vpack.c.b16 %v102, %v101
    %v116 = vpack.c.b16 %v104, %v103
    %v117 = vpack.c.b16 %v106, %v105
    %v118 = vpack.c.b16 %v108, %v107
    %v119 = vpack.c.b16 %v110, %v109
    %v120 = vpack.c.b16 %v112, %v111
    %129 = vmatprep.subr.bf16.mxu0 0
    %130 = vmatpush1.bf16.msra.mxu0 %v113
    %131 = vmatprep.subr.bf16.mxu0 0
    %132 = vmatpush1.bf16.msra.mxu0 %v114
    %133 = vmatprep.subr.bf16.mxu0 0
    %134 = vmatpush1.bf16.msra.mxu0 %v115
    %135 = vmatprep.subr.bf16.mxu0 0
    %136 = vmatpush1.bf16.msra.mxu0 %v116
    %137 = vmatprep.subr.bf16.mxu0 0
    %138 = vmatpush1.bf16.msra.mxu0 %v117
    %139 = vmatprep.subr.bf16.mxu0 0
    %140 = vmatpush1.bf16.msra.mxu0 %v118
    %141 = vmatprep.subr.bf16.mxu0 0
    %142 = vmatpush1.bf16.msra.mxu0 %v119
    %143 = vmatprep.subr.bf16.mxu0 0
    %144 = vmatpush1.bf16.msra.mxu0 %v120
    %145 = vmatprep.subr.bf16.mxu0 0
    %146 = vmatpush1.bf16.msra.mxu0 0
    %147 = vmatprep.subr.bf16.mxu0 0
    %148 = vmatpush1.bf16.msra.mxu0 0
    %149 = vmatprep.subr.bf16.mxu0 0
    %150 = vmatpush1.bf16.msra.mxu0 0
    %151 = vmatprep.subr.bf16.mxu0 0
    %152 = vmatpush1.bf16.msra.mxu0 0
    %153 = vmatprep.subr.bf16.mxu0 0
    %154 = vmatpush1.bf16.msra.mxu0 0
    %155 = vmatprep.subr.bf16.mxu0 0
    %156 = vmatpush1.bf16.msra.mxu0 0
    %157 = vmatprep.subr.bf16.mxu0 0
    %158 = vmatpush1.bf16.msra.mxu0 0
    %159 = vmatprep.subr.bf16.mxu0 0
    %160 = vmatpush1.bf16.msra.mxu0 0
    %161 = vmatprep.mubr.bf16.mxu0 0
    %162 = vmatmul.mubr.bf16.gmra.mrb[0].mxu0 %v60
    %v163 = vpop.f32.mrb[0].mxu0
    %v164 = vadd.f32 0.0, %v163
    %v165 = vpop.f32.mrb[0].mxu0
    %v166 = vpop.f32.mrb[0].mxu0
    %v167 = vadd.f32 0.0, %v166
    %v168 = vpop.f32.mrb[0].mxu0
    %169 = vmatprep.mubr.bf16.mxu0 0
    %170 = vmatmul.mubr.bf16.gmra.mrb[0].mxu0 %v61
    %v171 = vpop.f32.mrb[0].mxu0
    %v172 = vadd.f32 0.0, %v171
    %v173 = vpop.f32.mrb[0].mxu0
    %v174 = vpop.f32.mrb[0].mxu0
    %v175 = vadd.f32 0.0, %v174
    %v176 = vpop.f32.mrb[0].mxu0
    %177 = vmatprep.mubr.bf16.mxu0 0
    %178 = vmatmul.mubr.bf16.gmra.mrb[0].mxu0 %v62
    %v179 = vpop.f32.mrb[0].mxu0
    %v180 = vadd.f32 0.0, %v179
    %v181 = vpop.f32.mrb[0].mxu0
    %v182 = vpop.f32.mrb[0].mxu0
    %v183 = vadd.f32 0.0, %v182
    %v184 = vpop.f32.mrb[0].mxu0
    %185 = vmatprep.mubr.bf16.mxu0 0
    %186 = vmatmul.mubr.bf16.gmra.mrb[0].mxu0 %v63
    %v187 = vpop.f32.mrb[0].mxu0
    %v188 = vadd.f32 0.0, %v187
    %v189 = vpop.f32.mrb[0].mxu0
    %v190 = vpop.f32.mrb[0].mxu0
    %v191 = vadd.f32 0.0, %v190
    %v192 = vpop.f32.mrb[0].mxu0
    %193 = vdwg.mxu0
    %v210 = vunpack.c.l.b16 %v36
    %v211 = vunpack.c.l.b16 %v37
    %v212 = vunpack.c.l.b16 %v38
    %v213 = vunpack.c.l.b16 %v39
    %v214 = vunpack.c.l.b16 %v40
    %v215 = vunpack.c.l.b16 %v41
    %v216 = vunpack.c.l.b16 %v42
    %v217 = vunpack.c.l.b16 %v43
    %v218 = vunpack.c.l.b16 %v44
    %v219 = vunpack.c.l.b16 %v45
    %v220 = vunpack.c.l.b16 %v46
    %v221 = vunpack.c.l.b16 %v47
    %v222 = vunpack.c.l.b16 %v48
    %v223 = vunpack.c.l.b16 %v49
    %v224 = vunpack.c.l.b16 %v50
    %v225 = vunpack.c.l.b16 %v51
    %v226 = vpack.c.b16 %v211, %v210
    %v227 = vpack.c.b16 %v213, %v212
    %v228 = vpack.c.b16 %v215, %v214
    %v229 = vpack.c.b16 %v217, %v216
    %v230 = vpack.c.b16 %v219, %v218
    %v231 = vpack.c.b16 %v221, %v220
    %v232 = vpack.c.b16 %v223, %v222
    %v233 = vpack.c.b16 %v225, %v224
    %242 = vmatprep.subr.bf16.mxu0 0
    %243 = vmatpush1.bf16.msra.mxu0 %v226
    %244 = vmatprep.subr.bf16.mxu0 0
    %245 = vmatpush1.bf16.msra.mxu0 %v227
    %246 = vmatprep.subr.bf16.mxu0 0
    %247 = vmatpush1.bf16.msra.mxu0 %v228
    %248 = vmatprep.subr.bf16.mxu0 0
    %249 = vmatpush1.bf16.msra.mxu0 %v229
    %250 = vmatprep.subr.bf16.mxu0 0
    %251 = vmatpush1.bf16.msra.mxu0 %v230
    %252 = vmatprep.subr.bf16.mxu0 0
    %253 = vmatpush1.bf16.msra.mxu0 %v231
    %254 = vmatprep.subr.bf16.mxu0 0
    %255 = vmatpush1.bf16.msra.mxu0 %v232
    %256 = vmatprep.subr.bf16.mxu0 0
    %257 = vmatpush1.bf16.msra.mxu0 %v233
    %258 = vmatprep.subr.bf16.mxu0 0
    %259 = vmatpush1.bf16.msra.mxu0 0
    %260 = vmatprep.subr.bf16.mxu0 0
    %261 = vmatpush1.bf16.msra.mxu0 0
    %262 = vmatprep.subr.bf16.mxu0 0
    %263 = vmatpush1.bf16.msra.mxu0 0
    %264 = vmatprep.subr.bf16.mxu0 0
    %265 = vmatpush1.bf16.msra.mxu0 0
    %266 = vmatprep.subr.bf16.mxu0 0
    %267 = vmatpush1.bf16.msra.mxu0 0
    %268 = vmatprep.subr.bf16.mxu0 0
    %269 = vmatpush1.bf16.msra.mxu0 0
    %270 = vmatprep.subr.bf16.mxu0 0
    %271 = vmatpush1.bf16.msra.mxu0 0
    %272 = vmatprep.subr.bf16.mxu0 0
    %273 = vmatpush1.bf16.msra.mxu0 0
    %274 = vmatprep.mubr.bf16.mxu0 0
    %275 = vmatmul.mubr.bf16.gmra.mrb[0].mxu0 %v32
    %v276 = vpop.f32.mrb[0].mxu0
    %v277 = vadd.f32 %v164, %v276
    %v278 = vpop.f32.mrb[0].mxu0
    %v279 = vpop.f32.mrb[0].mxu0
    %v280 = vadd.f32 %v167, %v279
    %v281 = vpop.f32.mrb[0].mxu0
    %282 = vmatprep.mubr.bf16.mxu0 0
    %283 = vmatmul.mubr.bf16.gmra.mrb[0].mxu0 %v33
    %v284 = vpop.f32.mrb[0].mxu0
    %v285 = vadd.f32 %v172, %v284
    %v286 = vpop.f32.mrb[0].mxu0
    %v287 = vpop.f32.mrb[0].mxu0
    %v288 = vadd.f32 %v175, %v287
    %v289 = vpop.f32.mrb[0].mxu0
    %290 = vmatprep.mubr.bf16.mxu0 0
    %291 = vmatmul.mubr.bf16.gmra.mrb[0].mxu0 %v34
    %v292 = vpop.f32.mrb[0].mxu0
    %v293 = vadd.f32 %v180, %v292
    %v294 = vpop.f32.mrb[0].mxu0
    %v295 = vpop.f32.mrb[0].mxu0
    %v296 = vadd.f32 %v183, %v295
    %v297 = vpop.f32.mrb[0].mxu0
    %298 = vmatprep.mubr.bf16.mxu0 0
    %299 = vmatmul.mubr.bf16.gmra.mrb[0].mxu0 %v35
    %v300 = vpop.f32.mrb[0].mxu0
    %v301 = vadd.f32 %v188, %v300
    %v302 = vpop.f32.mrb[0].mxu0
    %v303 = vpop.f32.mrb[0].mxu0
    %v304 = vadd.f32 %v191, %v303
    %v305 = vpop.f32.mrb[0].mxu0
    %306 = vdwg.mxu0
    %v307 = vld [vmem:[%s23 + $0x2] sm:$0xff]
    %v308 = vld [vmem:[%s23 + $0x12] sm:$0xff]
    %v309 = vld [vmem:[%s23 + $0x22] sm:$0xff]
    %v310 = vld [vmem:[%s23 + $0x32] sm:$0xff]
    %v311 = vld [vmem:[%s23 + $0x42] sm:$0xff]
    %v312 = vld [vmem:[%s23 + $0x52] sm:$0xff]
    %v313 = vld [vmem:[%s23 + $0x62] sm:$0xff]
    %v314 = vld [vmem:[%s23 + $0x72] sm:$0xff]
    %v315 = vpack.c.bf16 %v308, %v307
    %v316 = vpack.c.bf16 %v310, %v309
    %v317 = vpack.c.bf16 %v312, %v311
    %v318 = vpack.c.bf16 %v314, %v313
    %s319 = scalar_lea.vmem %s1, 128
    %v320 = vld [vmem:[%s319] sm:$0xf]
    %v321 = vld [vmem:[%s319 + $0x4] sm:$0xf]
    %v322 = vld [vmem:[%s319 + $0x8] sm:$0xf]
    %v323 = vld [vmem:[%s319 + $0xc] sm:$0xf]
    %v324 = vld [vmem:[%s319 + $0x10] sm:$0xf]
    %v325 = vld [vmem:[%s319 + $0x14] sm:$0xf]
    %v326 = vld [vmem:[%s319 + $0x18] sm:$0xf]
    %v327 = vld [vmem:[%s319 + $0x1c] sm:$0xf]
    %v328 = vld [vmem:[%s319 + $0x20] sm:$0xf]
    %v329 = vld [vmem:[%s319 + $0x24] sm:$0xf]
    %v330 = vld [vmem:[%s319 + $0x28] sm:$0xf]
    %v331 = vld [vmem:[%s319 + $0x2c] sm:$0xf]
    %v332 = vld [vmem:[%s319 + $0x30] sm:$0xf]
    %v333 = vld [vmem:[%s319 + $0x34] sm:$0xf]
    %v334 = vld [vmem:[%s319 + $0x38] sm:$0xf]
    %v335 = vld [vmem:[%s319 + $0x3c] sm:$0xf]
    %v352 = vunpack.c.l.b16 %v320
    %v353 = vunpack.c.l.b16 %v321
    %v354 = vunpack.c.l.b16 %v322
    %v355 = vunpack.c.l.b16 %v323
    %v356 = vunpack.c.l.b16 %v324
    %v357 = vunpack.c.l.b16 %v325
    %v358 = vunpack.c.l.b16 %v326
    %v359 = vunpack.c.l.b16 %v327
    %v360 = vunpack.c.l.b16 %v328
    %v361 = vunpack.c.l.b16 %v329
    %v362 = vunpack.c.l.b16 %v330
    %v363 = vunpack.c.l.b16 %v331
    %v364 = vunpack.c.l.b16 %v332
    %v365 = vunpack.c.l.b16 %v333
    %v366 = vunpack.c.l.b16 %v334
    %v367 = vunpack.c.l.b16 %v335
    %v368 = vpack.c.b16 %v353, %v352
    %v369 = vpack.c.b16 %v355, %v354
    %v370 = vpack.c.b16 %v357, %v356
    %v371 = vpack.c.b16 %v359, %v358
    %v372 = vpack.c.b16 %v361, %v360
    %v373 = vpack.c.b16 %v363, %v362
    %v374 = vpack.c.b16 %v365, %v364
    %v375 = vpack.c.b16 %v367, %v366
    %384 = vmatprep.subr.bf16.mxu0 0
    %385 = vmatpush1.bf16.msra.mxu0 %v368
    %386 = vmatprep.subr.bf16.mxu0 0
    %387 = vmatpush1.bf16.msra.mxu0 %v369
    %388 = vmatprep.subr.bf16.mxu0 0
    %389 = vmatpush1.bf16.msra.mxu0 %v370
    %390 = vmatprep.subr.bf16.mxu0 0
    %391 = vmatpush1.bf16.msra.mxu0 %v371
    %392 = vmatprep.subr.bf16.mxu0 0
    %393 = vmatpush1.bf16.msra.mxu0 %v372
    %394 = vmatprep.subr.bf16.mxu0 0
    %395 = vmatpush1.bf16.msra.mxu0 %v373
    %396 = vmatprep.subr.bf16.mxu0 0
    %397 = vmatpush1.bf16.msra.mxu0 %v374
    %398 = vmatprep.subr.bf16.mxu0 0
    %399 = vmatpush1.bf16.msra.mxu0 %v375
    %400 = vmatprep.subr.bf16.mxu0 0
    %401 = vmatpush1.bf16.msra.mxu0 0
    %402 = vmatprep.subr.bf16.mxu0 0
    %403 = vmatpush1.bf16.msra.mxu0 0
    %404 = vmatprep.subr.bf16.mxu0 0
    %405 = vmatpush1.bf16.msra.mxu0 0
    %406 = vmatprep.subr.bf16.mxu0 0
    %407 = vmatpush1.bf16.msra.mxu0 0
    %408 = vmatprep.subr.bf16.mxu0 0
    %409 = vmatpush1.bf16.msra.mxu0 0
    %410 = vmatprep.subr.bf16.mxu0 0
    %411 = vmatpush1.bf16.msra.mxu0 0
    %412 = vmatprep.subr.bf16.mxu0 0
    %413 = vmatpush1.bf16.msra.mxu0 0
    %414 = vmatprep.subr.bf16.mxu0 0
    %415 = vmatpush1.bf16.msra.mxu0 0
    %416 = vmatprep.mubr.bf16.mxu0 0
    %417 = vmatmul.mubr.bf16.gmra.mrb[0].mxu0 %v315
    %v418 = vpop.f32.mrb[0].mxu0
    %v419 = vadd.f32 0.0, %v418
    %v420 = vpop.f32.mrb[0].mxu0
    %v421 = vpop.f32.mrb[0].mxu0
    %v422 = vadd.f32 0.0, %v421
    %v423 = vpop.f32.mrb[0].mxu0
    %424 = vmatprep.mubr.bf16.mxu0 0
    %425 = vmatmul.mubr.bf16.gmra.mrb[0].mxu0 %v316
    %v426 = vpop.f32.mrb[0].mxu0
    %v427 = vadd.f32 0.0, %v426
    %v428 = vpop.f32.mrb[0].mxu0
    %v429 = vpop.f32.mrb[0].mxu0
    %v430 = vadd.f32 0.0, %v429
    %v431 = vpop.f32.mrb[0].mxu0
    %432 = vmatprep.mubr.bf16.mxu0 0
    %433 = vmatmul.mubr.bf16.gmra.mrb[0].mxu0 %v317
    %v434 = vpop.f32.mrb[0].mxu0
    %v435 = vadd.f32 0.0, %v434
    %v436 = vpop.f32.mrb[0].mxu0
    %v437 = vpop.f32.mrb[0].mxu0
    %v438 = vadd.f32 0.0, %v437
    %v439 = vpop.f32.mrb[0].mxu0
    %440 = vmatprep.mubr.bf16.mxu0 0
    %441 = vmatmul.mubr.bf16.gmra.mrb[0].mxu0 %v318
    %v442 = vpop.f32.mrb[0].mxu0
    %v443 = vadd.f32 0.0, %v442
    %v444 = vpop.f32.mrb[0].mxu0
    %v445 = vpop.f32.mrb[0].mxu0
    %v446 = vadd.f32 0.0, %v445
    %v447 = vpop.f32.mrb[0].mxu0
    %448 = vdwg.mxu0
    %v449 = vadd.f32 %v277, %v419
    %v450 = vadd.f32 %v280, %v422
    %v451 = vadd.f32 %v285, %v427
    %v452 = vadd.f32 %v288, %v430
    %v453 = vadd.f32 %v293, %v435
    %v454 = vadd.f32 %v296, %v438
    %v455 = vadd.f32 %v301, %v443
    %v456 = vadd.f32 %v304, %v446
    %s457 = sadd.s32 16, %s22
    %s458 = scalar_lea.vmem %s0, %s457
    %v459 = vld [vmem:[%s458] sm:$0xff]
    %v460 = vld [vmem:[%s458 + $0x10] sm:$0xff]
    %v461 = vld [vmem:[%s458 + $0x20] sm:$0xff]
    %v462 = vld [vmem:[%s458 + $0x30] sm:$0xff]
    %v463 = vld [vmem:[%s458 + $0x40] sm:$0xff]
    %v464 = vld [vmem:[%s458 + $0x50] sm:$0xff]
    %v465 = vld [vmem:[%s458 + $0x60] sm:$0xff]
    %v466 = vld [vmem:[%s458 + $0x70] sm:$0xff]
    %v467 = vpack.c.bf16 %v460, %v459
    %v468 = vpack.c.bf16 %v462, %v461
    %v469 = vpack.c.bf16 %v464, %v463
    %v470 = vpack.c.bf16 %v466, %v465
    %s471 = scalar_lea.vmem %s1, 192
    %v472 = vld [vmem:[%s471] sm:$0xf]
    %v473 = vld [vmem:[%s471 + $0x4] sm:$0xf]
    %v474 = vld [vmem:[%s471 + $0x8] sm:$0xf]
    %v475 = vld [vmem:[%s471 + $0xc] sm:$0xf]
    %v476 = vld [vmem:[%s471 + $0x10] sm:$0xf]
    %v477 = vld [vmem:[%s471 + $0x14] sm:$0xf]
    %v478 = vld [vmem:[%s471 + $0x18] sm:$0xf]
    %v479 = vld [vmem:[%s471 + $0x1c] sm:$0xf]
    %v480 = vld [vmem:[%s471 + $0x20] sm:$0xf]
    %v481 = vld [vmem:[%s471 + $0x24] sm:$0xf]
    %v482 = vld [vmem:[%s471 + $0x28] sm:$0xf]
    %v483 = vld [vmem:[%s471 + $0x2c] sm:$0xf]
    %v484 = vld [vmem:[%s471 + $0x30] sm:$0xf]
    %v485 = vld [vmem:[%s471 + $0x34] sm:$0xf]
    %v486 = vld [vmem:[%s471 + $0x38] sm:$0xf]
    %v487 = vld [vmem:[%s471 + $0x3c] sm:$0xf]
    %v504 = vunpack.c.l.b16 %v472
    %v505 = vunpack.c.l.b16 %v473
    %v506 = vunpack.c.l.b16 %v474
    %v507 = vunpack.c.l.b16 %v475
    %v508 = vunpack.c.l.b16 %v476
    %v509 = vunpack.c.l.b16 %v477
    %v510 = vunpack.c.l.b16 %v478
    %v511 = vunpack.c.l.b16 %v479
    %v512 = vunpack.c.l.b16 %v480
    %v513 = vunpack.c.l.b16 %v481
    %v514 = vunpack.c.l.b16 %v482
    %v515 = vunpack.c.l.b16 %v483
    %v516 = vunpack.c.l.b16 %v484
    %v517 = vunpack.c.l.b16 %v485
    %v518 = vunpack.c.l.b16 %v486
    %v519 = vunpack.c.l.b16 %v487
    %v520 = vpack.c.b16 %v505, %v504
    %v521 = vpack.c.b16 %v507, %v506
    %v522 = vpack.c.b16 %v509, %v508
    %v523 = vpack.c.b16 %v511, %v510
    %v524 = vpack.c.b16 %v513, %v512
    %v525 = vpack.c.b16 %v515, %v514
    %v526 = vpack.c.b16 %v517, %v516
    %v527 = vpack.c.b16 %v519, %v518
    %536 = vmatprep.subr.bf16.mxu0 0
    %537 = vmatpush1.bf16.msra.mxu0 %v520
    %538 = vmatprep.subr.bf16.mxu0 0
    %539 = vmatpush1.bf16.msra.mxu0 %v521
    %540 = vmatprep.subr.bf16.mxu0 0
    %541 = vmatpush1.bf16.msra.mxu0 %v522
    %542 = vmatprep.subr.bf16.mxu0 0
    %543 = vmatpush1.bf16.msra.mxu0 %v523
    %544 = vmatprep.subr.bf16.mxu0 0
    %545 = vmatpush1.bf16.msra.mxu0 %v524
    %546 = vmatprep.subr.bf16.mxu0 0
    %547 = vmatpush1.bf16.msra.mxu0 %v525
    %548 = vmatprep.subr.bf16.mxu0 0
    %549 = vmatpush1.bf16.msra.mxu0 %v526
    %550 = vmatprep.subr.bf16.mxu0 0
    %551 = vmatpush1.bf16.msra.mxu0 %v527
    %552 = vmatprep.subr.bf16.mxu0 0
    %553 = vmatpush1.bf16.msra.mxu0 0
    %554 = vmatprep.subr.bf16.mxu0 0
    %555 = vmatpush1.bf16.msra.mxu0 0
    %556 = vmatprep.subr.bf16.mxu0 0
    %557 = vmatpush1.bf16.msra.mxu0 0
    %558 = vmatprep.subr.bf16.mxu0 0
    %559 = vmatpush1.bf16.msra.mxu0 0
    %560 = vmatprep.subr.bf16.mxu0 0
    %561 = vmatpush1.bf16.msra.mxu0 0
    %562 = vmatprep.subr.bf16.mxu0 0
    %563 = vmatpush1.bf16.msra.mxu0 0
    %564 = vmatprep.subr.bf16.mxu0 0
    %565 = vmatpush1.bf16.msra.mxu0 0
    %566 = vmatprep.subr.bf16.mxu0 0
    %567 = vmatpush1.bf16.msra.mxu0 0
    %568 = vmatprep.mubr.bf16.mxu0 0
    %569 = vmatmul.mubr.bf16.gmra.mrb[0].mxu0 %v467
    %v570 = vpop.f32.mrb[0].mxu0
    %v571 = vadd.f32 0.0, %v570
    %v572 = vpop.f32.mrb[0].mxu0
    %v573 = vpop.f32.mrb[0].mxu0
    %v574 = vadd.f32 0.0, %v573
    %v575 = vpop.f32.mrb[0].mxu0
    %576 = vmatprep.mubr.bf16.mxu0 0
    %577 = vmatmul.mubr.bf16.gmra.mrb[0].mxu0 %v468
    %v578 = vpop.f32.mrb[0].mxu0
    %v579 = vadd.f32 0.0, %v578
    %v580 = vpop.f32.mrb[0].mxu0
    %v581 = vpop.f32.mrb[0].mxu0
    %v582 = vadd.f32 0.0, %v581
    %v583 = vpop.f32.mrb[0].mxu0
    %584 = vmatprep.mubr.bf16.mxu0 0
    %585 = vmatmul.mubr.bf16.gmra.mrb[0].mxu0 %v469
    %v586 = vpop.f32.mrb[0].mxu0
    %v587 = vadd.f32 0.0, %v586
    %v588 = vpop.f32.mrb[0].mxu0
    %v589 = vpop.f32.mrb[0].mxu0
    %v590 = vadd.f32 0.0, %v589
    %v591 = vpop.f32.mrb[0].mxu0
    %592 = vmatprep.mubr.bf16.mxu0 0
    %593 = vmatmul.mubr.bf16.gmra.mrb[0].mxu0 %v470
    %v594 = vpop.f32.mrb[0].mxu0
    %v595 = vadd.f32 0.0, %v594
    %v596 = vpop.f32.mrb[0].mxu0
    %v597 = vpop.f32.mrb[0].mxu0
    %v598 = vadd.f32 0.0, %v597
    %v599 = vpop.f32.mrb[0].mxu0
    %600 = vdwg.mxu0
    %v601 = vadd.f32 %v449, %v571
    %v602 = vadd.f32 %v450, %v574
    %v603 = vadd.f32 %v451, %v579
    %v604 = vadd.f32 %v452, %v582
    %v605 = vadd.f32 %v453, %v587
    %v606 = vadd.f32 %v454, %v590
    %v607 = vadd.f32 %v455, %v595
    %v608 = vadd.f32 %v456, %v598
    %v609 = vld [vmem:[%s458 + $0x1] sm:$0xff]
    %v610 = vld [vmem:[%s458 + $0x11] sm:$0xff]
    %v611 = vld [vmem:[%s458 + $0x21] sm:$0xff]
    %v612 = vld [vmem:[%s458 + $0x31] sm:$0xff]
    %v613 = vld [vmem:[%s458 + $0x41] sm:$0xff]
    %v614 = vld [vmem:[%s458 + $0x51] sm:$0xff]
    %v615 = vld [vmem:[%s458 + $0x61] sm:$0xff]
    %v616 = vld [vmem:[%s458 + $0x71] sm:$0xff]
    %v617 = vpack.c.bf16 %v610, %v609
    %v618 = vpack.c.bf16 %v612, %v611
    %v619 = vpack.c.bf16 %v614, %v613
    %v620 = vpack.c.bf16 %v616, %v615
    %s621 = scalar_lea.vmem %s1, 256
    %v622 = vld [vmem:[%s621] sm:$0xf]
    %v623 = vld [vmem:[%s621 + $0x4] sm:$0xf]
    %v624 = vld [vmem:[%s621 + $0x8] sm:$0xf]
    %v625 = vld [vmem:[%s621 + $0xc] sm:$0xf]
    %v626 = vld [vmem:[%s621 + $0x10] sm:$0xf]
    %v627 = vld [vmem:[%s621 + $0x14] sm:$0xf]
    %v628 = vld [vmem:[%s621 + $0x18] sm:$0xf]
    %v629 = vld [vmem:[%s621 + $0x1c] sm:$0xf]
    %v630 = vld [vmem:[%s621 + $0x20] sm:$0xf]
    %v631 = vld [vmem:[%s621 + $0x24] sm:$0xf]
    %v632 = vld [vmem:[%s621 + $0x28] sm:$0xf]
    %v633 = vld [vmem:[%s621 + $0x2c] sm:$0xf]
    %v634 = vld [vmem:[%s621 + $0x30] sm:$0xf]
    %v635 = vld [vmem:[%s621 + $0x34] sm:$0xf]
    %v636 = vld [vmem:[%s621 + $0x38] sm:$0xf]
    %v637 = vld [vmem:[%s621 + $0x3c] sm:$0xf]
    %v654 = vunpack.c.l.b16 %v622
    %v655 = vunpack.c.l.b16 %v623
    %v656 = vunpack.c.l.b16 %v624
    %v657 = vunpack.c.l.b16 %v625
    %v658 = vunpack.c.l.b16 %v626
    %v659 = vunpack.c.l.b16 %v627
    %v660 = vunpack.c.l.b16 %v628
    %v661 = vunpack.c.l.b16 %v629
    %v662 = vunpack.c.l.b16 %v630
    %v663 = vunpack.c.l.b16 %v631
    %v664 = vunpack.c.l.b16 %v632
    %v665 = vunpack.c.l.b16 %v633
    %v666 = vunpack.c.l.b16 %v634
    %v667 = vunpack.c.l.b16 %v635
    %v668 = vunpack.c.l.b16 %v636
    %v669 = vunpack.c.l.b16 %v637
    %v670 = vpack.c.b16 %v655, %v654
    %v671 = vpack.c.b16 %v657, %v656
    %v672 = vpack.c.b16 %v659, %v658
    %v673 = vpack.c.b16 %v661, %v660
    %v674 = vpack.c.b16 %v663, %v662
    %v675 = vpack.c.b16 %v665, %v664
    %v676 = vpack.c.b16 %v667, %v666
    %v677 = vpack.c.b16 %v669, %v668
    %686 = vmatprep.subr.bf16.mxu0 0
    %687 = vmatpush1.bf16.msra.mxu0 %v670
    %688 = vmatprep.subr.bf16.mxu0 0
    %689 = vmatpush1.bf16.msra.mxu0 %v671
    %690 = vmatprep.subr.bf16.mxu0 0
    %691 = vmatpush1.bf16.msra.mxu0 %v672
    %692 = vmatprep.subr.bf16.mxu0 0
    %693 = vmatpush1.bf16.msra.mxu0 %v673
    %694 = vmatprep.subr.bf16.mxu0 0
    %695 = vmatpush1.bf16.msra.mxu0 %v674
    %696 = vmatprep.subr.bf16.mxu0 0
    %697 = vmatpush1.bf16.msra.mxu0 %v675
    %698 = vmatprep.subr.bf16.mxu0 0
    %699 = vmatpush1.bf16.msra.mxu0 %v676
    %700 = vmatprep.subr.bf16.mxu0 0
    %701 = vmatpush1.bf16.msra.mxu0 %v677
    %702 = vmatprep.subr.bf16.mxu0 0
    %703 = vmatpush1.bf16.msra.mxu0 0
    %704 = vmatprep.subr.bf16.mxu0 0
    %705 = vmatpush1.bf16.msra.mxu0 0
    %706 = vmatprep.subr.bf16.mxu0 0
    %707 = vmatpush1.bf16.msra.mxu0 0
    %708 = vmatprep.subr.bf16.mxu0 0
    %709 = vmatpush1.bf16.msra.mxu0 0
    %710 = vmatprep.subr.bf16.mxu0 0
    %711 = vmatpush1.bf16.msra.mxu0 0
    %712 = vmatprep.subr.bf16.mxu0 0
    %713 = vmatpush1.bf16.msra.mxu0 0
    %714 = vmatprep.subr.bf16.mxu0 0
    %715 = vmatpush1.bf16.msra.mxu0 0
    %716 = vmatprep.subr.bf16.mxu0 0
    %717 = vmatpush1.bf16.msra.mxu0 0
    %718 = vmatprep.mubr.bf16.mxu0 0
    %719 = vmatmul.mubr.bf16.gmra.mrb[0].mxu0 %v617
    %v720 = vpop.f32.mrb[0].mxu0
    %v721 = vadd.f32 0.0, %v720
    %v722 = vpop.f32.mrb[0].mxu0
    %v723 = vpop.f32.mrb[0].mxu0
    %v724 = vadd.f32 0.0, %v723
    %v725 = vpop.f32.mrb[0].mxu0
    %726 = vmatprep.mubr.bf16.mxu0 0
    %727 = vmatmul.mubr.bf16.gmra.mrb[0].mxu0 %v618
    %v728 = vpop.f32.mrb[0].mxu0
    %v729 = vadd.f32 0.0, %v728
    %v730 = vpop.f32.mrb[0].mxu0
    %v731 = vpop.f32.mrb[0].mxu0
    %v732 = vadd.f32 0.0, %v731
    %v733 = vpop.f32.mrb[0].mxu0
    %734 = vmatprep.mubr.bf16.mxu0 0
    %735 = vmatmul.mubr.bf16.gmra.mrb[0].mxu0 %v619
    %v736 = vpop.f32.mrb[0].mxu0
    %v737 = vadd.f32 0.0, %v736
    %v738 = vpop.f32.mrb[0].mxu0
    %v739 = vpop.f32.mrb[0].mxu0
    %v740 = vadd.f32 0.0, %v739
    %v741 = vpop.f32.mrb[0].mxu0
    %742 = vmatprep.mubr.bf16.mxu0 0
    %743 = vmatmul.mubr.bf16.gmra.mrb[0].mxu0 %v620
    %v744 = vpop.f32.mrb[0].mxu0
    %v745 = vadd.f32 0.0, %v744
    %v746 = vpop.f32.mrb[0].mxu0
    %v747 = vpop.f32.mrb[0].mxu0
    %v748 = vadd.f32 0.0, %v747
    %v749 = vpop.f32.mrb[0].mxu0
    %750 = vdwg.mxu0
    %v751 = vadd.f32 %v601, %v721
    %v752 = vadd.f32 %v602, %v724
    %v753 = vadd.f32 %v603, %v729
    %v754 = vadd.f32 %v604, %v732
    %v755 = vadd.f32 %v605, %v737
    %v756 = vadd.f32 %v606, %v740
    %v757 = vadd.f32 %v607, %v745
    %v758 = vadd.f32 %v608, %v748
    %v759 = vld [vmem:[%s458 + $0x2] sm:$0xff]
    %v760 = vld [vmem:[%s458 + $0x12] sm:$0xff]
    %v761 = vld [vmem:[%s458 + $0x22] sm:$0xff]
    %v762 = vld [vmem:[%s458 + $0x32] sm:$0xff]
    %v763 = vld [vmem:[%s458 + $0x42] sm:$0xff]
    %v764 = vld [vmem:[%s458 + $0x52] sm:$0xff]
    %v765 = vld [vmem:[%s458 + $0x62] sm:$0xff]
    %v766 = vld [vmem:[%s458 + $0x72] sm:$0xff]
    %v767 = vpack.c.bf16 %v760, %v759
    %v768 = vpack.c.bf16 %v762, %v761
    %v769 = vpack.c.bf16 %v764, %v763
    %v770 = vpack.c.bf16 %v766, %v765
    %s771 = scalar_lea.vmem %s1, 320
    %v772 = vld [vmem:[%s771] sm:$0xf]
    %v773 = vld [vmem:[%s771 + $0x4] sm:$0xf]
    %v774 = vld [vmem:[%s771 + $0x8] sm:$0xf]
    %v775 = vld [vmem:[%s771 + $0xc] sm:$0xf]
    %v776 = vld [vmem:[%s771 + $0x10] sm:$0xf]
    %v777 = vld [vmem:[%s771 + $0x14] sm:$0xf]
    %v778 = vld [vmem:[%s771 + $0x18] sm:$0xf]
    %v779 = vld [vmem:[%s771 + $0x1c] sm:$0xf]
    %v780 = vld [vmem:[%s771 + $0x20] sm:$0xf]
    %v781 = vld [vmem:[%s771 + $0x24] sm:$0xf]
    %v782 = vld [vmem:[%s771 + $0x28] sm:$0xf]
    %v783 = vld [vmem:[%s771 + $0x2c] sm:$0xf]
    %v784 = vld [vmem:[%s771 + $0x30] sm:$0xf]
    %v785 = vld [vmem:[%s771 + $0x34] sm:$0xf]
    %v786 = vld [vmem:[%s771 + $0x38] sm:$0xf]
    %v787 = vld [vmem:[%s771 + $0x3c] sm:$0xf]
    %v804 = vunpack.c.l.b16 %v772
    %v805 = vunpack.c.l.b16 %v773
    %v806 = vunpack.c.l.b16 %v774
    %v807 = vunpack.c.l.b16 %v775
    %v808 = vunpack.c.l.b16 %v776
    %v809 = vunpack.c.l.b16 %v777
    %v810 = vunpack.c.l.b16 %v778
    %v811 = vunpack.c.l.b16 %v779
    %v812 = vunpack.c.l.b16 %v780
    %v813 = vunpack.c.l.b16 %v781
    %v814 = vunpack.c.l.b16 %v782
    %v815 = vunpack.c.l.b16 %v783
    %v816 = vunpack.c.l.b16 %v784
    %v817 = vunpack.c.l.b16 %v785
    %v818 = vunpack.c.l.b16 %v786
    %v819 = vunpack.c.l.b16 %v787
    %v820 = vpack.c.b16 %v805, %v804
    %v821 = vpack.c.b16 %v807, %v806
    %v822 = vpack.c.b16 %v809, %v808
    %v823 = vpack.c.b16 %v811, %v810
    %v824 = vpack.c.b16 %v813, %v812
    %v825 = vpack.c.b16 %v815, %v814
    %v826 = vpack.c.b16 %v817, %v816
    %v827 = vpack.c.b16 %v819, %v818
    %836 = vmatprep.subr.bf16.mxu0 0
    %837 = vmatpush1.bf16.msra.mxu0 %v820
    %838 = vmatprep.subr.bf16.mxu0 0
    %839 = vmatpush1.bf16.msra.mxu0 %v821
    %840 = vmatprep.subr.bf16.mxu0 0
    %841 = vmatpush1.bf16.msra.mxu0 %v822
    %842 = vmatprep.subr.bf16.mxu0 0
    %843 = vmatpush1.bf16.msra.mxu0 %v823
    %844 = vmatprep.subr.bf16.mxu0 0
    %845 = vmatpush1.bf16.msra.mxu0 %v824
    %846 = vmatprep.subr.bf16.mxu0 0
    %847 = vmatpush1.bf16.msra.mxu0 %v825
    %848 = vmatprep.subr.bf16.mxu0 0
    %849 = vmatpush1.bf16.msra.mxu0 %v826
    %850 = vmatprep.subr.bf16.mxu0 0
    %851 = vmatpush1.bf16.msra.mxu0 %v827
    %852 = vmatprep.subr.bf16.mxu0 0
    %853 = vmatpush1.bf16.msra.mxu0 0
    %854 = vmatprep.subr.bf16.mxu0 0
    %855 = vmatpush1.bf16.msra.mxu0 0
    %856 = vmatprep.subr.bf16.mxu0 0
    %857 = vmatpush1.bf16.msra.mxu0 0
    %858 = vmatprep.subr.bf16.mxu0 0
    %859 = vmatpush1.bf16.msra.mxu0 0
    %860 = vmatprep.subr.bf16.mxu0 0
    %861 = vmatpush1.bf16.msra.mxu0 0
    %862 = vmatprep.subr.bf16.mxu0 0
    %863 = vmatpush1.bf16.msra.mxu0 0
    %864 = vmatprep.subr.bf16.mxu0 0
    %865 = vmatpush1.bf16.msra.mxu0 0
    %866 = vmatprep.subr.bf16.mxu0 0
    %867 = vmatpush1.bf16.msra.mxu0 0
    %868 = vmatprep.mubr.bf16.mxu0 0
    %869 = vmatmul.mubr.bf16.gmra.mrb[0].mxu0 %v767
    %v870 = vpop.f32.mrb[0].mxu0
    %v871 = vadd.f32 0.0, %v870
    %v872 = vpop.f32.mrb[0].mxu0
    %v873 = vpop.f32.mrb[0].mxu0
    %v874 = vadd.f32 0.0, %v873
    %v875 = vpop.f32.mrb[0].mxu0
    %876 = vmatprep.mubr.bf16.mxu0 0
    %877 = vmatmul.mubr.bf16.gmra.mrb[0].mxu0 %v768
    %v878 = vpop.f32.mrb[0].mxu0
    %v879 = vadd.f32 0.0, %v878
    %v880 = vpop.f32.mrb[0].mxu0
    %v881 = vpop.f32.mrb[0].mxu0
    %v882 = vadd.f32 0.0, %v881
    %v883 = vpop.f32.mrb[0].mxu0
    %884 = vmatprep.mubr.bf16.mxu0 0
    %885 = vmatmul.mubr.bf16.gmra.mrb[0].mxu0 %v769
    %v886 = vpop.f32.mrb[0].mxu0
    %v887 = vadd.f32 0.0, %v886
    %v888 = vpop.f32.mrb[0].mxu0
    %v889 = vpop.f32.mrb[0].mxu0
    %v890 = vadd.f32 0.0, %v889
    %v891 = vpop.f32.mrb[0].mxu0
    %892 = vmatprep.mubr.bf16.mxu0 0
    %893 = vmatmul.mubr.bf16.gmra.mrb[0].mxu0 %v770
    %v894 = vpop.f32.mrb[0].mxu0
    %v895 = vadd.f32 0.0, %v894
    %v896 = vpop.f32.mrb[0].mxu0
    %v897 = vpop.f32.mrb[0].mxu0
    %v898 = vadd.f32 0.0, %v897
    %v899 = vpop.f32.mrb[0].mxu0
    %900 = vdwg.mxu0
    %v901 = vadd.f32 %v751, %v871
    %v902 = vadd.f32 %v752, %v874
    %v903 = vadd.f32 %v753, %v879
    %v904 = vadd.f32 %v754, %v882
    %v905 = vadd.f32 %v755, %v887
    %v906 = vadd.f32 %v756, %v890
    %v907 = vadd.f32 %v757, %v895
    %v908 = vadd.f32 %v758, %v898
    %s909 = sadd.s32 32, %s22
    %s910 = scalar_lea.vmem %s0, %s909
    %v911 = vld [vmem:[%s910] sm:$0xff]
    %v912 = vld [vmem:[%s910 + $0x10] sm:$0xff]
    %v913 = vld [vmem:[%s910 + $0x20] sm:$0xff]
    %v914 = vld [vmem:[%s910 + $0x30] sm:$0xff]
    %v915 = vld [vmem:[%s910 + $0x40] sm:$0xff]
    %v916 = vld [vmem:[%s910 + $0x50] sm:$0xff]
    %v917 = vld [vmem:[%s910 + $0x60] sm:$0xff]
    %v918 = vld [vmem:[%s910 + $0x70] sm:$0xff]
    %v919 = vpack.c.bf16 %v912, %v911
    %v920 = vpack.c.bf16 %v914, %v913
    %v921 = vpack.c.bf16 %v916, %v915
    %v922 = vpack.c.bf16 %v918, %v917
    %s923 = scalar_lea.vmem %s1, 384
    %v924 = vld [vmem:[%s923] sm:$0xf]
    %v925 = vld [vmem:[%s923 + $0x4] sm:$0xf]
    %v926 = vld [vmem:[%s923 + $0x8] sm:$0xf]
    %v927 = vld [vmem:[%s923 + $0xc] sm:$0xf]
    %v928 = vld [vmem:[%s923 + $0x10] sm:$0xf]
    %v929 = vld [vmem:[%s923 + $0x14] sm:$0xf]
    %v930 = vld [vmem:[%s923 + $0x18] sm:$0xf]
    %v931 = vld [vmem:[%s923 + $0x1c] sm:$0xf]
    %v932 = vld [vmem:[%s923 + $0x20] sm:$0xf]
    %v933 = vld [vmem:[%s923 + $0x24] sm:$0xf]
    %v934 = vld [vmem:[%s923 + $0x28] sm:$0xf]
    %v935 = vld [vmem:[%s923 + $0x2c] sm:$0xf]
    %v936 = vld [vmem:[%s923 + $0x30] sm:$0xf]
    %v937 = vld [vmem:[%s923 + $0x34] sm:$0xf]
    %v938 = vld [vmem:[%s923 + $0x38] sm:$0xf]
    %v939 = vld [vmem:[%s923 + $0x3c] sm:$0xf]
    %v956 = vunpack.c.l.b16 %v924
    %v957 = vunpack.c.l.b16 %v925
    %v958 = vunpack.c.l.b16 %v926
    %v959 = vunpack.c.l.b16 %v927
    %v960 = vunpack.c.l.b16 %v928
    %v961 = vunpack.c.l.b16 %v929
    %v962 = vunpack.c.l.b16 %v930
    %v963 = vunpack.c.l.b16 %v931
    %v964 = vunpack.c.l.b16 %v932
    %v965 = vunpack.c.l.b16 %v933
    %v966 = vunpack.c.l.b16 %v934
    %v967 = vunpack.c.l.b16 %v935
    %v968 = vunpack.c.l.b16 %v936
    %v969 = vunpack.c.l.b16 %v937
    %v970 = vunpack.c.l.b16 %v938
    %v971 = vunpack.c.l.b16 %v939
    %v972 = vpack.c.b16 %v957, %v956
    %v973 = vpack.c.b16 %v959, %v958
    %v974 = vpack.c.b16 %v961, %v960
    %v975 = vpack.c.b16 %v963, %v962
    %v976 = vpack.c.b16 %v965, %v964
    %v977 = vpack.c.b16 %v967, %v966
    %v978 = vpack.c.b16 %v969, %v968
    %v979 = vpack.c.b16 %v971, %v970
    %988 = vmatprep.subr.bf16.mxu0 0
    %989 = vmatpush1.bf16.msra.mxu0 %v972
    %990 = vmatprep.subr.bf16.mxu0 0
    %991 = vmatpush1.bf16.msra.mxu0 %v973
    %992 = vmatprep.subr.bf16.mxu0 0
    %993 = vmatpush1.bf16.msra.mxu0 %v974
    %994 = vmatprep.subr.bf16.mxu0 0
    %995 = vmatpush1.bf16.msra.mxu0 %v975
    %996 = vmatprep.subr.bf16.mxu0 0
    %997 = vmatpush1.bf16.msra.mxu0 %v976
    %998 = vmatprep.subr.bf16.mxu0 0
    %999 = vmatpush1.bf16.msra.mxu0 %v977
    %1000 = vmatprep.subr.bf16.mxu0 0
    %1001 = vmatpush1.bf16.msra.mxu0 %v978
    %1002 = vmatprep.subr.bf16.mxu0 0
    %1003 = vmatpush1.bf16.msra.mxu0 %v979
    %1004 = vmatprep.subr.bf16.mxu0 0
    %1005 = vmatpush1.bf16.msra.mxu0 0
    %1006 = vmatprep.subr.bf16.mxu0 0
    %1007 = vmatpush1.bf16.msra.mxu0 0
    %1008 = vmatprep.subr.bf16.mxu0 0
    %1009 = vmatpush1.bf16.msra.mxu0 0
    %1010 = vmatprep.subr.bf16.mxu0 0
    %1011 = vmatpush1.bf16.msra.mxu0 0
    %1012 = vmatprep.subr.bf16.mxu0 0
    %1013 = vmatpush1.bf16.msra.mxu0 0
    %1014 = vmatprep.subr.bf16.mxu0 0
    %1015 = vmatpush1.bf16.msra.mxu0 0
    %1016 = vmatprep.subr.bf16.mxu0 0
    %1017 = vmatpush1.bf16.msra.mxu0 0
    %1018 = vmatprep.subr.bf16.mxu0 0
    %1019 = vmatpush1.bf16.msra.mxu0 0
    %1020 = vmatprep.mubr.bf16.mxu0 0
    %1021 = vmatmul.mubr.bf16.gmra.mrb[0].mxu0 %v919
    %v1022 = vpop.f32.mrb[0].mxu0
    %v1023 = vadd.f32 0.0, %v1022
    %v1024 = vpop.f32.mrb[0].mxu0
    %v1025 = vpop.f32.mrb[0].mxu0
    %v1026 = vadd.f32 0.0, %v1025
    %v1027 = vpop.f32.mrb[0].mxu0
    %1028 = vmatprep.mubr.bf16.mxu0 0
    %1029 = vmatmul.mubr.bf16.gmra.mrb[0].mxu0 %v920
    %v1030 = vpop.f32.mrb[0].mxu0
    %v1031 = vadd.f32 0.0, %v1030
    %v1032 = vpop.f32.mrb[0].mxu0
    %v1033 = vpop.f32.mrb[0].mxu0
    %v1034 = vadd.f32 0.0, %v1033
    %v1035 = vpop.f32.mrb[0].mxu0
    %1036 = vmatprep.mubr.bf16.mxu0 0
    %1037 = vmatmul.mubr.bf16.gmra.mrb[0].mxu0 %v921
    %v1038 = vpop.f32.mrb[0].mxu0
    %v1039 = vadd.f32 0.0, %v1038
    %v1040 = vpop.f32.mrb[0].mxu0
    %v1041 = vpop.f32.mrb[0].mxu0
    %v1042 = vadd.f32 0.0, %v1041
    %v1043 = vpop.f32.mrb[0].mxu0
    %1044 = vmatprep.mubr.bf16.mxu0 0
    %1045 = vmatmul.mubr.bf16.gmra.mrb[0].mxu0 %v922
    %v1046 = vpop.f32.mrb[0].mxu0
    %v1047 = vadd.f32 0.0, %v1046
    %v1048 = vpop.f32.mrb[0].mxu0
    %v1049 = vpop.f32.mrb[0].mxu0
    %v1050 = vadd.f32 0.0, %v1049
    %v1051 = vpop.f32.mrb[0].mxu0
    %1052 = vdwg.mxu0
    %v1053 = vadd.f32 %v901, %v1023
    %v1054 = vadd.f32 %v902, %v1026
    %v1055 = vadd.f32 %v903, %v1031
    %v1056 = vadd.f32 %v904, %v1034
    %v1057 = vadd.f32 %v905, %v1039
    %v1058 = vadd.f32 %v906, %v1042
    %v1059 = vadd.f32 %v907, %v1047
    %v1060 = vadd.f32 %v908, %v1050
    %v1061 = vld [vmem:[%s910 + $0x1] sm:$0xff]
    %v1062 = vld [vmem:[%s910 + $0x11] sm:$0xff]
    %v1063 = vld [vmem:[%s910 + $0x21] sm:$0xff]
    %v1064 = vld [vmem:[%s910 + $0x31] sm:$0xff]
    %v1065 = vld [vmem:[%s910 + $0x41] sm:$0xff]
    %v1066 = vld [vmem:[%s910 + $0x51] sm:$0xff]
    %v1067 = vld [vmem:[%s910 + $0x61] sm:$0xff]
    %v1068 = vld [vmem:[%s910 + $0x71] sm:$0xff]
    %v1069 = vpack.c.bf16 %v1062, %v1061
    %v1070 = vpack.c.bf16 %v1064, %v1063
    %v1071 = vpack.c.bf16 %v1066, %v1065
    %v1072 = vpack.c.bf16 %v1068, %v1067
    %s1073 = scalar_lea.vmem %s1, 448
    %v1074 = vld [vmem:[%s1073] sm:$0xf]
    %v1075 = vld [vmem:[%s1073 + $0x4] sm:$0xf]
    %v1076 = vld [vmem:[%s1073 + $0x8] sm:$0xf]
    %v1077 = vld [vmem:[%s1073 + $0xc] sm:$0xf]
    %v1078 = vld [vmem:[%s1073 + $0x10] sm:$0xf]
    %v1079 = vld [vmem:[%s1073 + $0x14] sm:$0xf]
    %v1080 = vld [vmem:[%s1073 + $0x18] sm:$0xf]
    %v1081 = vld [vmem:[%s1073 + $0x1c] sm:$0xf]
    %v1082 = vld [vmem:[%s1073 + $0x20] sm:$0xf]
    %v1083 = vld [vmem:[%s1073 + $0x24] sm:$0xf]
    %v1084 = vld [vmem:[%s1073 + $0x28] sm:$0xf]
    %v1085 = vld [vmem:[%s1073 + $0x2c] sm:$0xf]
    %v1086 = vld [vmem:[%s1073 + $0x30] sm:$0xf]
    %v1087 = vld [vmem:[%s1073 + $0x34] sm:$0xf]
    %v1088 = vld [vmem:[%s1073 + $0x38] sm:$0xf]
    %v1089 = vld [vmem:[%s1073 + $0x3c] sm:$0xf]
    %v1106 = vunpack.c.l.b16 %v1074
    %v1107 = vunpack.c.l.b16 %v1075
    %v1108 = vunpack.c.l.b16 %v1076
    %v1109 = vunpack.c.l.b16 %v1077
    %v1110 = vunpack.c.l.b16 %v1078
    %v1111 = vunpack.c.l.b16 %v1079
    %v1112 = vunpack.c.l.b16 %v1080
    %v1113 = vunpack.c.l.b16 %v1081
    %v1114 = vunpack.c.l.b16 %v1082
    %v1115 = vunpack.c.l.b16 %v1083
    %v1116 = vunpack.c.l.b16 %v1084
    %v1117 = vunpack.c.l.b16 %v1085
    %v1118 = vunpack.c.l.b16 %v1086
    %v1119 = vunpack.c.l.b16 %v1087
    %v1120 = vunpack.c.l.b16 %v1088
    %v1121 = vunpack.c.l.b16 %v1089
    %v1122 = vpack.c.b16 %v1107, %v1106
    %v1123 = vpack.c.b16 %v1109, %v1108
    %v1124 = vpack.c.b16 %v1111, %v1110
    %v1125 = vpack.c.b16 %v1113, %v1112
    %v1126 = vpack.c.b16 %v1115, %v1114
    %v1127 = vpack.c.b16 %v1117, %v1116
    %v1128 = vpack.c.b16 %v1119, %v1118
    %v1129 = vpack.c.b16 %v1121, %v1120
    %1138 = vmatprep.subr.bf16.mxu0 0
    %1139 = vmatpush1.bf16.msra.mxu0 %v1122
    %1140 = vmatprep.subr.bf16.mxu0 0
    %1141 = vmatpush1.bf16.msra.mxu0 %v1123
    %1142 = vmatprep.subr.bf16.mxu0 0
    %1143 = vmatpush1.bf16.msra.mxu0 %v1124
    %1144 = vmatprep.subr.bf16.mxu0 0
    %1145 = vmatpush1.bf16.msra.mxu0 %v1125
    %1146 = vmatprep.subr.bf16.mxu0 0
    %1147 = vmatpush1.bf16.msra.mxu0 %v1126
    %1148 = vmatprep.subr.bf16.mxu0 0
    %1149 = vmatpush1.bf16.msra.mxu0 %v1127
    %1150 = vmatprep.subr.bf16.mxu0 0
    %1151 = vmatpush1.bf16.msra.mxu0 %v1128
    %1152 = vmatprep.subr.bf16.mxu0 0
    %1153 = vmatpush1.bf16.msra.mxu0 %v1129
    %1154 = vmatprep.subr.bf16.mxu0 0
    %1155 = vmatpush1.bf16.msra.mxu0 0
    %1156 = vmatprep.subr.bf16.mxu0 0
    %1157 = vmatpush1.bf16.msra.mxu0 0
    %1158 = vmatprep.subr.bf16.mxu0 0
    %1159 = vmatpush1.bf16.msra.mxu0 0
    %1160 = vmatprep.subr.bf16.mxu0 0
    %1161 = vmatpush1.bf16.msra.mxu0 0
    %1162 = vmatprep.subr.bf16.mxu0 0
    %1163 = vmatpush1.bf16.msra.mxu0 0
    %1164 = vmatprep.subr.bf16.mxu0 0
    %1165 = vmatpush1.bf16.msra.mxu0 0
    %1166 = vmatprep.subr.bf16.mxu0 0
    %1167 = vmatpush1.bf16.msra.mxu0 0
    %1168 = vmatprep.subr.bf16.mxu0 0
    %1169 = vmatpush1.bf16.msra.mxu0 0
    %1170 = vmatprep.mubr.bf16.mxu0 0
    %1171 = vmatmul.mubr.bf16.gmra.mrb[0].mxu0 %v1069
    %v1172 = vpop.f32.mrb[0].mxu0
    %v1173 = vadd.f32 0.0, %v1172
    %v1174 = vpop.f32.mrb[0].mxu0
    %v1175 = vpop.f32.mrb[0].mxu0
    %v1176 = vadd.f32 0.0, %v1175
    %v1177 = vpop.f32.mrb[0].mxu0
    %1178 = vmatprep.mubr.bf16.mxu0 0
    %1179 = vmatmul.mubr.bf16.gmra.mrb[0].mxu0 %v1070
    %v1180 = vpop.f32.mrb[0].mxu0
    %v1181 = vadd.f32 0.0, %v1180
    %v1182 = vpop.f32.mrb[0].mxu0
    %v1183 = vpop.f32.mrb[0].mxu0
    %v1184 = vadd.f32 0.0, %v1183
    %v1185 = vpop.f32.mrb[0].mxu0
    %1186 = vmatprep.mubr.bf16.mxu0 0
    %1187 = vmatmul.mubr.bf16.gmra.mrb[0].mxu0 %v1071
    %v1188 = vpop.f32.mrb[0].mxu0
    %v1189 = vadd.f32 0.0, %v1188
    %v1190 = vpop.f32.mrb[0].mxu0
    %v1191 = vpop.f32.mrb[0].mxu0
    %v1192 = vadd.f32 0.0, %v1191
    %v1193 = vpop.f32.mrb[0].mxu0
    %1194 = vmatprep.mubr.bf16.mxu0 0
    %1195 = vmatmul.mubr.bf16.gmra.mrb[0].mxu0 %v1072
    %v1196 = vpop.f32.mrb[0].mxu0
    %v1197 = vadd.f32 0.0, %v1196
    %v1198 = vpop.f32.mrb[0].mxu0
    %v1199 = vpop.f32.mrb[0].mxu0
    %v1200 = vadd.f32 0.0, %v1199
    %v1201 = vpop.f32.mrb[0].mxu0
    %1202 = vdwg.mxu0
    %v1203 = vadd.f32 %v1053, %v1173
    %v1204 = vadd.f32 %v1054, %v1176
    %v1205 = vadd.f32 %v1055, %v1181
    %v1206 = vadd.f32 %v1056, %v1184
    %v1207 = vadd.f32 %v1057, %v1189
    %v1208 = vadd.f32 %v1058, %v1192
    %v1209 = vadd.f32 %v1059, %v1197
    %v1210 = vadd.f32 %v1060, %v1200
    %v1211 = vld [vmem:[%s910 + $0x2] sm:$0xff]
    %v1212 = vld [vmem:[%s910 + $0x12] sm:$0xff]
    %v1213 = vld [vmem:[%s910 + $0x22] sm:$0xff]
    %v1214 = vld [vmem:[%s910 + $0x32] sm:$0xff]
    %v1215 = vld [vmem:[%s910 + $0x42] sm:$0xff]
    %v1216 = vld [vmem:[%s910 + $0x52] sm:$0xff]
    %v1217 = vld [vmem:[%s910 + $0x62] sm:$0xff]
    %v1218 = vld [vmem:[%s910 + $0x72] sm:$0xff]
    %v1219 = vpack.c.bf16 %v1212, %v1211
    %v1220 = vpack.c.bf16 %v1214, %v1213
    %v1221 = vpack.c.bf16 %v1216, %v1215
    %v1222 = vpack.c.bf16 %v1218, %v1217
    %s1223 = scalar_lea.vmem %s1, 512
    %v1224 = vld [vmem:[%s1223] sm:$0xf]
    %v1225 = vld [vmem:[%s1223 + $0x4] sm:$0xf]
    %v1226 = vld [vmem:[%s1223 + $0x8] sm:$0xf]
    %v1227 = vld [vmem:[%s1223 + $0xc] sm:$0xf]
    %v1228 = vld [vmem:[%s1223 + $0x10] sm:$0xf]
    %v1229 = vld [vmem:[%s1223 + $0x14] sm:$0xf]
    %v1230 = vld [vmem:[%s1223 + $0x18] sm:$0xf]
    %v1231 = vld [vmem:[%s1223 + $0x1c] sm:$0xf]
    %v1232 = vld [vmem:[%s1223 + $0x20] sm:$0xf]
    %v1233 = vld [vmem:[%s1223 + $0x24] sm:$0xf]
    %v1234 = vld [vmem:[%s1223 + $0x28] sm:$0xf]
    %v1235 = vld [vmem:[%s1223 + $0x2c] sm:$0xf]
    %v1236 = vld [vmem:[%s1223 + $0x30] sm:$0xf]
    %v1237 = vld [vmem:[%s1223 + $0x34] sm:$0xf]
    %v1238 = vld [vmem:[%s1223 + $0x38] sm:$0xf]
    %v1239 = vld [vmem:[%s1223 + $0x3c] sm:$0xf]
    %v1256 = vunpack.c.l.b16 %v1224
    %v1257 = vunpack.c.l.b16 %v1225
    %v1258 = vunpack.c.l.b16 %v1226
    %v1259 = vunpack.c.l.b16 %v1227
    %v1260 = vunpack.c.l.b16 %v1228
    %v1261 = vunpack.c.l.b16 %v1229
    %v1262 = vunpack.c.l.b16 %v1230
    %v1263 = vunpack.c.l.b16 %v1231
    %v1264 = vunpack.c.l.b16 %v1232
    %v1265 = vunpack.c.l.b16 %v1233
    %v1266 = vunpack.c.l.b16 %v1234
    %v1267 = vunpack.c.l.b16 %v1235
    %v1268 = vunpack.c.l.b16 %v1236
    %v1269 = vunpack.c.l.b16 %v1237
    %v1270 = vunpack.c.l.b16 %v1238
    %v1271 = vunpack.c.l.b16 %v1239
    %v1272 = vpack.c.b16 %v1257, %v1256
    %v1273 = vpack.c.b16 %v1259, %v1258
    %v1274 = vpack.c.b16 %v1261, %v1260
    %v1275 = vpack.c.b16 %v1263, %v1262
    %v1276 = vpack.c.b16 %v1265, %v1264
    %v1277 = vpack.c.b16 %v1267, %v1266
    %v1278 = vpack.c.b16 %v1269, %v1268
    %v1279 = vpack.c.b16 %v1271, %v1270
    %1288 = vmatprep.subr.bf16.mxu0 0
    %1289 = vmatpush1.bf16.msra.mxu0 %v1272
    %1290 = vmatprep.subr.bf16.mxu0 0
    %1291 = vmatpush1.bf16.msra.mxu0 %v1273
    %1292 = vmatprep.subr.bf16.mxu0 0
    %1293 = vmatpush1.bf16.msra.mxu0 %v1274
    %1294 = vmatprep.subr.bf16.mxu0 0
    %1295 = vmatpush1.bf16.msra.mxu0 %v1275
    %1296 = vmatprep.subr.bf16.mxu0 0
    %1297 = vmatpush1.bf16.msra.mxu0 %v1276
    %1298 = vmatprep.subr.bf16.mxu0 0
    %1299 = vmatpush1.bf16.msra.mxu0 %v1277
    %1300 = vmatprep.subr.bf16.mxu0 0
    %1301 = vmatpush1.bf16.msra.mxu0 %v1278
    %1302 = vmatprep.subr.bf16.mxu0 0
    %1303 = vmatpush1.bf16.msra.mxu0 %v1279
    %1304 = vmatprep.subr.bf16.mxu0 0
    %1305 = vmatpush1.bf16.msra.mxu0 0
    %1306 = vmatprep.subr.bf16.mxu0 0
    %1307 = vmatpush1.bf16.msra.mxu0 0
    %1308 = vmatprep.subr.bf16.mxu0 0
    %1309 = vmatpush1.bf16.msra.mxu0 0
    %1310 = vmatprep.subr.bf16.mxu0 0
    %1311 = vmatpush1.bf16.msra.mxu0 0
    %1312 = vmatprep.subr.bf16.mxu0 0
    %1313 = vmatpush1.bf16.msra.mxu0 0
    %1314 = vmatprep.subr.bf16.mxu0 0
    %1315 = vmatpush1.bf16.msra.mxu0 0
    %1316 = vmatprep.subr.bf16.mxu0 0
    %1317 = vmatpush1.bf16.msra.mxu0 0
    %1318 = vmatprep.subr.bf16.mxu0 0
    %1319 = vmatpush1.bf16.msra.mxu0 0
    %1320 = vmatprep.mubr.bf16.mxu0 0
    %1321 = vmatmul.mubr.bf16.gmra.mrb[0].mxu0 %v1219
    %v1322 = vpop.f32.mrb[0].mxu0
    %v1323 = vadd.f32 0.0, %v1322
    %v1324 = vpop.f32.mrb[0].mxu0
    %v1325 = vpop.f32.mrb[0].mxu0
    %v1326 = vadd.f32 0.0, %v1325
    %v1327 = vpop.f32.mrb[0].mxu0
    %1328 = vmatprep.mubr.bf16.mxu0 0
    %1329 = vmatmul.mubr.bf16.gmra.mrb[0].mxu0 %v1220
    %v1330 = vpop.f32.mrb[0].mxu0
    %v1331 = vadd.f32 0.0, %v1330
    %v1332 = vpop.f32.mrb[0].mxu0
    %v1333 = vpop.f32.mrb[0].mxu0
    %v1334 = vadd.f32 0.0, %v1333
    %v1335 = vpop.f32.mrb[0].mxu0
    %1336 = vmatprep.mubr.bf16.mxu0 0
    %1337 = vmatmul.mubr.bf16.gmra.mrb[0].mxu0 %v1221
    %v1338 = vpop.f32.mrb[0].mxu0
    %v1339 = vadd.f32 0.0, %v1338
    %v1340 = vpop.f32.mrb[0].mxu0
    %v1341 = vpop.f32.mrb[0].mxu0
    %v1342 = vadd.f32 0.0, %v1341
    %v1343 = vpop.f32.mrb[0].mxu0
    %1344 = vmatprep.mubr.bf16.mxu0 0
    %1345 = vmatmul.mubr.bf16.gmra.mrb[0].mxu0 %v1222
    %v1346 = vpop.f32.mrb[0].mxu0
    %v1347 = vadd.f32 0.0, %v1346
    %v1348 = vpop.f32.mrb[0].mxu0
    %v1349 = vpop.f32.mrb[0].mxu0
    %v1350 = vadd.f32 0.0, %v1349
    %v1351 = vpop.f32.mrb[0].mxu0
    %1352 = vdwg.mxu0
    %v1353 = vadd.f32 %v1203, %v1323
    %v1354 = vadd.f32 %v1204, %v1326
    %v1355 = vadd.f32 %v1205, %v1331
    %v1356 = vadd.f32 %v1206, %v1334
    %v1357 = vadd.f32 %v1207, %v1339
    %v1358 = vadd.f32 %v1208, %v1342
    %v1359 = vadd.f32 %v1209, %v1347
    %v1360 = vadd.f32 %v1210, %v1350
    %v1362 = vlaneseq
    %v1363 = vshrl.u32 %v1362, 7
    %v1364 = vsub.s32 0, %v1363
    %v1365 = vrot.slane %v15, %v1364
    %v1367 = vadd.f32 %v1353, %v1365
    %v1368 = vadd.f32 %v1354, %v1365
    %v1369 = vadd.f32 %v1355, %v1365
    %v1370 = vadd.f32 %v1356, %v1365
    %v1371 = vadd.f32 %v1357, %v1365
    %v1372 = vadd.f32 %v1358, %v1365
    %v1373 = vadd.f32 %v1359, %v1365
    %v1374 = vadd.f32 %v1360, %v1365
    %v1375 = vmax.f32 %v1367, 0.0
    %v1376 = vmax.f32 %v1368, 0.0
    %v1377 = vmax.f32 %v1369, 0.0
    %v1378 = vmax.f32 %v1370, 0.0
    %v1379 = vmax.f32 %v1371, 0.0
    %v1380 = vmax.f32 %v1372, 0.0
    %v1381 = vmax.f32 %v1373, 0.0
    %v1382 = vmax.f32 %v1374, 0.0
    %v1383 = vmax.f32 %v1375, %v1376
    %v1384 = vmax.f32 %v1377, %v1378
    %v1385 = vmax.f32 %v1379, %v1380
    %v1386 = vmax.f32 %v1381, %v1382
    %1387 = vst [vmem:[#allocation2] sm:$0xff] %v1383
    %1388 = vst [vmem:[#allocation2 + $0x8] sm:$0xff] %v1384
    %1389 = vst [vmem:[#allocation2 + $0x10] sm:$0xff] %v1385
    %1390 = vst [vmem:[#allocation2 + $0x18] sm:$0xff] %v1386
    %v1391 = vld [vmem:[#allocation2] ss:$2 sm:$0xff]
    %s1392 = scalar_lea.vmem [#allocation2], 16
    %v1393 = vld [vmem:[%s1392] ss:$2 sm:$0xff]
    %s1394 = scalar_lea.vmem [#allocation2], 1
    %v1395 = vld [vmem:[%s1394] ss:$2 sm:$0xff]
    %s1396 = scalar_lea.vmem [#allocation2], 17
    %v1397 = vld [vmem:[%s1396] ss:$2 sm:$0xff]
    %v1398 = vmax.f32 %v1391, %v1395
    %v1399 = vmax.f32 %v1393, %v1397
    %v1400 = vpack.c.bf16 %v1399, %v1398
    %v1402 = vunpack.c.l.b16 %v1400
    %v1403 = vunpack.c.h.b16 %v1400
    %v1404 = vpack.c.b16 %v1402, %v1402
    %v1405 = vpack.c.b16 %v1403, %v1403
    %s1408 = smul.u32 %s17, 2
    %s1409 = smul.addr %s1408, 4
    %s1410 = scalar_lea.vmem %s3, %s1409
    %1411 = vst [vmem:[%s1410] sm:$0xf] %v1404
    %1412 = vst [vmem:[%s1410 + $0x4] sm:$0xf] %v1405
  $region18: #{net_forward.7} parent=0 // loop_footer
    %s21 = sadd.s32 1, %s17
  $region19: #{net_forward.7} parent=0 // loop_footer_branch
    %16 = sbr.rel target = $region15
  $region20: #{net_forward.7} parent=0 // loop_exit
    _
  // Predicated region
  $region21: #{net_forward.7} parent=0 // pred_check
    _
  $region22: #{net_forward.7} parent=0 // pred_check_branch
    %1414 = sbr.rel (0) target = $region24
  $region23: #{net_forward.7} parent=0 // pred_region
    _
  $region24: #{net_forward.7} parent=0 // pred_fallthru
    _
  // Predicated region
  $region25: #{net_forward.7} parent=0 // pred_check
    _
  $region26: #{net_forward.7} parent=0 // pred_check_branch
    %1416 = sbr.rel (0) target = $region28
  $region27: #{net_forward.7} parent=0 // pred_region
    _
  $region28: #{net_forward.7} parent=0 // pred_fallthru
    _

// kernel: net_forward.6
$region0: #{net_forward.6}
  #allocation0 [shape = 'u32[]', space=smem, size = 0x4, offset = 0x4, fixed_abs, tag = 'smem constant byte address 0x4 - core index']
  #allocation1 [shape = 'u32[144,128]{1,0:T(1,128)}', space=vmem, size = 0x12000, scoped, tag = 'internal scratch']
  #allocation2 [shape = 'f32[64,128]{1,0:T(8,128)}', space=vmem, size = 0x8000, scoped, tag = 'scratch operand']
  %s0 = inlined_call_operand.vmem [shape: f32[2,18,18,128], index: 0, kind: input, shape index: {}]
  %s1 = inlined_call_operand.vmem [shape: bf16[9,128,128], index: 1, kind: input, shape index: {}]
  %s2 = inlined_call_operand.vmem [shape: f32[1,128], index: 2, kind: input, shape index: {}]
  %s3 = inlined_call_operand.vmem [shape: f32[2,64,128], index: 3, kind: output, shape index: {}]
  %s4 = sld [smem:[#allocation0]]
  $region29: #{net_forward.6} parent=0
    _
  %s6 = ssub.s32 1, %s4
  %s7 = scalar_select 0, %s6, %s4
  // Predicated region
  $region2: #{net_forward.6} parent=0 // pred_check
    _
  $region3: #{net_forward.6} parent=0 // pred_check_branch
    %9 = sbr.rel (0) target = $region5
  $region4: #{net_forward.6} parent=0 // pred_region
    _
  $region5: #{net_forward.6} parent=0 // pred_fallthru
    _
  // Predicated region
  $region6: #{net_forward.6} parent=0 // pred_check
    _
  $region7: #{net_forward.6} parent=0 // pred_check_branch
    %11 = sbr.rel (0) target = $region9
  $region8: #{net_forward.6} parent=0 // pred_region
    _
  $region9: #{net_forward.6} parent=0 // pred_fallthru
    _
  // Predicated region
  $region10: #{net_forward.6} parent=0 // pred_check
    _
  $region11: #{net_forward.6} parent=0 // pred_check_branch
    %13 = sbr.rel (0) target = $region13
  $region12: #{net_forward.6} parent=0 // pred_region
    _
  $region13: #{net_forward.6} parent=0 // pred_fallthru
    _
  %v15 = vld [vmem:[%s2] sm:$0x1]
  loop: start=0, step=1, limit=2
  $region14: #{net_forward.6} parent=0 // loop_pre_header
    _
  $region15: #{net_forward.6} parent=0 // loop_header
    %s17 = sphi 0, %s21
    %p18 = scmp.ge.s32.totalorder %s17, 2
  $region16: #{net_forward.6} parent=0 // loop_header_branch
    %20 = sbr.rel (%p18) target = $region20
  $region17: #{net_forward.6} parent=0 // loop_body
    %s22 = smul.u32 %s17, 432
    %s23 = scalar_lea.vmem %s0, %s22
    %v24 = vld [vmem:[%s23] sm:$0xff]
    %v25 = vld [vmem:[%s23 + $0x8] sm:$0xff]
    %v26 = vld [vmem:[%s23 + $0x18] sm:$0xff]
    %v27 = vld [vmem:[%s23 + $0x20] sm:$0xff]
    %v28 = vld [vmem:[%s23 + $0x30] sm:$0xff]
    %v29 = vld [vmem:[%s23 + $0x38] sm:$0xff]
    %v30 = vld [vmem:[%s23 + $0x48] sm:$0xff]
    %v31 = vld [vmem:[%s23 + $0x50] sm:$0xff]
    %v32 = vld [vmem:[%s23 + $0x60] sm:$0xff]
    %v33 = vld [vmem:[%s23 + $0x68] sm:$0xff]
    %v34 = vld [vmem:[%s23 + $0x78] sm:$0xff]
    %v35 = vld [vmem:[%s23 + $0x80] sm:$0xff]
    %v36 = vld [vmem:[%s23 + $0x90] sm:$0xff]
    %v37 = vld [vmem:[%s23 + $0x98] sm:$0xff]
    %v38 = vld [vmem:[%s23 + $0xa8] sm:$0xff]
    %v39 = vld [vmem:[%s23 + $0xb0] sm:$0xff]
    %v40 = vpack.c.bf16 %v25, %v24
    %v41 = vpack.c.bf16 %v27, %v26
    %v42 = vpack.c.bf16 %v29, %v28
    %v43 = vpack.c.bf16 %v31, %v30
    %v44 = vpack.c.bf16 %v33, %v32
    %v45 = vpack.c.bf16 %v35, %v34
    %v46 = vpack.c.bf16 %v37, %v36
    %v47 = vpack.c.bf16 %v39, %v38
    %v48 = vld [vmem:[%s1] sm:$0xf]
    %v49 = vld [vmem:[%s1 + $0x4] sm:$0xf]
    %v50 = vld [vmem:[%s1 + $0x8] sm:$0xf]
    %v51 = vld [vmem:[%s1 + $0xc] sm:$0xf]
    %v52 = vld [vmem:[%s1 + $0x10] sm:$0xf]
    %v53 = vld [vmem:[%s1 + $0x14] sm:$0xf]
    %v54 = vld [vmem:[%s1 + $0x18] sm:$0xf]
    %v55 = vld [vmem:[%s1 + $0x1c] sm:$0xf]
    %v56 = vld [vmem:[%s1 + $0x20] sm:$0xf]
    %v57 = vld [vmem:[%s1 + $0x24] sm:$0xf]
    %v58 = vld [vmem:[%s1 + $0x28] sm:$0xf]
    %v59 = vld [vmem:[%s1 + $0x2c] sm:$0xf]
    %v60 = vld [vmem:[%s1 + $0x30] sm:$0xf]
    %v61 = vld [vmem:[%s1 + $0x34] sm:$0xf]
    %v62 = vld [vmem:[%s1 + $0x38] sm:$0xf]
    %v63 = vld [vmem:[%s1 + $0x3c] sm:$0xf]
    %v64 = vld [vmem:[%s23 + $0x1] sm:$0xff]
    %v65 = vld [vmem:[%s23 + $0x9] sm:$0xff]
    %v66 = vld [vmem:[%s23 + $0x19] sm:$0xff]
    %v67 = vld [vmem:[%s23 + $0x21] sm:$0xff]
    %v68 = vld [vmem:[%s23 + $0x31] sm:$0xff]
    %v69 = vld [vmem:[%s23 + $0x39] sm:$0xff]
    %v70 = vld [vmem:[%s23 + $0x49] sm:$0xff]
    %v71 = vld [vmem:[%s23 + $0x51] sm:$0xff]
    %v72 = vld [vmem:[%s23 + $0x61] sm:$0xff]
    %v73 = vld [vmem:[%s23 + $0x69] sm:$0xff]
    %v74 = vld [vmem:[%s23 + $0x79] sm:$0xff]
    %v75 = vld [vmem:[%s23 + $0x81] sm:$0xff]
    %v76 = vld [vmem:[%s23 + $0x91] sm:$0xff]
    %v77 = vld [vmem:[%s23 + $0x99] sm:$0xff]
    %v78 = vld [vmem:[%s23 + $0xa9] sm:$0xff]
    %v79 = vld [vmem:[%s23 + $0xb1] sm:$0xff]
    %v80 = vpack.c.bf16 %v65, %v64
    %v81 = vpack.c.bf16 %v67, %v66
    %v82 = vpack.c.bf16 %v69, %v68
    %v83 = vpack.c.bf16 %v71, %v70
    %v84 = vpack.c.bf16 %v73, %v72
    %v85 = vpack.c.bf16 %v75, %v74
    %v86 = vpack.c.bf16 %v77, %v76
    %v87 = vpack.c.bf16 %v79, %v78
    %s88 = scalar_lea.vmem %s1, 64
    %v89 = vld [vmem:[%s88] sm:$0xf]
    %v90 = vld [vmem:[%s88 + $0x4] sm:$0xf]
    %v91 = vld [vmem:[%s88 + $0x8] sm:$0xf]
    %v92 = vld [vmem:[%s88 + $0xc] sm:$0xf]
    %v93 = vld [vmem:[%s88 + $0x10] sm:$0xf]
    %v94 = vld [vmem:[%s88 + $0x14] sm:$0xf]
    %v95 = vld [vmem:[%s88 + $0x18] sm:$0xf]
    %v96 = vld [vmem:[%s88 + $0x1c] sm:$0xf]
    %v97 = vld [vmem:[%s88 + $0x20] sm:$0xf]
    %v98 = vld [vmem:[%s88 + $0x24] sm:$0xf]
    %v99 = vld [vmem:[%s88 + $0x28] sm:$0xf]
    %v100 = vld [vmem:[%s88 + $0x2c] sm:$0xf]
    %v101 = vld [vmem:[%s88 + $0x30] sm:$0xf]
    %v102 = vld [vmem:[%s88 + $0x34] sm:$0xf]
    %v103 = vld [vmem:[%s88 + $0x38] sm:$0xf]
    %v104 = vld [vmem:[%s88 + $0x3c] sm:$0xf]
    %v121 = vunpack.c.l.b16 %v89
    %v122 = vunpack.c.l.b16 %v90
    %v123 = vunpack.c.l.b16 %v91
    %v124 = vunpack.c.l.b16 %v92
    %v125 = vunpack.c.l.b16 %v93
    %v126 = vunpack.c.l.b16 %v94
    %v127 = vunpack.c.l.b16 %v95
    %v128 = vunpack.c.l.b16 %v96
    %v129 = vunpack.c.l.b16 %v97
    %v130 = vunpack.c.l.b16 %v98
    %v131 = vunpack.c.l.b16 %v99
    %v132 = vunpack.c.l.b16 %v100
    %v133 = vunpack.c.l.b16 %v101
    %v134 = vunpack.c.l.b16 %v102
    %v135 = vunpack.c.l.b16 %v103
    %v136 = vunpack.c.l.b16 %v104
    %v137 = vpack.c.b16 %v122, %v121
    %v138 = vpack.c.b16 %v124, %v123
    %v139 = vpack.c.b16 %v126, %v125
    %v140 = vpack.c.b16 %v128, %v127
    %v141 = vpack.c.b16 %v130, %v129
    %v142 = vpack.c.b16 %v132, %v131
    %v143 = vpack.c.b16 %v134, %v133
    %v144 = vpack.c.b16 %v136, %v135
    %153 = vmatprep.subr.bf16.mxu0 0
    %154 = vmatpush1.bf16.msra.mxu0 %v137
    %155 = vmatprep.subr.bf16.mxu0 0
    %156 = vmatpush1.bf16.msra.mxu0 %v138
    %157 = vmatprep.subr.bf16.mxu0 0
    %158 = vmatpush1.bf16.msra.mxu0 %v139
    %159 = vmatprep.subr.bf16.mxu0 0
    %160 = vmatpush1.bf16.msra.mxu0 %v140
    %161 = vmatprep.subr.bf16.mxu0 0
    %162 = vmatpush1.bf16.msra.mxu0 %v141
    %163 = vmatprep.subr.bf16.mxu0 0
    %164 = vmatpush1.bf16.msra.mxu0 %v142
    %165 = vmatprep.subr.bf16.mxu0 0
    %166 = vmatpush1.bf16.msra.mxu0 %v143
    %167 = vmatprep.subr.bf16.mxu0 0
    %168 = vmatpush1.bf16.msra.mxu0 %v144
    %169 = vmatprep.subr.bf16.mxu0 0
    %170 = vmatpush1.bf16.msra.mxu0 0
    %171 = vmatprep.subr.bf16.mxu0 0
    %172 = vmatpush1.bf16.msra.mxu0 0
    %173 = vmatprep.subr.bf16.mxu0 0
    %174 = vmatpush1.bf16.msra.mxu0 0
    %175 = vmatprep.subr.bf16.mxu0 0
    %176 = vmatpush1.bf16.msra.mxu0 0
    %177 = vmatprep.subr.bf16.mxu0 0
    %178 = vmatpush1.bf16.msra.mxu0 0
    %179 = vmatprep.subr.bf16.mxu0 0
    %180 = vmatpush1.bf16.msra.mxu0 0
    %181 = vmatprep.subr.bf16.mxu0 0
    %182 = vmatpush1.bf16.msra.mxu0 0
    %183 = vmatprep.subr.bf16.mxu0 0
    %184 = vmatpush1.bf16.msra.mxu0 0
    %185 = vmatprep.mubr.bf16.mxu0 0
    %186 = vmatmul.mubr.bf16.gmra.mrb[0].mxu0 %v80
    %v187 = vpop.f32.mrb[0].mxu0
    %v188 = vadd.f32 0.0, %v187
    %v189 = vpop.f32.mrb[0].mxu0
    %v190 = vpop.f32.mrb[0].mxu0
    %v191 = vadd.f32 0.0, %v190
    %v192 = vpop.f32.mrb[0].mxu0
    %193 = vmatprep.mubr.bf16.mxu0 0
    %194 = vmatmul.mubr.bf16.gmra.mrb[0].mxu0 %v81
    %v195 = vpop.f32.mrb[0].mxu0
    %v196 = vadd.f32 0.0, %v195
    %v197 = vpop.f32.mrb[0].mxu0
    %v198 = vpop.f32.mrb[0].mxu0
    %v199 = vadd.f32 0.0, %v198
    %v200 = vpop.f32.mrb[0].mxu0
    %201 = vmatprep.mubr.bf16.mxu0 0
    %202 = vmatmul.mubr.bf16.gmra.mrb[0].mxu0 %v82
    %v203 = vpop.f32.mrb[0].mxu0
    %v204 = vadd.f32 0.0, %v203
    %v205 = vpop.f32.mrb[0].mxu0
    %v206 = vpop.f32.mrb[0].mxu0
    %v207 = vadd.f32 0.0, %v206
    %v208 = vpop.f32.mrb[0].mxu0
    %209 = vmatprep.mubr.bf16.mxu0 0
    %210 = vmatmul.mubr.bf16.gmra.mrb[0].mxu0 %v83
    %v211 = vpop.f32.mrb[0].mxu0
    %v212 = vadd.f32 0.0, %v211
    %v213 = vpop.f32.mrb[0].mxu0
    %v214 = vpop.f32.mrb[0].mxu0
    %v215 = vadd.f32 0.0, %v214
    %v216 = vpop.f32.mrb[0].mxu0
    %217 = vmatprep.mubr.bf16.mxu0 0
    %218 = vmatmul.mubr.bf16.gmra.mrb[0].mxu0 %v84
    %v219 = vpop.f32.mrb[0].mxu0
    %v220 = vadd.f32 0.0, %v219
    %v221 = vpop.f32.mrb[0].mxu0
    %v222 = vpop.f32.mrb[0].mxu0
    %v223 = vadd.f32 0.0, %v222
    %v224 = vpop.f32.mrb[0].mxu0
    %225 = vmatprep.mubr.bf16.mxu0 0
    %226 = vmatmul.mubr.bf16.gmra.mrb[0].mxu0 %v85
    %v227 = vpop.f32.mrb[0].mxu0
    %v228 = vadd.f32 0.0, %v227
    %v229 = vpop.f32.mrb[0].mxu0
    %v230 = vpop.f32.mrb[0].mxu0
    %v231 = vadd.f32 0.0, %v230
    %v232 = vpop.f32.mrb[0].mxu0
    %233 = vmatprep.mubr.bf16.mxu0 0
    %234 = vmatmul.mubr.bf16.gmra.mrb[0].mxu0 %v86
    %v235 = vpop.f32.mrb[0].mxu0
    %v236 = vadd.f32 0.0, %v235
    %v237 = vpop.f32.mrb[0].mxu0
    %v238 = vpop.f32.mrb[0].mxu0
    %v239 = vadd.f32 0.0, %v238
    %v240 = vpop.f32.mrb[0].mxu0
    %241 = vmatprep.mubr.bf16.mxu0 0
    %242 = vmatmul.mubr.bf16.gmra.mrb[0].mxu0 %v87
    %v243 = vpop.f32.mrb[0].mxu0
    %v244 = vadd.f32 0.0, %v243
    %v245 = vpop.f32.mrb[0].mxu0
    %v246 = vpop.f32.mrb[0].mxu0
    %v247 = vadd.f32 0.0, %v246
    %v248 = vpop.f32.mrb[0].mxu0
    %249 = vdwg.mxu0
    %v266 = vunpack.c.l.b16 %v48
    %v267 = vunpack.c.l.b16 %v49
    %v268 = vunpack.c.l.b16 %v50
    %v269 = vunpack.c.l.b16 %v51
    %v270 = vunpack.c.l.b16 %v52
    %v271 = vunpack.c.l.b16 %v53
    %v272 = vunpack.c.l.b16 %v54
    %v273 = vunpack.c.l.b16 %v55
    %v274 = vunpack.c.l.b16 %v56
    %v275 = vunpack.c.l.b16 %v57
    %v276 = vunpack.c.l.b16 %v58
    %v277 = vunpack.c.l.b16 %v59
    %v278 = vunpack.c.l.b16 %v60
    %v279 = vunpack.c.l.b16 %v61
    %v280 = vunpack.c.l.b16 %v62
    %v281 = vunpack.c.l.b16 %v63
    %v282 = vpack.c.b16 %v267, %v266
    %v283 = vpack.c.b16 %v269, %v268
    %v284 = vpack.c.b16 %v271, %v270
    %v285 = vpack.c.b16 %v273, %v272
    %v286 = vpack.c.b16 %v275, %v274
    %v287 = vpack.c.b16 %v277, %v276
    %v288 = vpack.c.b16 %v279, %v278
    %v289 = vpack.c.b16 %v281, %v280
    %298 = vmatprep.subr.bf16.mxu0 0
    %299 = vmatpush1.bf16.msra.mxu0 %v282
    %300 = vmatprep.subr.bf16.mxu0 0
    %301 = vmatpush1.bf16.msra.mxu0 %v283
    %302 = vmatprep.subr.bf16.mxu0 0
    %303 = vmatpush1.bf16.msra.mxu0 %v284
    %304 = vmatprep.subr.bf16.mxu0 0
    %305 = vmatpush1.bf16.msra.mxu0 %v285
    %306 = vmatprep.subr.bf16.mxu0 0
    %307 = vmatpush1.bf16.msra.mxu0 %v286
    %308 = vmatprep.subr.bf16.mxu0 0
    %309 = vmatpush1.bf16.msra.mxu0 %v287
    %310 = vmatprep.subr.bf16.mxu0 0
    %311 = vmatpush1.bf16.msra.mxu0 %v288
    %312 = vmatprep.subr.bf16.mxu0 0
    %313 = vmatpush1.bf16.msra.mxu0 %v289
    %314 = vmatprep.subr.bf16.mxu0 0
    %315 = vmatpush1.bf16.msra.mxu0 0
    %316 = vmatprep.subr.bf16.mxu0 0
    %317 = vmatpush1.bf16.msra.mxu0 0
    %318 = vmatprep.subr.bf16.mxu0 0
    %319 = vmatpush1.bf16.msra.mxu0 0
    %320 = vmatprep.subr.bf16.mxu0 0
    %321 = vmatpush1.bf16.msra.mxu0 0
    %322 = vmatprep.subr.bf16.mxu0 0
    %323 = vmatpush1.bf16.msra.mxu0 0
    %324 = vmatprep.subr.bf16.mxu0 0
    %325 = vmatpush1.bf16.msra.mxu0 0
    %326 = vmatprep.subr.bf16.mxu0 0
    %327 = vmatpush1.bf16.msra.mxu0 0
    %328 = vmatprep.subr.bf16.mxu0 0
    %329 = vmatpush1.bf16.msra.mxu0 0
    %330 = vmatprep.mubr.bf16.mxu0 0
    %331 = vmatmul.mubr.bf16.gmra.mrb[0].mxu0 %v40
    %v332 = vpop.f32.mrb[0].mxu0
    %v333 = vadd.f32 %v188, %v332
    %v334 = vpop.f32.mrb[0].mxu0
    %v335 = vpop.f32.mrb[0].mxu0
    %v336 = vadd.f32 %v191, %v335
    %v337 = vpop.f32.mrb[0].mxu0
    %338 = vmatprep.mubr.bf16.mxu0 0
    %339 = vmatmul.mubr.bf16.gmra.mrb[0].mxu0 %v41
    %v340 = vpop.f32.mrb[0].mxu0
    %v341 = vadd.f32 %v196, %v340
    %v342 = vpop.f32.mrb[0].mxu0
    %v343 = vpop.f32.mrb[0].mxu0
    %v344 = vadd.f32 %v199, %v343
    %v345 = vpop.f32.mrb[0].mxu0
    %346 = vmatprep.mubr.bf16.mxu0 0
    %347 = vmatmul.mubr.bf16.gmra.mrb[0].mxu0 %v42
    %v348 = vpop.f32.mrb[0].mxu0
    %v349 = vadd.f32 %v204, %v348
    %v350 = vpop.f32.mrb[0].mxu0
    %v351 = vpop.f32.mrb[0].mxu0
    %v352 = vadd.f32 %v207, %v351
    %v353 = vpop.f32.mrb[0].mxu0
    %354 = vmatprep.mubr.bf16.mxu0 0
    %355 = vmatmul.mubr.bf16.gmra.mrb[0].mxu0 %v43
    %v356 = vpop.f32.mrb[0].mxu0
    %v357 = vadd.f32 %v212, %v356
    %v358 = vpop.f32.mrb[0].mxu0
    %v359 = vpop.f32.mrb[0].mxu0
    %v360 = vadd.f32 %v215, %v359
    %v361 = vpop.f32.mrb[0].mxu0
    %362 = vmatprep.mubr.bf16.mxu0 0
    %363 = vmatmul.mubr.bf16.gmra.mrb[0].mxu0 %v44
    %v364 = vpop.f32.mrb[0].mxu0
    %v365 = vadd.f32 %v220, %v364
    %v366 = vpop.f32.mrb[0].mxu0
    %v367 = vpop.f32.mrb[0].mxu0
    %v368 = vadd.f32 %v223, %v367
    %v369 = vpop.f32.mrb[0].mxu0
    %370 = vmatprep.mubr.bf16.mxu0 0
    %371 = vmatmul.mubr.bf16.gmra.mrb[0].mxu0 %v45
    %v372 = vpop.f32.mrb[0].mxu0
    %v373 = vadd.f32 %v228, %v372
    %v374 = vpop.f32.mrb[0].mxu0
    %v375 = vpop.f32.mrb[0].mxu0
    %v376 = vadd.f32 %v231, %v375
    %v377 = vpop.f32.mrb[0].mxu0
    %378 = vmatprep.mubr.bf16.mxu0 0
    %379 = vmatmul.mubr.bf16.gmra.mrb[0].mxu0 %v46
    %v380 = vpop.f32.mrb[0].mxu0
    %v381 = vadd.f32 %v236, %v380
    %v382 = vpop.f32.mrb[0].mxu0
    %v383 = vpop.f32.mrb[0].mxu0
    %v384 = vadd.f32 %v239, %v383
    %v385 = vpop.f32.mrb[0].mxu0
    %386 = vmatprep.mubr.bf16.mxu0 0
    %387 = vmatmul.mubr.bf16.gmra.mrb[0].mxu0 %v47
    %v388 = vpop.f32.mrb[0].mxu0
    %v389 = vadd.f32 %v244, %v388
    %v390 = vpop.f32.mrb[0].mxu0
    %v391 = vpop.f32.mrb[0].mxu0
    %v392 = vadd.f32 %v247, %v391
    %v393 = vpop.f32.mrb[0].mxu0
    %394 = vdwg.mxu0
    %v395 = vld [vmem:[%s23 + $0x2] sm:$0xff]
    %v396 = vld [vmem:[%s23 + $0xa] sm:$0xff]
    %v397 = vld [vmem:[%s23 + $0x1a] sm:$0xff]
    %v398 = vld [vmem:[%s23 + $0x22] sm:$0xff]
    %v399 = vld [vmem:[%s23 + $0x32] sm:$0xff]
    %v400 = vld [vmem:[%s23 + $0x3a] sm:$0xff]
    %v401 = vld [vmem:[%s23 + $0x4a] sm:$0xff]
    %v402 = vld [vmem:[%s23 + $0x52] sm:$0xff]
    %v403 = vld [vmem:[%s23 + $0x62] sm:$0xff]
    %v404 = vld [vmem:[%s23 + $0x6a] sm:$0xff]
    %v405 = vld [vmem:[%s23 + $0x7a] sm:$0xff]
    %v406 = vld [vmem:[%s23 + $0x82] sm:$0xff]
    %v407 = vld [vmem:[%s23 + $0x92] sm:$0xff]
    %v408 = vld [vmem:[%s23 + $0x9a] sm:$0xff]
    %v409 = vld [vmem:[%s23 + $0xaa] sm:$0xff]
    %v410 = vld [vmem:[%s23 + $0xb2] sm:$0xff]
    %v411 = vpack.c.bf16 %v396, %v395
    %v412 = vpack.c.bf16 %v398, %v397
    %v413 = vpack.c.bf16 %v400, %v399
    %v414 = vpack.c.bf16 %v402, %v401
    %v415 = vpack.c.bf16 %v404, %v403
    %v416 = vpack.c.bf16 %v406, %v405
    %v417 = vpack.c.bf16 %v408, %v407
    %v418 = vpack.c.bf16 %v410, %v409
    %s419 = scalar_lea.vmem %s1, 128
    %v420 = vld [vmem:[%s419] sm:$0xf]
    %v421 = vld [vmem:[%s419 + $0x4] sm:$0xf]
    %v422 = vld [vmem:[%s419 + $0x8] sm:$0xf]
    %v423 = vld [vmem:[%s419 + $0xc] sm:$0xf]
    %v424 = vld [vmem:[%s419 + $0x10] sm:$0xf]
    %v425 = vld [vmem:[%s419 + $0x14] sm:$0xf]
    %v426 = vld [vmem:[%s419 + $0x18] sm:$0xf]
    %v427 = vld [vmem:[%s419 + $0x1c] sm:$0xf]
    %v428 = vld [vmem:[%s419 + $0x20] sm:$0xf]
    %v429 = vld [vmem:[%s419 + $0x24] sm:$0xf]
    %v430 = vld [vmem:[%s419 + $0x28] sm:$0xf]
    %v431 = vld [vmem:[%s419 + $0x2c] sm:$0xf]
    %v432 = vld [vmem:[%s419 + $0x30] sm:$0xf]
    %v433 = vld [vmem:[%s419 + $0x34] sm:$0xf]
    %v434 = vld [vmem:[%s419 + $0x38] sm:$0xf]
    %v435 = vld [vmem:[%s419 + $0x3c] sm:$0xf]
    %v452 = vunpack.c.l.b16 %v420
    %v453 = vunpack.c.l.b16 %v421
    %v454 = vunpack.c.l.b16 %v422
    %v455 = vunpack.c.l.b16 %v423
    %v456 = vunpack.c.l.b16 %v424
    %v457 = vunpack.c.l.b16 %v425
    %v458 = vunpack.c.l.b16 %v426
    %v459 = vunpack.c.l.b16 %v427
    %v460 = vunpack.c.l.b16 %v428
    %v461 = vunpack.c.l.b16 %v429
    %v462 = vunpack.c.l.b16 %v430
    %v463 = vunpack.c.l.b16 %v431
    %v464 = vunpack.c.l.b16 %v432
    %v465 = vunpack.c.l.b16 %v433
    %v466 = vunpack.c.l.b16 %v434
    %v467 = vunpack.c.l.b16 %v435
    %v468 = vpack.c.b16 %v453, %v452
    %v469 = vpack.c.b16 %v455, %v454
    %v470 = vpack.c.b16 %v457, %v456
    %v471 = vpack.c.b16 %v459, %v458
    %v472 = vpack.c.b16 %v461, %v460
    %v473 = vpack.c.b16 %v463, %v462
    %v474 = vpack.c.b16 %v465, %v464
    %v475 = vpack.c.b16 %v467, %v466
    %484 = vmatprep.subr.bf16.mxu0 0
    %485 = vmatpush1.bf16.msra.mxu0 %v468
    %486 = vmatprep.subr.bf16.mxu0 0
    %487 = vmatpush1.bf16.msra.mxu0 %v469
    %488 = vmatprep.subr.bf16.mxu0 0
    %489 = vmatpush1.bf16.msra.mxu0 %v470
    %490 = vmatprep.subr.bf16.mxu0 0
    %491 = vmatpush1.bf16.msra.mxu0 %v471
    %492 = vmatprep.subr.bf16.mxu0 0
    %493 = vmatpush1.bf16.msra.mxu0 %v472
    %494 = vmatprep.subr.bf16.mxu0 0
    %495 = vmatpush1.bf16.msra.mxu0 %v473
    %496 = vmatprep.subr.bf16.mxu0 0
    %497 = vmatpush1.bf16.msra.mxu0 %v474
    %498 = vmatprep.subr.bf16.mxu0 0
    %499 = vmatpush1.bf16.msra.mxu0 %v475
    %500 = vmatprep.subr.bf16.mxu0 0
    %501 = vmatpush1.bf16.msra.mxu0 0
    %502 = vmatprep.subr.bf16.mxu0 0
    %503 = vmatpush1.bf16.msra.mxu0 0
    %504 = vmatprep.subr.bf16.mxu0 0
    %505 = vmatpush1.bf16.msra.mxu0 0
    %506 = vmatprep.subr.bf16.mxu0 0
    %507 = vmatpush1.bf16.msra.mxu0 0
    %508 = vmatprep.subr.bf16.mxu0 0
    %509 = vmatpush1.bf16.msra.mxu0 0
    %510 = vmatprep.subr.bf16.mxu0 0
    %511 = vmatpush1.bf16.msra.mxu0 0
    %512 = vmatprep.subr.bf16.mxu0 0
    %513 = vmatpush1.bf16.msra.mxu0 0
    %514 = vmatprep.subr.bf16.mxu0 0
    %515 = vmatpush1.bf16.msra.mxu0 0
    %516 = vmatprep.mubr.bf16.mxu0 0
    %517 = vmatmul.mubr.bf16.gmra.mrb[0].mxu0 %v411
    %v518 = vpop.f32.mrb[0].mxu0
    %v519 = vadd.f32 0.0, %v518
    %v520 = vpop.f32.mrb[0].mxu0
    %v521 = vpop.f32.mrb[0].mxu0
    %v522 = vadd.f32 0.0, %v521
    %v523 = vpop.f32.mrb[0].mxu0
    %524 = vmatprep.mubr.bf16.mxu0 0
    %525 = vmatmul.mubr.bf16.gmra.mrb[0].mxu0 %v412
    %v526 = vpop.f32.mrb[0].mxu0
    %v527 = vadd.f32 0.0, %v526
    %v528 = vpop.f32.mrb[0].mxu0
    %v529 = vpop.f32.mrb[0].mxu0
    %v530 = vadd.f32 0.0, %v529
    %v531 = vpop.f32.mrb[0].mxu0
    %532 = vmatprep.mubr.bf16.mxu0 0
    %533 = vmatmul.mubr.bf16.gmra.mrb[0].mxu0 %v413
    %v534 = vpop.f32.mrb[0].mxu0
    %v535 = vadd.f32 0.0, %v534
    %v536 = vpop.f32.mrb[0].mxu0
    %v537 = vpop.f32.mrb[0].mxu0
    %v538 = vadd.f32 0.0, %v537
    %v539 = vpop.f32.mrb[0].mxu0
    %540 = vmatprep.mubr.bf16.mxu0 0
    %541 = vmatmul.mubr.bf16.gmra.mrb[0].mxu0 %v414
    %v542 = vpop.f32.mrb[0].mxu0
    %v543 = vadd.f32 0.0, %v542
    %v544 = vpop.f32.mrb[0].mxu0
    %v545 = vpop.f32.mrb[0].mxu0
    %v546 = vadd.f32 0.0, %v545
    %v547 = vpop.f32.mrb[0].mxu0
    %548 = vmatprep.mubr.bf16.mxu0 0
    %549 = vmatmul.mubr.bf16.gmra.mrb[0].mxu0 %v415
    %v550 = vpop.f32.mrb[0].mxu0
    %v551 = vadd.f32 0.0, %v550
    %v552 = vpop.f32.mrb[0].mxu0
    %v553 = vpop.f32.mrb[0].mxu0
    %v554 = vadd.f32 0.0, %v553
    %v555 = vpop.f32.mrb[0].mxu0
    %556 = vmatprep.mubr.bf16.mxu0 0
    %557 = vmatmul.mubr.bf16.gmra.mrb[0].mxu0 %v416
    %v558 = vpop.f32.mrb[0].mxu0
    %v559 = vadd.f32 0.0, %v558
    %v560 = vpop.f32.mrb[0].mxu0
    %v561 = vpop.f32.mrb[0].mxu0
    %v562 = vadd.f32 0.0, %v561
    %v563 = vpop.f32.mrb[0].mxu0
    %564 = vmatprep.mubr.bf16.mxu0 0
    %565 = vmatmul.mubr.bf16.gmra.mrb[0].mxu0 %v417
    %v566 = vpop.f32.mrb[0].mxu0
    %v567 = vadd.f32 0.0, %v566
    %v568 = vpop.f32.mrb[0].mxu0
    %v569 = vpop.f32.mrb[0].mxu0
    %v570 = vadd.f32 0.0, %v569
    %v571 = vpop.f32.mrb[0].mxu0
    %572 = vmatprep.mubr.bf16.mxu0 0
    %573 = vmatmul.mubr.bf16.gmra.mrb[0].mxu0 %v418
    %v574 = vpop.f32.mrb[0].mxu0
    %v575 = vadd.f32 0.0, %v574
    %v576 = vpop.f32.mrb[0].mxu0
    %v577 = vpop.f32.mrb[0].mxu0
    %v578 = vadd.f32 0.0, %v577
    %v579 = vpop.f32.mrb[0].mxu0
    %580 = vdwg.mxu0
    %v581 = vadd.f32 %v333, %v519
    %v582 = vadd.f32 %v336, %v522
    %v583 = vadd.f32 %v341, %v527
    %v584 = vadd.f32 %v344, %v530
    %v585 = vadd.f32 %v349, %v535
    %v586 = vadd.f32 %v352, %v538
    %v587 = vadd.f32 %v357, %v543
    %v588 = vadd.f32 %v360, %v546
    %v589 = vadd.f32 %v365, %v551
    %v590 = vadd.f32 %v368, %v554
    %v591 = vadd.f32 %v373, %v559
    %v592 = vadd.f32 %v376, %v562
    %v593 = vadd.f32 %v381, %v567
    %v594 = vadd.f32 %v384, %v570
    %v595 = vadd.f32 %v389, %v575
    %v596 = vadd.f32 %v392, %v578
    %s597 = sadd.s32 24, %s22
    %s598 = scalar_lea.vmem %s0, %s597
    %v599 = vld [vmem:[%s598] sm:$0xff]
    %v600 = vld [vmem:[%s598 + $0x8] sm:$0xff]
    %v601 = vld [vmem:[%s598 + $0x18] sm:$0xff]
    %v602 = vld [vmem:[%s598 + $0x20] sm:$0xff]
    %v603 = vld [vmem:[%s598 + $0x30] sm:$0xff]
    %v604 = vld [vmem:[%s598 + $0x38] sm:$0xff]
    %v605 = vld [vmem:[%s598 + $0x48] sm:$0xff]
    %v606 = vld [vmem:[%s598 + $0x50] sm:$0xff]
    %v607 = vld [vmem:[%s598 + $0x60] sm:$0xff]
    %v608 = vld [vmem:[%s598 + $0x68] sm:$0xff]
    %v609 = vld [vmem:[%s598 + $0x78] sm:$0xff]
    %v610 = vld [vmem:[%s598 + $0x80] sm:$0xff]
    %v611 = vld [vmem:[%s598 + $0x90] sm:$0xff]
    %v612 = vld [vmem:[%s598 + $0x98] sm:$0xff]
    %v613 = vld [vmem:[%s598 + $0xa8] sm:$0xff]
    %v614 = vld [vmem:[%s598 + $0xb0] sm:$0xff]
    %v615 = vpack.c.bf16 %v600, %v599
    %v616 = vpack.c.bf16 %v602, %v601
    %v617 = vpack.c.bf16 %v604, %v603
    %v618 = vpack.c.bf16 %v606, %v605
    %v619 = vpack.c.bf16 %v608, %v607
    %v620 = vpack.c.bf16 %v610, %v609
    %v621 = vpack.c.bf16 %v612, %v611
    %v622 = vpack.c.bf16 %v614, %v613
    %s623 = scalar_lea.vmem %s1, 192
    %v624 = vld [vmem:[%s623] sm:$0xf]
    %v625 = vld [vmem:[%s623 + $0x4] sm:$0xf]
    %v626 = vld [vmem:[%s623 + $0x8] sm:$0xf]
    %v627 = vld [vmem:[%s623 + $0xc] sm:$0xf]
    %v628 = vld [vmem:[%s623 + $0x10] sm:$0xf]
    %v629 = vld [vmem:[%s623 + $0x14] sm:$0xf]
    %v630 = vld [vmem:[%s623 + $0x18] sm:$0xf]
    %v631 = vld [vmem:[%s623 + $0x1c] sm:$0xf]
    %v632 = vld [vmem:[%s623 + $0x20] sm:$0xf]
    %v633 = vld [vmem:[%s623 + $0x24] sm:$0xf]
    %v634 = vld [vmem:[%s623 + $0x28] sm:$0xf]
    %v635 = vld [vmem:[%s623 + $0x2c] sm:$0xf]
    %v636 = vld [vmem:[%s623 + $0x30] sm:$0xf]
    %v637 = vld [vmem:[%s623 + $0x34] sm:$0xf]
    %v638 = vld [vmem:[%s623 + $0x38] sm:$0xf]
    %v639 = vld [vmem:[%s623 + $0x3c] sm:$0xf]
    %v656 = vunpack.c.l.b16 %v624
    %v657 = vunpack.c.l.b16 %v625
    %v658 = vunpack.c.l.b16 %v626
    %v659 = vunpack.c.l.b16 %v627
    %v660 = vunpack.c.l.b16 %v628
    %v661 = vunpack.c.l.b16 %v629
    %v662 = vunpack.c.l.b16 %v630
    %v663 = vunpack.c.l.b16 %v631
    %v664 = vunpack.c.l.b16 %v632
    %v665 = vunpack.c.l.b16 %v633
    %v666 = vunpack.c.l.b16 %v634
    %v667 = vunpack.c.l.b16 %v635
    %v668 = vunpack.c.l.b16 %v636
    %v669 = vunpack.c.l.b16 %v637
    %v670 = vunpack.c.l.b16 %v638
    %v671 = vunpack.c.l.b16 %v639
    %v672 = vpack.c.b16 %v657, %v656
    %v673 = vpack.c.b16 %v659, %v658
    %v674 = vpack.c.b16 %v661, %v660
    %v675 = vpack.c.b16 %v663, %v662
    %v676 = vpack.c.b16 %v665, %v664
    %v677 = vpack.c.b16 %v667, %v666
    %v678 = vpack.c.b16 %v669, %v668
    %v679 = vpack.c.b16 %v671, %v670
    %688 = vmatprep.subr.bf16.mxu0 0
    %689 = vmatpush1.bf16.msra.mxu0 %v672
    %690 = vmatprep.subr.bf16.mxu0 0
    %691 = vmatpush1.bf16.msra.mxu0 %v673
    %692 = vmatprep.subr.bf16.mxu0 0
    %693 = vmatpush1.bf16.msra.mxu0 %v674
    %694 = vmatprep.subr.bf16.mxu0 0
    %695 = vmatpush1.bf16.msra.mxu0 %v675
    %696 = vmatprep.subr.bf16.mxu0 0
    %697 = vmatpush1.bf16.msra.mxu0 %v676
    %698 = vmatprep.subr.bf16.mxu0 0
    %699 = vmatpush1.bf16.msra.mxu0 %v677
    %700 = vmatprep.subr.bf16.mxu0 0
    %701 = vmatpush1.bf16.msra.mxu0 %v678
    %702 = vmatprep.subr.bf16.mxu0 0
    %703 = vmatpush1.bf16.msra.mxu0 %v679
    %704 = vmatprep.subr.bf16.mxu0 0
    %705 = vmatpush1.bf16.msra.mxu0 0
    %706 = vmatprep.subr.bf16.mxu0 0
    %707 = vmatpush1.bf16.msra.mxu0 0
    %708 = vmatprep.subr.bf16.mxu0 0
    %709 = vmatpush1.bf16.msra.mxu0 0
    %710 = vmatprep.subr.bf16.mxu0 0
    %711 = vmatpush1.bf16.msra.mxu0 0
    %712 = vmatprep.subr.bf16.mxu0 0
    %713 = vmatpush1.bf16.msra.mxu0 0
    %714 = vmatprep.subr.bf16.mxu0 0
    %715 = vmatpush1.bf16.msra.mxu0 0
    %716 = vmatprep.subr.bf16.mxu0 0
    %717 = vmatpush1.bf16.msra.mxu0 0
    %718 = vmatprep.subr.bf16.mxu0 0
    %719 = vmatpush1.bf16.msra.mxu0 0
    %720 = vmatprep.mubr.bf16.mxu0 0
    %721 = vmatmul.mubr.bf16.gmra.mrb[0].mxu0 %v615
    %v722 = vpop.f32.mrb[0].mxu0
    %v723 = vadd.f32 0.0, %v722
    %v724 = vpop.f32.mrb[0].mxu0
    %v725 = vpop.f32.mrb[0].mxu0
    %v726 = vadd.f32 0.0, %v725
    %v727 = vpop.f32.mrb[0].mxu0
    %728 = vmatprep.mubr.bf16.mxu0 0
    %729 = vmatmul.mubr.bf16.gmra.mrb[0].mxu0 %v616
    %v730 = vpop.f32.mrb[0].mxu0
    %v731 = vadd.f32 0.0, %v730
    %v732 = vpop.f32.mrb[0].mxu0
    %v733 = vpop.f32.mrb[0].mxu0
    %v734 = vadd.f32 0.0, %v733
    %v735 = vpop.f32.mrb[0].mxu0
    %736 = vmatprep.mubr.bf16.mxu0 0
    %737 = vmatmul.mubr.bf16.gmra.mrb[0].mxu0 %v617
    %v738 = vpop.f32.mrb[0].mxu0
    %v739 = vadd.f32 0.0, %v738
    %v740 = vpop.f32.mrb[0].mxu0
    %v741 = vpop.f32.mrb[0].mxu0
    %v742 = vadd.f32 0.0, %v741
    %v743 = vpop.f32.mrb[0].mxu0
    %744 = vmatprep.mubr.bf16.mxu0 0
    %745 = vmatmul.mubr.bf16.gmra.mrb[0].mxu0 %v618
    %v746 = vpop.f32.mrb[0].mxu0
    %v747 = vadd.f32 0.0, %v746
    %v748 = vpop.f32.mrb[0].mxu0
    %v749 = vpop.f32.mrb[0].mxu0
    %v750 = vadd.f32 0.0, %v749
    %v751 = vpop.f32.mrb[0].mxu0
    %752 = vmatprep.mubr.bf16.mxu0 0
    %753 = vmatmul.mubr.bf16.gmra.mrb[0].mxu0 %v619
    %v754 = vpop.f32.mrb[0].mxu0
    %v755 = vadd.f32 0.0, %v754
    %v756 = vpop.f32.mrb[0].mxu0
    %v757 = vpop.f32.mrb[0].mxu0
    %v758 = vadd.f32 0.0, %v757
    %v759 = vpop.f32.mrb[0].mxu0
    %760 = vmatprep.mubr.bf16.mxu0 0
    %761 = vmatmul.mubr.bf16.gmra.mrb[0].mxu0 %v620
    %v762 = vpop.f32.mrb[0].mxu0
    %v763 = vadd.f32 0.0, %v762
    %v764 = vpop.f32.mrb[0].mxu0
    %v765 = vpop.f32.mrb[0].mxu0
    %v766 = vadd.f32 0.0, %v765
    %v767 = vpop.f32.mrb[0].mxu0
    %768 = vmatprep.mubr.bf16.mxu0 0
    %769 = vmatmul.mubr.bf16.gmra.mrb[0].mxu0 %v621
    %v770 = vpop.f32.mrb[0].mxu0
    %v771 = vadd.f32 0.0, %v770
    %v772 = vpop.f32.mrb[0].mxu0
    %v773 = vpop.f32.mrb[0].mxu0
    %v774 = vadd.f32 0.0, %v773
    %v775 = vpop.f32.mrb[0].mxu0
    %776 = vmatprep.mubr.bf16.mxu0 0
    %777 = vmatmul.mubr.bf16.gmra.mrb[0].mxu0 %v622
    %v778 = vpop.f32.mrb[0].mxu0
    %v779 = vadd.f32 0.0, %v778
    %v780 = vpop.f32.mrb[0].mxu0
    %v781 = vpop.f32.mrb[0].mxu0
    %v782 = vadd.f32 0.0, %v781
    %v783 = vpop.f32.mrb[0].mxu0
    %784 = vdwg.mxu0
    %v785 = vadd.f32 %v581, %v723
    %v786 = vadd.f32 %v582, %v726
    %v787 = vadd.f32 %v583, %v731
    %v788 = vadd.f32 %v584, %v734
    %v789 = vadd.f32 %v585, %v739
    %v790 = vadd.f32 %v586, %v742
    %v791 = vadd.f32 %v587, %v747
    %v792 = vadd.f32 %v588, %v750
    %v793 = vadd.f32 %v589, %v755
    %v794 = vadd.f32 %v590, %v758
    %v795 = vadd.f32 %v591, %v763
    %v796 = vadd.f32 %v592, %v766
    %v797 = vadd.f32 %v593, %v771
    %v798 = vadd.f32 %v594, %v774
    %v799 = vadd.f32 %v595, %v779
    %v800 = vadd.f32 %v596, %v782
    %v801 = vld [vmem:[%s598 + $0x1] sm:$0xff]
    %v802 = vld [vmem:[%s598 + $0x9] sm:$0xff]
    %v803 = vld [vmem:[%s598 + $0x19] sm:$0xff]
    %v804 = vld [vmem:[%s598 + $0x21] sm:$0xff]
    %v805 = vld [vmem:[%s598 + $0x31] sm:$0xff]
    %v806 = vld [vmem:[%s598 + $0x39] sm:$0xff]
    %v807 = vld [vmem:[%s598 + $0x49] sm:$0xff]
    %v808 = vld [vmem:[%s598 + $0x51] sm:$0xff]
    %v809 = vld [vmem:[%s598 + $0x61] sm:$0xff]
    %v810 = vld [vmem:[%s598 + $0x69] sm:$0xff]
    %v811 = vld [vmem:[%s598 + $0x79] sm:$0xff]
    %v812 = vld [vmem:[%s598 + $0x81] sm:$0xff]
    %v813 = vld [vmem:[%s598 + $0x91] sm:$0xff]
    %v814 = vld [vmem:[%s598 + $0x99] sm:$0xff]
    %v815 = vld [vmem:[%s598 + $0xa9] sm:$0xff]
    %v816 = vld [vmem:[%s598 + $0xb1] sm:$0xff]
    %v817 = vpack.c.bf16 %v802, %v801
    %v818 = vpack.c.bf16 %v804, %v803
    %v819 = vpack.c.bf16 %v806, %v805
    %v820 = vpack.c.bf16 %v808, %v807
    %v821 = vpack.c.bf16 %v810, %v809
    %v822 = vpack.c.bf16 %v812, %v811
    %v823 = vpack.c.bf16 %v814, %v813
    %v824 = vpack.c.bf16 %v816, %v815
    %s825 = scalar_lea.vmem %s1, 256
    %v826 = vld [vmem:[%s825] sm:$0xf]
    %v827 = vld [vmem:[%s825 + $0x4] sm:$0xf]
    %v828 = vld [vmem:[%s825 + $0x8] sm:$0xf]
    %v829 = vld [vmem:[%s825 + $0xc] sm:$0xf]
    %v830 = vld [vmem:[%s825 + $0x10] sm:$0xf]
    %v831 = vld [vmem:[%s825 + $0x14] sm:$0xf]
    %v832 = vld [vmem:[%s825 + $0x18] sm:$0xf]
    %v833 = vld [vmem:[%s825 + $0x1c] sm:$0xf]
    %v834 = vld [vmem:[%s825 + $0x20] sm:$0xf]
    %v835 = vld [vmem:[%s825 + $0x24] sm:$0xf]
    %v836 = vld [vmem:[%s825 + $0x28] sm:$0xf]
    %v837 = vld [vmem:[%s825 + $0x2c] sm:$0xf]
    %v838 = vld [vmem:[%s825 + $0x30] sm:$0xf]
    %v839 = vld [vmem:[%s825 + $0x34] sm:$0xf]
    %v840 = vld [vmem:[%s825 + $0x38] sm:$0xf]
    %v841 = vld [vmem:[%s825 + $0x3c] sm:$0xf]
    %v858 = vunpack.c.l.b16 %v826
    %v859 = vunpack.c.l.b16 %v827
    %v860 = vunpack.c.l.b16 %v828
    %v861 = vunpack.c.l.b16 %v829
    %v862 = vunpack.c.l.b16 %v830
    %v863 = vunpack.c.l.b16 %v831
    %v864 = vunpack.c.l.b16 %v832
    %v865 = vunpack.c.l.b16 %v833
    %v866 = vunpack.c.l.b16 %v834
    %v867 = vunpack.c.l.b16 %v835
    %v868 = vunpack.c.l.b16 %v836
    %v869 = vunpack.c.l.b16 %v837
    %v870 = vunpack.c.l.b16 %v838
    %v871 = vunpack.c.l.b16 %v839
    %v872 = vunpack.c.l.b16 %v840
    %v873 = vunpack.c.l.b16 %v841
    %v874 = vpack.c.b16 %v859, %v858
    %v875 = vpack.c.b16 %v861, %v860
    %v876 = vpack.c.b16 %v863, %v862
    %v877 = vpack.c.b16 %v865, %v864
    %v878 = vpack.c.b16 %v867, %v866
    %v879 = vpack.c.b16 %v869, %v868
    %v880 = vpack.c.b16 %v871, %v870
    %v881 = vpack.c.b16 %v873, %v872
    %890 = vmatprep.subr.bf16.mxu0 0
    %891 = vmatpush1.bf16.msra.mxu0 %v874
    %892 = vmatprep.subr.bf16.mxu0 0
    %893 = vmatpush1.bf16.msra.mxu0 %v875
    %894 = vmatprep.subr.bf16.mxu0 0
    %895 = vmatpush1.bf16.msra.mxu0 %v876
    %896 = vmatprep.subr.bf16.mxu0 0
    %897 = vmatpush1.bf16.msra.mxu0 %v877
    %898 = vmatprep.subr.bf16.mxu0 0
    %899 = vmatpush1.bf16.msra.mxu0 %v878
    %900 = vmatprep.subr.bf16.mxu0 0
    %901 = vmatpush1.bf16.msra.mxu0 %v879
    %902 = vmatprep.subr.bf16.mxu0 0
    %903 = vmatpush1.bf16.msra.mxu0 %v880
    %904 = vmatprep.subr.bf16.mxu0 0
    %905 = vmatpush1.bf16.msra.mxu0 %v881
    %906 = vmatprep.subr.bf16.mxu0 0
    %907 = vmatpush1.bf16.msra.mxu0 0
    %908 = vmatprep.subr.bf16.mxu0 0
    %909 = vmatpush1.bf16.msra.mxu0 0
    %910 = vmatprep.subr.bf16.mxu0 0
    %911 = vmatpush1.bf16.msra.mxu0 0
    %912 = vmatprep.subr.bf16.mxu0 0
    %913 = vmatpush1.bf16.msra.mxu0 0
    %914 = vmatprep.subr.bf16.mxu0 0
    %915 = vmatpush1.bf16.msra.mxu0 0
    %916 = vmatprep.subr.bf16.mxu0 0
    %917 = vmatpush1.bf16.msra.mxu0 0
    %918 = vmatprep.subr.bf16.mxu0 0
    %919 = vmatpush1.bf16.msra.mxu0 0
    %920 = vmatprep.subr.bf16.mxu0 0
    %921 = vmatpush1.bf16.msra.mxu0 0
    %922 = vmatprep.mubr.bf16.mxu0 0
    %923 = vmatmul.mubr.bf16.gmra.mrb[0].mxu0 %v817
    %v924 = vpop.f32.mrb[0].mxu0
    %v925 = vadd.f32 0.0, %v924
    %v926 = vpop.f32.mrb[0].mxu0
    %v927 = vpop.f32.mrb[0].mxu0
    %v928 = vadd.f32 0.0, %v927
    %v929 = vpop.f32.mrb[0].mxu0
    %930 = vmatprep.mubr.bf16.mxu0 0
    %931 = vmatmul.mubr.bf16.gmra.mrb[0].mxu0 %v818
    %v932 = vpop.f32.mrb[0].mxu0
    %v933 = vadd.f32 0.0, %v932
    %v934 = vpop.f32.mrb[0].mxu0
    %v935 = vpop.f32.mrb[0].mxu0
    %v936 = vadd.f32 0.0, %v935
    %v937 = vpop.f32.mrb[0].mxu0
    %938 = vmatprep.mubr.bf16.mxu0 0
    %939 = vmatmul.mubr.bf16.gmra.mrb[0].mxu0 %v819
    %v940 = vpop.f32.mrb[0].mxu0
    %v941 = vadd.f32 0.0, %v940
    %v942 = vpop.f32.mrb[0].mxu0
    %v943 = vpop.f32.mrb[0].mxu0
    %v944 = vadd.f32 0.0, %v943
    %v945 = vpop.f32.mrb[0].mxu0
    %946 = vmatprep.mubr.bf16.mxu0 0
    %947 = vmatmul.mubr.bf16.gmra.mrb[0].mxu0 %v820
    %v948 = vpop.f32.mrb[0].mxu0
    %v949 = vadd.f32 0.0, %v948
    %v950 = vpop.f32.mrb[0].mxu0
    %v951 = vpop.f32.mrb[0].mxu0
    %v952 = vadd.f32 0.0, %v951
    %v953 = vpop.f32.mrb[0].mxu0
    %954 = vmatprep.mubr.bf16.mxu0 0
    %955 = vmatmul.mubr.bf16.gmra.mrb[0].mxu0 %v821
    %v956 = vpop.f32.mrb[0].mxu0
    %v957 = vadd.f32 0.0, %v956
    %v958 = vpop.f32.mrb[0].mxu0
    %v959 = vpop.f32.mrb[0].mxu0
    %v960 = vadd.f32 0.0, %v959
    %v961 = vpop.f32.mrb[0].mxu0
    %962 = vmatprep.mubr.bf16.mxu0 0
    %963 = vmatmul.mubr.bf16.gmra.mrb[0].mxu0 %v822
    %v964 = vpop.f32.mrb[0].mxu0
    %v965 = vadd.f32 0.0, %v964
    %v966 = vpop.f32.mrb[0].mxu0
    %v967 = vpop.f32.mrb[0].mxu0
    %v968 = vadd.f32 0.0, %v967
    %v969 = vpop.f32.mrb[0].mxu0
    %970 = vmatprep.mubr.bf16.mxu0 0
    %971 = vmatmul.mubr.bf16.gmra.mrb[0].mxu0 %v823
    %v972 = vpop.f32.mrb[0].mxu0
    %v973 = vadd.f32 0.0, %v972
    %v974 = vpop.f32.mrb[0].mxu0
    %v975 = vpop.f32.mrb[0].mxu0
    %v976 = vadd.f32 0.0, %v975
    %v977 = vpop.f32.mrb[0].mxu0
    %978 = vmatprep.mubr.bf16.mxu0 0
    %979 = vmatmul.mubr.bf16.gmra.mrb[0].mxu0 %v824
    %v980 = vpop.f32.mrb[0].mxu0
    %v981 = vadd.f32 0.0, %v980
    %v982 = vpop.f32.mrb[0].mxu0
    %v983 = vpop.f32.mrb[0].mxu0
    %v984 = vadd.f32 0.0, %v983
    %v985 = vpop.f32.mrb[0].mxu0
    %986 = vdwg.mxu0
    %v987 = vadd.f32 %v785, %v925
    %v988 = vadd.f32 %v786, %v928
    %v989 = vadd.f32 %v787, %v933
    %v990 = vadd.f32 %v788, %v936
    %v991 = vadd.f32 %v789, %v941
    %v992 = vadd.f32 %v790, %v944
    %v993 = vadd.f32 %v791, %v949
    %v994 = vadd.f32 %v792, %v952
    %v995 = vadd.f32 %v793, %v957
    %v996 = vadd.f32 %v794, %v960
    %v997 = vadd.f32 %v795, %v965
    %v998 = vadd.f32 %v796, %v968
    %v999 = vadd.f32 %v797, %v973
    %v1000 = vadd.f32 %v798, %v976
    %v1001 = vadd.f32 %v799, %v981
    %v1002 = vadd.f32 %v800, %v984
    %v1003 = vld [vmem:[%s598 + $0x2] sm:$0xff]
    %v1004 = vld [vmem:[%s598 + $0xa] sm:$0xff]
    %v1005 = vld [vmem:[%s598 + $0x1a] sm:$0xff]
    %v1006 = vld [vmem:[%s598 + $0x22] sm:$0xff]
    %v1007 = vld [vmem:[%s598 + $0x32] sm:$0xff]
    %v1008 = vld [vmem:[%s598 + $0x3a] sm:$0xff]
    %v1009 = vld [vmem:[%s598 + $0x4a] sm:$0xff]
    %v1010 = vld [vmem:[%s598 + $0x52] sm:$0xff]
    %v1011 = vld [vmem:[%s598 + $0x62] sm:$0xff]
    %v1012 = vld [vmem:[%s598 + $0x6a] sm:$0xff]
    %v1013 = vld [vmem:[%s598 + $0x7a] sm:$0xff]
    %v1014 = vld [vmem:[%s598 + $0x82] sm:$0xff]
    %v1015 = vld [vmem:[%s598 + $0x92] sm:$0xff]
    %v1016 = vld [vmem:[%s598 + $0x9a] sm:$0xff]
    %v1017 = vld [vmem:[%s598 + $0xaa] sm:$0xff]
    %v1018 = vld [vmem:[%s598 + $0xb2] sm:$0xff]
    %v1019 = vpack.c.bf16 %v1004, %v1003
    %v1020 = vpack.c.bf16 %v1006, %v1005
    %v1021 = vpack.c.bf16 %v1008, %v1007
    %v1022 = vpack.c.bf16 %v1010, %v1009
    %v1023 = vpack.c.bf16 %v1012, %v1011
    %v1024 = vpack.c.bf16 %v1014, %v1013
    %v1025 = vpack.c.bf16 %v1016, %v1015
    %v1026 = vpack.c.bf16 %v1018, %v1017
    %s1027 = scalar_lea.vmem %s1, 320
    %v1028 = vld [vmem:[%s1027] sm:$0xf]
    %v1029 = vld [vmem:[%s1027 + $0x4] sm:$0xf]
    %v1030 = vld [vmem:[%s1027 + $0x8] sm:$0xf]
    %v1031 = vld [vmem:[%s1027 + $0xc] sm:$0xf]
    %v1032 = vld [vmem:[%s1027 + $0x10] sm:$0xf]
    %v1033 = vld [vmem:[%s1027 + $0x14] sm:$0xf]
    %v1034 = vld [vmem:[%s1027 + $0x18] sm:$0xf]
    %v1035 = vld [vmem:[%s1027 + $0x1c] sm:$0xf]
    %v1036 = vld [vmem:[%s1027 + $0x20] sm:$0xf]
    %v1037 = vld [vmem:[%s1027 + $0x24] sm:$0xf]
    %v1038 = vld [vmem:[%s1027 + $0x28] sm:$0xf]
    %v1039 = vld [vmem:[%s1027 + $0x2c] sm:$0xf]
    %v1040 = vld [vmem:[%s1027 + $0x30] sm:$0xf]
    %v1041 = vld [vmem:[%s1027 + $0x34] sm:$0xf]
    %v1042 = vld [vmem:[%s1027 + $0x38] sm:$0xf]
    %v1043 = vld [vmem:[%s1027 + $0x3c] sm:$0xf]
    %v1060 = vunpack.c.l.b16 %v1028
    %v1061 = vunpack.c.l.b16 %v1029
    %v1062 = vunpack.c.l.b16 %v1030
    %v1063 = vunpack.c.l.b16 %v1031
    %v1064 = vunpack.c.l.b16 %v1032
    %v1065 = vunpack.c.l.b16 %v1033
    %v1066 = vunpack.c.l.b16 %v1034
    %v1067 = vunpack.c.l.b16 %v1035
    %v1068 = vunpack.c.l.b16 %v1036
    %v1069 = vunpack.c.l.b16 %v1037
    %v1070 = vunpack.c.l.b16 %v1038
    %v1071 = vunpack.c.l.b16 %v1039
    %v1072 = vunpack.c.l.b16 %v1040
    %v1073 = vunpack.c.l.b16 %v1041
    %v1074 = vunpack.c.l.b16 %v1042
    %v1075 = vunpack.c.l.b16 %v1043
    %v1076 = vpack.c.b16 %v1061, %v1060
    %v1077 = vpack.c.b16 %v1063, %v1062
    %v1078 = vpack.c.b16 %v1065, %v1064
    %v1079 = vpack.c.b16 %v1067, %v1066
    %v1080 = vpack.c.b16 %v1069, %v1068
    %v1081 = vpack.c.b16 %v1071, %v1070
    %v1082 = vpack.c.b16 %v1073, %v1072
    %v1083 = vpack.c.b16 %v1075, %v1074
    %1092 = vmatprep.subr.bf16.mxu0 0
    %1093 = vmatpush1.bf16.msra.mxu0 %v1076
    %1094 = vmatprep.subr.bf16.mxu0 0
    %1095 = vmatpush1.bf16.msra.mxu0 %v1077
    %1096 = vmatprep.subr.bf16.mxu0 0
    %1097 = vmatpush1.bf16.msra.mxu0 %v1078
    %1098 = vmatprep.subr.bf16.mxu0 0
    %1099 = vmatpush1.bf16.msra.mxu0 %v1079
    %1100 = vmatprep.subr.bf16.mxu0 0
    %1101 = vmatpush1.bf16.msra.mxu0 %v1080
    %1102 = vmatprep.subr.bf16.mxu0 0
    %1103 = vmatpush1.bf16.msra.mxu0 %v1081
    %1104 = vmatprep.subr.bf16.mxu0 0
    %1105 = vmatpush1.bf16.msra.mxu0 %v1082
    %1106 = vmatprep.subr.bf16.mxu0 0
    %1107 = vmatpush1.bf16.msra.mxu0 %v1083
    %1108 = vmatprep.subr.bf16.mxu0 0
    %1109 = vmatpush1.bf16.msra.mxu0 0
    %1110 = vmatprep.subr.bf16.mxu0 0
    %1111 = vmatpush1.bf16.msra.mxu0 0
    %1112 = vmatprep.subr.bf16.mxu0 0
    %1113 = vmatpush1.bf16.msra.mxu0 0
    %1114 = vmatprep.subr.bf16.mxu0 0
    %1115 = vmatpush1.bf16.msra.mxu0 0
    %1116 = vmatprep.subr.bf16.mxu0 0
    %1117 = vmatpush1.bf16.msra.mxu0 0
    %1118 = vmatprep.subr.bf16.mxu0 0
    %1119 = vmatpush1.bf16.msra.mxu0 0
    %1120 = vmatprep.subr.bf16.mxu0 0
    %1121 = vmatpush1.bf16.msra.mxu0 0
    %1122 = vmatprep.subr.bf16.mxu0 0
    %1123 = vmatpush1.bf16.msra.mxu0 0
    %1124 = vmatprep.mubr.bf16.mxu0 0
    %1125 = vmatmul.mubr.bf16.gmra.mrb[0].mxu0 %v1019
    %v1126 = vpop.f32.mrb[0].mxu0
    %v1127 = vadd.f32 0.0, %v1126
    %v1128 = vpop.f32.mrb[0].mxu0
    %v1129 = vpop.f32.mrb[0].mxu0
    %v1130 = vadd.f32 0.0, %v1129
    %v1131 = vpop.f32.mrb[0].mxu0
    %1132 = vmatprep.mubr.bf16.mxu0 0
    %1133 = vmatmul.mubr.bf16.gmra.mrb[0].mxu0 %v1020
    %v1134 = vpop.f32.mrb[0].mxu0
    %v1135 = vadd.f32 0.0, %v1134
    %v1136 = vpop.f32.mrb[0].mxu0
    %v1137 = vpop.f32.mrb[0].mxu0
    %v1138 = vadd.f32 0.0, %v1137
    %v1139 = vpop.f32.mrb[0].mxu0
    %1140 = vmatprep.mubr.bf16.mxu0 0
    %1141 = vmatmul.mubr.bf16.gmra.mrb[0].mxu0 %v1021
    %v1142 = vpop.f32.mrb[0].mxu0
    %v1143 = vadd.f32 0.0, %v1142
    %v1144 = vpop.f32.mrb[0].mxu0
    %v1145 = vpop.f32.mrb[0].mxu0
    %v1146 = vadd.f32 0.0, %v1145
    %v1147 = vpop.f32.mrb[0].mxu0
    %1148 = vmatprep.mubr.bf16.mxu0 0
    %1149 = vmatmul.mubr.bf16.gmra.mrb[0].mxu0 %v1022
    %v1150 = vpop.f32.mrb[0].mxu0
    %v1151 = vadd.f32 0.0, %v1150
    %v1152 = vpop.f32.mrb[0].mxu0
    %v1153 = vpop.f32.mrb[0].mxu0
    %v1154 = vadd.f32 0.0, %v1153
    %v1155 = vpop.f32.mrb[0].mxu0
    %1156 = vmatprep.mubr.bf16.mxu0 0
    %1157 = vmatmul.mubr.bf16.gmra.mrb[0].mxu0 %v1023
    %v1158 = vpop.f32.mrb[0].mxu0
    %v1159 = vadd.f32 0.0, %v1158
    %v1160 = vpop.f32.mrb[0].mxu0
    %v1161 = vpop.f32.mrb[0].mxu0
    %v1162 = vadd.f32 0.0, %v1161
    %v1163 = vpop.f32.mrb[0].mxu0
    %1164 = vmatprep.mubr.bf16.mxu0 0
    %1165 = vmatmul.mubr.bf16.gmra.mrb[0].mxu0 %v1024
    %v1166 = vpop.f32.mrb[0].mxu0
    %v1167 = vadd.f32 0.0, %v1166
    %v1168 = vpop.f32.mrb[0].mxu0
    %v1169 = vpop.f32.mrb[0].mxu0
    %v1170 = vadd.f32 0.0, %v1169
    %v1171 = vpop.f32.mrb[0].mxu0
    %1172 = vmatprep.mubr.bf16.mxu0 0
    %1173 = vmatmul.mubr.bf16.gmra.mrb[0].mxu0 %v1025
    %v1174 = vpop.f32.mrb[0].mxu0
    %v1175 = vadd.f32 0.0, %v1174
    %v1176 = vpop.f32.mrb[0].mxu0
    %v1177 = vpop.f32.mrb[0].mxu0
    %v1178 = vadd.f32 0.0, %v1177
    %v1179 = vpop.f32.mrb[0].mxu0
    %1180 = vmatprep.mubr.bf16.mxu0 0
    %1181 = vmatmul.mubr.bf16.gmra.mrb[0].mxu0 %v1026
    %v1182 = vpop.f32.mrb[0].mxu0
    %v1183 = vadd.f32 0.0, %v1182
    %v1184 = vpop.f32.mrb[0].mxu0
    %v1185 = vpop.f32.mrb[0].mxu0
    %v1186 = vadd.f32 0.0, %v1185
    %v1187 = vpop.f32.mrb[0].mxu0
    %1188 = vdwg.mxu0
    %v1189 = vadd.f32 %v987, %v1127
    %v1190 = vadd.f32 %v988, %v1130
    %v1191 = vadd.f32 %v989, %v1135
    %v1192 = vadd.f32 %v990, %v1138
    %v1193 = vadd.f32 %v991, %v1143
    %v1194 = vadd.f32 %v992, %v1146
    %v1195 = vadd.f32 %v993, %v1151
    %v1196 = vadd.f32 %v994, %v1154
    %v1197 = vadd.f32 %v995, %v1159
    %v1198 = vadd.f32 %v996, %v1162
    %v1199 = vadd.f32 %v997, %v1167
    %v1200 = vadd.f32 %v998, %v1170
    %v1201 = vadd.f32 %v999, %v1175
    %v1202 = vadd.f32 %v1000, %v1178
    %v1203 = vadd.f32 %v1001, %v1183
    %v1204 = vadd.f32 %v1002, %v1186
    %s1205 = sadd.s32 48, %s22
    %s1206 = scalar_lea.vmem %s0, %s1205
    %v1207 = vld [vmem:[%s1206] sm:$0xff]
    %v1208 = vld [vmem:[%s1206 + $0x8] sm:$0xff]
    %v1209 = vld [vmem:[%s1206 + $0x18] sm:$0xff]
    %v1210 = vld [vmem:[%s1206 + $0x20] sm:$0xff]
    %v1211 = vld [vmem:[%s1206 + $0x30] sm:$0xff]
    %v1212 = vld [vmem:[%s1206 + $0x38] sm:$0xff]
    %v1213 = vld [vmem:[%s1206 + $0x48] sm:$0xff]
    %v1214 = vld [vmem:[%s1206 + $0x50] sm:$0xff]
    %v1215 = vld [vmem:[%s1206 + $0x60] sm:$0xff]
    %v1216 = vld [vmem:[%s1206 + $0x68] sm:$0xff]
    %v1217 = vld [vmem:[%s1206 + $0x78] sm:$0xff]
    %v1218 = vld [vmem:[%s1206 + $0x80] sm:$0xff]
    %v1219 = vld [vmem:[%s1206 + $0x90] sm:$0xff]
    %v1220 = vld [vmem:[%s1206 + $0x98] sm:$0xff]
    %v1221 = vld [vmem:[%s1206 + $0xa8] sm:$0xff]
    %v1222 = vld [vmem:[%s1206 + $0xb0] sm:$0xff]
    %v1223 = vpack.c.bf16 %v1208, %v1207
    %v1224 = vpack.c.bf16 %v1210, %v1209
    %v1225 = vpack.c.bf16 %v1212, %v1211
    %v1226 = vpack.c.bf16 %v1214, %v1213
    %v1227 = vpack.c.bf16 %v1216, %v1215
    %v1228 = vpack.c.bf16 %v1218, %v1217
    %v1229 = vpack.c.bf16 %v1220, %v1219
    %v1230 = vpack.c.bf16 %v1222, %v1221
    %s1231 = scalar_lea.vmem %s1, 384
    %v1232 = vld [vmem:[%s1231] sm:$0xf]
    %v1233 = vld [vmem:[%s1231 + $0x4] sm:$0xf]
    %v1234 = vld [vmem:[%s1231 + $0x8] sm:$0xf]
    %v1235 = vld [vmem:[%s1231 + $0xc] sm:$0xf]
    %v1236 = vld [vmem:[%s1231 + $0x10] sm:$0xf]
    %v1237 = vld [vmem:[%s1231 + $0x14] sm:$0xf]
    %v1238 = vld [vmem:[%s1231 + $0x18] sm:$0xf]
    %v1239 = vld [vmem:[%s1231 + $0x1c] sm:$0xf]
    %v1240 = vld [vmem:[%s1231 + $0x20] sm:$0xf]
    %v1241 = vld [vmem:[%s1231 + $0x24] sm:$0xf]
    %v1242 = vld [vmem:[%s1231 + $0x28] sm:$0xf]
    %v1243 = vld [vmem:[%s1231 + $0x2c] sm:$0xf]
    %v1244 = vld [vmem:[%s1231 + $0x30] sm:$0xf]
    %v1245 = vld [vmem:[%s1231 + $0x34] sm:$0xf]
    %v1246 = vld [vmem:[%s1231 + $0x38] sm:$0xf]
    %v1247 = vld [vmem:[%s1231 + $0x3c] sm:$0xf]
    %v1264 = vunpack.c.l.b16 %v1232
    %v1265 = vunpack.c.l.b16 %v1233
    %v1266 = vunpack.c.l.b16 %v1234
    %v1267 = vunpack.c.l.b16 %v1235
    %v1268 = vunpack.c.l.b16 %v1236
    %v1269 = vunpack.c.l.b16 %v1237
    %v1270 = vunpack.c.l.b16 %v1238
    %v1271 = vunpack.c.l.b16 %v1239
    %v1272 = vunpack.c.l.b16 %v1240
    %v1273 = vunpack.c.l.b16 %v1241
    %v1274 = vunpack.c.l.b16 %v1242
    %v1275 = vunpack.c.l.b16 %v1243
    %v1276 = vunpack.c.l.b16 %v1244
    %v1277 = vunpack.c.l.b16 %v1245
    %v1278 = vunpack.c.l.b16 %v1246
    %v1279 = vunpack.c.l.b16 %v1247
    %v1280 = vpack.c.b16 %v1265, %v1264
    %v1281 = vpack.c.b16 %v1267, %v1266
    %v1282 = vpack.c.b16 %v1269, %v1268
    %v1283 = vpack.c.b16 %v1271, %v1270
    %v1284 = vpack.c.b16 %v1273, %v1272
    %v1285 = vpack.c.b16 %v1275, %v1274
    %v1286 = vpack.c.b16 %v1277, %v1276
    %v1287 = vpack.c.b16 %v1279, %v1278
    %1296 = vmatprep.subr.bf16.mxu0 0
    %1297 = vmatpush1.bf16.msra.mxu0 %v1280
    %1298 = vmatprep.subr.bf16.mxu0 0
    %1299 = vmatpush1.bf16.msra.mxu0 %v1281
    %1300 = vmatprep.subr.bf16.mxu0 0
    %1301 = vmatpush1.bf16.msra.mxu0 %v1282
    %1302 = vmatprep.subr.bf16.mxu0 0
    %1303 = vmatpush1.bf16.msra.mxu0 %v1283
    %1304 = vmatprep.subr.bf16.mxu0 0
    %1305 = vmatpush1.bf16.msra.mxu0 %v1284
    %1306 = vmatprep.subr.bf16.mxu0 0
    %1307 = vmatpush1.bf16.msra.mxu0 %v1285
    %1308 = vmatprep.subr.bf16.mxu0 0
    %1309 = vmatpush1.bf16.msra.mxu0 %v1286
    %1310 = vmatprep.subr.bf16.mxu0 0
    %1311 = vmatpush1.bf16.msra.mxu0 %v1287
    %1312 = vmatprep.subr.bf16.mxu0 0
    %1313 = vmatpush1.bf16.msra.mxu0 0
    %1314 = vmatprep.subr.bf16.mxu0 0
    %1315 = vmatpush1.bf16.msra.mxu0 0
    %1316 = vmatprep.subr.bf16.mxu0 0
    %1317 = vmatpush1.bf16.msra.mxu0 0
    %1318 = vmatprep.subr.bf16.mxu0 0
    %1319 = vmatpush1.bf16.msra.mxu0 0
    %1320 = vmatprep.subr.bf16.mxu0 0
    %1321 = vmatpush1.bf16.msra.mxu0 0
    %1322 = vmatprep.subr.bf16.mxu0 0
    %1323 = vmatpush1.bf16.msra.mxu0 0
    %1324 = vmatprep.subr.bf16.mxu0 0
    %1325 = vmatpush1.bf16.msra.mxu0 0
    %1326 = vmatprep.subr.bf16.mxu0 0
    %1327 = vmatpush1.bf16.msra.mxu0 0
    %1328 = vmatprep.mubr.bf16.mxu0 0
    %1329 = vmatmul.mubr.bf16.gmra.mrb[0].mxu0 %v1223
    %v1330 = vpop.f32.mrb[0].mxu0
    %v1331 = vadd.f32 0.0, %v1330
    %v1332 = vpop.f32.mrb[0].mxu0
    %v1333 = vpop.f32.mrb[0].mxu0
    %v1334 = vadd.f32 0.0, %v1333
    %v1335 = vpop.f32.mrb[0].mxu0
    %1336 = vmatprep.mubr.bf16.mxu0 0
    %1337 = vmatmul.mubr.bf16.gmra.mrb[0].mxu0 %v1224
    %v1338 = vpop.f32.mrb[0].mxu0
    %v1339 = vadd.f32 0.0, %v1338
    %v1340 = vpop.f32.mrb[0].mxu0
    %v1341 = vpop.f32.mrb[0].mxu0
    %v1342 = vadd.f32 0.0, %v1341
    %v1343 = vpop.f32.mrb[0].mxu0
    %1344 = vmatprep.mubr.bf16.mxu0 0
    %1345 = vmatmul.mubr.bf16.gmra.mrb[0].mxu0 %v1225
    %v1346 = vpop.f32.mrb[0].mxu0
    %v1347 = vadd.f32 0.0, %v1346
    %v1348 = vpop.f32.mrb[0].mxu0
    %v1349 = vpop.f32.mrb[0].mxu0
    %v1350 = vadd.f32 0.0, %v1349
    %v1351 = vpop.f32.mrb[0].mxu0
    %1352 = vmatprep.mubr.bf16.mxu0 0
    %1353 = vmatmul.mubr.bf16.gmra.mrb[0].mxu0 %v1226
    %v1354 = vpop.f32.mrb[0].mxu0
    %v1355 = vadd.f32 0.0, %v1354
    %v1356 = vpop.f32.mrb[0].mxu0
    %v1357 = vpop.f32.mrb[0].mxu0
    %v1358 = vadd.f32 0.0, %v1357
    %v1359 = vpop.f32.mrb[0].mxu0
    %1360 = vmatprep.mubr.bf16.mxu0 0
    %1361 = vmatmul.mubr.bf16.gmra.mrb[0].mxu0 %v1227
    %v1362 = vpop.f32.mrb[0].mxu0
    %v1363 = vadd.f32 0.0, %v1362
    %v1364 = vpop.f32.mrb[0].mxu0
    %v1365 = vpop.f32.mrb[0].mxu0
    %v1366 = vadd.f32 0.0, %v1365
    %v1367 = vpop.f32.mrb[0].mxu0
    %1368 = vmatprep.mubr.bf16.mxu0 0
    %1369 = vmatmul.mubr.bf16.gmra.mrb[0].mxu0 %v1228
    %v1370 = vpop.f32.mrb[0].mxu0
    %v1371 = vadd.f32 0.0, %v1370
    %v1372 = vpop.f32.mrb[0].mxu0
    %v1373 = vpop.f32.mrb[0].mxu0
    %v1374 = vadd.f32 0.0, %v1373
    %v1375 = vpop.f32.mrb[0].mxu0
    %1376 = vmatprep.mubr.bf16.mxu0 0
    %1377 = vmatmul.mubr.bf16.gmra.mrb[0].mxu0 %v1229
    %v1378 = vpop.f32.mrb[0].mxu0
    %v1379 = vadd.f32 0.0, %v1378
    %v1380 = vpop.f32.mrb[0].mxu0
    %v1381 = vpop.f32.mrb[0].mxu0
    %v1382 = vadd.f32 0.0, %v1381
    %v1383 = vpop.f32.mrb[0].mxu0
    %1384 = vmatprep.mubr.bf16.mxu0 0
    %1385 = vmatmul.mubr.bf16.gmra.mrb[0].mxu0 %v1230
    %v1386 = vpop.f32.mrb[0].mxu0
    %v1387 = vadd.f32 0.0, %v1386
    %v1388 = vpop.f32.mrb[0].mxu0
    %v1389 = vpop.f32.mrb[0].mxu0
    %v1390 = vadd.f32 0.0, %v1389
    %v1391 = vpop.f32.mrb[0].mxu0
    %1392 = vdwg.mxu0
    %v1393 = vadd.f32 %v1189, %v1331
    %v1394 = vadd.f32 %v1190, %v1334
    %v1395 = vadd.f32 %v1191, %v1339
    %v1396 = vadd.f32 %v1192, %v1342
    %v1397 = vadd.f32 %v1193, %v1347
    %v1398 = vadd.f32 %v1194, %v1350
    %v1399 = vadd.f32 %v1195, %v1355
    %v1400 = vadd.f32 %v1196, %v1358
    %v1401 = vadd.f32 %v1197, %v1363
    %v1402 = vadd.f32 %v1198, %v1366
    %v1403 = vadd.f32 %v1199, %v1371
    %v1404 = vadd.f32 %v1200, %v1374
    %v1405 = vadd.f32 %v1201, %v1379
    %v1406 = vadd.f32 %v1202, %v1382
    %v1407 = vadd.f32 %v1203, %v1387
    %v1408 = vadd.f32 %v1204, %v1390
    %v1409 = vld [vmem:[%s1206 + $0x1] sm:$0xff]
    %v1410 = vld [vmem:[%s1206 + $0x9] sm:$0xff]
    %v1411 = vld [vmem:[%s1206 + $0x19] sm:$0xff]
    %v1412 = vld [vmem:[%s1206 + $0x21] sm:$0xff]
    %v1413 = vld [vmem:[%s1206 + $0x31] sm:$0xff]
    %v1414 = vld [vmem:[%s1206 + $0x39] sm:$0xff]
    %v1415 = vld [vmem:[%s1206 + $0x49] sm:$0xff]
    %v1416 = vld [vmem:[%s1206 + $0x51] sm:$0xff]
    %v1417 = vld [vmem:[%s1206 + $0x61] sm:$0xff]
    %v1418 = vld [vmem:[%s1206 + $0x69] sm:$0xff]
    %v1419 = vld [vmem:[%s1206 + $0x79] sm:$0xff]
    %v1420 = vld [vmem:[%s1206 + $0x81] sm:$0xff]
    %v1421 = vld [vmem:[%s1206 + $0x91] sm:$0xff]
    %v1422 = vld [vmem:[%s1206 + $0x99] sm:$0xff]
    %v1423 = vld [vmem:[%s1206 + $0xa9] sm:$0xff]
    %v1424 = vld [vmem:[%s1206 + $0xb1] sm:$0xff]
    %v1425 = vpack.c.bf16 %v1410, %v1409
    %v1426 = vpack.c.bf16 %v1412, %v1411
    %v1427 = vpack.c.bf16 %v1414, %v1413
    %v1428 = vpack.c.bf16 %v1416, %v1415
    %v1429 = vpack.c.bf16 %v1418, %v1417
    %v1430 = vpack.c.bf16 %v1420, %v1419
    %v1431 = vpack.c.bf16 %v1422, %v1421
    %v1432 = vpack.c.bf16 %v1424, %v1423
    %s1433 = scalar_lea.vmem %s1, 448
    %v1434 = vld [vmem:[%s1433] sm:$0xf]
    %v1435 = vld [vmem:[%s1433 + $0x4] sm:$0xf]
    %v1436 = vld [vmem:[%s1433 + $0x8] sm:$0xf]
    %v1437 = vld [vmem:[%s1433 + $0xc] sm:$0xf]
    %v1438 = vld [vmem:[%s1433 + $0x10] sm:$0xf]
    %v1439 = vld [vmem:[%s1433 + $0x14] sm:$0xf]
    %v1440 = vld [vmem:[%s1433 + $0x18] sm:$0xf]
    %v1441 = vld [vmem:[%s1433 + $0x1c] sm:$0xf]
    %v1442 = vld [vmem:[%s1433 + $0x20] sm:$0xf]
    %v1443 = vld [vmem:[%s1433 + $0x24] sm:$0xf]
    %v1444 = vld [vmem:[%s1433 + $0x28] sm:$0xf]
    %v1445 = vld [vmem:[%s1433 + $0x2c] sm:$0xf]
    %v1446 = vld [vmem:[%s1433 + $0x30] sm:$0xf]
    %v1447 = vld [vmem:[%s1433 + $0x34] sm:$0xf]
    %v1448 = vld [vmem:[%s1433 + $0x38] sm:$0xf]
    %v1449 = vld [vmem:[%s1433 + $0x3c] sm:$0xf]
    %v1466 = vunpack.c.l.b16 %v1434
    %v1467 = vunpack.c.l.b16 %v1435
    %v1468 = vunpack.c.l.b16 %v1436
    %v1469 = vunpack.c.l.b16 %v1437
    %v1470 = vunpack.c.l.b16 %v1438
    %v1471 = vunpack.c.l.b16 %v1439
    %v1472 = vunpack.c.l.b16 %v1440
    %v1473 = vunpack.c.l.b16 %v1441
    %v1474 = vunpack.c.l.b16 %v1442
    %v1475 = vunpack.c.l.b16 %v1443
    %v1476 = vunpack.c.l.b16 %v1444
    %v1477 = vunpack.c.l.b16 %v1445
    %v1478 = vunpack.c.l.b16 %v1446
    %v1479 = vunpack.c.l.b16 %v1447
    %v1480 = vunpack.c.l.b16 %v1448
    %v1481 = vunpack.c.l.b16 %v1449
    %v1482 = vpack.c.b16 %v1467, %v1466
    %v1483 = vpack.c.b16 %v1469, %v1468
    %v1484 = vpack.c.b16 %v1471, %v1470
    %v1485 = vpack.c.b16 %v1473, %v1472
    %v1486 = vpack.c.b16 %v1475, %v1474
    %v1487 = vpack.c.b16 %v1477, %v1476
    %v1488 = vpack.c.b16 %v1479, %v1478
    %v1489 = vpack.c.b16 %v1481, %v1480
    %1498 = vmatprep.subr.bf16.mxu0 0
    %1499 = vmatpush1.bf16.msra.mxu0 %v1482
    %1500 = vmatprep.subr.bf16.mxu0 0
    %1501 = vmatpush1.bf16.msra.mxu0 %v1483
    %1502 = vmatprep.subr.bf16.mxu0 0
    %1503 = vmatpush1.bf16.msra.mxu0 %v1484
    %1504 = vmatprep.subr.bf16.mxu0 0
    %1505 = vmatpush1.bf16.msra.mxu0 %v1485
    %1506 = vmatprep.subr.bf16.mxu0 0
    %1507 = vmatpush1.bf16.msra.mxu0 %v1486
    %1508 = vmatprep.subr.bf16.mxu0 0
    %1509 = vmatpush1.bf16.msra.mxu0 %v1487
    %1510 = vmatprep.subr.bf16.mxu0 0
    %1511 = vmatpush1.bf16.msra.mxu0 %v1488
    %1512 = vmatprep.subr.bf16.mxu0 0
    %1513 = vmatpush1.bf16.msra.mxu0 %v1489
    %1514 = vmatprep.subr.bf16.mxu0 0
    %1515 = vmatpush1.bf16.msra.mxu0 0
    %1516 = vmatprep.subr.bf16.mxu0 0
    %1517 = vmatpush1.bf16.msra.mxu0 0
    %1518 = vmatprep.subr.bf16.mxu0 0
    %1519 = vmatpush1.bf16.msra.mxu0 0
    %1520 = vmatprep.subr.bf16.mxu0 0
    %1521 = vmatpush1.bf16.msra.mxu0 0
    %1522 = vmatprep.subr.bf16.mxu0 0
    %1523 = vmatpush1.bf16.msra.mxu0 0
    %1524 = vmatprep.subr.bf16.mxu0 0
    %1525 = vmatpush1.bf16.msra.mxu0 0
    %1526 = vmatprep.subr.bf16.mxu0 0
    %1527 = vmatpush1.bf16.msra.mxu0 0
    %1528 = vmatprep.subr.bf16.mxu0 0
    %1529 = vmatpush1.bf16.msra.mxu0 0
    %1530 = vmatprep.mubr.bf16.mxu0 0
    %1531 = vmatmul.mubr.bf16.gmra.mrb[0].mxu0 %v1425
    %v1532 = vpop.f32.mrb[0].mxu0
    %v1533 = vadd.f32 0.0, %v1532
    %v1534 = vpop.f32.mrb[0].mxu0
    %v1535 = vpop.f32.mrb[0].mxu0
    %v1536 = vadd.f32 0.0, %v1535
    %v1537 = vpop.f32.mrb[0].mxu0
    %1538 = vmatprep.mubr.bf16.mxu0 0
    %1539 = vmatmul.mubr.bf16.gmra.mrb[0].mxu0 %v1426
    %v1540 = vpop.f32.mrb[0].mxu0
    %v1541 = vadd.f32 0.0, %v1540
    %v1542 = vpop.f32.mrb[0].mxu0
    %v1543 = vpop.f32.mrb[0].mxu0
    %v1544 = vadd.f32 0.0, %v1543
    %v1545 = vpop.f32.mrb[0].mxu0
    %1546 = vmatprep.mubr.bf16.mxu0 0
    %1547 = vmatmul.mubr.bf16.gmra.mrb[0].mxu0 %v1427
    %v1548 = vpop.f32.mrb[0].mxu0
    %v1549 = vadd.f32 0.0, %v1548
    %v1550 = vpop.f32.mrb[0].mxu0
    %v1551 = vpop.f32.mrb[0].mxu0
    %v1552 = vadd.f32 0.0, %v1551
    %v1553 = vpop.f32.mrb[0].mxu0
    %1554 = vmatprep.mubr.bf16.mxu0 0
    %1555 = vmatmul.mubr.bf16.gmra.mrb[0].mxu0 %v1428
    %v1556 = vpop.f32.mrb[0].mxu0
    %v1557 = vadd.f32 0.0, %v1556
    %v1558 = vpop.f32.mrb[0].mxu0
    %v1559 = vpop.f32.mrb[0].mxu0
    %v1560 = vadd.f32 0.0, %v1559
    %v1561 = vpop.f32.mrb[0].mxu0
    %1562 = vmatprep.mubr.bf16.mxu0 0
    %1563 = vmatmul.mubr.bf16.gmra.mrb[0].mxu0 %v1429
    %v1564 = vpop.f32.mrb[0].mxu0
    %v1565 = vadd.f32 0.0, %v1564
    %v1566 = vpop.f32.mrb[0].mxu0
    %v1567 = vpop.f32.mrb[0].mxu0
    %v1568 = vadd.f32 0.0, %v1567
    %v1569 = vpop.f32.mrb[0].mxu0
    %1570 = vmatprep.mubr.bf16.mxu0 0
    %1571 = vmatmul.mubr.bf16.gmra.mrb[0].mxu0 %v1430
    %v1572 = vpop.f32.mrb[0].mxu0
    %v1573 = vadd.f32 0.0, %v1572
    %v1574 = vpop.f32.mrb[0].mxu0
    %v1575 = vpop.f32.mrb[0].mxu0
    %v1576 = vadd.f32 0.0, %v1575
    %v1577 = vpop.f32.mrb[0].mxu0
    %1578 = vmatprep.mubr.bf16.mxu0 0
    %1579 = vmatmul.mubr.bf16.gmra.mrb[0].mxu0 %v1431
    %v1580 = vpop.f32.mrb[0].mxu0
    %v1581 = vadd.f32 0.0, %v1580
    %v1582 = vpop.f32.mrb[0].mxu0
    %v1583 = vpop.f32.mrb[0].mxu0
    %v1584 = vadd.f32 0.0, %v1583
    %v1585 = vpop.f32.mrb[0].mxu0
    %1586 = vmatprep.mubr.bf16.mxu0 0
    %1587 = vmatmul.mubr.bf16.gmra.mrb[0].mxu0 %v1432
    %v1588 = vpop.f32.mrb[0].mxu0
    %v1589 = vadd.f32 0.0, %v1588
    %v1590 = vpop.f32.mrb[0].mxu0
    %v1591 = vpop.f32.mrb[0].mxu0
    %v1592 = vadd.f32 0.0, %v1591
    %v1593 = vpop.f32.mrb[0].mxu0
    %1594 = vdwg.mxu0
    %v1595 = vadd.f32 %v1393, %v1533
    %v1596 = vadd.f32 %v1394, %v1536
    %v1597 = vadd.f32 %v1395, %v1541
    %v1598 = vadd.f32 %v1396, %v1544
    %v1599 = vadd.f32 %v1397, %v1549
    %v1600 = vadd.f32 %v1398, %v1552
    %v1601 = vadd.f32 %v1399, %v1557
    %v1602 = vadd.f32 %v1400, %v1560
    %v1603 = vadd.f32 %v1401, %v1565
    %v1604 = vadd.f32 %v1402, %v1568
    %v1605 = vadd.f32 %v1403, %v1573
    %v1606 = vadd.f32 %v1404, %v1576
    %v1607 = vadd.f32 %v1405, %v1581
    %v1608 = vadd.f32 %v1406, %v1584
    %v1609 = vadd.f32 %v1407, %v1589
    %v1610 = vadd.f32 %v1408, %v1592
    %v1611 = vld [vmem:[%s1206 + $0x2] sm:$0xff]
    %v1612 = vld [vmem:[%s1206 + $0xa] sm:$0xff]
    %v1613 = vld [vmem:[%s1206 + $0x1a] sm:$0xff]
    %v1614 = vld [vmem:[%s1206 + $0x22] sm:$0xff]
    %v1615 = vld [vmem:[%s1206 + $0x32] sm:$0xff]
    %v1616 = vld [vmem:[%s1206 + $0x3a] sm:$0xff]
    %v1617 = vld [vmem:[%s1206 + $0x4a] sm:$0xff]
    %v1618 = vld [vmem:[%s1206 + $0x52] sm:$0xff]
    %v1619 = vld [vmem:[%s1206 + $0x62] sm:$0xff]
    %v1620 = vld [vmem:[%s1206 + $0x6a] sm:$0xff]
    %v1621 = vld [vmem:[%s1206 + $0x7a] sm:$0xff]
    %v1622 = vld [vmem:[%s1206 + $0x82] sm:$0xff]
    %v1623 = vld [vmem:[%s1206 + $0x92] sm:$0xff]
    %v1624 = vld [vmem:[%s1206 + $0x9a] sm:$0xff]
    %v1625 = vld [vmem:[%s1206 + $0xaa] sm:$0xff]
    %v1626 = vld [vmem:[%s1206 + $0xb2] sm:$0xff]
    %v1627 = vpack.c.bf16 %v1612, %v1611
    %v1628 = vpack.c.bf16 %v1614, %v1613
    %v1629 = vpack.c.bf16 %v1616, %v1615
    %v1630 = vpack.c.bf16 %v1618, %v1617
    %v1631 = vpack.c.bf16 %v1620, %v1619
    %v1632 = vpack.c.bf16 %v1622, %v1621
    %v1633 = vpack.c.bf16 %v1624, %v1623
    %v1634 = vpack.c.bf16 %v1626, %v1625
    %s1635 = scalar_lea.vmem %s1, 512
    %v1636 = vld [vmem:[%s1635] sm:$0xf]
    %v1637 = vld [vmem:[%s1635 + $0x4] sm:$0xf]
    %v1638 = vld [vmem:[%s1635 + $0x8] sm:$0xf]
    %v1639 = vld [vmem:[%s1635 + $0xc] sm:$0xf]
    %v1640 = vld [vmem:[%s1635 + $0x10] sm:$0xf]
    %v1641 = vld [vmem:[%s1635 + $0x14] sm:$0xf]
    %v1642 = vld [vmem:[%s1635 + $0x18] sm:$0xf]
    %v1643 = vld [vmem:[%s1635 + $0x1c] sm:$0xf]
    %v1644 = vld [vmem:[%s1635 + $0x20] sm:$0xf]
    %v1645 = vld [vmem:[%s1635 + $0x24] sm:$0xf]
    %v1646 = vld [vmem:[%s1635 + $0x28] sm:$0xf]
    %v1647 = vld [vmem:[%s1635 + $0x2c] sm:$0xf]
    %v1648 = vld [vmem:[%s1635 + $0x30] sm:$0xf]
    %v1649 = vld [vmem:[%s1635 + $0x34] sm:$0xf]
    %v1650 = vld [vmem:[%s1635 + $0x38] sm:$0xf]
    %v1651 = vld [vmem:[%s1635 + $0x3c] sm:$0xf]
    %v1668 = vunpack.c.l.b16 %v1636
    %v1669 = vunpack.c.l.b16 %v1637
    %v1670 = vunpack.c.l.b16 %v1638
    %v1671 = vunpack.c.l.b16 %v1639
    %v1672 = vunpack.c.l.b16 %v1640
    %v1673 = vunpack.c.l.b16 %v1641
    %v1674 = vunpack.c.l.b16 %v1642
    %v1675 = vunpack.c.l.b16 %v1643
    %v1676 = vunpack.c.l.b16 %v1644
    %v1677 = vunpack.c.l.b16 %v1645
    %v1678 = vunpack.c.l.b16 %v1646
    %v1679 = vunpack.c.l.b16 %v1647
    %v1680 = vunpack.c.l.b16 %v1648
    %v1681 = vunpack.c.l.b16 %v1649
    %v1682 = vunpack.c.l.b16 %v1650
    %v1683 = vunpack.c.l.b16 %v1651
    %v1684 = vpack.c.b16 %v1669, %v1668
    %v1685 = vpack.c.b16 %v1671, %v1670
    %v1686 = vpack.c.b16 %v1673, %v1672
    %v1687 = vpack.c.b16 %v1675, %v1674
    %v1688 = vpack.c.b16 %v1677, %v1676
    %v1689 = vpack.c.b16 %v1679, %v1678
    %v1690 = vpack.c.b16 %v1681, %v1680
    %v1691 = vpack.c.b16 %v1683, %v1682
    %1700 = vmatprep.subr.bf16.mxu0 0
    %1701 = vmatpush1.bf16.msra.mxu0 %v1684
    %1702 = vmatprep.subr.bf16.mxu0 0
    %1703 = vmatpush1.bf16.msra.mxu0 %v1685
    %1704 = vmatprep.subr.bf16.mxu0 0
    %1705 = vmatpush1.bf16.msra.mxu0 %v1686
    %1706 = vmatprep.subr.bf16.mxu0 0
    %1707 = vmatpush1.bf16.msra.mxu0 %v1687
    %1708 = vmatprep.subr.bf16.mxu0 0
    %1709 = vmatpush1.bf16.msra.mxu0 %v1688
    %1710 = vmatprep.subr.bf16.mxu0 0
    %1711 = vmatpush1.bf16.msra.mxu0 %v1689
    %1712 = vmatprep.subr.bf16.mxu0 0
    %1713 = vmatpush1.bf16.msra.mxu0 %v1690
    %1714 = vmatprep.subr.bf16.mxu0 0
    %1715 = vmatpush1.bf16.msra.mxu0 %v1691
    %1716 = vmatprep.subr.bf16.mxu0 0
    %1717 = vmatpush1.bf16.msra.mxu0 0
    %1718 = vmatprep.subr.bf16.mxu0 0
    %1719 = vmatpush1.bf16.msra.mxu0 0
    %1720 = vmatprep.subr.bf16.mxu0 0
    %1721 = vmatpush1.bf16.msra.mxu0 0
    %1722 = vmatprep.subr.bf16.mxu0 0
    %1723 = vmatpush1.bf16.msra.mxu0 0
    %1724 = vmatprep.subr.bf16.mxu0 0
    %1725 = vmatpush1.bf16.msra.mxu0 0
    %1726 = vmatprep.subr.bf16.mxu0 0
    %1727 = vmatpush1.bf16.msra.mxu0 0
    %1728 = vmatprep.subr.bf16.mxu0 0
    %1729 = vmatpush1.bf16.msra.mxu0 0
    %1730 = vmatprep.subr.bf16.mxu0 0
    %1731 = vmatpush1.bf16.msra.mxu0 0
    %1732 = vmatprep.mubr.bf16.mxu0 0
    %1733 = vmatmul.mubr.bf16.gmra.mrb[0].mxu0 %v1627
    %v1734 = vpop.f32.mrb[0].mxu0
    %v1735 = vadd.f32 0.0, %v1734
    %v1736 = vpop.f32.mrb[0].mxu0
    %v1737 = vpop.f32.mrb[0].mxu0
    %v1738 = vadd.f32 0.0, %v1737
    %v1739 = vpop.f32.mrb[0].mxu0
    %1740 = vmatprep.mubr.bf16.mxu0 0
    %1741 = vmatmul.mubr.bf16.gmra.mrb[0].mxu0 %v1628
    %v1742 = vpop.f32.mrb[0].mxu0
    %v1743 = vadd.f32 0.0, %v1742
    %v1744 = vpop.f32.mrb[0].mxu0
    %v1745 = vpop.f32.mrb[0].mxu0
    %v1746 = vadd.f32 0.0, %v1745
    %v1747 = vpop.f32.mrb[0].mxu0
    %1748 = vmatprep.mubr.bf16.mxu0 0
    %1749 = vmatmul.mubr.bf16.gmra.mrb[0].mxu0 %v1629
    %v1750 = vpop.f32.mrb[0].mxu0
    %v1751 = vadd.f32 0.0, %v1750
    %v1752 = vpop.f32.mrb[0].mxu0
    %v1753 = vpop.f32.mrb[0].mxu0
    %v1754 = vadd.f32 0.0, %v1753
    %v1755 = vpop.f32.mrb[0].mxu0
    %1756 = vmatprep.mubr.bf16.mxu0 0
    %1757 = vmatmul.mubr.bf16.gmra.mrb[0].mxu0 %v1630
    %v1758 = vpop.f32.mrb[0].mxu0
    %v1759 = vadd.f32 0.0, %v1758
    %v1760 = vpop.f32.mrb[0].mxu0
    %v1761 = vpop.f32.mrb[0].mxu0
    %v1762 = vadd.f32 0.0, %v1761
    %v1763 = vpop.f32.mrb[0].mxu0
    %1764 = vmatprep.mubr.bf16.mxu0 0
    %1765 = vmatmul.mubr.bf16.gmra.mrb[0].mxu0 %v1631
    %v1766 = vpop.f32.mrb[0].mxu0
    %v1767 = vadd.f32 0.0, %v1766
    %v1768 = vpop.f32.mrb[0].mxu0
    %v1769 = vpop.f32.mrb[0].mxu0
    %v1770 = vadd.f32 0.0, %v1769
    %v1771 = vpop.f32.mrb[0].mxu0
    %1772 = vmatprep.mubr.bf16.mxu0 0
    %1773 = vmatmul.mubr.bf16.gmra.mrb[0].mxu0 %v1632
    %v1774 = vpop.f32.mrb[0].mxu0
    %v1775 = vadd.f32 0.0, %v1774
    %v1776 = vpop.f32.mrb[0].mxu0
    %v1777 = vpop.f32.mrb[0].mxu0
    %v1778 = vadd.f32 0.0, %v1777
    %v1779 = vpop.f32.mrb[0].mxu0
    %1780 = vmatprep.mubr.bf16.mxu0 0
    %1781 = vmatmul.mubr.bf16.gmra.mrb[0].mxu0 %v1633
    %v1782 = vpop.f32.mrb[0].mxu0
    %v1783 = vadd.f32 0.0, %v1782
    %v1784 = vpop.f32.mrb[0].mxu0
    %v1785 = vpop.f32.mrb[0].mxu0
    %v1786 = vadd.f32 0.0, %v1785
    %v1787 = vpop.f32.mrb[0].mxu0
    %1788 = vmatprep.mubr.bf16.mxu0 0
    %1789 = vmatmul.mubr.bf16.gmra.mrb[0].mxu0 %v1634
    %v1790 = vpop.f32.mrb[0].mxu0
    %v1791 = vadd.f32 0.0, %v1790
    %v1792 = vpop.f32.mrb[0].mxu0
    %v1793 = vpop.f32.mrb[0].mxu0
    %v1794 = vadd.f32 0.0, %v1793
    %v1795 = vpop.f32.mrb[0].mxu0
    %1796 = vdwg.mxu0
    %v1797 = vadd.f32 %v1595, %v1735
    %v1798 = vadd.f32 %v1596, %v1738
    %v1799 = vadd.f32 %v1597, %v1743
    %v1800 = vadd.f32 %v1598, %v1746
    %v1801 = vadd.f32 %v1599, %v1751
    %v1802 = vadd.f32 %v1600, %v1754
    %v1803 = vadd.f32 %v1601, %v1759
    %v1804 = vadd.f32 %v1602, %v1762
    %v1805 = vadd.f32 %v1603, %v1767
    %v1806 = vadd.f32 %v1604, %v1770
    %v1807 = vadd.f32 %v1605, %v1775
    %v1808 = vadd.f32 %v1606, %v1778
    %v1809 = vadd.f32 %v1607, %v1783
    %v1810 = vadd.f32 %v1608, %v1786
    %v1811 = vadd.f32 %v1609, %v1791
    %v1812 = vadd.f32 %v1610, %v1794
    %v1814 = vlaneseq
    %v1815 = vshrl.u32 %v1814, 7
    %v1816 = vsub.s32 0, %v1815
    %v1817 = vrot.slane %v15, %v1816
    %v1819 = vadd.f32 %v1797, %v1817
    %v1820 = vadd.f32 %v1798, %v1817
    %v1821 = vadd.f32 %v1799, %v1817
    %v1822 = vadd.f32 %v1800, %v1817
    %v1823 = vadd.f32 %v1801, %v1817
    %v1824 = vadd.f32 %v1802, %v1817
    %v1825 = vadd.f32 %v1803, %v1817
    %v1826 = vadd.f32 %v1804, %v1817
    %v1827 = vadd.f32 %v1805, %v1817
    %v1828 = vadd.f32 %v1806, %v1817
    %v1829 = vadd.f32 %v1807, %v1817
    %v1830 = vadd.f32 %v1808, %v1817
    %v1831 = vadd.f32 %v1809, %v1817
    %v1832 = vadd.f32 %v1810, %v1817
    %v1833 = vadd.f32 %v1811, %v1817
    %v1834 = vadd.f32 %v1812, %v1817
    %v1835 = vmax.f32 %v1819, 0.0
    %v1836 = vmax.f32 %v1820, 0.0
    %v1837 = vmax.f32 %v1821, 0.0
    %v1838 = vmax.f32 %v1822, 0.0
    %v1839 = vmax.f32 %v1823, 0.0
    %v1840 = vmax.f32 %v1824, 0.0
    %v1841 = vmax.f32 %v1825, 0.0
    %v1842 = vmax.f32 %v1826, 0.0
    %v1843 = vmax.f32 %v1827, 0.0
    %v1844 = vmax.f32 %v1828, 0.0
    %v1845 = vmax.f32 %v1829, 0.0
    %v1846 = vmax.f32 %v1830, 0.0
    %v1847 = vmax.f32 %v1831, 0.0
    %v1848 = vmax.f32 %v1832, 0.0
    %v1849 = vmax.f32 %v1833, 0.0
    %v1850 = vmax.f32 %v1834, 0.0
    %v1851 = vmax.f32 %v1835, %v1837
    %v1852 = vmax.f32 %v1836, %v1838
    %v1853 = vmax.f32 %v1839, %v1841
    %v1854 = vmax.f32 %v1840, %v1842
    %v1855 = vmax.f32 %v1843, %v1845
    %v1856 = vmax.f32 %v1844, %v1846
    %v1857 = vmax.f32 %v1847, %v1849
    %v1858 = vmax.f32 %v1848, %v1850
    %1859 = vst [vmem:[#allocation2] sm:$0xff] %v1851
    %1860 = vst [vmem:[#allocation2 + $0x8] sm:$0xff] %v1852
    %1861 = vst [vmem:[#allocation2 + $0x10] sm:$0xff] %v1853
    %1862 = vst [vmem:[#allocation2 + $0x18] sm:$0xff] %v1854
    %1863 = vst [vmem:[#allocation2 + $0x20] sm:$0xff] %v1855
    %1864 = vst [vmem:[#allocation2 + $0x28] sm:$0xff] %v1856
    %1865 = vst [vmem:[#allocation2 + $0x30] sm:$0xff] %v1857
    %1866 = vst [vmem:[#allocation2 + $0x38] sm:$0xff] %v1858
    %v1867 = vld [vmem:[#allocation2] ss:$2 sm:$0xff]
    %s1868 = scalar_lea.vmem [#allocation2], 16
    %v1869 = vld [vmem:[%s1868] ss:$2 sm:$0xff]
    %s1870 = scalar_lea.vmem [#allocation2], 32
    %v1871 = vld [vmem:[%s1870] ss:$2 sm:$0xff]
    %s1872 = scalar_lea.vmem [#allocation2], 48
    %v1873 = vld [vmem:[%s1872] ss:$2 sm:$0xff]
    %s1874 = scalar_lea.vmem [#allocation2], 1
    %v1875 = vld [vmem:[%s1874] ss:$2 sm:$0xff]
    %s1876 = scalar_lea.vmem [#allocation2], 17
    %v1877 = vld [vmem:[%s1876] ss:$2 sm:$0xff]
    %s1878 = scalar_lea.vmem [#allocation2], 33
    %v1879 = vld [vmem:[%s1878] ss:$2 sm:$0xff]
    %s1880 = scalar_lea.vmem [#allocation2], 49
    %v1881 = vld [vmem:[%s1880] ss:$2 sm:$0xff]
    %v1882 = vmax.f32 %v1867, %v1875
    %v1883 = vmax.f32 %v1869, %v1877
    %v1884 = vmax.f32 %v1871, %v1879
    %v1885 = vmax.f32 %v1873, %v1881
    %s1886 = smul.u32 %s17, 64
    %s1887 = scalar_lea.vmem %s3, %s1886
    %1888 = vst [vmem:[%s1887] sm:$0xff] %v1882
    %1889 = vst [vmem:[%s1887 + $0x8] sm:$0xff] %v1883
    %1890 = vst [vmem:[%s1887 + $0x10] sm:$0xff] %v1884
    %1891 = vst [vmem:[%s1887 + $0x18] sm:$0xff] %v1885
    %s1892 = sadd.s32 192, %s22
    %s1893 = scalar_lea.vmem %s0, %s1892
    %v1894 = vld [vmem:[%s1893] sm:$0xff]
    %v1895 = vld [vmem:[%s1893 + $0x8] sm:$0xff]
    %v1896 = vld [vmem:[%s1893 + $0x18] sm:$0xff]
    %v1897 = vld [vmem:[%s1893 + $0x20] sm:$0xff]
    %v1898 = vld [vmem:[%s1893 + $0x30] sm:$0xff]
    %v1899 = vld [vmem:[%s1893 + $0x38] sm:$0xff]
    %v1900 = vld [vmem:[%s1893 + $0x48] sm:$0xff]
    %v1901 = vld [vmem:[%s1893 + $0x50] sm:$0xff]
    %v1902 = vld [vmem:[%s1893 + $0x60] sm:$0xff]
    %v1903 = vld [vmem:[%s1893 + $0x68] sm:$0xff]
    %v1904 = vld [vmem:[%s1893 + $0x78] sm:$0xff]
    %v1905 = vld [vmem:[%s1893 + $0x80] sm:$0xff]
    %v1906 = vld [vmem:[%s1893 + $0x90] sm:$0xff]
    %v1907 = vld [vmem:[%s1893 + $0x98] sm:$0xff]
    %v1908 = vld [vmem:[%s1893 + $0xa8] sm:$0xff]
    %v1909 = vld [vmem:[%s1893 + $0xb0] sm:$0xff]
    %v1910 = vpack.c.bf16 %v1895, %v1894
    %v1911 = vpack.c.bf16 %v1897, %v1896
    %v1912 = vpack.c.bf16 %v1899, %v1898
    %v1913 = vpack.c.bf16 %v1901, %v1900
    %v1914 = vpack.c.bf16 %v1903, %v1902
    %v1915 = vpack.c.bf16 %v1905, %v1904
    %v1916 = vpack.c.bf16 %v1907, %v1906
    %v1917 = vpack.c.bf16 %v1909, %v1908
    %v1918 = vld [vmem:[%s1] sm:$0xf]
    %v1919 = vld [vmem:[%s1 + $0x4] sm:$0xf]
    %v1920 = vld [vmem:[%s1 + $0x8] sm:$0xf]
    %v1921 = vld [vmem:[%s1 + $0xc] sm:$0xf]
    %v1922 = vld [vmem:[%s1 + $0x10] sm:$0xf]
    %v1923 = vld [vmem:[%s1 + $0x14] sm:$0xf]
    %v1924 = vld [vmem:[%s1 + $0x18] sm:$0xf]
    %v1925 = vld [vmem:[%s1 + $0x1c] sm:$0xf]
    %v1926 = vld [vmem:[%s1 + $0x20] sm:$0xf]
    %v1927 = vld [vmem:[%s1 + $0x24] sm:$0xf]
    %v1928 = vld [vmem:[%s1 + $0x28] sm:$0xf]
    %v1929 = vld [vmem:[%s1 + $0x2c] sm:$0xf]
    %v1930 = vld [vmem:[%s1 + $0x30] sm:$0xf]
    %v1931 = vld [vmem:[%s1 + $0x34] sm:$0xf]
    %v1932 = vld [vmem:[%s1 + $0x38] sm:$0xf]
    %v1933 = vld [vmem:[%s1 + $0x3c] sm:$0xf]
    %v1934 = vld [vmem:[%s1893 + $0x1] sm:$0xff]
    %v1935 = vld [vmem:[%s1893 + $0x9] sm:$0xff]
    %v1936 = vld [vmem:[%s1893 + $0x19] sm:$0xff]
    %v1937 = vld [vmem:[%s1893 + $0x21] sm:$0xff]
    %v1938 = vld [vmem:[%s1893 + $0x31] sm:$0xff]
    %v1939 = vld [vmem:[%s1893 + $0x39] sm:$0xff]
    %v1940 = vld [vmem:[%s1893 + $0x49] sm:$0xff]
    %v1941 = vld [vmem:[%s1893 + $0x51] sm:$0xff]
    %v1942 = vld [vmem:[%s1893 + $0x61] sm:$0xff]
    %v1943 = vld [vmem:[%s1893 + $0x69] sm:$0xff]
    %v1944 = vld [vmem:[%s1893 + $0x79] sm:$0xff]
    %v1945 = vld [vmem:[%s1893 + $0x81] sm:$0xff]
    %v1946 = vld [vmem:[%s1893 + $0x91] sm:$0xff]
    %v1947 = vld [vmem:[%s1893 + $0x99] sm:$0xff]
    %v1948 = vld [vmem:[%s1893 + $0xa9] sm:$0xff]
    %v1949 = vld [vmem:[%s1893 + $0xb1] sm:$0xff]
    %v1950 = vpack.c.bf16 %v1935, %v1934
    %v1951 = vpack.c.bf16 %v1937, %v1936
    %v1952 = vpack.c.bf16 %v1939, %v1938
    %v1953 = vpack.c.bf16 %v1941, %v1940
    %v1954 = vpack.c.bf16 %v1943, %v1942
    %v1955 = vpack.c.bf16 %v1945, %v1944
    %v1956 = vpack.c.bf16 %v1947, %v1946
    %v1957 = vpack.c.bf16 %v1949, %v1948
    %v1958 = vld [vmem:[%s88] sm:$0xf]
    %v1959 = vld [vmem:[%s88 + $0x4] sm:$0xf]
    %v1960 = vld [vmem:[%s88 + $0x8] sm:$0xf]
    %v1961 = vld [vmem:[%s88 + $0xc] sm:$0xf]
    %v1962 = vld [vmem:[%s88 + $0x10] sm:$0xf]
    %v1963 = vld [vmem:[%s88 + $0x14] sm:$0xf]
    %v1964 = vld [vmem:[%s88 + $0x18] sm:$0xf]
    %v1965 = vld [vmem:[%s88 + $0x1c] sm:$0xf]
    %v1966 = vld [vmem:[%s88 + $0x20] sm:$0xf]
    %v1967 = vld [vmem:[%s88 + $0x24] sm:$0xf]
    %v1968 = vld [vmem:[%s88 + $0x28] sm:$0xf]
    %v1969 = vld [vmem:[%s88 + $0x2c] sm:$0xf]
    %v1970 = vld [vmem:[%s88 + $0x30] sm:$0xf]
    %v1971 = vld [vmem:[%s88 + $0x34] sm:$0xf]
    %v1972 = vld [vmem:[%s88 + $0x38] sm:$0xf]
    %v1973 = vld [vmem:[%s88 + $0x3c] sm:$0xf]
    %v1990 = vunpack.c.l.b16 %v1958
    %v1991 = vunpack.c.l.b16 %v1959
    %v1992 = vunpack.c.l.b16 %v1960
    %v1993 = vunpack.c.l.b16 %v1961
    %v1994 = vunpack.c.l.b16 %v1962
    %v1995 = vunpack.c.l.b16 %v1963
    %v1996 = vunpack.c.l.b16 %v1964
    %v1997 = vunpack.c.l.b16 %v1965
    %v1998 = vunpack.c.l.b16 %v1966
    %v1999 = vunpack.c.l.b16 %v1967
    %v2000 = vunpack.c.l.b16 %v1968
    %v2001 = vunpack.c.l.b16 %v1969
    %v2002 = vunpack.c.l.b16 %v1970
    %v2003 = vunpack.c.l.b16 %v1971
    %v2004 = vunpack.c.l.b16 %v1972
    %v2005 = vunpack.c.l.b16 %v1973
    %v2006 = vpack.c.b16 %v1991, %v1990
    %v2007 = vpack.c.b16 %v1993, %v1992
    %v2008 = vpack.c.b16 %v1995, %v1994
    %v2009 = vpack.c.b16 %v1997, %v1996
    %v2010 = vpack.c.b16 %v1999, %v1998
    %v2011 = vpack.c.b16 %v2001, %v2000
    %v2012 = vpack.c.b16 %v2003, %v2002
    %v2013 = vpack.c.b16 %v2005, %v2004
    %2022 = vmatprep.subr.bf16.mxu0 0
    %2023 = vmatpush1.bf16.msra.mxu0 %v2006
    %2024 = vmatprep.subr.bf16.mxu0 0
    %2025 = vmatpush1.bf16.msra.mxu0 %v2007
    %2026 = vmatprep.subr.bf16.mxu0 0
    %2027 = vmatpush1.bf16.msra.mxu0 %v2008
    %2028 = vmatprep.subr.bf16.mxu0 0
    %2029 = vmatpush1.bf16.msra.mxu0 %v2009
    %2030 = vmatprep.subr.bf16.mxu0 0
    %2031 = vmatpush1.bf16.msra.mxu0 %v2010
    %2032 = vmatprep.subr.bf16.mxu0 0
    %2033 = vmatpush1.bf16.msra.mxu0 %v2011
    %2034 = vmatprep.subr.bf16.mxu0 0
    %2035 = vmatpush1.bf16.msra.mxu0 %v2012
    %2036 = vmatprep.subr.bf16.mxu0 0
    %2037 = vmatpush1.bf16.msra.mxu0 %v2013
    %2038 = vmatprep.subr.bf16.mxu0 0
    %2039 = vmatpush1.bf16.msra.mxu0 0
    %2040 = vmatprep.subr.bf16.mxu0 0
    %2041 = vmatpush1.bf16.msra.mxu0 0
    %2042 = vmatprep.subr.bf16.mxu0 0
    %2043 = vmatpush1.bf16.msra.mxu0 0
    %2044 = vmatprep.subr.bf16.mxu0 0
    %2045 = vmatpush1.bf16.msra.mxu0 0
    %2046 = vmatprep.subr.bf16.mxu0 0
    %2047 = vmatpush1.bf16.msra.mxu0 0
    %2048 = vmatprep.subr.bf16.mxu0 0
    %2049 = vmatpush1.bf16.msra.mxu0 0
    %2050 = vmatprep.subr.bf16.mxu0 0
    %2051 = vmatpush1.bf16.msra.mxu0 0
    %2052 = vmatprep.subr.bf16.mxu0 0
    %2053 = vmatpush1.bf16.msra.mxu0 0
    %2054 = vmatprep.mubr.bf16.mxu0 0
    %2055 = vmatmul.mubr.bf16.gmra.mrb[0].mxu0 %v1950
    %v2056 = vpop.f32.mrb[0].mxu0
    %v2057 = vadd.f32 0.0, %v2056
    %v2058 = vpop.f32.mrb[0].mxu0
    %v2059 = vpop.f32.mrb[0].mxu0
    %v2060 = vadd.f32 0.0, %v2059
    %v2061 = vpop.f32.mrb[0].mxu0
    %2062 = vmatprep.mubr.bf16.mxu0 0
    %2063 = vmatmul.mubr.bf16.gmra.mrb[0].mxu0 %v1951
    %v2064 = vpop.f32.mrb[0].mxu0
    %v2065 = vadd.f32 0.0, %v2064
    %v2066 = vpop.f32.mrb[0].mxu0
    %v2067 = vpop.f32.mrb[0].mxu0
    %v2068 = vadd.f32 0.0, %v2067
    %v2069 = vpop.f32.mrb[0].mxu0
    %2070 = vmatprep.mubr.bf16.mxu0 0
    %2071 = vmatmul.mubr.bf16.gmra.mrb[0].mxu0 %v1952
    %v2072 = vpop.f32.mrb[0].mxu0
    %v2073 = vadd.f32 0.0, %v2072
    %v2074 = vpop.f32.mrb[0].mxu0
    %v2075 = vpop.f32.mrb[0].mxu0
    %v2076 = vadd.f32 0.0, %v2075
    %v2077 = vpop.f32.mrb[0].mxu0
    %2078 = vmatprep.mubr.bf16.mxu0 0
    %2079 = vmatmul.mubr.bf16.gmra.mrb[0].mxu0 %v1953
    %v2080 = vpop.f32.mrb[0].mxu0
    %v2081 = vadd.f32 0.0, %v2080
    %v2082 = vpop.f32.mrb[0].mxu0
    %v2083 = vpop.f32.mrb[0].mxu0
    %v2084 = vadd.f32 0.0, %v2083
    %v2085 = vpop.f32.mrb[0].mxu0
    %2086 = vmatprep.mubr.bf16.mxu0 0
    %2087 = vmatmul.mubr.bf16.gmra.mrb[0].mxu0 %v1954
    %v2088 = vpop.f32.mrb[0].mxu0
    %v2089 = vadd.f32 0.0, %v2088
    %v2090 = vpop.f32.mrb[0].mxu0
    %v2091 = vpop.f32.mrb[0].mxu0
    %v2092 = vadd.f32 0.0, %v2091
    %v2093 = vpop.f32.mrb[0].mxu0
    %2094 = vmatprep.mubr.bf16.mxu0 0
    %2095 = vmatmul.mubr.bf16.gmra.mrb[0].mxu0 %v1955
    %v2096 = vpop.f32.mrb[0].mxu0
    %v2097 = vadd.f32 0.0, %v2096
    %v2098 = vpop.f32.mrb[0].mxu0
    %v2099 = vpop.f32.mrb[0].mxu0
    %v2100 = vadd.f32 0.0, %v2099
    %v2101 = vpop.f32.mrb[0].mxu0
    %2102 = vmatprep.mubr.bf16.mxu0 0
    %2103 = vmatmul.mubr.bf16.gmra.mrb[0].mxu0 %v1956
    %v2104 = vpop.f32.mrb[0].mxu0
    %v2105 = vadd.f32 0.0, %v2104
    %v2106 = vpop.f32.mrb[0].mxu0
    %v2107 = vpop.f32.mrb[0].mxu0
    %v2108 = vadd.f32 0.0, %v2107
    %v2109 = vpop.f32.mrb[0].mxu0
    %2110 = vmatprep.mubr.bf16.mxu0 0
    %2111 = vmatmul.mubr.bf16.gmra.mrb[0].mxu0 %v1957
    %v2112 = vpop.f32.mrb[0].mxu0
    %v2113 = vadd.f32 0.0, %v2112
    %v2114 = vpop.f32.mrb[0].mxu0
    %v2115 = vpop.f32.mrb[0].mxu0
    %v2116 = vadd.f32 0.0, %v2115
    %v2117 = vpop.f32.mrb[0].mxu0
    %2118 = vdwg.mxu0
    %v2135 = vunpack.c.l.b16 %v1918
    %v2136 = vunpack.c.l.b16 %v1919
    %v2137 = vunpack.c.l.b16 %v1920
    %v2138 = vunpack.c.l.b16 %v1921
    %v2139 = vunpack.c.l.b16 %v1922
    %v2140 = vunpack.c.l.b16 %v1923
    %v2141 = vunpack.c.l.b16 %v1924
    %v2142 = vunpack.c.l.b16 %v1925
    %v2143 = vunpack.c.l.b16 %v1926
    %v2144 = vunpack.c.l.b16 %v1927
    %v2145 = vunpack.c.l.b16 %v1928
    %v2146 = vunpack.c.l.b16 %v1929
    %v2147 = vunpack.c.l.b16 %v1930
    %v2148 = vunpack.c.l.b16 %v1931
    %v2149 = vunpack.c.l.b16 %v1932
    %v2150 = vunpack.c.l.b16 %v1933
    %v2151 = vpack.c.b16 %v2136, %v2135
    %v2152 = vpack.c.b16 %v2138, %v2137
    %v2153 = vpack.c.b16 %v2140, %v2139
    %v2154 = vpack.c.b16 %v2142, %v2141
    %v2155 = vpack.c.b16 %v2144, %v2143
    %v2156 = vpack.c.b16 %v2146, %v2145
    %v2157 = vpack.c.b16 %v2148, %v2147
    %v2158 = vpack.c.b16 %v2150, %v2149
    %2167 = vmatprep.subr.bf16.mxu0 0
    %2168 = vmatpush1.bf16.msra.mxu0 %v2151
    %2169 = vmatprep.subr.bf16.mxu0 0
    %2170 = vmatpush1.bf16.msra.mxu0 %v2152
    %2171 = vmatprep.subr.bf16.mxu0 0
    %2172 = vmatpush1.bf16.msra.mxu0 %v2153
    %2173 = vmatprep.subr.bf16.mxu0 0
    %2174 = vmatpush1.bf16.msra.mxu0 %v2154
    %2175 = vmatprep.subr.bf16.mxu0 0
    %2176 = vmatpush1.bf16.msra.mxu0 %v2155
    %2177 = vmatprep.subr.bf16.mxu0 0
    %2178 = vmatpush1.bf16.msra.mxu0 %v2156
    %2179 = vmatprep.subr.bf16.mxu0 0
    %2180 = vmatpush1.bf16.msra.mxu0 %v2157
    %2181 = vmatprep.subr.bf16.mxu0 0
    %2182 = vmatpush1.bf16.msra.mxu0 %v2158
    %2183 = vmatprep.subr.bf16.mxu0 0
    %2184 = vmatpush1.bf16.msra.mxu0 0
    %2185 = vmatprep.subr.bf16.mxu0 0
    %2186 = vmatpush1.bf16.msra.mxu0 0
    %2187 = vmatprep.subr.bf16.mxu0 0
    %2188 = vmatpush1.bf16.msra.mxu0 0
    %2189 = vmatprep.subr.bf16.mxu0 0
    %2190 = vmatpush1.bf16.msra.mxu0 0
    %2191 = vmatprep.subr.bf16.mxu0 0
    %2192 = vmatpush1.bf16.msra.mxu0 0
    %2193 = vmatprep.subr.bf16.mxu0 0
    %2194 = vmatpush1.bf16.msra.mxu0 0
    %2195 = vmatprep.subr.bf16.mxu0 0
    %2196 = vmatpush1.bf16.msra.mxu0 0
    %2197 = vmatprep.subr.bf16.mxu0 0
    %2198 = vmatpush1.bf16.msra.mxu0 0
    %2199 = vmatprep.mubr.bf16.mxu0 0
    %2200 = vmatmul.mubr.bf16.gmra.mrb[0].mxu0 %v1910
    %v2201 = vpop.f32.mrb[0].mxu0
    %v2202 = vadd.f32 %v2057, %v2201
    %v2203 = vpop.f32.mrb[0].mxu0
    %v2204 = vpop.f32.mrb[0].mxu0
    %v2205 = vadd.f32 %v2060, %v2204
    %v2206 = vpop.f32.mrb[0].mxu0
    %2207 = vmatprep.mubr.bf16.mxu0 0
    %2208 = vmatmul.mubr.bf16.gmra.mrb[0].mxu0 %v1911
    %v2209 = vpop.f32.mrb[0].mxu0
    %v2210 = vadd.f32 %v2065, %v2209
    %v2211 = vpop.f32.mrb[0].mxu0
    %v2212 = vpop.f32.mrb[0].mxu0
    %v2213 = vadd.f32 %v2068, %v2212
    %v2214 = vpop.f32.mrb[0].mxu0
    %2215 = vmatprep.mubr.bf16.mxu0 0
    %2216 = vmatmul.mubr.bf16.gmra.mrb[0].mxu0 %v1912
    %v2217 = vpop.f32.mrb[0].mxu0
    %v2218 = vadd.f32 %v2073, %v2217
    %v2219 = vpop.f32.mrb[0].mxu0
    %v2220 = vpop.f32.mrb[0].mxu0
    %v2221 = vadd.f32 %v2076, %v2220
    %v2222 = vpop.f32.mrb[0].mxu0
    %2223 = vmatprep.mubr.bf16.mxu0 0
    %2224 = vmatmul.mubr.bf16.gmra.mrb[0].mxu0 %v1913
    %v2225 = vpop.f32.mrb[0].mxu0
    %v2226 = vadd.f32 %v2081, %v2225
    %v2227 = vpop.f32.mrb[0].mxu0
    %v2228 = vpop.f32.mrb[0].mxu0
    %v2229 = vadd.f32 %v2084, %v2228
    %v2230 = vpop.f32.mrb[0].mxu0
    %2231 = vmatprep.mubr.bf16.mxu0 0
    %2232 = vmatmul.mubr.bf16.gmra.mrb[0].mxu0 %v1914
    %v2233 = vpop.f32.mrb[0].mxu0
    %v2234 = vadd.f32 %v2089, %v2233
    %v2235 = vpop.f32.mrb[0].mxu0
    %v2236 = vpop.f32.mrb[0].mxu0
    %v2237 = vadd.f32 %v2092, %v2236
    %v2238 = vpop.f32.mrb[0].mxu0
    %2239 = vmatprep.mubr.bf16.mxu0 0
    %2240 = vmatmul.mubr.bf16.gmra.mrb[0].mxu0 %v1915
    %v2241 = vpop.f32.mrb[0].mxu0
    %v2242 = vadd.f32 %v2097, %v2241
    %v2243 = vpop.f32.mrb[0].mxu0
    %v2244 = vpop.f32.mrb[0].mxu0
    %v2245 = vadd.f32 %v2100, %v2244
    %v2246 = vpop.f32.mrb[0].mxu0
    %2247 = vmatprep.mubr.bf16.mxu0 0
    %2248 = vmatmul.mubr.bf16.gmra.mrb[0].mxu0 %v1916
    %v2249 = vpop.f32.mrb[0].mxu0
    %v2250 = vadd.f32 %v2105, %v2249
    %v2251 = vpop.f32.mrb[0].mxu0
    %v2252 = vpop.f32.mrb[0].mxu0
    %v2253 = vadd.f32 %v2108, %v2252
    %v2254 = vpop.f32.mrb[0].mxu0
    %2255 = vmatprep.mubr.bf16.mxu0 0
    %2256 = vmatmul.mubr.bf16.gmra.mrb[0].mxu0 %v1917
    %v2257 = vpop.f32.mrb[0].mxu0
    %v2258 = vadd.f32 %v2113, %v2257
    %v2259 = vpop.f32.mrb[0].mxu0
    %v2260 = vpop.f32.mrb[0].mxu0
    %v2261 = vadd.f32 %v2116, %v2260
    %v2262 = vpop.f32.mrb[0].mxu0
    %2263 = vdwg.mxu0
    %v2264 = vld [vmem:[%s1893 + $0x2] sm:$0xff]
    %v2265 = vld [vmem:[%s1893 + $0xa] sm:$0xff]
    %v2266 = vld [vmem:[%s1893 + $0x1a] sm:$0xff]
    %v2267 = vld [vmem:[%s1893 + $0x22] sm:$0xff]
    %v2268 = vld [vmem:[%s1893 + $0x32] sm:$0xff]
    %v2269 = vld [vmem:[%s1893 + $0x3a] sm:$0xff]
    %v2270 = vld [vmem:[%s1893 + $0x4a] sm:$0xff]
    %v2271 = vld [vmem:[%s1893 + $0x52] sm:$0xff]
    %v2272 = vld [vmem:[%s1893 + $0x62] sm:$0xff]
    %v2273 = vld [vmem:[%s1893 + $0x6a] sm:$0xff]
    %v2274 = vld [vmem:[%s1893 + $0x7a] sm:$0xff]
    %v2275 = vld [vmem:[%s1893 + $0x82] sm:$0xff]
    %v2276 = vld [vmem:[%s1893 + $0x92] sm:$0xff]
    %v2277 = vld [vmem:[%s1893 + $0x9a] sm:$0xff]
    %v2278 = vld [vmem:[%s1893 + $0xaa] sm:$0xff]
    %v2279 = vld [vmem:[%s1893 + $0xb2] sm:$0xff]
    %v2280 = vpack.c.bf16 %v2265, %v2264
    %v2281 = vpack.c.bf16 %v2267, %v2266
    %v2282 = vpack.c.bf16 %v2269, %v2268
    %v2283 = vpack.c.bf16 %v2271, %v2270
    %v2284 = vpack.c.bf16 %v2273, %v2272
    %v2285 = vpack.c.bf16 %v2275, %v2274
    %v2286 = vpack.c.bf16 %v2277, %v2276
    %v2287 = vpack.c.bf16 %v2279, %v2278
    %v2288 = vld [vmem:[%s419] sm:$0xf]
    %v2289 = vld [vmem:[%s419 + $0x4] sm:$0xf]
    %v2290 = vld [vmem:[%s419 + $0x8] sm:$0xf]
    %v2291 = vld [vmem:[%s419 + $0xc] sm:$0xf]
    %v2292 = vld [vmem:[%s419 + $0x10] sm:$0xf]
    %v2293 = vld [vmem:[%s419 + $0x14] sm:$0xf]
    %v2294 = vld [vmem:[%s419 + $0x18] sm:$0xf]
    %v2295 = vld [vmem:[%s419 + $0x1c] sm:$0xf]
    %v2296 = vld [vmem:[%s419 + $0x20] sm:$0xf]
    %v2297 = vld [vmem:[%s419 + $0x24] sm:$0xf]
    %v2298 = vld [vmem:[%s419 + $0x28] sm:$0xf]
    %v2299 = vld [vmem:[%s419 + $0x2c] sm:$0xf]
    %v2300 = vld [vmem:[%s419 + $0x30] sm:$0xf]
    %v2301 = vld [vmem:[%s419 + $0x34] sm:$0xf]
    %v2302 = vld [vmem:[%s419 + $0x38] sm:$0xf]
    %v2303 = vld [vmem:[%s419 + $0x3c] sm:$0xf]
    %v2320 = vunpack.c.l.b16 %v2288
    %v2321 = vunpack.c.l.b16 %v2289
    %v2322 = vunpack.c.l.b16 %v2290
    %v2323 = vunpack.c.l.b16 %v2291
    %v2324 = vunpack.c.l.b16 %v2292
    %v2325 = vunpack.c.l.b16 %v2293
    %v2326 = vunpack.c.l.b16 %v2294
    %v2327 = vunpack.c.l.b16 %v2295
    %v2328 = vunpack.c.l.b16 %v2296
    %v2329 = vunpack.c.l.b16 %v2297
    %v2330 = vunpack.c.l.b16 %v2298
    %v2331 = vunpack.c.l.b16 %v2299
    %v2332 = vunpack.c.l.b16 %v2300
    %v2333 = vunpack.c.l.b16 %v2301
    %v2334 = vunpack.c.l.b16 %v2302
    %v2335 = vunpack.c.l.b16 %v2303
    %v2336 = vpack.c.b16 %v2321, %v2320
    %v2337 = vpack.c.b16 %v2323, %v2322
    %v2338 = vpack.c.b16 %v2325, %v2324
    %v2339 = vpack.c.b16 %v2327, %v2326
    %v2340 = vpack.c.b16 %v2329, %v2328
    %v2341 = vpack.c.b16 %v2331, %v2330
    %v2342 = vpack.c.b16 %v2333, %v2332
    %v2343 = vpack.c.b16 %v2335, %v2334
    %2352 = vmatprep.subr.bf16.mxu0 0
    %2353 = vmatpush1.bf16.msra.mxu0 %v2336
    %2354 = vmatprep.subr.bf16.mxu0 0
    %2355 = vmatpush1.bf16.msra.mxu0 %v2337
    %2356 = vmatprep.subr.bf16.mxu0 0
    %2357 = vmatpush1.bf16.msra.mxu0 %v2338
    %2358 = vmatprep.subr.bf16.mxu0 0
    %2359 = vmatpush1.bf16.msra.mxu0 %v2339
    %2360 = vmatprep.subr.bf16.mxu0 0
    %2361 = vmatpush1.bf16.msra.mxu0 %v2340
    %2362 = vmatprep.subr.bf16.mxu0 0
    %2363 = vmatpush1.bf16.msra.mxu0 %v2341
    %2364 = vmatprep.subr.bf16.mxu0 0
    %2365 = vmatpush1.bf16.msra.mxu0 %v2342
    %2366 = vmatprep.subr.bf16.mxu0 0
    %2367 = vmatpush1.bf16.msra.mxu0 %v2343
    %2368 = vmatprep.subr.bf16.mxu0 0
    %2369 = vmatpush1.bf16.msra.mxu0 0
    %2370 = vmatprep.subr.bf16.mxu0 0
    %2371 = vmatpush1.bf16.msra.mxu0 0
    %2372 = vmatprep.subr.bf16.mxu0 0
    %2373 = vmatpush1.bf16.msra.mxu0 0
    %2374 = vmatprep.subr.bf16.mxu0 0
    %2375 = vmatpush1.bf16.msra.mxu0 0
    %2376 = vmatprep.subr.bf16.mxu0 0
    %2377 = vmatpush1.bf16.msra.mxu0 0
    %2378 = vmatprep.subr.bf16.mxu0 0
    %2379 = vmatpush1.bf16.msra.mxu0 0
    %2380 = vmatprep.subr.bf16.mxu0 0
    %2381 = vmatpush1.bf16.msra.mxu0 0
    %2382 = vmatprep.subr.bf16.mxu0 0
    %2383 = vmatpush1.bf16.msra.mxu0 0
    %2384 = vmatprep.mubr.bf16.mxu0 0
    %2385 = vmatmul.mubr.bf16.gmra.mrb[0].mxu0 %v2280
    %v2386 = vpop.f32.mrb[0].mxu0
    %v2387 = vadd.f32 0.0, %v2386
    %v2388 = vpop.f32.mrb[0].mxu0
    %v2389 = vpop.f32.mrb[0].mxu0
    %v2390 = vadd.f32 0.0, %v2389
    %v2391 = vpop.f32.mrb[0].mxu0
    %2392 = vmatprep.mubr.bf16.mxu0 0
    %2393 = vmatmul.mubr.bf16.gmra.mrb[0].mxu0 %v2281
    %v2394 = vpop.f32.mrb[0].mxu0
    %v2395 = vadd.f32 0.0, %v2394
    %v2396 = vpop.f32.mrb[0].mxu0
    %v2397 = vpop.f32.mrb[0].mxu0
    %v2398 = vadd.f32 0.0, %v2397
    %v2399 = vpop.f32.mrb[0].mxu0
    %2400 = vmatprep.mubr.bf16.mxu0 0
    %2401 = vmatmul.mubr.bf16.gmra.mrb[0].mxu0 %v2282
    %v2402 = vpop.f32.mrb[0].mxu0
    %v2403 = vadd.f32 0.0, %v2402
    %v2404 = vpop.f32.mrb[0].mxu0
    %v2405 = vpop.f32.mrb[0].mxu0
    %v2406 = vadd.f32 0.0, %v2405
    %v2407 = vpop.f32.mrb[0].mxu0
    %2408 = vmatprep.mubr.bf16.mxu0 0
    %2409 = vmatmul.mubr.bf16.gmra.mrb[0].mxu0 %v2283
    %v2410 = vpop.f32.mrb[0].mxu0
    %v2411 = vadd.f32 0.0, %v2410
    %v2412 = vpop.f32.mrb[0].mxu0
    %v2413 = vpop.f32.mrb[0].mxu0
    %v2414 = vadd.f32 0.0, %v2413
    %v2415 = vpop.f32.mrb[0].mxu0
    %2416 = vmatprep.mubr.bf16.mxu0 0
    %2417 = vmatmul.mubr.bf16.gmra.mrb[0].mxu0 %v2284
    %v2418 = vpop.f32.mrb[0].mxu0
    %v2419 = vadd.f32 0.0, %v2418
    %v2420 = vpop.f32.mrb[0].mxu0
    %v2421 = vpop.f32.mrb[0].mxu0
    %v2422 = vadd.f32 0.0, %v2421
    %v2423 = vpop.f32.mrb[0].mxu0
    %2424 = vmatprep.mubr.bf16.mxu0 0
    %2425 = vmatmul.mubr.bf16.gmra.mrb[0].mxu0 %v2285
    %v2426 = vpop.f32.mrb[0].mxu0
    %v2427 = vadd.f32 0.0, %v2426
    %v2428 = vpop.f32.mrb[0].mxu0
    %v2429 = vpop.f32.mrb[0].mxu0
    %v2430 = vadd.f32 0.0, %v2429
    %v2431 = vpop.f32.mrb[0].mxu0
    %2432 = vmatprep.mubr.bf16.mxu0 0
    %2433 = vmatmul.mubr.bf16.gmra.mrb[0].mxu0 %v2286
    %v2434 = vpop.f32.mrb[0].mxu0
    %v2435 = vadd.f32 0.0, %v2434
    %v2436 = vpop.f32.mrb[0].mxu0
    %v2437 = vpop.f32.mrb[0].mxu0
    %v2438 = vadd.f32 0.0, %v2437
    %v2439 = vpop.f32.mrb[0].mxu0
    %2440 = vmatprep.mubr.bf16.mxu0 0
    %2441 = vmatmul.mubr.bf16.gmra.mrb[0].mxu0 %v2287
    %v2442 = vpop.f32.mrb[0].mxu0
    %v2443 = vadd.f32 0.0, %v2442
    %v2444 = vpop.f32.mrb[0].mxu0
    %v2445 = vpop.f32.mrb[0].mxu0
    %v2446 = vadd.f32 0.0, %v2445
    %v2447 = vpop.f32.mrb[0].mxu0
    %2448 = vdwg.mxu0
    %v2449 = vadd.f32 %v2202, %v2387
    %v2450 = vadd.f32 %v2205, %v2390
    %v2451 = vadd.f32 %v2210, %v2395
    %v2452 = vadd.f32 %v2213, %v2398
    %v2453 = vadd.f32 %v2218, %v2403
    %v2454 = vadd.f32 %v2221, %v2406
    %v2455 = vadd.f32 %v2226, %v2411
    %v2456 = vadd.f32 %v2229, %v2414
    %v2457 = vadd.f32 %v2234, %v2419
    %v2458 = vadd.f32 %v2237, %v2422
    %v2459 = vadd.f32 %v2242, %v2427
    %v2460 = vadd.f32 %v2245, %v2430
    %v2461 = vadd.f32 %v2250, %v2435
    %v2462 = vadd.f32 %v2253, %v2438
    %v2463 = vadd.f32 %v2258, %v2443
    %v2464 = vadd.f32 %v2261, %v2446
    %s2465 = sadd.s32 216, %s22
    %s2466 = scalar_lea.vmem %s0, %s2465
    %v2467 = vld [vmem:[%s2466] sm:$0xff]
    %v2468 = vld [vmem:[%s2466 + $0x8] sm:$0xff]
    %v2469 = vld [vmem:[%s2466 + $0x18] sm:$0xff]
    %v2470 = vld [vmem:[%s2466 + $0x20] sm:$0xff]
    %v2471 = vld [vmem:[%s2466 + $0x30] sm:$0xff]
    %v2472 = vld [vmem:[%s2466 + $0x38] sm:$0xff]
    %v2473 = vld [vmem:[%s2466 + $0x48] sm:$0xff]
    %v2474 = vld [vmem:[%s2466 + $0x50] sm:$0xff]
    %v2475 = vld [vmem:[%s2466 + $0x60] sm:$0xff]
    %v2476 = vld [vmem:[%s2466 + $0x68] sm:$0xff]
    %v2477 = vld [vmem:[%s2466 + $0x78] sm:$0xff]
    %v2478 = vld [vmem:[%s2466 + $0x80] sm:$0xff]
    %v2479 = vld [vmem:[%s2466 + $0x90] sm:$0xff]
    %v2480 = vld [vmem:[%s2466 + $0x98] sm:$0xff]
    %v2481 = vld [vmem:[%s2466 + $0xa8] sm:$0xff]
    %v2482 = vld [vmem:[%s2466 + $0xb0] sm:$0xff]
    %v2483 = vpack.c.bf16 %v2468, %v2467
    %v2484 = vpack.c.bf16 %v2470, %v2469
    %v2485 = vpack.c.bf16 %v2472, %v2471
    %v2486 = vpack.c.bf16 %v2474, %v2473
    %v2487 = vpack.c.bf16 %v2476, %v2475
    %v2488 = vpack.c.bf16 %v2478, %v2477
    %v2489 = vpack.c.bf16 %v2480, %v2479
    %v2490 = vpack.c.bf16 %v2482, %v2481
    %v2491 = vld [vmem:[%s623] sm:$0xf]
    %v2492 = vld [vmem:[%s623 + $0x4] sm:$0xf]
    %v2493 = vld [vmem:[%s623 + $0x8] sm:$0xf]
    %v2494 = vld [vmem:[%s623 + $0xc] sm:$0xf]
    %v2495 = vld [vmem:[%s623 + $0x10] sm:$0xf]
    %v2496 = vld [vmem:[%s623 + $0x14] sm:$0xf]
    %v2497 = vld [vmem:[%s623 + $0x18] sm:$0xf]
    %v2498 = vld [vmem:[%s623 + $0x1c] sm:$0xf]
    %v2499 = vld [vmem:[%s623 + $0x20] sm:$0xf]
    %v2500 = vld [vmem:[%s623 + $0x24] sm:$0xf]
    %v2501 = vld [vmem:[%s623 + $0x28] sm:$0xf]
    %v2502 = vld [vmem:[%s623 + $0x2c] sm:$0xf]
    %v2503 = vld [vmem:[%s623 + $0x30] sm:$0xf]
    %v2504 = vld [vmem:[%s623 + $0x34] sm:$0xf]
    %v2505 = vld [vmem:[%s623 + $0x38] sm:$0xf]
    %v2506 = vld [vmem:[%s623 + $0x3c] sm:$0xf]
    %v2523 = vunpack.c.l.b16 %v2491
    %v2524 = vunpack.c.l.b16 %v2492
    %v2525 = vunpack.c.l.b16 %v2493
    %v2526 = vunpack.c.l.b16 %v2494
    %v2527 = vunpack.c.l.b16 %v2495
    %v2528 = vunpack.c.l.b16 %v2496
    %v2529 = vunpack.c.l.b16 %v2497
    %v2530 = vunpack.c.l.b16 %v2498
    %v2531 = vunpack.c.l.b16 %v2499
    %v2532 = vunpack.c.l.b16 %v2500
    %v2533 = vunpack.c.l.b16 %v2501
    %v2534 = vunpack.c.l.b16 %v2502
    %v2535 = vunpack.c.l.b16 %v2503
    %v2536 = vunpack.c.l.b16 %v2504
    %v2537 = vunpack.c.l.b16 %v2505
    %v2538 = vunpack.c.l.b16 %v2506
    %v2539 = vpack.c.b16 %v2524, %v2523
    %v2540 = vpack.c.b16 %v2526, %v2525
    %v2541 = vpack.c.b16 %v2528, %v2527
    %v2542 = vpack.c.b16 %v2530, %v2529
    %v2543 = vpack.c.b16 %v2532, %v2531
    %v2544 = vpack.c.b16 %v2534, %v2533
    %v2545 = vpack.c.b16 %v2536, %v2535
    %v2546 = vpack.c.b16 %v2538, %v2537
    %2555 = vmatprep.subr.bf16.mxu0 0
    %2556 = vmatpush1.bf16.msra.mxu0 %v2539
    %2557 = vmatprep.subr.bf16.mxu0 0
    %2558 = vmatpush1.bf16.msra.mxu0 %v2540
    %2559 = vmatprep.subr.bf16.mxu0 0
    %2560 = vmatpush1.bf16.msra.mxu0 %v2541
    %2561 = vmatprep.subr.bf16.mxu0 0
    %2562 = vmatpush1.bf16.msra.mxu0 %v2542
    %2563 = vmatprep.subr.bf16.mxu0 0
    %2564 = vmatpush1.bf16.msra.mxu0 %v2543
    %2565 = vmatprep.subr.bf16.mxu0 0
    %2566 = vmatpush1.bf16.msra.mxu0 %v2544
    %2567 = vmatprep.subr.bf16.mxu0 0
    %2568 = vmatpush1.bf16.msra.mxu0 %v2545
    %2569 = vmatprep.subr.bf16.mxu0 0
    %2570 = vmatpush1.bf16.msra.mxu0 %v2546
    %2571 = vmatprep.subr.bf16.mxu0 0
    %2572 = vmatpush1.bf16.msra.mxu0 0
    %2573 = vmatprep.subr.bf16.mxu0 0
    %2574 = vmatpush1.bf16.msra.mxu0 0
    %2575 = vmatprep.subr.bf16.mxu0 0
    %2576 = vmatpush1.bf16.msra.mxu0 0
    %2577 = vmatprep.subr.bf16.mxu0 0
    %2578 = vmatpush1.bf16.msra.mxu0 0
    %2579 = vmatprep.subr.bf16.mxu0 0
    %2580 = vmatpush1.bf16.msra.mxu0 0
    %2581 = vmatprep.subr.bf16.mxu0 0
    %2582 = vmatpush1.bf16.msra.mxu0 0
    %2583 = vmatprep.subr.bf16.mxu0 0
    %2584 = vmatpush1.bf16.msra.mxu0 0
    %2585 = vmatprep.subr.bf16.mxu0 0
    %2586 = vmatpush1.bf16.msra.mxu0 0
    %2587 = vmatprep.mubr.bf16.mxu0 0
    %2588 = vmatmul.mubr.bf16.gmra.mrb[0].mxu0 %v2483
    %v2589 = vpop.f32.mrb[0].mxu0
    %v2590 = vadd.f32 0.0, %v2589
    %v2591 = vpop.f32.mrb[0].mxu0
    %v2592 = vpop.f32.mrb[0].mxu0
    %v2593 = vadd.f32 0.0, %v2592
    %v2594 = vpop.f32.mrb[0].mxu0
    %2595 = vmatprep.mubr.bf16.mxu0 0
    %2596 = vmatmul.mubr.bf16.gmra.mrb[0].mxu0 %v2484
    %v2597 = vpop.f32.mrb[0].mxu0
    %v2598 = vadd.f32 0.0, %v2597
    %v2599 = vpop.f32.mrb[0].mxu0
    %v2600 = vpop.f32.mrb[0].mxu0
    %v2601 = vadd.f32 0.0, %v2600
    %v2602 = vpop.f32.mrb[0].mxu0
    %2603 = vmatprep.mubr.bf16.mxu0 0
    %2604 = vmatmul.mubr.bf16.gmra.mrb[0].mxu0 %v2485
    %v2605 = vpop.f32.mrb[0].mxu0
    %v2606 = vadd.f32 0.0, %v2605
    %v2607 = vpop.f32.mrb[0].mxu0
    %v2608 = vpop.f32.mrb[0].mxu0
    %v2609 = vadd.f32 0.0, %v2608
    %v2610 = vpop.f32.mrb[0].mxu0
    %2611 = vmatprep.mubr.bf16.mxu0 0
    %2612 = vmatmul.mubr.bf16.gmra.mrb[0].mxu0 %v2486
    %v2613 = vpop.f32.mrb[0].mxu0
    %v2614 = vadd.f32 0.0, %v2613
    %v2615 = vpop.f32.mrb[0].mxu0
    %v2616 = vpop.f32.mrb[0].mxu0
    %v2617 = vadd.f32 0.0, %v2616
    %v2618 = vpop.f32.mrb[0].mxu0
    %2619 = vmatprep.mubr.bf16.mxu0 0
    %2620 = vmatmul.mubr.bf16.gmra.mrb[0].mxu0 %v2487
    %v2621 = vpop.f32.mrb[0].mxu0
    %v2622 = vadd.f32 0.0, %v2621
    %v2623 = vpop.f32.mrb[0].mxu0
    %v2624 = vpop.f32.mrb[0].mxu0
    %v2625 = vadd.f32 0.0, %v2624
    %v2626 = vpop.f32.mrb[0].mxu0
    %2627 = vmatprep.mubr.bf16.mxu0 0
    %2628 = vmatmul.mubr.bf16.gmra.mrb[0].mxu0 %v2488
    %v2629 = vpop.f32.mrb[0].mxu0
    %v2630 = vadd.f32 0.0, %v2629
    %v2631 = vpop.f32.mrb[0].mxu0
    %v2632 = vpop.f32.mrb[0].mxu0
    %v2633 = vadd.f32 0.0, %v2632
    %v2634 = vpop.f32.mrb[0].mxu0
    %2635 = vmatprep.mubr.bf16.mxu0 0
    %2636 = vmatmul.mubr.bf16.gmra.mrb[0].mxu0 %v2489
    %v2637 = vpop.f32.mrb[0].mxu0
    %v2638 = vadd.f32 0.0, %v2637
    %v2639 = vpop.f32.mrb[0].mxu0
    %v2640 = vpop.f32.mrb[0].mxu0
    %v2641 = vadd.f32 0.0, %v2640
    %v2642 = vpop.f32.mrb[0].mxu0
    %2643 = vmatprep.mubr.bf16.mxu0 0
    %2644 = vmatmul.mubr.bf16.gmra.mrb[0].mxu0 %v2490
    %v2645 = vpop.f32.mrb[0].mxu0
    %v2646 = vadd.f32 0.0, %v2645
    %v2647 = vpop.f32.mrb[0].mxu0
    %v2648 = vpop.f32.mrb[0].mxu0
    %v2649 = vadd.f32 0.0, %v2648
    %v2650 = vpop.f32.mrb[0].mxu0
    %2651 = vdwg.mxu0
    %v2652 = vadd.f32 %v2449, %v2590
    %v2653 = vadd.f32 %v2450, %v2593
    %v2654 = vadd.f32 %v2451, %v2598
    %v2655 = vadd.f32 %v2452, %v2601
    %v2656 = vadd.f32 %v2453, %v2606
    %v2657 = vadd.f32 %v2454, %v2609
    %v2658 = vadd.f32 %v2455, %v2614
    %v2659 = vadd.f32 %v2456, %v2617
    %v2660 = vadd.f32 %v2457, %v2622
    %v2661 = vadd.f32 %v2458, %v2625
    %v2662 = vadd.f32 %v2459, %v2630
    %v2663 = vadd.f32 %v2460, %v2633
    %v2664 = vadd.f32 %v2461, %v2638
    %v2665 = vadd.f32 %v2462, %v2641
    %v2666 = vadd.f32 %v2463, %v2646
    %v2667 = vadd.f32 %v2464, %v2649
    %v2668 = vld [vmem:[%s2466 + $0x1] sm:$0xff]
    %v2669 = vld [vmem:[%s2466 + $0x9] sm:$0xff]
    %v2670 = vld [vmem:[%s2466 + $0x19] sm:$0xff]
    %v2671 = vld [vmem:[%s2466 + $0x21] sm:$0xff]
    %v2672 = vld [vmem:[%s2466 + $0x31] sm:$0xff]
    %v2673 = vld [vmem:[%s2466 + $0x39] sm:$0xff]
    %v2674 = vld [vmem:[%s2466 + $0x49] sm:$0xff]
    %v2675 = vld [vmem:[%s2466 + $0x51] sm:$0xff]
    %v2676 = vld [vmem:[%s2466 + $0x61] sm:$0xff]
    %v2677 = vld [vmem:[%s2466 + $0x69] sm:$0xff]
    %v2678 = vld [vmem:[%s2466 + $0x79] sm:$0xff]
    %v2679 = vld [vmem:[%s2466 + $0x81] sm:$0xff]
    %v2680 = vld [vmem:[%s2466 + $0x91] sm:$0xff]
    %v2681 = vld [vmem:[%s2466 + $0x99] sm:$0xff]
    %v2682 = vld [vmem:[%s2466 + $0xa9] sm:$0xff]
    %v2683 = vld [vmem:[%s2466 + $0xb1] sm:$0xff]
    %v2684 = vpack.c.bf16 %v2669, %v2668
    %v2685 = vpack.c.bf16 %v2671, %v2670
    %v2686 = vpack.c.bf16 %v2673, %v2672
    %v2687 = vpack.c.bf16 %v2675, %v2674
    %v2688 = vpack.c.bf16 %v2677, %v2676
    %v2689 = vpack.c.bf16 %v2679, %v2678
    %v2690 = vpack.c.bf16 %v2681, %v2680
    %v2691 = vpack.c.bf16 %v2683, %v2682
    %v2692 = vld [vmem:[%s825] sm:$0xf]
    %v2693 = vld [vmem:[%s825 + $0x4] sm:$0xf]
    %v2694 = vld [vmem:[%s825 + $0x8] sm:$0xf]
    %v2695 = vld [vmem:[%s825 + $0xc] sm:$0xf]
    %v2696 = vld [vmem:[%s825 + $0x10] sm:$0xf]
    %v2697 = vld [vmem:[%s825 + $0x14] sm:$0xf]
    %v2698 = vld [vmem:[%s825 + $0x18] sm:$0xf]
    %v2699 = vld [vmem:[%s825 + $0x1c] sm:$0xf]
    %v2700 = vld [vmem:[%s825 + $0x20] sm:$0xf]
    %v2701 = vld [vmem:[%s825 + $0x24] sm:$0xf]
    %v2702 = vld [vmem:[%s825 + $0x28] sm:$0xf]
    %v2703 = vld [vmem:[%s825 + $0x2c] sm:$0xf]
    %v2704 = vld [vmem:[%s825 + $0x30] sm:$0xf]
    %v2705 = vld [vmem:[%s825 + $0x34] sm:$0xf]
    %v2706 = vld [vmem:[%s825 + $0x38] sm:$0xf]
    %v2707 = vld [vmem:[%s825 + $0x3c] sm:$0xf]
    %v2724 = vunpack.c.l.b16 %v2692
    %v2725 = vunpack.c.l.b16 %v2693
    %v2726 = vunpack.c.l.b16 %v2694
    %v2727 = vunpack.c.l.b16 %v2695
    %v2728 = vunpack.c.l.b16 %v2696
    %v2729 = vunpack.c.l.b16 %v2697
    %v2730 = vunpack.c.l.b16 %v2698
    %v2731 = vunpack.c.l.b16 %v2699
    %v2732 = vunpack.c.l.b16 %v2700
    %v2733 = vunpack.c.l.b16 %v2701
    %v2734 = vunpack.c.l.b16 %v2702
    %v2735 = vunpack.c.l.b16 %v2703
    %v2736 = vunpack.c.l.b16 %v2704
    %v2737 = vunpack.c.l.b16 %v2705
    %v2738 = vunpack.c.l.b16 %v2706
    %v2739 = vunpack.c.l.b16 %v2707
    %v2740 = vpack.c.b16 %v2725, %v2724
    %v2741 = vpack.c.b16 %v2727, %v2726
    %v2742 = vpack.c.b16 %v2729, %v2728
    %v2743 = vpack.c.b16 %v2731, %v2730
    %v2744 = vpack.c.b16 %v2733, %v2732
    %v2745 = vpack.c.b16 %v2735, %v2734
    %v2746 = vpack.c.b16 %v2737, %v2736
    %v2747 = vpack.c.b16 %v2739, %v2738
    %2756 = vmatprep.subr.bf16.mxu0 0
    %2757 = vmatpush1.bf16.msra.mxu0 %v2740
    %2758 = vmatprep.subr.bf16.mxu0 0
    %2759 = vmatpush1.bf16.msra.mxu0 %v2741
    %2760 = vmatprep.subr.bf16.mxu0 0
    %2761 = vmatpush1.bf16.msra.mxu0 %v2742
    %2762 = vmatprep.subr.bf16.mxu0 0
    %2763 = vmatpush1.bf16.msra.mxu0 %v2743
    %2764 = vmatprep.subr.bf16.mxu0 0
    %2765 = vmatpush1.bf16.msra.mxu0 %v2744
    %2766 = vmatprep.subr.bf16.mxu0 0
    %2767 = vmatpush1.bf16.msra.mxu0 %v2745
    %2768 = vmatprep.subr.bf16.mxu0 0
    %2769 = vmatpush1.bf16.msra.mxu0 %v2746
    %2770 = vmatprep.subr.bf16.mxu0 0
    %2771 = vmatpush1.bf16.msra.mxu0 %v2747
    %2772 = vmatprep.subr.bf16.mxu0 0
    %2773 = vmatpush1.bf16.msra.mxu0 0
    %2774 = vmatprep.subr.bf16.mxu0 0
    %2775 = vmatpush1.bf16.msra.mxu0 0
    %2776 = vmatprep.subr.bf16.mxu0 0
    %2777 = vmatpush1.bf16.msra.mxu0 0
    %2778 = vmatprep.subr.bf16.mxu0 0
    %2779 = vmatpush1.bf16.msra.mxu0 0
    %2780 = vmatprep.subr.bf16.mxu0 0
    %2781 = vmatpush1.bf16.msra.mxu0 0
    %2782 = vmatprep.subr.bf16.mxu0 0
    %2783 = vmatpush1.bf16.msra.mxu0 0
    %2784 = vmatprep.subr.bf16.mxu0 0
    %2785 = vmatpush1.bf16.msra.mxu0 0
    %2786 = vmatprep.subr.bf16.mxu0 0
    %2787 = vmatpush1.bf16.msra.mxu0 0
    %2788 = vmatprep.mubr.bf16.mxu0 0
    %2789 = vmatmul.mubr.bf16.gmra.mrb[0].mxu0 %v2684
    %v2790 = vpop.f32.mrb[0].mxu0
    %v2791 = vadd.f32 0.0, %v2790
    %v2792 = vpop.f32.mrb[0].mxu0
    %v2793 = vpop.f32.mrb[0].mxu0
    %v2794 = vadd.f32 0.0, %v2793
    %v2795 = vpop.f32.mrb[0].mxu0
    %2796 = vmatprep.mubr.bf16.mxu0 0
    %2797 = vmatmul.mubr.bf16.gmra.mrb[0].mxu0 %v2685
    %v2798 = vpop.f32.mrb[0].mxu0
    %v2799 = vadd.f32 0.0, %v2798
    %v2800 = vpop.f32.mrb[0].mxu0
    %v2801 = vpop.f32.mrb[0].mxu0
    %v2802 = vadd.f32 0.0, %v2801
    %v2803 = vpop.f32.mrb[0].mxu0
    %2804 = vmatprep.mubr.bf16.mxu0 0
    %2805 = vmatmul.mubr.bf16.gmra.mrb[0].mxu0 %v2686
    %v2806 = vpop.f32.mrb[0].mxu0
    %v2807 = vadd.f32 0.0, %v2806
    %v2808 = vpop.f32.mrb[0].mxu0
    %v2809 = vpop.f32.mrb[0].mxu0
    %v2810 = vadd.f32 0.0, %v2809
    %v2811 = vpop.f32.mrb[0].mxu0
    %2812 = vmatprep.mubr.bf16.mxu0 0
    %2813 = vmatmul.mubr.bf16.gmra.mrb[0].mxu0 %v2687
    %v2814 = vpop.f32.mrb[0].mxu0
    %v2815 = vadd.f32 0.0, %v2814
    %v2816 = vpop.f32.mrb[0].mxu0
    %v2817 = vpop.f32.mrb[0].mxu0
    %v2818 = vadd.f32 0.0, %v2817
    %v2819 = vpop.f32.mrb[0].mxu0
    %2820 = vmatprep.mubr.bf16.mxu0 0
    %2821 = vmatmul.mubr.bf16.gmra.mrb[0].mxu0 %v2688
    %v2822 = vpop.f32.mrb[0].mxu0
    %v2823 = vadd.f32 0.0, %v2822
    %v2824 = vpop.f32.mrb[0].mxu0
    %v2825 = vpop.f32.mrb[0].mxu0
    %v2826 = vadd.f32 0.0, %v2825
    %v2827 = vpop.f32.mrb[0].mxu0
    %2828 = vmatprep.mubr.bf16.mxu0 0
    %2829 = vmatmul.mubr.bf16.gmra.mrb[0].mxu0 %v2689
    %v2830 = vpop.f32.mrb[0].mxu0
    %v2831 = vadd.f32 0.0, %v2830
    %v2832 = vpop.f32.mrb[0].mxu0
    %v2833 = vpop.f32.mrb[0].mxu0
    %v2834 = vadd.f32 0.0, %v2833
    %v2835 = vpop.f32.mrb[0].mxu0
    %2836 = vmatprep.mubr.bf16.mxu0 0
    %2837 = vmatmul.mubr.bf16.gmra.mrb[0].mxu0 %v2690
    %v2838 = vpop.f32.mrb[0].mxu0
    %v2839 = vadd.f32 0.0, %v2838
    %v2840 = vpop.f32.mrb[0].mxu0
    %v2841 = vpop.f32.mrb[0].mxu0
    %v2842 = vadd.f32 0.0, %v2841
    %v2843 = vpop.f32.mrb[0].mxu0
    %2844 = vmatprep.mubr.bf16.mxu0 0
    %2845 = vmatmul.mubr.bf16.gmra.mrb[0].mxu0 %v2691
    %v2846 = vpop.f32.mrb[0].mxu0
    %v2847 = vadd.f32 0.0, %v2846
    %v2848 = vpop.f32.mrb[0].mxu0
    %v2849 = vpop.f32.mrb[0].mxu0
    %v2850 = vadd.f32 0.0, %v2849
    %v2851 = vpop.f32.mrb[0].mxu0
    %2852 = vdwg.mxu0
    %v2853 = vadd.f32 %v2652, %v2791
    %v2854 = vadd.f32 %v2653, %v2794
    %v2855 = vadd.f32 %v2654, %v2799
    %v2856 = vadd.f32 %v2655, %v2802
    %v2857 = vadd.f32 %v2656, %v2807
    %v2858 = vadd.f32 %v2657, %v2810
    %v2859 = vadd.f32 %v2658, %v2815
    %v2860 = vadd.f32 %v2659, %v2818
    %v2861 = vadd.f32 %v2660, %v2823
    %v2862 = vadd.f32 %v2661, %v2826
    %v2863 = vadd.f32 %v2662, %v2831
    %v2864 = vadd.f32 %v2663, %v2834
    %v2865 = vadd.f32 %v2664, %v2839
    %v2866 = vadd.f32 %v2665, %v2842
    %v2867 = vadd.f32 %v2666, %v2847
    %v2868 = vadd.f32 %v2667, %v2850
    %v2869 = vld [vmem:[%s2466 + $0x2] sm:$0xff]
    %v2870 = vld [vmem:[%s2466 + $0xa] sm:$0xff]
    %v2871 = vld [vmem:[%s2466 + $0x1a] sm:$0xff]
    %v2872 = vld [vmem:[%s2466 + $0x22] sm:$0xff]
    %v2873 = vld [vmem:[%s2466 + $0x32] sm:$0xff]
    %v2874 = vld [vmem:[%s2466 + $0x3a] sm:$0xff]
    %v2875 = vld [vmem:[%s2466 + $0x4a] sm:$0xff]
    %v2876 = vld [vmem:[%s2466 + $0x52] sm:$0xff]
    %v2877 = vld [vmem:[%s2466 + $0x62] sm:$0xff]
    %v2878 = vld [vmem:[%s2466 + $0x6a] sm:$0xff]
    %v2879 = vld [vmem:[%s2466 + $0x7a] sm:$0xff]
    %v2880 = vld [vmem:[%s2466 + $0x82] sm:$0xff]
    %v2881 = vld [vmem:[%s2466 + $0x92] sm:$0xff]
    %v2882 = vld [vmem:[%s2466 + $0x9a] sm:$0xff]
    %v2883 = vld [vmem:[%s2466 + $0xaa] sm:$0xff]
    %v2884 = vld [vmem:[%s2466 + $0xb2] sm:$0xff]
    %v2885 = vpack.c.bf16 %v2870, %v2869
    %v2886 = vpack.c.bf16 %v2872, %v2871
    %v2887 = vpack.c.bf16 %v2874, %v2873
    %v2888 = vpack.c.bf16 %v2876, %v2875
    %v2889 = vpack.c.bf16 %v2878, %v2877
    %v2890 = vpack.c.bf16 %v2880, %v2879
    %v2891 = vpack.c.bf16 %v2882, %v2881
    %v2892 = vpack.c.bf16 %v2884, %v2883
    %v2893 = vld [vmem:[%s1027] sm:$0xf]
    %v2894 = vld [vmem:[%s1027 + $0x4] sm:$0xf]
    %v2895 = vld [vmem:[%s1027 + $0x8] sm:$0xf]
    %v2896 = vld [vmem:[%s1027 + $0xc] sm:$0xf]
    %v2897 = vld [vmem:[%s1027 + $0x10] sm:$0xf]
    %v2898 = vld [vmem:[%s1027 + $0x14] sm:$0xf]
    %v2899 = vld [vmem:[%s1027 + $0x18] sm:$0xf]
    %v2900 = vld [vmem:[%s1027 + $0x1c] sm:$0xf]
    %v2901 = vld [vmem:[%s1027 + $0x20] sm:$0xf]
    %v2902 = vld [vmem:[%s1027 + $0x24] sm:$0xf]
    %v2903 = vld [vmem:[%s1027 + $0x28] sm:$0xf]
    %v2904 = vld [vmem:[%s1027 + $0x2c] sm:$0xf]
    %v2905 = vld [vmem:[%s1027 + $0x30] sm:$0xf]
    %v2906 = vld [vmem:[%s1027 + $0x34] sm:$0xf]
    %v2907 = vld [vmem:[%s1027 + $0x38] sm:$0xf]
    %v2908 = vld [vmem:[%s1027 + $0x3c] sm:$0xf]
    %v2925 = vunpack.c.l.b16 %v2893
    %v2926 = vunpack.c.l.b16 %v2894
    %v2927 = vunpack.c.l.b16 %v2895
    %v2928 = vunpack.c.l.b16 %v2896
    %v2929 = vunpack.c.l.b16 %v2897
    %v2930 = vunpack.c.l.b16 %v2898
    %v2931 = vunpack.c.l.b16 %v2899
    %v2932 = vunpack.c.l.b16 %v2900
    %v2933 = vunpack.c.l.b16 %v2901
    %v2934 = vunpack.c.l.b16 %v2902
    %v2935 = vunpack.c.l.b16 %v2903
    %v2936 = vunpack.c.l.b16 %v2904
    %v2937 = vunpack.c.l.b16 %v2905
    %v2938 = vunpack.c.l.b16 %v2906
    %v2939 = vunpack.c.l.b16 %v2907
    %v2940 = vunpack.c.l.b16 %v2908
    %v2941 = vpack.c.b16 %v2926, %v2925
    %v2942 = vpack.c.b16 %v2928, %v2927
    %v2943 = vpack.c.b16 %v2930, %v2929
    %v2944 = vpack.c.b16 %v2932, %v2931
    %v2945 = vpack.c.b16 %v2934, %v2933
    %v2946 = vpack.c.b16 %v2936, %v2935
    %v2947 = vpack.c.b16 %v2938, %v2937
    %v2948 = vpack.c.b16 %v2940, %v2939
    %2957 = vmatprep.subr.bf16.mxu0 0
    %2958 = vmatpush1.bf16.msra.mxu0 %v2941
    %2959 = vmatprep.subr.bf16.mxu0 0
    %2960 = vmatpush1.bf16.msra.mxu0 %v2942
    %2961 = vmatprep.subr.bf16.mxu0 0
    %2962 = vmatpush1.bf16.msra.mxu0 %v2943
    %2963 = vmatprep.subr.bf16.mxu0 0
    %2964 = vmatpush1.bf16.msra.mxu0 %v2944
    %2965 = vmatprep.subr.bf16.mxu0 0
    %2966 = vmatpush1.bf16.msra.mxu0 %v2945
    %2967 = vmatprep.subr.bf16.mxu0 0
    %2968 = vmatpush1.bf16.msra.mxu0 %v2946
    %2969 = vmatprep.subr.bf16.mxu0 0
    %2970 = vmatpush1.bf16.msra.mxu0 %v2947
    %2971 = vmatprep.subr.bf16.mxu0 0
    %2972 = vmatpush1.bf16.msra.mxu0 %v2948
    %2973 = vmatprep.subr.bf16.mxu0 0
    %2974 = vmatpush1.bf16.msra.mxu0 0
    %2975 = vmatprep.subr.bf16.mxu0 0
    %2976 = vmatpush1.bf16.msra.mxu0 0
    %2977 = vmatprep.subr.bf16.mxu0 0
    %2978 = vmatpush1.bf16.msra.mxu0 0
    %2979 = vmatprep.subr.bf16.mxu0 0
    %2980 = vmatpush1.bf16.msra.mxu0 0
    %2981 = vmatprep.subr.bf16.mxu0 0
    %2982 = vmatpush1.bf16.msra.mxu0 0
    %2983 = vmatprep.subr.bf16.mxu0 0
    %2984 = vmatpush1.bf16.msra.mxu0 0
    %2985 = vmatprep.subr.bf16.mxu0 0
    %2986 = vmatpush1.bf16.msra.mxu0 0
    %2987 = vmatprep.subr.bf16.mxu0 0
    %2988 = vmatpush1.bf16.msra.mxu0 0
    %2989 = vmatprep.mubr.bf16.mxu0 0
    %2990 = vmatmul.mubr.bf16.gmra.mrb[0].mxu0 %v2885
    %v2991 = vpop.f32.mrb[0].mxu0
    %v2992 = vadd.f32 0.0, %v2991
    %v2993 = vpop.f32.mrb[0].mxu0
    %v2994 = vpop.f32.mrb[0].mxu0
    %v2995 = vadd.f32 0.0, %v2994
    %v2996 = vpop.f32.mrb[0].mxu0
    %2997 = vmatprep.mubr.bf16.mxu0 0
    %2998 = vmatmul.mubr.bf16.gmra.mrb[0].mxu0 %v2886
    %v2999 = vpop.f32.mrb[0].mxu0
    %v3000 = vadd.f32 0.0, %v2999
    %v3001 = vpop.f32.mrb[0].mxu0
    %v3002 = vpop.f32.mrb[0].mxu0
    %v3003 = vadd.f32 0.0, %v3002
    %v3004 = vpop.f32.mrb[0].mxu0
    %3005 = vmatprep.mubr.bf16.mxu0 0
    %3006 = vmatmul.mubr.bf16.gmra.mrb[0].mxu0 %v2887
    %v3007 = vpop.f32.mrb[0].mxu0
    %v3008 = vadd.f32 0.0, %v3007
    %v3009 = vpop.f32.mrb[0].mxu0
    %v3010 = vpop.f32.mrb[0].mxu0
    %v3011 = vadd.f32 0.0, %v3010
    %v3012 = vpop.f32.mrb[0].mxu0
    %3013 = vmatprep.mubr.bf16.mxu0 0
    %3014 = vmatmul.mubr.bf16.gmra.mrb[0].mxu0 %v2888
    %v3015 = vpop.f32.mrb[0].mxu0
    %v3016 = vadd.f32 0.0, %v3015
    %v3017 = vpop.f32.mrb[0].mxu0
    %v3018 = vpop.f32.mrb[0].mxu0
    %v3019 = vadd.f32 0.0, %v3018
    %v3020 = vpop.f32.mrb[0].mxu0
    %3021 = vmatprep.mubr.bf16.mxu0 0
    %3022 = vmatmul.mubr.bf16.gmra.mrb[0].mxu0 %v2889
    %v3023 = vpop.f32.mrb[0].mxu0
    %v3024 = vadd.f32 0.0, %v3023
    %v3025 = vpop.f32.mrb[0].mxu0
    %v3026 = vpop.f32.mrb[0].mxu0
    %v3027 = vadd.f32 0.0, %v3026
    %v3028 = vpop.f32.mrb[0].mxu0
    %3029 = vmatprep.mubr.bf16.mxu0 0
    %3030 = vmatmul.mubr.bf16.gmra.mrb[0].mxu0 %v2890
    %v3031 = vpop.f32.mrb[0].mxu0
    %v3032 = vadd.f32 0.0, %v3031
    %v3033 = vpop.f32.mrb[0].mxu0
    %v3034 = vpop.f32.mrb[0].mxu0
    %v3035 = vadd.f32 0.0, %v3034
    %v3036 = vpop.f32.mrb[0].mxu0
    %3037 = vmatprep.mubr.bf16.mxu0 0
    %3038 = vmatmul.mubr.bf16.gmra.mrb[0].mxu0 %v2891
    %v3039 = vpop.f32.mrb[0].mxu0
    %v3040 = vadd.f32 0.0, %v3039
    %v3041 = vpop.f32.mrb[0].mxu0
    %v3042 = vpop.f32.mrb[0].mxu0
    %v3043 = vadd.f32 0.0, %v3042
    %v3044 = vpop.f32.mrb[0].mxu0
    %3045 = vmatprep.mubr.bf16.mxu0 0
    %3046 = vmatmul.mubr.bf16.gmra.mrb[0].mxu0 %v2892
    %v3047 = vpop.f32.mrb[0].mxu0
    %v3048 = vadd.f32 0.0, %v3047
    %v3049 = vpop.f32.mrb[0].mxu0
    %v3050 = vpop.f32.mrb[0].mxu0
    %v3051 = vadd.f32 0.0, %v3050
    %v3052 = vpop.f32.mrb[0].mxu0
    %3053 = vdwg.mxu0
    %v3054 = vadd.f32 %v2853, %v2992
    %v3055 = vadd.f32 %v2854, %v2995
    %v3056 = vadd.f32 %v2855, %v3000
    %v3057 = vadd.f32 %v2856, %v3003
    %v3058 = vadd.f32 %v2857, %v3008
    %v3059 = vadd.f32 %v2858, %v3011
    %v3060 = vadd.f32 %v2859, %v3016
    %v3061 = vadd.f32 %v2860, %v3019
    %v3062 = vadd.f32 %v2861, %v3024
    %v3063 = vadd.f32 %v2862, %v3027
    %v3064 = vadd.f32 %v2863, %v3032
    %v3065 = vadd.f32 %v2864, %v3035
    %v3066 = vadd.f32 %v2865, %v3040
    %v3067 = vadd.f32 %v2866, %v3043
    %v3068 = vadd.f32 %v2867, %v3048
    %v3069 = vadd.f32 %v2868, %v3051
    %s3070 = sadd.s32 240, %s22
    %s3071 = scalar_lea.vmem %s0, %s3070
    %v3072 = vld [vmem:[%s3071] sm:$0xff]
    %v3073 = vld [vmem:[%s3071 + $0x8] sm:$0xff]
    %v3074 = vld [vmem:[%s3071 + $0x18] sm:$0xff]
    %v3075 = vld [vmem:[%s3071 + $0x20] sm:$0xff]
    %v3076 = vld [vmem:[%s3071 + $0x30] sm:$0xff]
    %v3077 = vld [vmem:[%s3071 + $0x38] sm:$0xff]
    %v3078 = vld [vmem:[%s3071 + $0x48] sm:$0xff]
    %v3079 = vld [vmem:[%s3071 + $0x50] sm:$0xff]
    %v3080 = vld [vmem:[%s3071 + $0x60] sm:$0xff]
    %v3081 = vld [vmem:[%s3071 + $0x68] sm:$0xff]
    %v3082 = vld [vmem:[%s3071 + $0x78] sm:$0xff]
    %v3083 = vld [vmem:[%s3071 + $0x80] sm:$0xff]
    %v3084 = vld [vmem:[%s3071 + $0x90] sm:$0xff]
    %v3085 = vld [vmem:[%s3071 + $0x98] sm:$0xff]
    %v3086 = vld [vmem:[%s3071 + $0xa8] sm:$0xff]
    %v3087 = vld [vmem:[%s3071 + $0xb0] sm:$0xff]
    %v3088 = vpack.c.bf16 %v3073, %v3072
    %v3089 = vpack.c.bf16 %v3075, %v3074
    %v3090 = vpack.c.bf16 %v3077, %v3076
    %v3091 = vpack.c.bf16 %v3079, %v3078
    %v3092 = vpack.c.bf16 %v3081, %v3080
    %v3093 = vpack.c.bf16 %v3083, %v3082
    %v3094 = vpack.c.bf16 %v3085, %v3084
    %v3095 = vpack.c.bf16 %v3087, %v3086
    %v3096 = vld [vmem:[%s1231] sm:$0xf]
    %v3097 = vld [vmem:[%s1231 + $0x4] sm:$0xf]
    %v3098 = vld [vmem:[%s1231 + $0x8] sm:$0xf]
    %v3099 = vld [vmem:[%s1231 + $0xc] sm:$0xf]
    %v3100 = vld [vmem:[%s1231 + $0x10] sm:$0xf]
    %v3101 = vld [vmem:[%s1231 + $0x14] sm:$0xf]
    %v3102 = vld [vmem:[%s1231 + $0x18] sm:$0xf]
    %v3103 = vld [vmem:[%s1231 + $0x1c] sm:$0xf]
    %v3104 = vld [vmem:[%s1231 + $0x20] sm:$0xf]
    %v3105 = vld [vmem:[%s1231 + $0x24] sm:$0xf]
    %v3106 = vld [vmem:[%s1231 + $0x28] sm:$0xf]
    %v3107 = vld [vmem:[%s1231 + $0x2c] sm:$0xf]
    %v3108 = vld [vmem:[%s1231 + $0x30] sm:$0xf]
    %v3109 = vld [vmem:[%s1231 + $0x34] sm:$0xf]
    %v3110 = vld [vmem:[%s1231 + $0x38] sm:$0xf]
    %v3111 = vld [vmem:[%s1231 + $0x3c] sm:$0xf]
    %v3128 = vunpack.c.l.b16 %v3096
    %v3129 = vunpack.c.l.b16 %v3097
    %v3130 = vunpack.c.l.b16 %v3098
    %v3131 = vunpack.c.l.b16 %v3099
    %v3132 = vunpack.c.l.b16 %v3100
    %v3133 = vunpack.c.l.b16 %v3101
    %v3134 = vunpack.c.l.b16 %v3102
    %v3135 = vunpack.c.l.b16 %v3103
    %v3136 = vunpack.c.l.b16 %v3104
    %v3137 = vunpack.c.l.b16 %v3105
    %v3138 = vunpack.c.l.b16 %v3106
    %v3139 = vunpack.c.l.b16 %v3107
    %v3140 = vunpack.c.l.b16 %v3108
    %v3141 = vunpack.c.l.b16 %v3109
    %v3142 = vunpack.c.l.b16 %v3110
    %v3143 = vunpack.c.l.b16 %v3111
    %v3144 = vpack.c.b16 %v3129, %v3128
    %v3145 = vpack.c.b16 %v3131, %v3130
    %v3146 = vpack.c.b16 %v3133, %v3132
    %v3147 = vpack.c.b16 %v3135, %v3134
    %v3148 = vpack.c.b16 %v3137, %v3136
    %v3149 = vpack.c.b16 %v3139, %v3138
    %v3150 = vpack.c.b16 %v3141, %v3140
    %v3151 = vpack.c.b16 %v3143, %v3142
    %3160 = vmatprep.subr.bf16.mxu0 0
    %3161 = vmatpush1.bf16.msra.mxu0 %v3144
    %3162 = vmatprep.subr.bf16.mxu0 0
    %3163 = vmatpush1.bf16.msra.mxu0 %v3145
    %3164 = vmatprep.subr.bf16.mxu0 0
    %3165 = vmatpush1.bf16.msra.mxu0 %v3146
    %3166 = vmatprep.subr.bf16.mxu0 0
    %3167 = vmatpush1.bf16.msra.mxu0 %v3147
    %3168 = vmatprep.subr.bf16.mxu0 0
    %3169 = vmatpush1.bf16.msra.mxu0 %v3148
    %3170 = vmatprep.subr.bf16.mxu0 0
    %3171 = vmatpush1.bf16.msra.mxu0 %v3149
    %3172 = vmatprep.subr.bf16.mxu0 0
    %3173 = vmatpush1.bf16.msra.mxu0 %v3150
    %3174 = vmatprep.subr.bf16.mxu0 0
    %3175 = vmatpush1.bf16.msra.mxu0 %v3151
    %3176 = vmatprep.subr.bf16.mxu0 0
    %3177 = vmatpush1.bf16.msra.mxu0 0
    %3178 = vmatprep.subr.bf16.mxu0 0
    %3179 = vmatpush1.bf16.msra.mxu0 0
    %3180 = vmatprep.subr.bf16.mxu0 0
    %3181 = vmatpush1.bf16.msra.mxu0 0
    %3182 = vmatprep.subr.bf16.mxu0 0
    %3183 = vmatpush1.bf16.msra.mxu0 0
    %3184 = vmatprep.subr.bf16.mxu0 0
    %3185 = vmatpush1.bf16.msra.mxu0 0
    %3186 = vmatprep.subr.bf16.mxu0 0
    %3187 = vmatpush1.bf16.msra.mxu0 0
    %3188 = vmatprep.subr.bf16.mxu0 0
    %3189 = vmatpush1.bf16.msra.mxu0 0
    %3190 = vmatprep.subr.bf16.mxu0 0
    %3191 = vmatpush1.bf16.msra.mxu0 0
    %3192 = vmatprep.mubr.bf16.mxu0 0
    %3193 = vmatmul.mubr.bf16.gmra.mrb[0].mxu0 %v3088
    %v3194 = vpop.f32.mrb[0].mxu0
    %v3195 = vadd.f32 0.0, %v3194
    %v3196 = vpop.f32.mrb[0].mxu0
    %v3197 = vpop.f32.mrb[0].mxu0
    %v3198 = vadd.f32 0.0, %v3197
    %v3199 = vpop.f32.mrb[0].mxu0
    %3200 = vmatprep.mubr.bf16.mxu0 0
    %3201 = vmatmul.mubr.bf16.gmra.mrb[0].mxu0 %v3089
    %v3202 = vpop.f32.mrb[0].mxu0
    %v3203 = vadd.f32 0.0, %v3202
    %v3204 = vpop.f32.mrb[0].mxu0
    %v3205 = vpop.f32.mrb[0].mxu0
    %v3206 = vadd.f32 0.0, %v3205
    %v3207 = vpop.f32.mrb[0].mxu0
    %3208 = vmatprep.mubr.bf16.mxu0 0
    %3209 = vmatmul.mubr.bf16.gmra.mrb[0].mxu0 %v3090
    %v3210 = vpop.f32.mrb[0].mxu0
    %v3211 = vadd.f32 0.0, %v3210
    %v3212 = vpop.f32.mrb[0].mxu0
    %v3213 = vpop.f32.mrb[0].mxu0
    %v3214 = vadd.f32 0.0, %v3213
    %v3215 = vpop.f32.mrb[0].mxu0
    %3216 = vmatprep.mubr.bf16.mxu0 0
    %3217 = vmatmul.mubr.bf16.gmra.mrb[0].mxu0 %v3091
    %v3218 = vpop.f32.mrb[0].mxu0
    %v3219 = vadd.f32 0.0, %v3218
    %v3220 = vpop.f32.mrb[0].mxu0
    %v3221 = vpop.f32.mrb[0].mxu0
    %v3222 = vadd.f32 0.0, %v3221
    %v3223 = vpop.f32.mrb[0].mxu0
    %3224 = vmatprep.mubr.bf16.mxu0 0
    %3225 = vmatmul.mubr.bf16.gmra.mrb[0].mxu0 %v3092
    %v3226 = vpop.f32.mrb[0].mxu0
    %v3227 = vadd.f32 0.0, %v3226
    %v3228 = vpop.f32.mrb[0].mxu0
    %v3229 = vpop.f32.mrb[0].mxu0
    %v3230 = vadd.f32 0.0, %v3229
    %v3231 = vpop.f32.mrb[0].mxu0
    %3232 = vmatprep.mubr.bf16.mxu0 0
    %3233 = vmatmul.mubr.bf16.gmra.mrb[0].mxu0 %v3093
    %v3234 = vpop.f32.mrb[0].mxu0
    %v3235 = vadd.f32 0.0, %v3234
    %v3236 = vpop.f32.mrb[0].mxu0
    %v3237 = vpop.f32.mrb[0].mxu0
    %v3238 = vadd.f32 0.0, %v3237
    %v3239 = vpop.f32.mrb[0].mxu0
    %3240 = vmatprep.mubr.bf16.mxu0 0
    %3241 = vmatmul.mubr.bf16.gmra.mrb[0].mxu0 %v3094
    %v3242 = vpop.f32.mrb[0].mxu0
    %v3243 = vadd.f32 0.0, %v3242
    %v3244 = vpop.f32.mrb[0].mxu0
    %v3245 = vpop.f32.mrb[0].mxu0
    %v3246 = vadd.f32 0.0, %v3245
    %v3247 = vpop.f32.mrb[0].mxu0
    %3248 = vmatprep.mubr.bf16.mxu0 0
    %3249 = vmatmul.mubr.bf16.gmra.mrb[0].mxu0 %v3095
    %v3250 = vpop.f32.mrb[0].mxu0
    %v3251 = vadd.f32 0.0, %v3250
    %v3252 = vpop.f32.mrb[0].mxu0
    %v3253 = vpop.f32.mrb[0].mxu0
    %v3254 = vadd.f32 0.0, %v3253
    %v3255 = vpop.f32.mrb[0].mxu0
    %3256 = vdwg.mxu0
    %v3257 = vadd.f32 %v3054, %v3195
    %v3258 = vadd.f32 %v3055, %v3198
    %v3259 = vadd.f32 %v3056, %v3203
    %v3260 = vadd.f32 %v3057, %v3206
    %v3261 = vadd.f32 %v3058, %v3211
    %v3262 = vadd.f32 %v3059, %v3214
    %v3263 = vadd.f32 %v3060, %v3219
    %v3264 = vadd.f32 %v3061, %v3222
    %v3265 = vadd.f32 %v3062, %v3227
    %v3266 = vadd.f32 %v3063, %v3230
    %v3267 = vadd.f32 %v3064, %v3235
    %v3268 = vadd.f32 %v3065, %v3238
    %v3269 = vadd.f32 %v3066, %v3243
    %v3270 = vadd.f32 %v3067, %v3246
    %v3271 = vadd.f32 %v3068, %v3251
    %v3272 = vadd.f32 %v3069, %v3254
    %v3273 = vld [vmem:[%s3071 + $0x1] sm:$0xff]
    %v3274 = vld [vmem:[%s3071 + $0x9] sm:$0xff]
    %v3275 = vld [vmem:[%s3071 + $0x19] sm:$0xff]
    %v3276 = vld [vmem:[%s3071 + $0x21] sm:$0xff]
    %v3277 = vld [vmem:[%s3071 + $0x31] sm:$0xff]
    %v3278 = vld [vmem:[%s3071 + $0x39] sm:$0xff]
    %v3279 = vld [vmem:[%s3071 + $0x49] sm:$0xff]
    %v3280 = vld [vmem:[%s3071 + $0x51] sm:$0xff]
    %v3281 = vld [vmem:[%s3071 + $0x61] sm:$0xff]
    %v3282 = vld [vmem:[%s3071 + $0x69] sm:$0xff]
    %v3283 = vld [vmem:[%s3071 + $0x79] sm:$0xff]
    %v3284 = vld [vmem:[%s3071 + $0x81] sm:$0xff]
    %v3285 = vld [vmem:[%s3071 + $0x91] sm:$0xff]
    %v3286 = vld [vmem:[%s3071 + $0x99] sm:$0xff]
    %v3287 = vld [vmem:[%s3071 + $0xa9] sm:$0xff]
    %v3288 = vld [vmem:[%s3071 + $0xb1] sm:$0xff]
    %v3289 = vpack.c.bf16 %v3274, %v3273
    %v3290 = vpack.c.bf16 %v3276, %v3275
    %v3291 = vpack.c.bf16 %v3278, %v3277
    %v3292 = vpack.c.bf16 %v3280, %v3279
    %v3293 = vpack.c.bf16 %v3282, %v3281
    %v3294 = vpack.c.bf16 %v3284, %v3283
    %v3295 = vpack.c.bf16 %v3286, %v3285
    %v3296 = vpack.c.bf16 %v3288, %v3287
    %v3297 = vld [vmem:[%s1433] sm:$0xf]
    %v3298 = vld [vmem:[%s1433 + $0x4] sm:$0xf]
    %v3299 = vld [vmem:[%s1433 + $0x8] sm:$0xf]
    %v3300 = vld [vmem:[%s1433 + $0xc] sm:$0xf]
    %v3301 = vld [vmem:[%s1433 + $0x10] sm:$0xf]
    %v3302 = vld [vmem:[%s1433 + $0x14] sm:$0xf]
    %v3303 = vld [vmem:[%s1433 + $0x18] sm:$0xf]
    %v3304 = vld [vmem:[%s1433 + $0x1c] sm:$0xf]
    %v3305 = vld [vmem:[%s1433 + $0x20] sm:$0xf]
    %v3306 = vld [vmem:[%s1433 + $0x24] sm:$0xf]
    %v3307 = vld [vmem:[%s1433 + $0x28] sm:$0xf]
    %v3308 = vld [vmem:[%s1433 + $0x2c] sm:$0xf]
    %v3309 = vld [vmem:[%s1433 + $0x30] sm:$0xf]
    %v3310 = vld [vmem:[%s1433 + $0x34] sm:$0xf]
    %v3311 = vld [vmem:[%s1433 + $0x38] sm:$0xf]
    %v3312 = vld [vmem:[%s1433 + $0x3c] sm:$0xf]
    %v3329 = vunpack.c.l.b16 %v3297
    %v3330 = vunpack.c.l.b16 %v3298
    %v3331 = vunpack.c.l.b16 %v3299
    %v3332 = vunpack.c.l.b16 %v3300
    %v3333 = vunpack.c.l.b16 %v3301
    %v3334 = vunpack.c.l.b16 %v3302
    %v3335 = vunpack.c.l.b16 %v3303
    %v3336 = vunpack.c.l.b16 %v3304
    %v3337 = vunpack.c.l.b16 %v3305
    %v3338 = vunpack.c.l.b16 %v3306
    %v3339 = vunpack.c.l.b16 %v3307
    %v3340 = vunpack.c.l.b16 %v3308
    %v3341 = vunpack.c.l.b16 %v3309
    %v3342 = vunpack.c.l.b16 %v3310
    %v3343 = vunpack.c.l.b16 %v3311
    %v3344 = vunpack.c.l.b16 %v3312
    %v3345 = vpack.c.b16 %v3330, %v3329
    %v3346 = vpack.c.b16 %v3332, %v3331
    %v3347 = vpack.c.b16 %v3334, %v3333
    %v3348 = vpack.c.b16 %v3336, %v3335
    %v3349 = vpack.c.b16 %v3338, %v3337
    %v3350 = vpack.c.b16 %v3340, %v3339
    %v3351 = vpack.c.b16 %v3342, %v3341
    %v3352 = vpack.c.b16 %v3344, %v3343
    %3361 = vmatprep.subr.bf16.mxu0 0
    %3362 = vmatpush1.bf16.msra.mxu0 %v3345
    %3363 = vmatprep.subr.bf16.mxu0 0
    %3364 = vmatpush1.bf16.msra.mxu0 %v3346
    %3365 = vmatprep.subr.bf16.mxu0 0
    %3366 = vmatpush1.bf16.msra.mxu0 %v3347
    %3367 = vmatprep.subr.bf16.mxu0 0
    %3368 = vmatpush1.bf16.msra.mxu0 %v3348
    %3369 = vmatprep.subr.bf16.mxu0 0
    %3370 = vmatpush1.bf16.msra.mxu0 %v3349
    %3371 = vmatprep.subr.bf16.mxu0 0
    %3372 = vmatpush1.bf16.msra.mxu0 %v3350
    %3373 = vmatprep.subr.bf16.mxu0 0
    %3374 = vmatpush1.bf16.msra.mxu0 %v3351
    %3375 = vmatprep.subr.bf16.mxu0 0
    %3376 = vmatpush1.bf16.msra.mxu0 %v3352
    %3377 = vmatprep.subr.bf16.mxu0 0
    %3378 = vmatpush1.bf16.msra.mxu0 0
    %3379 = vmatprep.subr.bf16.mxu0 0
    %3380 = vmatpush1.bf16.msra.mxu0 0
    %3381 = vmatprep.subr.bf16.mxu0 0
    %3382 = vmatpush1.bf16.msra.mxu0 0
    %3383 = vmatprep.subr.bf16.mxu0 0
    %3384 = vmatpush1.bf16.msra.mxu0 0
    %3385 = vmatprep.subr.bf16.mxu0 0
    %3386 = vmatpush1.bf16.msra.mxu0 0
    %3387 = vmatprep.subr.bf16.mxu0 0
    %3388 = vmatpush1.bf16.msra.mxu0 0
    %3389 = vmatprep.subr.bf16.mxu0 0
    %3390 = vmatpush1.bf16.msra.mxu0 0
    %3391 = vmatprep.subr.bf16.mxu0 0
    %3392 = vmatpush1.bf16.msra.mxu0 0
    %3393 = vmatprep.mubr.bf16.mxu0 0
    %3394 = vmatmul.mubr.bf16.gmra.mrb[0].mxu0 %v3289
    %v3395 = vpop.f32.mrb[0].mxu0
    %v3396 = vadd.f32 0.0, %v3395
    %v3397 = vpop.f32.mrb[0].mxu0
    %v3398 = vpop.f32.mrb[0].mxu0
    %v3399 = vadd.f32 0.0, %v3398
    %v3400 = vpop.f32.mrb[0].mxu0
    %3401 = vmatprep.mubr.bf16.mxu0 0
    %3402 = vmatmul.mubr.bf16.gmra.mrb[0].mxu0 %v3290
    %v3403 = vpop.f32.mrb[0].mxu0
    %v3404 = vadd.f32 0.0, %v3403
    %v3405 = vpop.f32.mrb[0].mxu0
    %v3406 = vpop.f32.mrb[0].mxu0
    %v3407 = vadd.f32 0.0, %v3406
    %v3408 = vpop.f32.mrb[0].mxu0
    %3409 = vmatprep.mubr.bf16.mxu0 0
    %3410 = vmatmul.mubr.bf16.gmra.mrb[0].mxu0 %v3291
    %v3411 = vpop.f32.mrb[0].mxu0
    %v3412 = vadd.f32 0.0, %v3411
    %v3413 = vpop.f32.mrb[0].mxu0
    %v3414 = vpop.f32.mrb[0].mxu0
    %v3415 = vadd.f32 0.0, %v3414
    %v3416 = vpop.f32.mrb[0].mxu0
    %3417 = vmatprep.mubr.bf16.mxu0 0
    %3418 = vmatmul.mubr.bf16.gmra.mrb[0].mxu0 %v3292
    %v3419 = vpop.f32.mrb[0].mxu0
    %v3420 = vadd.f32 0.0, %v3419
    %v3421 = vpop.f32.mrb[0].mxu0
    %v3422 = vpop.f32.mrb[0].mxu0
    %v3423 = vadd.f32 0.0, %v3422
    %v3424 = vpop.f32.mrb[0].mxu0
    %3425 = vmatprep.mubr.bf16.mxu0 0
    %3426 = vmatmul.mubr.bf16.gmra.mrb[0].mxu0 %v3293
    %v3427 = vpop.f32.mrb[0].mxu0
    %v3428 = vadd.f32 0.0, %v3427
    %v3429 = vpop.f32.mrb[0].mxu0
    %v3430 = vpop.f32.mrb[0].mxu0
    %v3431 = vadd.f32 0.0, %v3430
    %v3432 = vpop.f32.mrb[0].mxu0
    %3433 = vmatprep.mubr.bf16.mxu0 0
    %3434 = vmatmul.mubr.bf16.gmra.mrb[0].mxu0 %v3294
    %v3435 = vpop.f32.mrb[0].mxu0
    %v3436 = vadd.f32 0.0, %v3435
    %v3437 = vpop.f32.mrb[0].mxu0
    %v3438 = vpop.f32.mrb[0].mxu0
    %v3439 = vadd.f32 0.0, %v3438
    %v3440 = vpop.f32.mrb[0].mxu0
    %3441 = vmatprep.mubr.bf16.mxu0 0
    %3442 = vmatmul.mubr.bf16.gmra.mrb[0].mxu0 %v3295
    %v3443 = vpop.f32.mrb[0].mxu0
    %v3444 = vadd.f32 0.0, %v3443
    %v3445 = vpop.f32.mrb[0].mxu0
    %v3446 = vpop.f32.mrb[0].mxu0
    %v3447 = vadd.f32 0.0, %v3446
    %v3448 = vpop.f32.mrb[0].mxu0
    %3449 = vmatprep.mubr.bf16.mxu0 0
    %3450 = vmatmul.mubr.bf16.gmra.mrb[0].mxu0 %v3296
    %v3451 = vpop.f32.mrb[0].mxu0
    %v3452 = vadd.f32 0.0, %v3451
    %v3453 = vpop.f32.mrb[0].mxu0
    %v3454 = vpop.f32.mrb[0].mxu0
    %v3455 = vadd.f32 0.0, %v3454
    %v3456 = vpop.f32.mrb[0].mxu0
    %3457 = vdwg.mxu0
    %v3458 = vadd.f32 %v3257, %v3396
    %v3459 = vadd.f32 %v3258, %v3399
    %v3460 = vadd.f32 %v3259, %v3404
    %v3461 = vadd.f32 %v3260, %v3407
    %v3462 = vadd.f32 %v3261, %v3412
    %v3463 = vadd.f32 %v3262, %v3415
    %v3464 = vadd.f32 %v3263, %v3420
    %v3465 = vadd.f32 %v3264, %v3423
    %v3466 = vadd.f32 %v3265, %v3428
    %v3467 = vadd.f32 %v3266, %v3431
    %v3468 = vadd.f32 %v3267, %v3436
    %v3469 = vadd.f32 %v3268, %v3439
    %v3470 = vadd.f32 %v3269, %v3444
    %v3471 = vadd.f32 %v3270, %v3447
    %v3472 = vadd.f32 %v3271, %v3452
    %v3473 = vadd.f32 %v3272, %v3455
    %v3474 = vld [vmem:[%s3071 + $0x2] sm:$0xff]
    %v3475 = vld [vmem:[%s3071 + $0xa] sm:$0xff]
    %v3476 = vld [vmem:[%s3071 + $0x1a] sm:$0xff]
    %v3477 = vld [vmem:[%s3071 + $0x22] sm:$0xff]
    %v3478 = vld [vmem:[%s3071 + $0x32] sm:$0xff]
    %v3479 = vld [vmem:[%s3071 + $0x3a] sm:$0xff]
    %v3480 = vld [vmem:[%s3071 + $0x4a] sm:$0xff]
    %v3481 = vld [vmem:[%s3071 + $0x52] sm:$0xff]
    %v3482 = vld [vmem:[%s3071 + $0x62] sm:$0xff]
    %v3483 = vld [vmem:[%s3071 + $0x6a] sm:$0xff]
    %v3484 = vld [vmem:[%s3071 + $0x7a] sm:$0xff]
    %v3485 = vld [vmem:[%s3071 + $0x82] sm:$0xff]
    %v3486 = vld [vmem:[%s3071 + $0x92] sm:$0xff]
    %v3487 = vld [vmem:[%s3071 + $0x9a] sm:$0xff]
    %v3488 = vld [vmem:[%s3071 + $0xaa] sm:$0xff]
    %v3489 = vld [vmem:[%s3071 + $0xb2] sm:$0xff]
    %v3490 = vpack.c.bf16 %v3475, %v3474
    %v3491 = vpack.c.bf16 %v3477, %v3476
    %v3492 = vpack.c.bf16 %v3479, %v3478
    %v3493 = vpack.c.bf16 %v3481, %v3480
    %v3494 = vpack.c.bf16 %v3483, %v3482
    %v3495 = vpack.c.bf16 %v3485, %v3484
    %v3496 = vpack.c.bf16 %v3487, %v3486
    %v3497 = vpack.c.bf16 %v3489, %v3488
    %v3498 = vld [vmem:[%s1635] sm:$0xf]
    %v3499 = vld [vmem:[%s1635 + $0x4] sm:$0xf]
    %v3500 = vld [vmem:[%s1635 + $0x8] sm:$0xf]
    %v3501 = vld [vmem:[%s1635 + $0xc] sm:$0xf]
    %v3502 = vld [vmem:[%s1635 + $0x10] sm:$0xf]
    %v3503 = vld [vmem:[%s1635 + $0x14] sm:$0xf]
    %v3504 = vld [vmem:[%s1635 + $0x18] sm:$0xf]
    %v3505 = vld [vmem:[%s1635 + $0x1c] sm:$0xf]
    %v3506 = vld [vmem:[%s1635 + $0x20] sm:$0xf]
    %v3507 = vld [vmem:[%s1635 + $0x24] sm:$0xf]
    %v3508 = vld [vmem:[%s1635 + $0x28] sm:$0xf]
    %v3509 = vld [vmem:[%s1635 + $0x2c] sm:$0xf]
    %v3510 = vld [vmem:[%s1635 + $0x30] sm:$0xf]
    %v3511 = vld [vmem:[%s1635 + $0x34] sm:$0xf]
    %v3512 = vld [vmem:[%s1635 + $0x38] sm:$0xf]
    %v3513 = vld [vmem:[%s1635 + $0x3c] sm:$0xf]
    %v3530 = vunpack.c.l.b16 %v3498
    %v3531 = vunpack.c.l.b16 %v3499
    %v3532 = vunpack.c.l.b16 %v3500
    %v3533 = vunpack.c.l.b16 %v3501
    %v3534 = vunpack.c.l.b16 %v3502
    %v3535 = vunpack.c.l.b16 %v3503
    %v3536 = vunpack.c.l.b16 %v3504
    %v3537 = vunpack.c.l.b16 %v3505
    %v3538 = vunpack.c.l.b16 %v3506
    %v3539 = vunpack.c.l.b16 %v3507
    %v3540 = vunpack.c.l.b16 %v3508
    %v3541 = vunpack.c.l.b16 %v3509
    %v3542 = vunpack.c.l.b16 %v3510
    %v3543 = vunpack.c.l.b16 %v3511
    %v3544 = vunpack.c.l.b16 %v3512
    %v3545 = vunpack.c.l.b16 %v3513
    %v3546 = vpack.c.b16 %v3531, %v3530
    %v3547 = vpack.c.b16 %v3533, %v3532
    %v3548 = vpack.c.b16 %v3535, %v3534
    %v3549 = vpack.c.b16 %v3537, %v3536
    %v3550 = vpack.c.b16 %v3539, %v3538
    %v3551 = vpack.c.b16 %v3541, %v3540
    %v3552 = vpack.c.b16 %v3543, %v3542
    %v3553 = vpack.c.b16 %v3545, %v3544
    %3562 = vmatprep.subr.bf16.mxu0 0
    %3563 = vmatpush1.bf16.msra.mxu0 %v3546
    %3564 = vmatprep.subr.bf16.mxu0 0
    %3565 = vmatpush1.bf16.msra.mxu0 %v3547
    %3566 = vmatprep.subr.bf16.mxu0 0
    %3567 = vmatpush1.bf16.msra.mxu0 %v3548
    %3568 = vmatprep.subr.bf16.mxu0 0
    %3569 = vmatpush1.bf16.msra.mxu0 %v3549
    %3570 = vmatprep.subr.bf16.mxu0 0
    %3571 = vmatpush1.bf16.msra.mxu0 %v3550
    %3572 = vmatprep.subr.bf16.mxu0 0
    %3573 = vmatpush1.bf16.msra.mxu0 %v3551
    %3574 = vmatprep.subr.bf16.mxu0 0
    %3575 = vmatpush1.bf16.msra.mxu0 %v3552
    %3576 = vmatprep.subr.bf16.mxu0 0
    %3577 = vmatpush1.bf16.msra.mxu0 %v3553
    %3578 = vmatprep.subr.bf16.mxu0 0
    %3579 = vmatpush1.bf16.msra.mxu0 0
    %3580 = vmatprep.subr.bf16.mxu0 0
    %3581 = vmatpush1.bf16.msra.mxu0 0
    %3582 = vmatprep.subr.bf16.mxu0 0
    %3583 = vmatpush1.bf16.msra.mxu0 0
    %3584 = vmatprep.subr.bf16.mxu0 0
    %3585 = vmatpush1.bf16.msra.mxu0 0
    %3586 = vmatprep.subr.bf16.mxu0 0
    %3587 = vmatpush1.bf16.msra.mxu0 0
    %3588 = vmatprep.subr.bf16.mxu0 0
    %3589 = vmatpush1.bf16.msra.mxu0 0
    %3590 = vmatprep.subr.bf16.mxu0 0
    %3591 = vmatpush1.bf16.msra.mxu0 0
    %3592 = vmatprep.subr.bf16.mxu0 0
    %3593 = vmatpush1.bf16.msra.mxu0 0
    %3594 = vmatprep.mubr.bf16.mxu0 0
    %3595 = vmatmul.mubr.bf16.gmra.mrb[0].mxu0 %v3490
    %v3596 = vpop.f32.mrb[0].mxu0
    %v3597 = vadd.f32 0.0, %v3596
    %v3598 = vpop.f32.mrb[0].mxu0
    %v3599 = vpop.f32.mrb[0].mxu0
    %v3600 = vadd.f32 0.0, %v3599
    %v3601 = vpop.f32.mrb[0].mxu0
    %3602 = vmatprep.mubr.bf16.mxu0 0
    %3603 = vmatmul.mubr.bf16.gmra.mrb[0].mxu0 %v3491
    %v3604 = vpop.f32.mrb[0].mxu0
    %v3605 = vadd.f32 0.0, %v3604
    %v3606 = vpop.f32.mrb[0].mxu0
    %v3607 = vpop.f32.mrb[0].mxu0
    %v3608 = vadd.f32 0.0, %v3607
    %v3609 = vpop.f32.mrb[0].mxu0
    %3610 = vmatprep.mubr.bf16.mxu0 0
    %3611 = vmatmul.mubr.bf16.gmra.mrb[0].mxu0 %v3492
    %v3612 = vpop.f32.mrb[0].mxu0
    %v3613 = vadd.f32 0.0, %v3612
    %v3614 = vpop.f32.mrb[0].mxu0
    %v3615 = vpop.f32.mrb[0].mxu0
    %v3616 = vadd.f32 0.0, %v3615
    %v3617 = vpop.f32.mrb[0].mxu0
    %3618 = vmatprep.mubr.bf16.mxu0 0
    %3619 = vmatmul.mubr.bf16.gmra.mrb[0].mxu0 %v3493
    %v3620 = vpop.f32.mrb[0].mxu0
    %v3621 = vadd.f32 0.0, %v3620
    %v3622 = vpop.f32.mrb[0].mxu0
    %v3623 = vpop.f32.mrb[0].mxu0
    %v3624 = vadd.f32 0.0, %v3623
    %v3625 = vpop.f32.mrb[0].mxu0
    %3626 = vmatprep.mubr.bf16.mxu0 0
    %3627 = vmatmul.mubr.bf16.gmra.mrb[0].mxu0 %v3494
    %v3628 = vpop.f32.mrb[0].mxu0
    %v3629 = vadd.f32 0.0, %v3628
    %v3630 = vpop.f32.mrb[0].mxu0
    %v3631 = vpop.f32.mrb[0].mxu0
    %v3632 = vadd.f32 0.0, %v3631
    %v3633 = vpop.f32.mrb[0].mxu0
    %3634 = vmatprep.mubr.bf16.mxu0 0
    %3635 = vmatmul.mubr.bf16.gmra.mrb[0].mxu0 %v3495
    %v3636 = vpop.f32.mrb[0].mxu0
    %v3637 = vadd.f32 0.0, %v3636
    %v3638 = vpop.f32.mrb[0].mxu0
    %v3639 = vpop.f32.mrb[0].mxu0
    %v3640 = vadd.f32 0.0, %v3639
    %v3641 = vpop.f32.mrb[0].mxu0
    %3642 = vmatprep.mubr.bf16.mxu0 0
    %3643 = vmatmul.mubr.bf16.gmra.mrb[0].mxu0 %v3496
    %v3644 = vpop.f32.mrb[0].mxu0
    %v3645 = vadd.f32 0.0, %v3644
    %v3646 = vpop.f32.mrb[0].mxu0
    %v3647 = vpop.f32.mrb[0].mxu0
    %v3648 = vadd.f32 0.0, %v3647
    %v3649 = vpop.f32.mrb[0].mxu0
    %3650 = vmatprep.mubr.bf16.mxu0 0
    %3651 = vmatmul.mubr.bf16.gmra.mrb[0].mxu0 %v3497
    %v3652 = vpop.f32.mrb[0].mxu0
    %v3653 = vadd.f32 0.0, %v3652
    %v3654 = vpop.f32.mrb[0].mxu0
    %v3655 = vpop.f32.mrb[0].mxu0
    %v3656 = vadd.f32 0.0, %v3655
    %v3657 = vpop.f32.mrb[0].mxu0
    %3658 = vdwg.mxu0
    %v3659 = vadd.f32 %v3458, %v3597
    %v3660 = vadd.f32 %v3459, %v3600
    %v3661 = vadd.f32 %v3460, %v3605
    %v3662 = vadd.f32 %v3461, %v3608
    %v3663 = vadd.f32 %v3462, %v3613
    %v3664 = vadd.f32 %v3463, %v3616
    %v3665 = vadd.f32 %v3464, %v3621
    %v3666 = vadd.f32 %v3465, %v3624
    %v3667 = vadd.f32 %v3466, %v3629
    %v3668 = vadd.f32 %v3467, %v3632
    %v3669 = vadd.f32 %v3468, %v3637
    %v3670 = vadd.f32 %v3469, %v3640
    %v3671 = vadd.f32 %v3470, %v3645
    %v3672 = vadd.f32 %v3471, %v3648
    %v3673 = vadd.f32 %v3472, %v3653
    %v3674 = vadd.f32 %v3473, %v3656
    %v3675 = vadd.f32 %v3659, %v1817
    %v3676 = vadd.f32 %v3660, %v1817
    %v3677 = vadd.f32 %v3661, %v1817
    %v3678 = vadd.f32 %v3662, %v1817
    %v3679 = vadd.f32 %v3663, %v1817
    %v3680 = vadd.f32 %v3664, %v1817
    %v3681 = vadd.f32 %v3665, %v1817
    %v3682 = vadd.f32 %v3666, %v1817
    %v3683 = vadd.f32 %v3667, %v1817
    %v3684 = vadd.f32 %v3668, %v1817
    %v3685 = vadd.f32 %v3669, %v1817
    %v3686 = vadd.f32 %v3670, %v1817
    %v3687 = vadd.f32 %v3671, %v1817
    %v3688 = vadd.f32 %v3672, %v1817
    %v3689 = vadd.f32 %v3673, %v1817
    %v3690 = vadd.f32 %v3674, %v1817
    %v3691 = vmax.f32 %v3675, 0.0
    %v3692 = vmax.f32 %v3676, 0.0
    %v3693 = vmax.f32 %v3677, 0.0
    %v3694 = vmax.f32 %v3678, 0.0
    %v3695 = vmax.f32 %v3679, 0.0
    %v3696 = vmax.f32 %v3680, 0.0
    %v3697 = vmax.f32 %v3681, 0.0
    %v3698 = vmax.f32 %v3682, 0.0
    %v3699 = vmax.f32 %v3683, 0.0
    %v3700 = vmax.f32 %v3684, 0.0
    %v3701 = vmax.f32 %v3685, 0.0
    %v3702 = vmax.f32 %v3686, 0.0
    %v3703 = vmax.f32 %v3687, 0.0
    %v3704 = vmax.f32 %v3688, 0.0
    %v3705 = vmax.f32 %v3689, 0.0
    %v3706 = vmax.f32 %v3690, 0.0
    %v3707 = vmax.f32 %v3691, %v3693
    %v3708 = vmax.f32 %v3692, %v3694
    %v3709 = vmax.f32 %v3695, %v3697
    %v3710 = vmax.f32 %v3696, %v3698
    %v3711 = vmax.f32 %v3699, %v3701
    %v3712 = vmax.f32 %v3700, %v3702
    %v3713 = vmax.f32 %v3703, %v3705
    %v3714 = vmax.f32 %v3704, %v3706
    %3715 = vst [vmem:[#allocation2] sm:$0xff] %v3707
    %3716 = vst [vmem:[#allocation2 + $0x8] sm:$0xff] %v3708
    %3717 = vst [vmem:[#allocation2 + $0x10] sm:$0xff] %v3709
    %3718 = vst [vmem:[#allocation2 + $0x18] sm:$0xff] %v3710
    %3719 = vst [vmem:[#allocation2 + $0x20] sm:$0xff] %v3711
    %3720 = vst [vmem:[#allocation2 + $0x28] sm:$0xff] %v3712
    %3721 = vst [vmem:[#allocation2 + $0x30] sm:$0xff] %v3713
    %3722 = vst [vmem:[#allocation2 + $0x38] sm:$0xff] %v3714
    %v3723 = vld [vmem:[#allocation2] ss:$2 sm:$0xff]
    %v3724 = vld [vmem:[%s1868] ss:$2 sm:$0xff]
    %v3725 = vld [vmem:[%s1870] ss:$2 sm:$0xff]
    %v3726 = vld [vmem:[%s1872] ss:$2 sm:$0xff]
    %v3727 = vld [vmem:[%s1874] ss:$2 sm:$0xff]
    %v3728 = vld [vmem:[%s1876] ss:$2 sm:$0xff]
    %v3729 = vld [vmem:[%s1878] ss:$2 sm:$0xff]
    %v3730 = vld [vmem:[%s1880] ss:$2 sm:$0xff]
    %v3731 = vmax.f32 %v3723, %v3727
    %v3732 = vmax.f32 %v3724, %v3728
    %v3733 = vmax.f32 %v3725, %v3729
    %v3734 = vmax.f32 %v3726, %v3730
    %3735 = vst [vmem:[%s1887 + $0x20] sm:$0xff] %v3731
    %3736 = vst [vmem:[%s1887 + $0x28] sm:$0xff] %v3732
    %3737 = vst [vmem:[%s1887 + $0x30] sm:$0xff] %v3733
    %3738 = vst [vmem:[%s1887 + $0x38] sm:$0xff] %v3734
  $region18: #{net_forward.6} parent=0 // loop_footer
    %s21 = sadd.s32 1, %s17
  $region19: #{net_forward.6} parent=0 // loop_footer_branch
    %16 = sbr.rel target = $region15
  $region20: #{net_forward.6} parent=0 // loop_exit
    _
  // Predicated region
  $region21: #{net_forward.6} parent=0 // pred_check
    _
  $region22: #{net_forward.6} parent=0 // pred_check_branch
    %3740 = sbr.rel (0) target = $region24
  $region23: #{net_forward.6} parent=0 // pred_region
    _
  $region24: #{net_forward.6} parent=0 // pred_fallthru
    _
  // Predicated region
  $region25: #{net_forward.6} parent=0 // pred_check
    _
  $region26: #{net_forward.6} parent=0 // pred_check_branch
    %3742 = sbr.rel (0) target = $region28
  $region27: #{net_forward.6} parent=0 // pred_region
    _
  $region28: #{net_forward.6} parent=0 // pred_fallthru
    _

// kernel: net_forward.9
$region0: #{net_forward.9}
  #allocation0 [shape = 'u32[]', space=smem, size = 0x4, offset = 0x4, fixed_abs, tag = 'smem constant byte address 0x4 - core index']
  #allocation1 [shape = 'u32[144,128]{1,0:T(1,128)}', space=vmem, size = 0x12000, scoped, tag = 'internal scratch']
  %s0 = inlined_call_operand.vmem [shape: bf16[2,512], index: 0, kind: input, shape index: {}]
  %s1 = inlined_call_operand.vmem [shape: bf16[512,128], index: 1, kind: input, shape index: {}]
  %s2 = inlined_call_operand.vmem [shape: f32[1,128], index: 2, kind: input, shape index: {}]
  %s3 = inlined_call_operand.hbm [shape: f32[2,128], index: 3, kind: output, shape index: {}]
  %s4 = sld [smem:[#allocation0]]
  $region22: #{net_forward.9} parent=0
    _
  %s6 = ssub.s32 1, %s4
  %s7 = scalar_select 0, %s6, %s4
  $region1: #{net_forward.9} parent=0
    #allocation2 [shape = 'u8[1024]{0}', space=vmem, size = 0x400, scoped, tag = 'output window, operand 0, single buffered']
    #allocation3 [shape = 's32[1]{0}', space=sflag, size = 0x4, scoped, tag = 'scoped memory for net_forward.9']
    %8 = vsyncpa [#allocation3], 0
    // Predicated region
    $region2: #{net_forward.9} parent=1 // pred_check
      _
    $region3: #{net_forward.9} parent=1 // pred_check_branch
      %10 = sbr.rel (0) target = $region5
    $region4: #{net_forward.9} parent=1 // pred_region
      _
    $region5: #{net_forward.9} parent=1 // pred_fallthru
      _
    // Predicated region
    $region6: #{net_forward.9} parent=1 // pred_check
      _
    $region7: #{net_forward.9} parent=1 // pred_check_branch
      %12 = sbr.rel (0) target = $region9
    $region8: #{net_forward.9} parent=1 // pred_region
      _
    $region9: #{net_forward.9} parent=1 // pred_fallthru
      _
    // Predicated region
    $region10: #{net_forward.9} parent=1 // pred_check
      _
    $region11: #{net_forward.9} parent=1 // pred_check_branch
      %14 = sbr.rel (0) target = $region13
    $region12: #{net_forward.9} parent=1 // pred_region
      _
    $region13: #{net_forward.9} parent=1 // pred_fallthru
      _
    %v16 = vld [vmem:[%s0] sm:$0xf]
    %v17 = vld [vmem:[%s1] sm:$0xf]
    %v18 = vld [vmem:[%s1 + $0x4] sm:$0xf]
    %v19 = vld [vmem:[%s1 + $0x8] sm:$0xf]
    %v20 = vld [vmem:[%s1 + $0xc] sm:$0xf]
    %v21 = vld [vmem:[%s1 + $0x10] sm:$0xf]
    %v22 = vld [vmem:[%s1 + $0x14] sm:$0xf]
    %v23 = vld [vmem:[%s1 + $0x18] sm:$0xf]
    %v24 = vld [vmem:[%s1 + $0x1c] sm:$0xf]
    %v25 = vld [vmem:[%s1 + $0x20] sm:$0xf]
    %v26 = vld [vmem:[%s1 + $0x24] sm:$0xf]
    %v27 = vld [vmem:[%s1 + $0x28] sm:$0xf]
    %v28 = vld [vmem:[%s1 + $0x2c] sm:$0xf]
    %v29 = vld [vmem:[%s1 + $0x30] sm:$0xf]
    %v30 = vld [vmem:[%s1 + $0x34] sm:$0xf]
    %v31 = vld [vmem:[%s1 + $0x38] sm:$0xf]
    %v32 = vld [vmem:[%s1 + $0x3c] sm:$0xf]
    %v33 = vld [vmem:[%s1 + $0x40] sm:$0xf]
    %v34 = vld [vmem:[%s1 + $0x44] sm:$0xf]
    %v35 = vld [vmem:[%s1 + $0x48] sm:$0xf]
    %v36 = vld [vmem:[%s1 + $0x4c] sm:$0xf]
    %v37 = vld [vmem:[%s1 + $0x50] sm:$0xf]
    %v38 = vld [vmem:[%s1 + $0x54] sm:$0xf]
    %v39 = vld [vmem:[%s1 + $0x58] sm:$0xf]
    %v40 = vld [vmem:[%s1 + $0x5c] sm:$0xf]
    %v41 = vld [vmem:[%s1 + $0x60] sm:$0xf]
    %v42 = vld [vmem:[%s1 + $0x64] sm:$0xf]
    %v43 = vld [vmem:[%s1 + $0x68] sm:$0xf]
    %v44 = vld [vmem:[%s1 + $0x6c] sm:$0xf]
    %v45 = vld [vmem:[%s1 + $0x70] sm:$0xf]
    %v46 = vld [vmem:[%s1 + $0x74] sm:$0xf]
    %v47 = vld [vmem:[%s1 + $0x78] sm:$0xf]
    %v48 = vld [vmem:[%s1 + $0x7c] sm:$0xf]
    %v49 = vld [vmem:[%s1 + $0x80] sm:$0xf]
    %v50 = vld [vmem:[%s1 + $0x84] sm:$0xf]
    %v51 = vld [vmem:[%s1 + $0x88] sm:$0xf]
    %v52 = vld [vmem:[%s1 + $0x8c] sm:$0xf]
    %v53 = vld [vmem:[%s1 + $0x90] sm:$0xf]
    %v54 = vld [vmem:[%s1 + $0x94] sm:$0xf]
    %v55 = vld [vmem:[%s1 + $0x98] sm:$0xf]
    %v56 = vld [vmem:[%s1 + $0x9c] sm:$0xf]
    %v57 = vld [vmem:[%s1 + $0xa0] sm:$0xf]
    %v58 = vld [vmem:[%s1 + $0xa4] sm:$0xf]
    %v59 = vld [vmem:[%s1 + $0xa8] sm:$0xf]
    %v60 = vld [vmem:[%s1 + $0xac] sm:$0xf]
    %v61 = vld [vmem:[%s1 + $0xb0] sm:$0xf]
    %v62 = vld [vmem:[%s1 + $0xb4] sm:$0xf]
    %v63 = vld [vmem:[%s1 + $0xb8] sm:$0xf]
    %v64 = vld [vmem:[%s1 + $0xbc] sm:$0xf]
    %v65 = vld [vmem:[%s1 + $0xc0] sm:$0xf]
    %v66 = vld [vmem:[%s1 + $0xc4] sm:$0xf]
    %v67 = vld [vmem:[%s1 + $0xc8] sm:$0xf]
    %v68 = vld [vmem:[%s1 + $0xcc] sm:$0xf]
    %v69 = vld [vmem:[%s1 + $0xd0] sm:$0xf]
    %v70 = vld [vmem:[%s1 + $0xd4] sm:$0xf]
    %v71 = vld [vmem:[%s1 + $0xd8] sm:$0xf]
    %v72 = vld [vmem:[%s1 + $0xdc] sm:$0xf]
    %v73 = vld [vmem:[%s1 + $0xe0] sm:$0xf]
    %v74 = vld [vmem:[%s1 + $0xe4] sm:$0xf]
    %v75 = vld [vmem:[%s1 + $0xe8] sm:$0xf]
    %v76 = vld [vmem:[%s1 + $0xec] sm:$0xf]
    %v77 = vld [vmem:[%s1 + $0xf0] sm:$0xf]
    %v78 = vld [vmem:[%s1 + $0xf4] sm:$0xf]
    %v79 = vld [vmem:[%s1 + $0xf8] sm:$0xf]
    %v80 = vld [vmem:[%s1 + $0xfc] sm:$0xf]
    %v81 = vld [vmem:[%s2] sm:$0x1]
    %v83 = vlaneseq
    %v84 = vshrl.u32 %v83, 7
    %v85 = vsub.s32 0, %v84
    %v86 = vrot.slane %v81, %v85
    %v90 = vunpack.c.l.s4 1966171168
    %v91 = vunpack.c.0.s8 %v90
    %v92 = vlaneseq
    %v93 = vshrl.u32 %v92, 7
    %v94 = vsub.s32 %v91, %v93
    %v95 = vrot.slane %v16, %v94
    %v96 = vcombine.high %v95, %v95
    %v98 = vunpack.c.l.s4 1966171168
    %v99 = vunpack.c.0.s8 %v98
    %v100 = vlaneseq
    %v101 = vshrl.u32 %v100, 7
    %v102 = vsub.s32 %v99, %v101
    %v103 = vrot.slane %v95, %v102
    %v105 = vunpack.c.l.s4 1966171168
    %v106 = vunpack.c.0.s8 %v105
    %v107 = vlaneseq
    %v108 = vshrl.u32 %v107, 7
    %v109 = vsub.s32 %v106, %v108
    %v110 = vrot.slane %v96, %v109
    %v111 = vcombine.high %v103, %v103
    %v112 = vcombine.high %v110, %v110
    %v181 = vunpack.c.l.b16 %v17
    %v182 = vunpack.c.l.b16 %v18
    %v183 = vunpack.c.l.b16 %v19
    %v184 = vunpack.c.l.b16 %v20
    %v185 = vunpack.c.l.b16 %v21
    %v186 = vunpack.c.l.b16 %v22
    %v187 = vunpack.c.l.b16 %v23
    %v188 = vunpack.c.l.b16 %v24
    %v189 = vunpack.c.l.b16 %v25
    %v190 = vunpack.c.l.b16 %v26
    %v191 = vunpack.c.l.b16 %v27
    %v192 = vunpack.c.l.b16 %v28
    %v193 = vunpack.c.l.b16 %v29
    %v194 = vunpack.c.l.b16 %v30
    %v195 = vunpack.c.l.b16 %v31
    %v196 = vunpack.c.l.b16 %v32
    %v197 = vunpack.c.l.b16 %v33
    %v198 = vunpack.c.l.b16 %v34
    %v199 = vunpack.c.l.b16 %v35
    %v200 = vunpack.c.l.b16 %v36
    %v201 = vunpack.c.l.b16 %v37
    %v202 = vunpack.c.l.b16 %v38
    %v203 = vunpack.c.l.b16 %v39
    %v204 = vunpack.c.l.b16 %v40
    %v205 = vunpack.c.l.b16 %v41
    %v206 = vunpack.c.l.b16 %v42
    %v207 = vunpack.c.l.b16 %v43
    %v208 = vunpack.c.l.b16 %v44
    %v209 = vunpack.c.l.b16 %v45
    %v210 = vunpack.c.l.b16 %v46
    %v211 = vunpack.c.l.b16 %v47
    %v212 = vunpack.c.l.b16 %v48
    %v213 = vunpack.c.l.b16 %v49
    %v214 = vunpack.c.l.b16 %v50
    %v215 = vunpack.c.l.b16 %v51
    %v216 = vunpack.c.l.b16 %v52
    %v217 = vunpack.c.l.b16 %v53
    %v218 = vunpack.c.l.b16 %v54
    %v219 = vunpack.c.l.b16 %v55
    %v220 = vunpack.c.l.b16 %v56
    %v221 = vunpack.c.l.b16 %v57
    %v222 = vunpack.c.l.b16 %v58
    %v223 = vunpack.c.l.b16 %v59
    %v224 = vunpack.c.l.b16 %v60
    %v225 = vunpack.c.l.b16 %v61
    %v226 = vunpack.c.l.b16 %v62
    %v227 = vunpack.c.l.b16 %v63
    %v228 = vunpack.c.l.b16 %v64
    %v229 = vunpack.c.l.b16 %v65
    %v230 = vunpack.c.l.b16 %v66
    %v231 = vunpack.c.l.b16 %v67
    %v232 = vunpack.c.l.b16 %v68
    %v233 = vunpack.c.l.b16 %v69
    %v234 = vunpack.c.l.b16 %v70
    %v235 = vunpack.c.l.b16 %v71
    %v236 = vunpack.c.l.b16 %v72
    %v237 = vunpack.c.l.b16 %v73
    %v238 = vunpack.c.l.b16 %v74
    %v239 = vunpack.c.l.b16 %v75
    %v240 = vunpack.c.l.b16 %v76
    %v241 = vunpack.c.l.b16 %v77
    %v242 = vunpack.c.l.b16 %v78
    %v243 = vunpack.c.l.b16 %v79
    %v244 = vunpack.c.l.b16 %v80
    %v245 = vpack.c.b16 %v182, %v181
    %v246 = vpack.c.b16 %v184, %v183
    %v247 = vpack.c.b16 %v186, %v185
    %v248 = vpack.c.b16 %v188, %v187
    %v249 = vpack.c.b16 %v190, %v189
    %v250 = vpack.c.b16 %v192, %v191
    %v251 = vpack.c.b16 %v194, %v193
    %v252 = vpack.c.b16 %v196, %v195
    %v253 = vpack.c.b16 %v198, %v197
    %v254 = vpack.c.b16 %v200, %v199
    %v255 = vpack.c.b16 %v202, %v201
    %v256 = vpack.c.b16 %v204, %v203
    %v257 = vpack.c.b16 %v206, %v205
    %v258 = vpack.c.b16 %v208, %v207
    %v259 = vpack.c.b16 %v210, %v209
    %v260 = vpack.c.b16 %v212, %v211
    %v261 = vpack.c.b16 %v214, %v213
    %v262 = vpack.c.b16 %v216, %v215
    %v263 = vpack.c.b16 %v218, %v217
    %v264 = vpack.c.b16 %v220, %v219
    %v265 = vpack.c.b16 %v222, %v221
    %v266 = vpack.c.b16 %v224, %v223
    %v267 = vpack.c.b16 %v226, %v225
    %v268 = vpack.c.b16 %v228, %v227
    %v269 = vpack.c.b16 %v230, %v229
    %v270 = vpack.c.b16 %v232, %v231
    %v271 = vpack.c.b16 %v234, %v233
    %v272 = vpack.c.b16 %v236, %v235
    %v273 = vpack.c.b16 %v238, %v237
    %v274 = vpack.c.b16 %v240, %v239
    %v275 = vpack.c.b16 %v242, %v241
    %v276 = vpack.c.b16 %v244, %v243
    %309 = vmatprep.subr.bf16.mxu0 0
    %310 = vmatpush1.bf16.msra.mxu0 %v245
    %311 = vmatprep.subr.bf16.mxu0 0
    %312 = vmatpush1.bf16.msra.mxu0 %v246
    %313 = vmatprep.subr.bf16.mxu0 0
    %314 = vmatpush1.bf16.msra.mxu0 %v247
    %315 = vmatprep.subr.bf16.mxu0 0
    %316 = vmatpush1.bf16.msra.mxu0 %v248
    %317 = vmatprep.subr.bf16.mxu0 0
    %318 = vmatpush1.bf16.msra.mxu0 %v249
    %319 = vmatprep.subr.bf16.mxu0 0
    %320 = vmatpush1.bf16.msra.mxu0 %v250
    %321 = vmatprep.subr.bf16.mxu0 0
    %322 = vmatpush1.bf16.msra.mxu0 %v251
    %323 = vmatprep.subr.bf16.mxu0 0
    %324 = vmatpush1.bf16.msra.mxu0 %v252
    %325 = vmatprep.subr.bf16.mxu0 0
    %326 = vmatpush1.bf16.msra.mxu0 %v253
    %327 = vmatprep.subr.bf16.mxu0 0
    %328 = vmatpush1.bf16.msra.mxu0 %v254
    %329 = vmatprep.subr.bf16.mxu0 0
    %330 = vmatpush1.bf16.msra.mxu0 %v255
    %331 = vmatprep.subr.bf16.mxu0 0
    %332 = vmatpush1.bf16.msra.mxu0 %v256
    %333 = vmatprep.subr.bf16.mxu0 0
    %334 = vmatpush1.bf16.msra.mxu0 %v257
    %335 = vmatprep.subr.bf16.mxu0 0
    %336 = vmatpush1.bf16.msra.mxu0 %v258
    %337 = vmatprep.subr.bf16.mxu0 0
    %338 = vmatpush1.bf16.msra.mxu0 %v259
    %339 = vmatprep.subr.bf16.mxu0 0
    %340 = vmatpush1.bf16.msra.mxu0 %v260
    %341 = vmatprep.mubr.bf16.mxu0 %v110
    %342 = vmatmul.mubr.bf16.gmra.mrb[0].mxu0 %v103
    %v343 = vpop.f32.mrb[0].mxu0
    %v344 = vadd.f32 %v86, %v343
    %v345 = vpop.f32.mrb[0].mxu0
    %v346 = vpop.f32.mrb[0].mxu0
    %v347 = vpop.f32.mrb[0].mxu0
    %348 = vdwg.mxu0
    %349 = vmatprep.subr.bf16.mxu0 0
    %350 = vmatpush1.bf16.msra.mxu0 %v261
    %351 = vmatprep.subr.bf16.mxu0 0
    %352 = vmatpush1.bf16.msra.mxu0 %v262
    %353 = vmatprep.subr.bf16.mxu0 0
    %354 = vmatpush1.bf16.msra.mxu0 %v263
    %355 = vmatprep.subr.bf16.mxu0 0
    %356 = vmatpush1.bf16.msra.mxu0 %v264
    %357 = vmatprep.subr.bf16.mxu0 0
    %358 = vmatpush1.bf16.msra.mxu0 %v265
    %359 = vmatprep.subr.bf16.mxu0 0
    %360 = vmatpush1.bf16.msra.mxu0 %v266
    %361 = vmatprep.subr.bf16.mxu0 0
    %362 = vmatpush1.bf16.msra.mxu0 %v267
    %363 = vmatprep.subr.bf16.mxu0 0
    %364 = vmatpush1.bf16.msra.mxu0 %v268
    %365 = vmatprep.subr.bf16.mxu0 0
    %366 = vmatpush1.bf16.msra.mxu0 %v269
    %367 = vmatprep.subr.bf16.mxu0 0
    %368 = vmatpush1.bf16.msra.mxu0 %v270
    %369 = vmatprep.subr.bf16.mxu0 0
    %370 = vmatpush1.bf16.msra.mxu0 %v271
    %371 = vmatprep.subr.bf16.mxu0 0
    %372 = vmatpush1.bf16.msra.mxu0 %v272
    %373 = vmatprep.subr.bf16.mxu0 0
    %374 = vmatpush1.bf16.msra.mxu0 %v273
    %375 = vmatprep.subr.bf16.mxu0 0
    %376 = vmatpush1.bf16.msra.mxu0 %v274
    %377 = vmatprep.subr.bf16.mxu0 0
    %378 = vmatpush1.bf16.msra.mxu0 %v275
    %379 = vmatprep.subr.bf16.mxu0 0
    %380 = vmatpush1.bf16.msra.mxu0 %v276
    %381 = vmatprep.mubr.bf16.mxu0 %v112
    %382 = vmatmul.mubr.bf16.gmra.mrb[0].mxu0 %v111
    %v383 = vpop.f32.mrb[0].mxu0
    %v384 = vadd.f32 %v344, %v383
    %v385 = vpop.f32.mrb[0].mxu0
    %v386 = vpop.f32.mrb[0].mxu0
    %v387 = vpop.f32.mrb[0].mxu0
    %388 = vdwg.mxu0
    %v389 = vmax.f32 %v384, 0.0
    %390 = vst [vmem:[#allocation2] sm:$0x3] %v389
    // Predicated region
    $region14: #{net_forward.9} parent=1 // pred_check
      _
    $region15: #{net_forward.9} parent=1 // pred_check_branch
      %392 = sbr.rel (0) target = $region17
    $region16: #{net_forward.9} parent=1 // pred_region
      %s394 = ssub.s32 32, 32
      %395 = vsyncadd [#allocation3], %s394
      %s397 = sshll.u32 [#allocation2], 4
      %s398 = int_to_ptr.vmem [resolvable:$true] %s397
      %400 = dma.vmem_to_hbm [thread:$0]  %s398, 32, %s3, [#allocation3]
    $region17: #{net_forward.9} parent=1 // pred_fallthru
      _
    // Predicated region
    $region18: #{net_forward.9} parent=1 // pred_check
      _
    $region19: #{net_forward.9} parent=1 // pred_check_branch
      %402 = sbr.rel (0) target = $region21
    $region20: #{net_forward.9} parent=1 // pred_region
      %403 = dma.done [#allocation3], 32
    $region21: #{net_forward.9} parent=1 // pred_fallthru
      _
    %404 = vsyncpa [#allocation3], 1

// kernel: net_forward.8
$region0: #{net_forward.8}
  #allocation0 [shape = 'u32[]', space=smem, size = 0x4, offset = 0x4, fixed_abs, tag = 'smem constant byte address 0x4 - core index']
  #allocation1 [shape = 'u32[144,128]{1,0:T(1,128)}', space=vmem, size = 0x12000, scoped, tag = 'internal scratch']
  %s0 = inlined_call_operand.vmem [shape: bf16[2,2048], index: 0, kind: input, shape index: {}]
  %s1 = inlined_call_operand.vmem [shape: bf16[2048,512], index: 1, kind: input, shape index: {}]
  %s2 = inlined_call_operand.vmem [shape: f32[1,512], index: 2, kind: input, shape index: {}]
  %s3 = inlined_call_operand.vmem [shape: bf16[2,512], index: 3, kind: output, shape index: {}]
  %s4 = sld [smem:[#allocation0]]
  $region22: #{net_forward.8} parent=0
    _
  %s6 = ssub.s32 1, %s4
  %s7 = scalar_select 0, %s6, %s4
  // Predicated region
  $region2: #{net_forward.8} parent=0 // pred_check
    _
  $region3: #{net_forward.8} parent=0 // pred_check_branch
    %9 = sbr.rel (0) target = $region5
  $region4: #{net_forward.8} parent=0 // pred_region
    _
  $region5: #{net_forward.8} parent=0 // pred_fallthru
    _
  // Predicated region
  $region6: #{net_forward.8} parent=0 // pred_check
    _
  $region7: #{net_forward.8} parent=0 // pred_check_branch
    %11 = sbr.rel (0) target = $region9
  $region8: #{net_forward.8} parent=0 // pred_region
    _
  $region9: #{net_forward.8} parent=0 // pred_fallthru
    _
  // Predicated region
  $region10: #{net_forward.8} parent=0 // pred_check
    _
  $region11: #{net_forward.8} parent=0 // pred_check_branch
    %13 = sbr.rel (0) target = $region13
  $region12: #{net_forward.8} parent=0 // pred_region
    _
  $region13: #{net_forward.8} parent=0 // pred_fallthru
    _
  %v14 = vld [vmem:[%s0] sm:$0xff]
  %v15 = vld [vmem:[%s0 + $0x8] sm:$0xff]
  %v16 = vld [vmem:[%s1] sm:$0xff]
  %v17 = vld [vmem:[%s1 + $0x8] sm:$0xff]
  %v18 = vld [vmem:[%s1 + $0x10] sm:$0xff]
  %v19 = vld [vmem:[%s1 + $0x18] sm:$0xff]
  %v20 = vld [vmem:[%s1 + $0x20] sm:$0xff]
  %v21 = vld [vmem:[%s1 + $0x28] sm:$0xff]
  %v22 = vld [vmem:[%s1 + $0x30] sm:$0xff]
  %v23 = vld [vmem:[%s1 + $0x38] sm:$0xff]
  %v24 = vld [vmem:[%s1 + $0x40] sm:$0xff]
  %v25 = vld [vmem:[%s1 + $0x48] sm:$0xff]
  %v26 = vld [vmem:[%s1 + $0x50] sm:$0xff]
  %v27 = vld [vmem:[%s1 + $0x58] sm:$0xff]
  %v28 = vld [vmem:[%s1 + $0x60] sm:$0xff]
  %v29 = vld [vmem:[%s1 + $0x68] sm:$0xff]
  %v30 = vld [vmem:[%s1 + $0x70] sm:$0xff]
  %v31 = vld [vmem:[%s1 + $0x78] sm:$0xff]
  %v32 = vld [vmem:[%s1 + $0x80] sm:$0xff]
  %v33 = vld [vmem:[%s1 + $0x88] sm:$0xff]
  %v34 = vld [vmem:[%s1 + $0x90] sm:$0xff]
  %v35 = vld [vmem:[%s1 + $0x98] sm:$0xff]
  %v36 = vld [vmem:[%s1 + $0xa0] sm:$0xff]
  %v37 = vld [vmem:[%s1 + $0xa8] sm:$0xff]
  %v38 = vld [vmem:[%s1 + $0xb0] sm:$0xff]
  %v39 = vld [vmem:[%s1 + $0xb8] sm:$0xff]
  %v40 = vld [vmem:[%s1 + $0xc0] sm:$0xff]
  %v41 = vld [vmem:[%s1 + $0xc8] sm:$0xff]
  %v42 = vld [vmem:[%s1 + $0xd0] sm:$0xff]
  %v43 = vld [vmem:[%s1 + $0xd8] sm:$0xff]
  %v44 = vld [vmem:[%s1 + $0xe0] sm:$0xff]
  %v45 = vld [vmem:[%s1 + $0xe8] sm:$0xff]
  %v46 = vld [vmem:[%s1 + $0xf0] sm:$0xff]
  %v47 = vld [vmem:[%s1 + $0xf8] sm:$0xff]
  %v48 = vld [vmem:[%s1 + $0x100] sm:$0xff]
  %v49 = vld [vmem:[%s1 + $0x108] sm:$0xff]
  %v50 = vld [vmem:[%s1 + $0x110] sm:$0xff]
  %v51 = vld [vmem:[%s1 + $0x118] sm:$0xff]
  %v52 = vld [vmem:[%s1 + $0x120] sm:$0xff]
  %v53 = vld [vmem:[%s1 + $0x128] sm:$0xff]
  %v54 = vld [vmem:[%s1 + $0x130] sm:$0xff]
  %v55 = vld [vmem:[%s1 + $0x138] sm:$0xff]
  %v56 = vld [vmem:[%s1 + $0x140] sm:$0xff]
  %v57 = vld [vmem:[%s1 + $0x148] sm:$0xff]
  %v58 = vld [vmem:[%s1 + $0x150] sm:$0xff]
  %v59 = vld [vmem:[%s1 + $0x158] sm:$0xff]
  %v60 = vld [vmem:[%s1 + $0x160] sm:$0xff]
  %v61 = vld [vmem:[%s1 + $0x168] sm:$0xff]
  %v62 = vld [vmem:[%s1 + $0x170] sm:$0xff]
  %v63 = vld [vmem:[%s1 + $0x178] sm:$0xff]
  %v64 = vld [vmem:[%s1 + $0x180] sm:$0xff]
  %v65 = vld [vmem:[%s1 + $0x188] sm:$0xff]
  %v66 = vld [vmem:[%s1 + $0x190] sm:$0xff]
  %v67 = vld [vmem:[%s1 + $0x198] sm:$0xff]
  %v68 = vld [vmem:[%s1 + $0x1a0] sm:$0xff]
  %v69 = vld [vmem:[%s1 + $0x1a8] sm:$0xff]
  %v70 = vld [vmem:[%s1 + $0x1b0] sm:$0xff]
  %v71 = vld [vmem:[%s1 + $0x1b8] sm:$0xff]
  %v72 = vld [vmem:[%s1 + $0x1c0] sm:$0xff]
  %v73 = vld [vmem:[%s1 + $0x1c8] sm:$0xff]
  %v74 = vld [vmem:[%s1 + $0x1d0] sm:$0xff]
  %v75 = vld [vmem:[%s1 + $0x1d8] sm:$0xff]
  %v76 = vld [vmem:[%s1 + $0x1e0] sm:$0xff]
  %v77 = vld [vmem:[%s1 + $0x1e8] sm:$0xff]
  %v78 = vld [vmem:[%s1 + $0x1f0] sm:$0xff]
  %v79 = vld [vmem:[%s1 + $0x1f8] sm:$0xff]
  %v80 = vld [vmem:[%s1 + $0x200] sm:$0xff]
  %v81 = vld [vmem:[%s1 + $0x208] sm:$0xff]
  %v82 = vld [vmem:[%s1 + $0x210] sm:$0xff]
  %v83 = vld [vmem:[%s1 + $0x218] sm:$0xff]
  %v84 = vld [vmem:[%s1 + $0x220] sm:$0xff]
  %v85 = vld [vmem:[%s1 + $0x228] sm:$0xff]
  %v86 = vld [vmem:[%s1 + $0x230] sm:$0xff]
  %v87 = vld [vmem:[%s1 + $0x238] sm:$0xff]
  %v88 = vld [vmem:[%s1 + $0x240] sm:$0xff]
  %v89 = vld [vmem:[%s1 + $0x248] sm:$0xff]
  %v90 = vld [vmem:[%s1 + $0x250] sm:$0xff]
  %v91 = vld [vmem:[%s1 + $0x258] sm:$0xff]
  %v92 = vld [vmem:[%s1 + $0x260] sm:$0xff]
  %v93 = vld [vmem:[%s1 + $0x268] sm:$0xff]
  %v94 = vld [vmem:[%s1 + $0x270] sm:$0xff]
  %v95 = vld [vmem:[%s1 + $0x278] sm:$0xff]
  %v96 = vld [vmem:[%s1 + $0x280] sm:$0xff]
  %v97 = vld [vmem:[%s1 + $0x288] sm:$0xff]
  %v98 = vld [vmem:[%s1 + $0x290] sm:$0xff]
  %v99 = vld [vmem:[%s1 + $0x298] sm:$0xff]
  %v100 = vld [vmem:[%s1 + $0x2a0] sm:$0xff]
  %v101 = vld [vmem:[%s1 + $0x2a8] sm:$0xff]
  %v102 = vld [vmem:[%s1 + $0x2b0] sm:$0xff]
  %v103 = vld [vmem:[%s1 + $0x2b8] sm:$0xff]
  %v104 = vld [vmem:[%s1 + $0x2c0] sm:$0xff]
  %v105 = vld [vmem:[%s1 + $0x2c8] sm:$0xff]
  %v106 = vld [vmem:[%s1 + $0x2d0] sm:$0xff]
  %v107 = vld [vmem:[%s1 + $0x2d8] sm:$0xff]
  %v108 = vld [vmem:[%s1 + $0x2e0] sm:$0xff]
  %v109 = vld [vmem:[%s1 + $0x2e8] sm:$0xff]
  %v110 = vld [vmem:[%s1 + $0x2f0] sm:$0xff]
  %v111 = vld [vmem:[%s1 + $0x2f8] sm:$0xff]
  %v112 = vld [vmem:[%s1 + $0x300] sm:$0xff]
  %v113 = vld [vmem:[%s1 + $0x308] sm:$0xff]
  %v114 = vld [vmem:[%s1 + $0x310] sm:$0xff]
  %v115 = vld [vmem:[%s1 + $0x318] sm:$0xff]
  %v116 = vld [vmem:[%s1 + $0x320] sm:$0xff]
  %v117 = vld [vmem:[%s1 + $0x328] sm:$0xff]
  %v118 = vld [vmem:[%s1 + $0x330] sm:$0xff]
  %v119 = vld [vmem:[%s1 + $0x338] sm:$0xff]
  %v120 = vld [vmem:[%s1 + $0x340] sm:$0xff]
  %v121 = vld [vmem:[%s1 + $0x348] sm:$0xff]
  %v122 = vld [vmem:[%s1 + $0x350] sm:$0xff]
  %v123 = vld [vmem:[%s1 + $0x358] sm:$0xff]
  %v124 = vld [vmem:[%s1 + $0x360] sm:$0xff]
  %v125 = vld [vmem:[%s1 + $0x368] sm:$0xff]
  %v126 = vld [vmem:[%s1 + $0x370] sm:$0xff]
  %v127 = vld [vmem:[%s1 + $0x378] sm:$0xff]
  %v128 = vld [vmem:[%s1 + $0x380] sm:$0xff]
  %v129 = vld [vmem:[%s1 + $0x388] sm:$0xff]
  %v130 = vld [vmem:[%s1 + $0x390] sm:$0xff]
  %v131 = vld [vmem:[%s1 + $0x398] sm:$0xff]
  %v132 = vld [vmem:[%s1 + $0x3a0] sm:$0xff]
  %v133 = vld [vmem:[%s1 + $0x3a8] sm:$0xff]
  %v134 = vld [vmem:[%s1 + $0x3b0] sm:$0xff]
  %v135 = vld [vmem:[%s1 + $0x3b8] sm:$0xff]
  %v136 = vld [vmem:[%s1 + $0x3c0] sm:$0xff]
  %v137 = vld [vmem:[%s1 + $0x3c8] sm:$0xff]
  %v138 = vld [vmem:[%s1 + $0x3d0] sm:$0xff]
  %v139 = vld [vmem:[%s1 + $0x3d8] sm:$0xff]
  %v140 = vld [vmem:[%s1 + $0x3e0] sm:$0xff]
  %v141 = vld [vmem:[%s1 + $0x3e8] sm:$0xff]
  %v142 = vld [vmem:[%s1 + $0x3f0] sm:$0xff]
  %v143 = vld [vmem:[%s1 + $0x3f8] sm:$0xff]
  %v144 = vld [vmem:[%s1 + $0x400] sm:$0xff]
  %v145 = vld [vmem:[%s1 + $0x408] sm:$0xff]
  %v146 = vld [vmem:[%s1 + $0x410] sm:$0xff]
  %v147 = vld [vmem:[%s1 + $0x418] sm:$0xff]
  %v148 = vld [vmem:[%s1 + $0x420] sm:$0xff]
  %v149 = vld [vmem:[%s1 + $0x428] sm:$0xff]
  %v150 = vld [vmem:[%s1 + $0x430] sm:$0xff]
  %v151 = vld [vmem:[%s1 + $0x438] sm:$0xff]
  %v152 = vld [vmem:[%s1 + $0x440] sm:$0xff]
  %v153 = vld [vmem:[%s1 + $0x448] sm:$0xff]
  %v154 = vld [vmem:[%s1 + $0x450] sm:$0xff]
  %v155 = vld [vmem:[%s1 + $0x458] sm:$0xff]
  %v156 = vld [vmem:[%s1 + $0x460] sm:$0xff]
  %v157 = vld [vmem:[%s1 + $0x468] sm:$0xff]
  %v158 = vld [vmem:[%s1 + $0x470] sm:$0xff]
  %v159 = vld [vmem:[%s1 + $0x478] sm:$0xff]
  %v160 = vld [vmem:[%s1 + $0x480] sm:$0xff]
  %v161 = vld [vmem:[%s1 + $0x488] sm:$0xff]
  %v162 = vld [vmem:[%s1 + $0x490] sm:$0xff]
  %v163 = vld [vmem:[%s1 + $0x498] sm:$0xff]
  %v164 = vld [vmem:[%s1 + $0x4a0] sm:$0xff]
  %v165 = vld [vmem:[%s1 + $0x4a8] sm:$0xff]
  %v166 = vld [vmem:[%s1 + $0x4b0] sm:$0xff]
  %v167 = vld [vmem:[%s1 + $0x4b8] sm:$0xff]
  %v168 = vld [vmem:[%s1 + $0x4c0] sm:$0xff]
  %v169 = vld [vmem:[%s1 + $0x4c8] sm:$0xff]
  %v170 = vld [vmem:[%s1 + $0x4d0] sm:$0xff]
  %v171 = vld [vmem:[%s1 + $0x4d8] sm:$0xff]
  %v172 = vld [vmem:[%s1 + $0x4e0] sm:$0xff]
  %v173 = vld [vmem:[%s1 + $0x4e8] sm:$0xff]
  %v174 = vld [vmem:[%s1 + $0x4f0] sm:$0xff]
  %v175 = vld [vmem:[%s1 + $0x4f8] sm:$0xff]
  %v176 = vld [vmem:[%s1 + $0x500] sm:$0xff]
  %v177 = vld [vmem:[%s1 + $0x508] sm:$0xff]
  %v178 = vld [vmem:[%s1 + $0x510] sm:$0xff]
  %v179 = vld [vmem:[%s1 + $0x518] sm:$0xff]
  %v180 = vld [vmem:[%s1 + $0x520] sm:$0xff]
  %v181 = vld [vmem:[%s1 + $0x528] sm:$0xff]
  %v182 = vld [vmem:[%s1 + $0x530] sm:$0xff]
  %v183 = vld [vmem:[%s1 + $0x538] sm:$0xff]
  %v184 = vld [vmem:[%s1 + $0x540] sm:$0xff]
  %v185 = vld [vmem:[%s1 + $0x548] sm:$0xff]
  %v186 = vld [vmem:[%s1 + $0x550] sm:$0xff]
  %v187 = vld [vmem:[%s1 + $0x558] sm:$0xff]
  %v188 = vld [vmem:[%s1 + $0x560] sm:$0xff]
  %v189 = vld [vmem:[%s1 + $0x568] sm:$0xff]
  %v190 = vld [vmem:[%s1 + $0x570] sm:$0xff]
  %v191 = vld [vmem:[%s1 + $0x578] sm:$0xff]
  %v192 = vld [vmem:[%s1 + $0x580] sm:$0xff]
  %v193 = vld [vmem:[%s1 + $0x588] sm:$0xff]
  %v194 = vld [vmem:[%s1 + $0x590] sm:$0xff]
  %v195 = vld [vmem:[%s1 + $0x598] sm:$0xff]
  %v196 = vld [vmem:[%s1 + $0x5a0] sm:$0xff]
  %v197 = vld [vmem:[%s1 + $0x5a8] sm:$0xff]
  %v198 = vld [vmem:[%s1 + $0x5b0] sm:$0xff]
  %v199 = vld [vmem:[%s1 + $0x5b8] sm:$0xff]
  %v200 = vld [vmem:[%s1 + $0x5c0] sm:$0xff]
  %v201 = vld [vmem:[%s1 + $0x5c8] sm:$0xff]
  %v202 = vld [vmem:[%s1 + $0x5d0] sm:$0xff]
  %v203 = vld [vmem:[%s1 + $0x5d8] sm:$0xff]
  %v204 = vld [vmem:[%s1 + $0x5e0] sm:$0xff]
  %v205 = vld [vmem:[%s1 + $0x5e8] sm:$0xff]
  %v206 = vld [vmem:[%s1 + $0x5f0] sm:$0xff]
  %v207 = vld [vmem:[%s1 + $0x5f8] sm:$0xff]
  %v208 = vld [vmem:[%s1 + $0x600] sm:$0xff]
  %v209 = vld [vmem:[%s1 + $0x608] sm:$0xff]
  %v210 = vld [vmem:[%s1 + $0x610] sm:$0xff]
  %v211 = vld [vmem:[%s1 + $0x618] sm:$0xff]
  %v212 = vld [vmem:[%s1 + $0x620] sm:$0xff]
  %v213 = vld [vmem:[%s1 + $0x628] sm:$0xff]
  %v214 = vld [vmem:[%s1 + $0x630] sm:$0xff]
  %v215 = vld [vmem:[%s1 + $0x638] sm:$0xff]
  %v216 = vld [vmem:[%s1 + $0x640] sm:$0xff]
  %v217 = vld [vmem:[%s1 + $0x648] sm:$0xff]
  %v218 = vld [vmem:[%s1 + $0x650] sm:$0xff]
  %v219 = vld [vmem:[%s1 + $0x658] sm:$0xff]
  %v220 = vld [vmem:[%s1 + $0x660] sm:$0xff]
  %v221 = vld [vmem:[%s1 + $0x668] sm:$0xff]
  %v222 = vld [vmem:[%s1 + $0x670] sm:$0xff]
  %v223 = vld [vmem:[%s1 + $0x678] sm:$0xff]
  %v224 = vld [vmem:[%s1 + $0x680] sm:$0xff]
  %v225 = vld [vmem:[%s1 + $0x688] sm:$0xff]
  %v226 = vld [vmem:[%s1 + $0x690] sm:$0xff]
  %v227 = vld [vmem:[%s1 + $0x698] sm:$0xff]
  %v228 = vld [vmem:[%s1 + $0x6a0] sm:$0xff]
  %v229 = vld [vmem:[%s1 + $0x6a8] sm:$0xff]
  %v230 = vld [vmem:[%s1 + $0x6b0] sm:$0xff]
  %v231 = vld [vmem:[%s1 + $0x6b8] sm:$0xff]
  %v232 = vld [vmem:[%s1 + $0x6c0] sm:$0xff]
  %v233 = vld [vmem:[%s1 + $0x6c8] sm:$0xff]
  %v234 = vld [vmem:[%s1 + $0x6d0] sm:$0xff]
  %v235 = vld [vmem:[%s1 + $0x6d8] sm:$0xff]
  %v236 = vld [vmem:[%s1 + $0x6e0] sm:$0xff]
  %v237 = vld [vmem:[%s1 + $0x6e8] sm:$0xff]
  %v238 = vld [vmem:[%s1 + $0x6f0] sm:$0xff]
  %v239 = vld [vmem:[%s1 + $0x6f8] sm:$0xff]
  %v240 = vld [vmem:[%s1 + $0x700] sm:$0xff]
  %v241 = vld [vmem:[%s1 + $0x708] sm:$0xff]
  %v242 = vld [vmem:[%s1 + $0x710] sm:$0xff]
  %v243 = vld [vmem:[%s1 + $0x718] sm:$0xff]
  %v244 = vld [vmem:[%s1 + $0x720] sm:$0xff]
  %v245 = vld [vmem:[%s1 + $0x728] sm:$0xff]
  %v246 = vld [vmem:[%s1 + $0x730] sm:$0xff]
  %v247 = vld [vmem:[%s1 + $0x738] sm:$0xff]
  %v248 = vld [vmem:[%s1 + $0x740] sm:$0xff]
  %v249 = vld [vmem:[%s1 + $0x748] sm:$0xff]
  %v250 = vld [vmem:[%s1 + $0x750] sm:$0xff]
  %v251 = vld [vmem:[%s1 + $0x758] sm:$0xff]
  %v252 = vld [vmem:[%s1 + $0x760] sm:$0xff]
  %v253 = vld [vmem:[%s1 + $0x768] sm:$0xff]
  %v254 = vld [vmem:[%s1 + $0x770] sm:$0xff]
  %v255 = vld [vmem:[%s1 + $0x778] sm:$0xff]
  %v256 = vld [vmem:[%s1 + $0x780] sm:$0xff]
  %v257 = vld [vmem:[%s1 + $0x788] sm:$0xff]
  %v258 = vld [vmem:[%s1 + $0x790] sm:$0xff]
  %v259 = vld [vmem:[%s1 + $0x798] sm:$0xff]
  %v260 = vld [vmem:[%s1 + $0x7a0] sm:$0xff]
  %v261 = vld [vmem:[%s1 + $0x7a8] sm:$0xff]
  %v262 = vld [vmem:[%s1 + $0x7b0] sm:$0xff]
  %v263 = vld [vmem:[%s1 + $0x7b8] sm:$0xff]
  %v264 = vld [vmem:[%s1 + $0x7c0] sm:$0xff]
  %v265 = vld [vmem:[%s1 + $0x7c8] sm:$0xff]
  %v266 = vld [vmem:[%s1 + $0x7d0] sm:$0xff]
  %v267 = vld [vmem:[%s1 + $0x7d8] sm:$0xff]
  %v268 = vld [vmem:[%s1 + $0x7e0] sm:$0xff]
  %v269 = vld [vmem:[%s1 + $0x7e8] sm:$0xff]
  %v270 = vld [vmem:[%s1 + $0x7f0] sm:$0xff]
  %v271 = vld [vmem:[%s1 + $0x7f8] sm:$0xff]
  %v272 = vld [vmem:[%s1 + $0x800] sm:$0xff]
  %v273 = vld [vmem:[%s1 + $0x808] sm:$0xff]
  %v274 = vld [vmem:[%s1 + $0x810] sm:$0xff]
  %v275 = vld [vmem:[%s1 + $0x818] sm:$0xff]
  %v276 = vld [vmem:[%s1 + $0x820] sm:$0xff]
  %v277 = vld [vmem:[%s1 + $0x828] sm:$0xff]
  %v278 = vld [vmem:[%s1 + $0x830] sm:$0xff]
  %v279 = vld [vmem:[%s1 + $0x838] sm:$0xff]
  %v280 = vld [vmem:[%s1 + $0x840] sm:$0xff]
  %v281 = vld [vmem:[%s1 + $0x848] sm:$0xff]
  %v282 = vld [vmem:[%s1 + $0x850] sm:$0xff]
  %v283 = vld [vmem:[%s1 + $0x858] sm:$0xff]
  %v284 = vld [vmem:[%s1 + $0x860] sm:$0xff]
  %v285 = vld [vmem:[%s1 + $0x868] sm:$0xff]
  %v286 = vld [vmem:[%s1 + $0x870] sm:$0xff]
  %v287 = vld [vmem:[%s1 + $0x878] sm:$0xff]
  %v288 = vld [vmem:[%s1 + $0x880] sm:$0xff]
  %v289 = vld [vmem:[%s1 + $0x888] sm:$0xff]
  %v290 = vld [vmem:[%s1 + $0x890] sm:$0xff]
  %v291 = vld [vmem:[%s1 + $0x898] sm:$0xff]
  %v292 = vld [vmem:[%s1 + $0x8a0] sm:$0xff]
  %v293 = vld [vmem:[%s1 + $0x8a8] sm:$0xff]
  %v294 = vld [vmem:[%s1 + $0x8b0] sm:$0xff]
  %v295 = vld [vmem:[%s1 + $0x8b8] sm:$0xff]
  %v296 = vld [vmem:[%s1 + $0x8c0] sm:$0xff]
  %v297 = vld [vmem:[%s1 + $0x8c8] sm:$0xff]
  %v298 = vld [vmem:[%s1 + $0x8d0] sm:$0xff]
  %v299 = vld [vmem:[%s1 + $0x8d8] sm:$0xff]
  %v300 = vld [vmem:[%s1 + $0x8e0] sm:$0xff]
  %v301 = vld [vmem:[%s1 + $0x8e8] sm:$0xff]
  %v302 = vld [vmem:[%s1 + $0x8f0] sm:$0xff]
  %v303 = vld [vmem:[%s1 + $0x8f8] sm:$0xff]
  %v304 = vld [vmem:[%s1 + $0x900] sm:$0xff]
  %v305 = vld [vmem:[%s1 + $0x908] sm:$0xff]
  %v306 = vld [vmem:[%s1 + $0x910] sm:$0xff]
  %v307 = vld [vmem:[%s1 + $0x918] sm:$0xff]
  %v308 = vld [vmem:[%s1 + $0x920] sm:$0xff]
  %v309 = vld [vmem:[%s1 + $0x928] sm:$0xff]
  %v310 = vld [vmem:[%s1 + $0x930] sm:$0xff]
  %v311 = vld [vmem:[%s1 + $0x938] sm:$0xff]
  %v312 = vld [vmem:[%s1 + $0x940] sm:$0xff]
  %v313 = vld [vmem:[%s1 + $0x948] sm:$0xff]
  %v314 = vld [vmem:[%s1 + $0x950] sm:$0xff]
  %v315 = vld [vmem:[%s1 + $0x958] sm:$0xff]
  %v316 = vld [vmem:[%s1 + $0x960] sm:$0xff]
  %v317 = vld [vmem:[%s1 + $0x968] sm:$0xff]
  %v318 = vld [vmem:[%s1 + $0x970] sm:$0xff]
  %v319 = vld [vmem:[%s1 + $0x978] sm:$0xff]
  %v320 = vld [vmem:[%s1 + $0x980] sm:$0xff]
  %v321 = vld [vmem:[%s1 + $0x988] sm:$0xff]
  %v322 = vld [vmem:[%s1 + $0x990] sm:$0xff]
  %v323 = vld [vmem:[%s1 + $0x998] sm:$0xff]
  %v324 = vld [vmem:[%s1 + $0x9a0] sm:$0xff]
  %v325 = vld [vmem:[%s1 + $0x9a8] sm:$0xff]
  %v326 = vld [vmem:[%s1 + $0x9b0] sm:$0xff]
  %v327 = vld [vmem:[%s1 + $0x9b8] sm:$0xff]
  %v328 = vld [vmem:[%s1 + $0x9c0] sm:$0xff]
  %v329 = vld [vmem:[%s1 + $0x9c8] sm:$0xff]
  %v330 = vld [vmem:[%s1 + $0x9d0] sm:$0xff]
  %v331 = vld [vmem:[%s1 + $0x9d8] sm:$0xff]
  %v332 = vld [vmem:[%s1 + $0x9e0] sm:$0xff]
  %v333 = vld [vmem:[%s1 + $0x9e8] sm:$0xff]
  %v334 = vld [vmem:[%s1 + $0x9f0] sm:$0xff]
  %v335 = vld [vmem:[%s1 + $0x9f8] sm:$0xff]
  %v336 = vld [vmem:[%s1 + $0xa00] sm:$0xff]
  %v337 = vld [vmem:[%s1 + $0xa08] sm:$0xff]
  %v338 = vld [vmem:[%s1 + $0xa10] sm:$0xff]
  %v339 = vld [vmem:[%s1 + $0xa18] sm:$0xff]
  %v340 = vld [vmem:[%s1 + $0xa20] sm:$0xff]
  %v341 = vld [vmem:[%s1 + $0xa28] sm:$0xff]
  %v342 = vld [vmem:[%s1 + $0xa30] sm:$0xff]
  %v343 = vld [vmem:[%s1 + $0xa38] sm:$0xff]
  %v344 = vld [vmem:[%s1 + $0xa40] sm:$0xff]
  %v345 = vld [vmem:[%s1 + $0xa48] sm:$0xff]
  %v346 = vld [vmem:[%s1 + $0xa50] sm:$0xff]
  %v347 = vld [vmem:[%s1 + $0xa58] sm:$0xff]
  %v348 = vld [vmem:[%s1 + $0xa60] sm:$0xff]
  %v349 = vld [vmem:[%s1 + $0xa68] sm:$0xff]
  %v350 = vld [vmem:[%s1 + $0xa70] sm:$0xff]
  %v351 = vld [vmem:[%s1 + $0xa78] sm:$0xff]
  %v352 = vld [vmem:[%s1 + $0xa80] sm:$0xff]
  %v353 = vld [vmem:[%s1 + $0xa88] sm:$0xff]
  %v354 = vld [vmem:[%s1 + $0xa90] sm:$0xff]
  %v355 = vld [vmem:[%s1 + $0xa98] sm:$0xff]
  %v356 = vld [vmem:[%s1 + $0xaa0] sm:$0xff]
  %v357 = vld [vmem:[%s1 + $0xaa8] sm:$0xff]
  %v358 = vld [vmem:[%s1 + $0xab0] sm:$0xff]
  %v359 = vld [vmem:[%s1 + $0xab8] sm:$0xff]
  %v360 = vld [vmem:[%s1 + $0xac0] sm:$0xff]
  %v361 = vld [vmem:[%s1 + $0xac8] sm:$0xff]
  %v362 = vld [vmem:[%s1 + $0xad0] sm:$0xff]
  %v363 = vld [vmem:[%s1 + $0xad8] sm:$0xff]
  %v364 = vld [vmem:[%s1 + $0xae0] sm:$0xff]
  %v365 = vld [vmem:[%s1 + $0xae8] sm:$0xff]
  %v366 = vld [vmem:[%s1 + $0xaf0] sm:$0xff]
  %v367 = vld [vmem:[%s1 + $0xaf8] sm:$0xff]
  %v368 = vld [vmem:[%s1 + $0xb00] sm:$0xff]
  %v369 = vld [vmem:[%s1 + $0xb08] sm:$0xff]
  %v370 = vld [vmem:[%s1 + $0xb10] sm:$0xff]
  %v371 = vld [vmem:[%s1 + $0xb18] sm:$0xff]
  %v372 = vld [vmem:[%s1 + $0xb20] sm:$0xff]
  %v373 = vld [vmem:[%s1 + $0xb28] sm:$0xff]
  %v374 = vld [vmem:[%s1 + $0xb30] sm:$0xff]
  %v375 = vld [vmem:[%s1 + $0xb38] sm:$0xff]
  %v376 = vld [vmem:[%s1 + $0xb40] sm:$0xff]
  %v377 = vld [vmem:[%s1 + $0xb48] sm:$0xff]
  %v378 = vld [vmem:[%s1 + $0xb50] sm:$0xff]
  %v379 = vld [vmem:[%s1 + $0xb58] sm:$0xff]
  %v380 = vld [vmem:[%s1 + $0xb60] sm:$0xff]
  %v381 = vld [vmem:[%s1 + $0xb68] sm:$0xff]
  %v382 = vld [vmem:[%s1 + $0xb70] sm:$0xff]
  %v383 = vld [vmem:[%s1 + $0xb78] sm:$0xff]
  %v384 = vld [vmem:[%s1 + $0xb80] sm:$0xff]
  %v385 = vld [vmem:[%s1 + $0xb88] sm:$0xff]
  %v386 = vld [vmem:[%s1 + $0xb90] sm:$0xff]
  %v387 = vld [vmem:[%s1 + $0xb98] sm:$0xff]
  %v388 = vld [vmem:[%s1 + $0xba0] sm:$0xff]
  %v389 = vld [vmem:[%s1 + $0xba8] sm:$0xff]
  %v390 = vld [vmem:[%s1 + $0xbb0] sm:$0xff]
  %v391 = vld [vmem:[%s1 + $0xbb8] sm:$0xff]
  %v392 = vld [vmem:[%s1 + $0xbc0] sm:$0xff]
  %v393 = vld [vmem:[%s1 + $0xbc8] sm:$0xff]
  %v394 = vld [vmem:[%s1 + $0xbd0] sm:$0xff]
  %v395 = vld [vmem:[%s1 + $0xbd8] sm:$0xff]
  %v396 = vld [vmem:[%s1 + $0xbe0] sm:$0xff]
  %v397 = vld [vmem:[%s1 + $0xbe8] sm:$0xff]
  %v398 = vld [vmem:[%s1 + $0xbf0] sm:$0xff]
  %v399 = vld [vmem:[%s1 + $0xbf8] sm:$0xff]
  %v400 = vld [vmem:[%s1 + $0xc00] sm:$0xff]
  %v401 = vld [vmem:[%s1 + $0xc08] sm:$0xff]
  %v402 = vld [vmem:[%s1 + $0xc10] sm:$0xff]
  %v403 = vld [vmem:[%s1 + $0xc18] sm:$0xff]
  %v404 = vld [vmem:[%s1 + $0xc20] sm:$0xff]
  %v405 = vld [vmem:[%s1 + $0xc28] sm:$0xff]
  %v406 = vld [vmem:[%s1 + $0xc30] sm:$0xff]
  %v407 = vld [vmem:[%s1 + $0xc38] sm:$0xff]
  %v408 = vld [vmem:[%s1 + $0xc40] sm:$0xff]
  %v409 = vld [vmem:[%s1 + $0xc48] sm:$0xff]
  %v410 = vld [vmem:[%s1 + $0xc50] sm:$0xff]
  %v411 = vld [vmem:[%s1 + $0xc58] sm:$0xff]
  %v412 = vld [vmem:[%s1 + $0xc60] sm:$0xff]
  %v413 = vld [vmem:[%s1 + $0xc68] sm:$0xff]
  %v414 = vld [vmem:[%s1 + $0xc70] sm:$0xff]
  %v415 = vld [vmem:[%s1 + $0xc78] sm:$0xff]
  %v416 = vld [vmem:[%s1 + $0xc80] sm:$0xff]
  %v417 = vld [vmem:[%s1 + $0xc88] sm:$0xff]
  %v418 = vld [vmem:[%s1 + $0xc90] sm:$0xff]
  %v419 = vld [vmem:[%s1 + $0xc98] sm:$0xff]
  %v420 = vld [vmem:[%s1 + $0xca0] sm:$0xff]
  %v421 = vld [vmem:[%s1 + $0xca8] sm:$0xff]
  %v422 = vld [vmem:[%s1 + $0xcb0] sm:$0xff]
  %v423 = vld [vmem:[%s1 + $0xcb8] sm:$0xff]
  %v424 = vld [vmem:[%s1 + $0xcc0] sm:$0xff]
  %v425 = vld [vmem:[%s1 + $0xcc8] sm:$0xff]
  %v426 = vld [vmem:[%s1 + $0xcd0] sm:$0xff]
  %v427 = vld [vmem:[%s1 + $0xcd8] sm:$0xff]
  %v428 = vld [vmem:[%s1 + $0xce0] sm:$0xff]
  %v429 = vld [vmem:[%s1 + $0xce8] sm:$0xff]
  %v430 = vld [vmem:[%s1 + $0xcf0] sm:$0xff]
  %v431 = vld [vmem:[%s1 + $0xcf8] sm:$0xff]
  %v432 = vld [vmem:[%s1 + $0xd00] sm:$0xff]
  %v433 = vld [vmem:[%s1 + $0xd08] sm:$0xff]
  %v434 = vld [vmem:[%s1 + $0xd10] sm:$0xff]
  %v435 = vld [vmem:[%s1 + $0xd18] sm:$0xff]
  %v436 = vld [vmem:[%s1 + $0xd20] sm:$0xff]
  %v437 = vld [vmem:[%s1 + $0xd28] sm:$0xff]
  %v438 = vld [vmem:[%s1 + $0xd30] sm:$0xff]
  %v439 = vld [vmem:[%s1 + $0xd38] sm:$0xff]
  %v440 = vld [vmem:[%s1 + $0xd40] sm:$0xff]
  %v441 = vld [vmem:[%s1 + $0xd48] sm:$0xff]
  %v442 = vld [vmem:[%s1 + $0xd50] sm:$0xff]
  %v443 = vld [vmem:[%s1 + $0xd58] sm:$0xff]
  %v444 = vld [vmem:[%s1 + $0xd60] sm:$0xff]
  %v445 = vld [vmem:[%s1 + $0xd68] sm:$0xff]
  %v446 = vld [vmem:[%s1 + $0xd70] sm:$0xff]
  %v447 = vld [vmem:[%s1 + $0xd78] sm:$0xff]
  %v448 = vld [vmem:[%s1 + $0xd80] sm:$0xff]
  %v449 = vld [vmem:[%s1 + $0xd88] sm:$0xff]
  %v450 = vld [vmem:[%s1 + $0xd90] sm:$0xff]
  %v451 = vld [vmem:[%s1 + $0xd98] sm:$0xff]
  %v452 = vld [vmem:[%s1 + $0xda0] sm:$0xff]
  %v453 = vld [vmem:[%s1 + $0xda8] sm:$0xff]
  %v454 = vld [vmem:[%s1 + $0xdb0] sm:$0xff]
  %v455 = vld [vmem:[%s1 + $0xdb8] sm:$0xff]
  %v456 = vld [vmem:[%s1 + $0xdc0] sm:$0xff]
  %v457 = vld [vmem:[%s1 + $0xdc8] sm:$0xff]
  %v458 = vld [vmem:[%s1 + $0xdd0] sm:$0xff]
  %v459 = vld [vmem:[%s1 + $0xdd8] sm:$0xff]
  %v460 = vld [vmem:[%s1 + $0xde0] sm:$0xff]
  %v461 = vld [vmem:[%s1 + $0xde8] sm:$0xff]
  %v462 = vld [vmem:[%s1 + $0xdf0] sm:$0xff]
  %v463 = vld [vmem:[%s1 + $0xdf8] sm:$0xff]
  %v464 = vld [vmem:[%s1 + $0xe00] sm:$0xff]
  %v465 = vld [vmem:[%s1 + $0xe08] sm:$0xff]
  %v466 = vld [vmem:[%s1 + $0xe10] sm:$0xff]
  %v467 = vld [vmem:[%s1 + $0xe18] sm:$0xff]
  %v468 = vld [vmem:[%s1 + $0xe20] sm:$0xff]
  %v469 = vld [vmem:[%s1 + $0xe28] sm:$0xff]
  %v470 = vld [vmem:[%s1 + $0xe30] sm:$0xff]
  %v471 = vld [vmem:[%s1 + $0xe38] sm:$0xff]
  %v472 = vld [vmem:[%s1 + $0xe40] sm:$0xff]
  %v473 = vld [vmem:[%s1 + $0xe48] sm:$0xff]
  %v474 = vld [vmem:[%s1 + $0xe50] sm:$0xff]
  %v475 = vld [vmem:[%s1 + $0xe58] sm:$0xff]
  %v476 = vld [vmem:[%s1 + $0xe60] sm:$0xff]
  %v477 = vld [vmem:[%s1 + $0xe68] sm:$0xff]
  %v478 = vld [vmem:[%s1 + $0xe70] sm:$0xff]
  %v479 = vld [vmem:[%s1 + $0xe78] sm:$0xff]
  %v480 = vld [vmem:[%s1 + $0xe80] sm:$0xff]
  %v481 = vld [vmem:[%s1 + $0xe88] sm:$0xff]
  %v482 = vld [vmem:[%s1 + $0xe90] sm:$0xff]
  %v483 = vld [vmem:[%s1 + $0xe98] sm:$0xff]
  %v484 = vld [vmem:[%s1 + $0xea0] sm:$0xff]
  %v485 = vld [vmem:[%s1 + $0xea8] sm:$0xff]
  %v486 = vld [vmem:[%s1 + $0xeb0] sm:$0xff]
  %v487 = vld [vmem:[%s1 + $0xeb8] sm:$0xff]
  %v488 = vld [vmem:[%s1 + $0xec0] sm:$0xff]
  %v489 = vld [vmem:[%s1 + $0xec8] sm:$0xff]
  %v490 = vld [vmem:[%s1 + $0xed0] sm:$0xff]
  %v491 = vld [vmem:[%s1 + $0xed8] sm:$0xff]
  %v492 = vld [vmem:[%s1 + $0xee0] sm:$0xff]
  %v493 = vld [vmem:[%s1 + $0xee8] sm:$0xff]
  %v494 = vld [vmem:[%s1 + $0xef0] sm:$0xff]
  %v495 = vld [vmem:[%s1 + $0xef8] sm:$0xff]
  %v496 = vld [vmem:[%s1 + $0xf00] sm:$0xff]
  %v497 = vld [vmem:[%s1 + $0xf08] sm:$0xff]
  %v498 = vld [vmem:[%s1 + $0xf10] sm:$0xff]
  %v499 = vld [vmem:[%s1 + $0xf18] sm:$0xff]
  %v500 = vld [vmem:[%s1 + $0xf20] sm:$0xff]
  %v501 = vld [vmem:[%s1 + $0xf28] sm:$0xff]
  %v502 = vld [vmem:[%s1 + $0xf30] sm:$0xff]
  %v503 = vld [vmem:[%s1 + $0xf38] sm:$0xff]
  %v504 = vld [vmem:[%s1 + $0xf40] sm:$0xff]
  %v505 = vld [vmem:[%s1 + $0xf48] sm:$0xff]
  %v506 = vld [vmem:[%s1 + $0xf50] sm:$0xff]
  %v507 = vld [vmem:[%s1 + $0xf58] sm:$0xff]
  %v508 = vld [vmem:[%s1 + $0xf60] sm:$0xff]
  %v509 = vld [vmem:[%s1 + $0xf68] sm:$0xff]
  %v510 = vld [vmem:[%s1 + $0xf70] sm:$0xff]
  %v511 = vld [vmem:[%s1 + $0xf78] sm:$0xff]
  %v512 = vld [vmem:[%s1 + $0xf80] sm:$0xff]
  %v513 = vld [vmem:[%s1 + $0xf88] sm:$0xff]
  %v514 = vld [vmem:[%s1 + $0xf90] sm:$0xff]
  %v515 = vld [vmem:[%s1 + $0xf98] sm:$0xff]
  %v516 = vld [vmem:[%s1 + $0xfa0] sm:$0xff]
  %v517 = vld [vmem:[%s1 + $0xfa8] sm:$0xff]
  %v518 = vld [vmem:[%s1 + $0xfb0] sm:$0xff]
  %v519 = vld [vmem:[%s1 + $0xfb8] sm:$0xff]
  %v520 = vld [vmem:[%s1 + $0xfc0] sm:$0xff]
  %v521 = vld [vmem:[%s1 + $0xfc8] sm:$0xff]
  %v522 = vld [vmem:[%s1 + $0xfd0] sm:$0xff]
  %v523 = vld [vmem:[%s1 + $0xfd8] sm:$0xff]
  %v524 = vld [vmem:[%s1 + $0xfe0] sm:$0xff]
  %v525 = vld [vmem:[%s1 + $0xfe8] sm:$0xff]
  %v526 = vld [vmem:[%s1 + $0xff0] sm:$0xff]
  %v527 = vld [vmem:[%s1 + $0xff8] sm:$0xff]
  %v528 = vld [vmem:[%s2] sm:$0xf]
  %v530 = vlaneseq
  %v531 = vshrl.u32 %v530, 7
  %v532 = vsub.s32 0, %v531
  %v533 = vrot.slane %v528, %v532
  %v534 = vlaneseq
  %v535 = vshrl.u32 %v534, 7
  %v536 = vsub.s32 1, %v535
  %v537 = vrot.slane %v528, %v536
  %v538 = vlaneseq
  %v539 = vshrl.u32 %v538, 7
  %v540 = vsub.s32 2, %v539
  %v541 = vrot.slane %v528, %v540
  %v542 = vlaneseq
  %v543 = vshrl.u32 %v542, 7
  %v544 = vsub.s32 3, %v543
  %v545 = vrot.slane %v528, %v544
  %v552 = vcombine.high %v14, %v14
  %v554 = vunpack.c.l.s4 1966171168
  %v555 = vunpack.c.0.s8 %v554
  %v556 = vlaneseq
  %v557 = vshrl.u32 %v556, 7
  %v558 = vsub.s32 %v555, %v557
  %v559 = vrot.slane %v14, %v558
  %v561 = vunpack.c.l.s4 1966171168
  %v562 = vunpack.c.0.s8 %v561
  %v563 = vlaneseq
  %v564 = vshrl.u32 %v563, 7
  %v565 = vsub.s32 %v562, %v564
  %v566 = vrot.slane %v552, %v565
  %v567 = vcombine.high %v559, %v559
  %v568 = vcombine.high %v566, %v566
  %v570 = vunpack.c.l.s4 1966171168
  %v571 = vunpack.c.0.s8 %v570
  %v572 = vlaneseq
  %v573 = vshrl.u32 %v572, 7
  %v574 = vsub.s32 %v571, %v573
  %v575 = vrot.slane %v559, %v574
  %v577 = vunpack.c.l.s4 1966171168
  %v578 = vunpack.c.0.s8 %v577
  %v579 = vlaneseq
  %v580 = vshrl.u32 %v579, 7
  %v581 = vsub.s32 %v578, %v580
  %v582 = vrot.slane %v566, %v581
  %v584 = vunpack.c.l.s4 1966171168
  %v585 = vunpack.c.0.s8 %v584
  %v586 = vlaneseq
  %v587 = vshrl.u32 %v586, 7
  %v588 = vsub.s32 %v585, %v587
  %v589 = vrot.slane %v567, %v588
  %v591 = vunpack.c.l.s4 1966171168
  %v592 = vunpack.c.0.s8 %v591
  %v593 = vlaneseq
  %v594 = vshrl.u32 %v593, 7
  %v595 = vsub.s32 %v592, %v594
  %v596 = vrot.slane %v568, %v595
  %v597 = vcombine.high %v575, %v575
  %v598 = vcombine.high %v582, %v582
  %v599 = vcombine.high %v589, %v589
  %v600 = vcombine.high %v596, %v596
  %v601 = vcombine.high %v15, %v15
  %v603 = vunpack.c.l.s4 1966171168
  %v604 = vunpack.c.0.s8 %v603
  %v605 = vlaneseq
  %v606 = vshrl.u32 %v605, 7
  %v607 = vsub.s32 %v604, %v606
  %v608 = vrot.slane %v15, %v607
  %v610 = vunpack.c.l.s4 1966171168
  %v611 = vunpack.c.0.s8 %v610
  %v612 = vlaneseq
  %v613 = vshrl.u32 %v612, 7
  %v614 = vsub.s32 %v611, %v613
  %v615 = vrot.slane %v601, %v614
  %v616 = vcombine.high %v608, %v608
  %v617 = vcombine.high %v615, %v615
  %v619 = vunpack.c.l.s4 1966171168
  %v620 = vunpack.c.0.s8 %v619
  %v621 = vlaneseq
  %v622 = vshrl.u32 %v621, 7
  %v623 = vsub.s32 %v620, %v622
  %v624 = vrot.slane %v608, %v623
  %v626 = vunpack.c.l.s4 1966171168
  %v627 = vunpack.c.0.s8 %v626
  %v628 = vlaneseq
  %v629 = vshrl.u32 %v628, 7
  %v630 = vsub.s32 %v627, %v629
  %v631 = vrot.slane %v615, %v630
  %v633 = vunpack.c.l.s4 1966171168
  %v634 = vunpack.c.0.s8 %v633
  %v635 = vlaneseq
  %v636 = vshrl.u32 %v635, 7
  %v637 = vsub.s32 %v634, %v636
  %v638 = vrot.slane %v616, %v637
  %v640 = vunpack.c.l.s4 1966171168
  %v641 = vunpack.c.0.s8 %v640
  %v642 = vlaneseq
  %v643 = vshrl.u32 %v642, 7
  %v644 = vsub.s32 %v641, %v643
  %v645 = vrot.slane %v617, %v644
  %v646 = vcombine.high %v624, %v624
  %v647 = vcombine.high %v631, %v631
  %v648 = vcombine.high %v638, %v638
  %v649 = vcombine.high %v645, %v645
  %v1178 = vunpack.c.l.b16 %v16
  %v1179 = vunpack.c.h.b16 %v16
  %v1180 = vunpack.c.l.b16 %v17
  %v1181 = vunpack.c.h.b16 %v17
  %v1182 = vunpack.c.l.b16 %v18
  %v1183 = vunpack.c.h.b16 %v18
  %v1184 = vunpack.c.l.b16 %v19
  %v1185 = vunpack.c.h.b16 %v19
  %v1186 = vunpack.c.l.b16 %v20
  %v1187 = vunpack.c.h.b16 %v20
  %v1188 = vunpack.c.l.b16 %v21
  %v1189 = vunpack.c.h.b16 %v21
  %v1190 = vunpack.c.l.b16 %v22
  %v1191 = vunpack.c.h.b16 %v22
  %v1192 = vunpack.c.l.b16 %v23
  %v1193 = vunpack.c.h.b16 %v23
  %v1194 = vunpack.c.l.b16 %v24
  %v1195 = vunpack.c.h.b16 %v24
  %v1196 = vunpack.c.l.b16 %v25
  %v1197 = vunpack.c.h.b16 %v25
  %v1198 = vunpack.c.l.b16 %v26
  %v1199 = vunpack.c.h.b16 %v26
  %v1200 = vunpack.c.l.b16 %v27
  %v1201 = vunpack.c.h.b16 %v27
  %v1202 = vunpack.c.l.b16 %v28
  %v1203 = vunpack.c.h.b16 %v28
  %v1204 = vunpack.c.l.b16 %v29
  %v1205 = vunpack.c.h.b16 %v29
  %v1206 = vunpack.c.l.b16 %v30
  %v1207 = vunpack.c.h.b16 %v30
  %v1208 = vunpack.c.l.b16 %v31
  %v1209 = vunpack.c.h.b16 %v31
  %v1210 = vunpack.c.l.b16 %v32
  %v1211 = vunpack.c.h.b16 %v32
  %v1212 = vunpack.c.l.b16 %v33
  %v1213 = vunpack.c.h.b16 %v33
  %v1214 = vunpack.c.l.b16 %v34
  %v1215 = vunpack.c.h.b16 %v34
  %v1216 = vunpack.c.l.b16 %v35
  %v1217 = vunpack.c.h.b16 %v35
  %v1218 = vunpack.c.l.b16 %v36
  %v1219 = vunpack.c.h.b16 %v36
  %v1220 = vunpack.c.l.b16 %v37
  %v1221 = vunpack.c.h.b16 %v37
  %v1222 = vunpack.c.l.b16 %v38
  %v1223 = vunpack.c.h.b16 %v38
  %v1224 = vunpack.c.l.b16 %v39
  %v1225 = vunpack.c.h.b16 %v39
  %v1226 = vunpack.c.l.b16 %v40
  %v1227 = vunpack.c.h.b16 %v40
  %v1228 = vunpack.c.l.b16 %v41
  %v1229 = vunpack.c.h.b16 %v41
  %v1230 = vunpack.c.l.b16 %v42
  %v1231 = vunpack.c.h.b16 %v42
  %v1232 = vunpack.c.l.b16 %v43
  %v1233 = vunpack.c.h.b16 %v43
  %v1234 = vunpack.c.l.b16 %v44
  %v1235 = vunpack.c.h.b16 %v44
  %v1236 = vunpack.c.l.b16 %v45
  %v1237 = vunpack.c.h.b16 %v45
  %v1238 = vunpack.c.l.b16 %v46
  %v1239 = vunpack.c.h.b16 %v46
  %v1240 = vunpack.c.l.b16 %v47
  %v1241 = vunpack.c.h.b16 %v47
  %v1242 = vunpack.c.l.b16 %v48
  %v1243 = vunpack.c.h.b16 %v48
  %v1244 = vunpack.c.l.b16 %v49
  %v1245 = vunpack.c.h.b16 %v49
  %v1246 = vunpack.c.l.b16 %v50
  %v1247 = vunpack.c.h.b16 %v50
  %v1248 = vunpack.c.l.b16 %v51
  %v1249 = vunpack.c.h.b16 %v51
  %v1250 = vunpack.c.l.b16 %v52
  %v1251 = vunpack.c.h.b16 %v52
  %v1252 = vunpack.c.l.b16 %v53
  %v1253 = vunpack.c.h.b16 %v53
  %v1254 = vunpack.c.l.b16 %v54
  %v1255 = vunpack.c.h.b16 %v54
  %v1256 = vunpack.c.l.b16 %v55
  %v1257 = vunpack.c.h.b16 %v55
  %v1258 = vunpack.c.l.b16 %v56
  %v1259 = vunpack.c.h.b16 %v56
  %v1260 = vunpack.c.l.b16 %v57
  %v1261 = vunpack.c.h.b16 %v57
  %v1262 = vunpack.c.l.b16 %v58
  %v1263 = vunpack.c.h.b16 %v58
  %v1264 = vunpack.c.l.b16 %v59
  %v1265 = vunpack.c.h.b16 %v59
  %v1266 = vunpack.c.l.b16 %v60
  %v1267 = vunpack.c.h.b16 %v60
  %v1268 = vunpack.c.l.b16 %v61
  %v1269 = vunpack.c.h.b16 %v61
  %v1270 = vunpack.c.l.b16 %v62
  %v1271 = vunpack.c.h.b16 %v62
  %v1272 = vunpack.c.l.b16 %v63
  %v1273 = vunpack.c.h.b16 %v63
  %v1274 = vunpack.c.l.b16 %v64
  %v1275 = vunpack.c.h.b16 %v64
  %v1276 = vunpack.c.l.b16 %v65
  %v1277 = vunpack.c.h.b16 %v65
  %v1278 = vunpack.c.l.b16 %v66
  %v1279 = vunpack.c.h.b16 %v66
  %v1280 = vunpack.c.l.b16 %v67
  %v1281 = vunpack.c.h.b16 %v67
  %v1282 = vunpack.c.l.b16 %v68
  %v1283 = vunpack.c.h.b16 %v68
  %v1284 = vunpack.c.l.b16 %v69
  %v1285 = vunpack.c.h.b16 %v69
  %v1286 = vunpack.c.l.b16 %v70
  %v1287 = vunpack.c.h.b16 %v70
  %v1288 = vunpack.c.l.b16 %v71
  %v1289 = vunpack.c.h.b16 %v71
  %v1290 = vunpack.c.l.b16 %v72
  %v1291 = vunpack.c.h.b16 %v72
  %v1292 = vunpack.c.l.b16 %v73
  %v1293 = vunpack.c.h.b16 %v73
  %v1294 = vunpack.c.l.b16 %v74
  %v1295 = vunpack.c.h.b16 %v74
  %v1296 = vunpack.c.l.b16 %v75
  %v1297 = vunpack.c.h.b16 %v75
  %v1298 = vunpack.c.l.b16 %v76
  %v1299 = vunpack.c.h.b16 %v76
  %v1300 = vunpack.c.l.b16 %v77
  %v1301 = vunpack.c.h.b16 %v77
  %v1302 = vunpack.c.l.b16 %v78
  %v1303 = vunpack.c.h.b16 %v78
  %v1304 = vunpack.c.l.b16 %v79
  %v1305 = vunpack.c.h.b16 %v79
  %v1306 = vunpack.c.l.b16 %v80
  %v1307 = vunpack.c.h.b16 %v80
  %v1308 = vunpack.c.l.b16 %v81
  %v1309 = vunpack.c.h.b16 %v81
  %v1310 = vunpack.c.l.b16 %v82
  %v1311 = vunpack.c.h.b16 %v82
  %v1312 = vunpack.c.l.b16 %v83
  %v1313 = vunpack.c.h.b16 %v83
  %v1314 = vunpack.c.l.b16 %v84
  %v1315 = vunpack.c.h.b16 %v84
  %v1316 = vunpack.c.l.b16 %v85
  %v1317 = vunpack.c.h.b16 %v85
  %v1318 = vunpack.c.l.b16 %v86
  %v1319 = vunpack.c.h.b16 %v86
  %v1320 = vunpack.c.l.b16 %v87
  %v1321 = vunpack.c.h.b16 %v87
  %v1322 = vunpack.c.l.b16 %v88
  %v1323 = vunpack.c.h.b16 %v88
  %v1324 = vunpack.c.l.b16 %v89
  %v1325 = vunpack.c.h.b16 %v89
  %v1326 = vunpack.c.l.b16 %v90
  %v1327 = vunpack.c.h.b16 %v90
  %v1328 = vunpack.c.l.b16 %v91
  %v1329 = vunpack.c.h.b16 %v91
  %v1330 = vunpack.c.l.b16 %v92
  %v1331 = vunpack.c.h.b16 %v92
  %v1332 = vunpack.c.l.b16 %v93
  %v1333 = vunpack.c.h.b16 %v93
  %v1334 = vunpack.c.l.b16 %v94
  %v1335 = vunpack.c.h.b16 %v94
  %v1336 = vunpack.c.l.b16 %v95
  %v1337 = vunpack.c.h.b16 %v95
  %v1338 = vunpack.c.l.b16 %v96
  %v1339 = vunpack.c.h.b16 %v96
  %v1340 = vunpack.c.l.b16 %v97
  %v1341 = vunpack.c.h.b16 %v97
  %v1342 = vunpack.c.l.b16 %v98
  %v1343 = vunpack.c.h.b16 %v98
  %v1344 = vunpack.c.l.b16 %v99
  %v1345 = vunpack.c.h.b16 %v99
  %v1346 = vunpack.c.l.b16 %v100
  %v1347 = vunpack.c.h.b16 %v100
  %v1348 = vunpack.c.l.b16 %v101
  %v1349 = vunpack.c.h.b16 %v101
  %v1350 = vunpack.c.l.b16 %v102
  %v1351 = vunpack.c.h.b16 %v102
  %v1352 = vunpack.c.l.b16 %v103
  %v1353 = vunpack.c.h.b16 %v103
  %v1354 = vunpack.c.l.b16 %v104
  %v1355 = vunpack.c.h.b16 %v104
  %v1356 = vunpack.c.l.b16 %v105
  %v1357 = vunpack.c.h.b16 %v105
  %v1358 = vunpack.c.l.b16 %v106
  %v1359 = vunpack.c.h.b16 %v106
  %v1360 = vunpack.c.l.b16 %v107
  %v1361 = vunpack.c.h.b16 %v107
  %v1362 = vunpack.c.l.b16 %v108
  %v1363 = vunpack.c.h.b16 %v108
  %v1364 = vunpack.c.l.b16 %v109
  %v1365 = vunpack.c.h.b16 %v109
  %v1366 = vunpack.c.l.b16 %v110
  %v1367 = vunpack.c.h.b16 %v110
  %v1368 = vunpack.c.l.b16 %v111
  %v1369 = vunpack.c.h.b16 %v111
  %v1370 = vunpack.c.l.b16 %v112
  %v1371 = vunpack.c.h.b16 %v112
  %v1372 = vunpack.c.l.b16 %v113
  %v1373 = vunpack.c.h.b16 %v113
  %v1374 = vunpack.c.l.b16 %v114
  %v1375 = vunpack.c.h.b16 %v114
  %v1376 = vunpack.c.l.b16 %v115
  %v1377 = vunpack.c.h.b16 %v115
  %v1378 = vunpack.c.l.b16 %v116
  %v1379 = vunpack.c.h.b16 %v116
  %v1380 = vunpack.c.l.b16 %v117
  %v1381 = vunpack.c.h.b16 %v117
  %v1382 = vunpack.c.l.b16 %v118
  %v1383 = vunpack.c.h.b16 %v118
  %v1384 = vunpack.c.l.b16 %v119
  %v1385 = vunpack.c.h.b16 %v119
  %v1386 = vunpack.c.l.b16 %v120
  %v1387 = vunpack.c.h.b16 %v120
  %v1388 = vunpack.c.l.b16 %v121
  %v1389 = vunpack.c.h.b16 %v121
  %v1390 = vunpack.c.l.b16 %v122
  %v1391 = vunpack.c.h.b16 %v122
  %v1392 = vunpack.c.l.b16 %v123
  %v1393 = vunpack.c.h.b16 %v123
  %v1394 = vunpack.c.l.b16 %v124
  %v1395 = vunpack.c.h.b16 %v124
  %v1396 = vunpack.c.l.b16 %v125
  %v1397 = vunpack.c.h.b16 %v125
  %v1398 = vunpack.c.l.b16 %v126
  %v1399 = vunpack.c.h.b16 %v126
  %v1400 = vunpack.c.l.b16 %v127
  %v1401 = vunpack.c.h.b16 %v127
  %v1402 = vunpack.c.l.b16 %v128
  %v1403 = vunpack.c.h.b16 %v128
  %v1404 = vunpack.c.l.b16 %v129
  %v1405 = vunpack.c.h.b16 %v129
  %v1406 = vunpack.c.l.b16 %v130
  %v1407 = vunpack.c.h.b16 %v130
  %v1408 = vunpack.c.l.b16 %v131
  %v1409 = vunpack.c.h.b16 %v131
  %v1410 = vunpack.c.l.b16 %v132
  %v1411 = vunpack.c.h.b16 %v132
  %v1412 = vunpack.c.l.b16 %v133
  %v1413 = vunpack.c.h.b16 %v133
  %v1414 = vunpack.c.l.b16 %v134
  %v1415 = vunpack.c.h.b16 %v134
  %v1416 = vunpack.c.l.b16 %v135
  %v1417 = vunpack.c.h.b16 %v135
  %v1418 = vunpack.c.l.b16 %v136
  %v1419 = vunpack.c.h.b16 %v136
  %v1420 = vunpack.c.l.b16 %v137
  %v1421 = vunpack.c.h.b16 %v137
  %v1422 = vunpack.c.l.b16 %v138
  %v1423 = vunpack.c.h.b16 %v138
  %v1424 = vunpack.c.l.b16 %v139
  %v1425 = vunpack.c.h.b16 %v139
  %v1426 = vunpack.c.l.b16 %v140
  %v1427 = vunpack.c.h.b16 %v140
  %v1428 = vunpack.c.l.b16 %v141
  %v1429 = vunpack.c.h.b16 %v141
  %v1430 = vunpack.c.l.b16 %v142
  %v1431 = vunpack.c.h.b16 %v142
  %v1432 = vunpack.c.l.b16 %v143
  %v1433 = vunpack.c.h.b16 %v143
  %v1434 = vunpack.c.l.b16 %v144
  %v1435 = vunpack.c.h.b16 %v144
  %v1436 = vunpack.c.l.b16 %v145
  %v1437 = vunpack.c.h.b16 %v145
  %v1438 = vunpack.c.l.b16 %v146
  %v1439 = vunpack.c.h.b16 %v146
  %v1440 = vunpack.c.l.b16 %v147
  %v1441 = vunpack.c.h.b16 %v147
  %v1442 = vunpack.c.l.b16 %v148
  %v1443 = vunpack.c.h.b16 %v148
  %v1444 = vunpack.c.l.b16 %v149
  %v1445 = vunpack.c.h.b16 %v149
  %v1446 = vunpack.c.l.b16 %v150
  %v1447 = vunpack.c.h.b16 %v150
  %v1448 = vunpack.c.l.b16 %v151
  %v1449 = vunpack.c.h.b16 %v151
  %v1450 = vunpack.c.l.b16 %v152
  %v1451 = vunpack.c.h.b16 %v152
  %v1452 = vunpack.c.l.b16 %v153
  %v1453 = vunpack.c.h.b16 %v153
  %v1454 = vunpack.c.l.b16 %v154
  %v1455 = vunpack.c.h.b16 %v154
  %v1456 = vunpack.c.l.b16 %v155
  %v1457 = vunpack.c.h.b16 %v155
  %v1458 = vunpack.c.l.b16 %v156
  %v1459 = vunpack.c.h.b16 %v156
  %v1460 = vunpack.c.l.b16 %v157
  %v1461 = vunpack.c.h.b16 %v157
  %v1462 = vunpack.c.l.b16 %v158
  %v1463 = vunpack.c.h.b16 %v158
  %v1464 = vunpack.c.l.b16 %v159
  %v1465 = vunpack.c.h.b16 %v159
  %v1466 = vunpack.c.l.b16 %v160
  %v1467 = vunpack.c.h.b16 %v160
  %v1468 = vunpack.c.l.b16 %v161
  %v1469 = vunpack.c.h.b16 %v161
  %v1470 = vunpack.c.l.b16 %v162
  %v1471 = vunpack.c.h.b16 %v162
  %v1472 = vunpack.c.l.b16 %v163
  %v1473 = vunpack.c.h.b16 %v163
  %v1474 = vunpack.c.l.b16 %v164
  %v1475 = vunpack.c.h.b16 %v164
  %v1476 = vunpack.c.l.b16 %v165
  %v1477 = vunpack.c.h.b16 %v165
  %v1478 = vunpack.c.l.b16 %v166
  %v1479 = vunpack.c.h.b16 %v166
  %v1480 = vunpack.c.l.b16 %v167
  %v1481 = vunpack.c.h.b16 %v167
  %v1482 = vunpack.c.l.b16 %v168
  %v1483 = vunpack.c.h.b16 %v168
  %v1484 = vunpack.c.l.b16 %v169
  %v1485 = vunpack.c.h.b16 %v169
  %v1486 = vunpack.c.l.b16 %v170
  %v1487 = vunpack.c.h.b16 %v170
  %v1488 = vunpack.c.l.b16 %v171
  %v1489 = vunpack.c.h.b16 %v171
  %v1490 = vunpack.c.l.b16 %v172
  %v1491 = vunpack.c.h.b16 %v172
  %v1492 = vunpack.c.l.b16 %v173
  %v1493 = vunpack.c.h.b16 %v173
  %v1494 = vunpack.c.l.b16 %v174
  %v1495 = vunpack.c.h.b16 %v174
  %v1496 = vunpack.c.l.b16 %v175
  %v1497 = vunpack.c.h.b16 %v175
  %v1498 = vunpack.c.l.b16 %v176
  %v1499 = vunpack.c.h.b16 %v176
  %v1500 = vunpack.c.l.b16 %v177
  %v1501 = vunpack.c.h.b16 %v177
  %v1502 = vunpack.c.l.b16 %v178
  %v1503 = vunpack.c.h.b16 %v178
  %v1504 = vunpack.c.l.b16 %v179
  %v1505 = vunpack.c.h.b16 %v179
  %v1506 = vunpack.c.l.b16 %v180
  %v1507 = vunpack.c.h.b16 %v180
  %v1508 = vunpack.c.l.b16 %v181
  %v1509 = vunpack.c.h.b16 %v181
  %v1510 = vunpack.c.l.b16 %v182
  %v1511 = vunpack.c.h.b16 %v182
  %v1512 = vunpack.c.l.b16 %v183
  %v1513 = vunpack.c.h.b16 %v183
  %v1514 = vunpack.c.l.b16 %v184
  %v1515 = vunpack.c.h.b16 %v184
  %v1516 = vunpack.c.l.b16 %v185
  %v1517 = vunpack.c.h.b16 %v185
  %v1518 = vunpack.c.l.b16 %v186
  %v1519 = vunpack.c.h.b16 %v186
  %v1520 = vunpack.c.l.b16 %v187
  %v1521 = vunpack.c.h.b16 %v187
  %v1522 = vunpack.c.l.b16 %v188
  %v1523 = vunpack.c.h.b16 %v188
  %v1524 = vunpack.c.l.b16 %v189
  %v1525 = vunpack.c.h.b16 %v189
  %v1526 = vunpack.c.l.b16 %v190
  %v1527 = vunpack.c.h.b16 %v190
  %v1528 = vunpack.c.l.b16 %v191
  %v1529 = vunpack.c.h.b16 %v191
  %v1530 = vunpack.c.l.b16 %v192
  %v1531 = vunpack.c.h.b16 %v192
  %v1532 = vunpack.c.l.b16 %v193
  %v1533 = vunpack.c.h.b16 %v193
  %v1534 = vunpack.c.l.b16 %v194
  %v1535 = vunpack.c.h.b16 %v194
  %v1536 = vunpack.c.l.b16 %v195
  %v1537 = vunpack.c.h.b16 %v195
  %v1538 = vunpack.c.l.b16 %v196
  %v1539 = vunpack.c.h.b16 %v196
  %v1540 = vunpack.c.l.b16 %v197
  %v1541 = vunpack.c.h.b16 %v197
  %v1542 = vunpack.c.l.b16 %v198
  %v1543 = vunpack.c.h.b16 %v198
  %v1544 = vunpack.c.l.b16 %v199
  %v1545 = vunpack.c.h.b16 %v199
  %v1546 = vunpack.c.l.b16 %v200
  %v1547 = vunpack.c.h.b16 %v200
  %v1548 = vunpack.c.l.b16 %v201
  %v1549 = vunpack.c.h.b16 %v201
  %v1550 = vunpack.c.l.b16 %v202
  %v1551 = vunpack.c.h.b16 %v202
  %v1552 = vunpack.c.l.b16 %v203
  %v1553 = vunpack.c.h.b16 %v203
  %v1554 = vunpack.c.l.b16 %v204
  %v1555 = vunpack.c.h.b16 %v204
  %v1556 = vunpack.c.l.b16 %v205
  %v1557 = vunpack.c.h.b16 %v205
  %v1558 = vunpack.c.l.b16 %v206
  %v1559 = vunpack.c.h.b16 %v206
  %v1560 = vunpack.c.l.b16 %v207
  %v1561 = vunpack.c.h.b16 %v207
  %v1562 = vunpack.c.l.b16 %v208
  %v1563 = vunpack.c.h.b16 %v208
  %v1564 = vunpack.c.l.b16 %v209
  %v1565 = vunpack.c.h.b16 %v209
  %v1566 = vunpack.c.l.b16 %v210
  %v1567 = vunpack.c.h.b16 %v210
  %v1568 = vunpack.c.l.b16 %v211
  %v1569 = vunpack.c.h.b16 %v211
  %v1570 = vunpack.c.l.b16 %v212
  %v1571 = vunpack.c.h.b16 %v212
  %v1572 = vunpack.c.l.b16 %v213
  %v1573 = vunpack.c.h.b16 %v213
  %v1574 = vunpack.c.l.b16 %v214
  %v1575 = vunpack.c.h.b16 %v214
  %v1576 = vunpack.c.l.b16 %v215
  %v1577 = vunpack.c.h.b16 %v215
  %v1578 = vunpack.c.l.b16 %v216
  %v1579 = vunpack.c.h.b16 %v216
  %v1580 = vunpack.c.l.b16 %v217
  %v1581 = vunpack.c.h.b16 %v217
  %v1582 = vunpack.c.l.b16 %v218
  %v1583 = vunpack.c.h.b16 %v218
  %v1584 = vunpack.c.l.b16 %v219
  %v1585 = vunpack.c.h.b16 %v219
  %v1586 = vunpack.c.l.b16 %v220
  %v1587 = vunpack.c.h.b16 %v220
  %v1588 = vunpack.c.l.b16 %v221
  %v1589 = vunpack.c.h.b16 %v221
  %v1590 = vunpack.c.l.b16 %v222
  %v1591 = vunpack.c.h.b16 %v222
  %v1592 = vunpack.c.l.b16 %v223
  %v1593 = vunpack.c.h.b16 %v223
  %v1594 = vunpack.c.l.b16 %v224
  %v1595 = vunpack.c.h.b16 %v224
  %v1596 = vunpack.c.l.b16 %v225
  %v1597 = vunpack.c.h.b16 %v225
  %v1598 = vunpack.c.l.b16 %v226
  %v1599 = vunpack.c.h.b16 %v226
  %v1600 = vunpack.c.l.b16 %v227
  %v1601 = vunpack.c.h.b16 %v227
  %v1602 = vunpack.c.l.b16 %v228
  %v1603 = vunpack.c.h.b16 %v228
  %v1604 = vunpack.c.l.b16 %v229
  %v1605 = vunpack.c.h.b16 %v229
  %v1606 = vunpack.c.l.b16 %v230
  %v1607 = vunpack.c.h.b16 %v230
  %v1608 = vunpack.c.l.b16 %v231
  %v1609 = vunpack.c.h.b16 %v231
  %v1610 = vunpack.c.l.b16 %v232
  %v1611 = vunpack.c.h.b16 %v232
  %v1612 = vunpack.c.l.b16 %v233
  %v1613 = vunpack.c.h.b16 %v233
  %v1614 = vunpack.c.l.b16 %v234
  %v1615 = vunpack.c.h.b16 %v234
  %v1616 = vunpack.c.l.b16 %v235
  %v1617 = vunpack.c.h.b16 %v235
  %v1618 = vunpack.c.l.b16 %v236
  %v1619 = vunpack.c.h.b16 %v236
  %v1620 = vunpack.c.l.b16 %v237
  %v1621 = vunpack.c.h.b16 %v237
  %v1622 = vunpack.c.l.b16 %v238
  %v1623 = vunpack.c.h.b16 %v238
  %v1624 = vunpack.c.l.b16 %v239
  %v1625 = vunpack.c.h.b16 %v239
  %v1626 = vunpack.c.l.b16 %v240
  %v1627 = vunpack.c.h.b16 %v240
  %v1628 = vunpack.c.l.b16 %v241
  %v1629 = vunpack.c.h.b16 %v241
  %v1630 = vunpack.c.l.b16 %v242
  %v1631 = vunpack.c.h.b16 %v242
  %v1632 = vunpack.c.l.b16 %v243
  %v1633 = vunpack.c.h.b16 %v243
  %v1634 = vunpack.c.l.b16 %v244
  %v1635 = vunpack.c.h.b16 %v244
  %v1636 = vunpack.c.l.b16 %v245
  %v1637 = vunpack.c.h.b16 %v245
  %v1638 = vunpack.c.l.b16 %v246
  %v1639 = vunpack.c.h.b16 %v246
  %v1640 = vunpack.c.l.b16 %v247
  %v1641 = vunpack.c.h.b16 %v247
  %v1642 = vunpack.c.l.b16 %v248
  %v1643 = vunpack.c.h.b16 %v248
  %v1644 = vunpack.c.l.b16 %v249
  %v1645 = vunpack.c.h.b16 %v249
  %v1646 = vunpack.c.l.b16 %v250
  %v1647 = vunpack.c.h.b16 %v250
  %v1648 = vunpack.c.l.b16 %v251
  %v1649 = vunpack.c.h.b16 %v251
  %v1650 = vunpack.c.l.b16 %v252
  %v1651 = vunpack.c.h.b16 %v252
  %v1652 = vunpack.c.l.b16 %v253
  %v1653 = vunpack.c.h.b16 %v253
  %v1654 = vunpack.c.l.b16 %v254
  %v1655 = vunpack.c.h.b16 %v254
  %v1656 = vunpack.c.l.b16 %v255
  %v1657 = vunpack.c.h.b16 %v255
  %v1658 = vunpack.c.l.b16 %v256
  %v1659 = vunpack.c.h.b16 %v256
  %v1660 = vunpack.c.l.b16 %v257
  %v1661 = vunpack.c.h.b16 %v257
  %v1662 = vunpack.c.l.b16 %v258
  %v1663 = vunpack.c.h.b16 %v258
  %v1664 = vunpack.c.l.b16 %v259
  %v1665 = vunpack.c.h.b16 %v259
  %v1666 = vunpack.c.l.b16 %v260
  %v1667 = vunpack.c.h.b16 %v260
  %v1668 = vunpack.c.l.b16 %v261
  %v1669 = vunpack.c.h.b16 %v261
  %v1670 = vunpack.c.l.b16 %v262
  %v1671 = vunpack.c.h.b16 %v262
  %v1672 = vunpack.c.l.b16 %v263
  %v1673 = vunpack.c.h.b16 %v263
  %v1674 = vunpack.c.l.b16 %v264
  %v1675 = vunpack.c.h.b16 %v264
  %v1676 = vunpack.c.l.b16 %v265
  %v1677 = vunpack.c.h.b16 %v265
  %v1678 = vunpack.c.l.b16 %v266
  %v1679 = vunpack.c.h.b16 %v266
  %v1680 = vunpack.c.l.b16 %v267
  %v1681 = vunpack.c.h.b16 %v267
  %v1682 = vunpack.c.l.b16 %v268
  %v1683 = vunpack.c.h.b16 %v268
  %v1684 = vunpack.c.l.b16 %v269
  %v1685 = vunpack.c.h.b16 %v269
  %v1686 = vunpack.c.l.b16 %v270
  %v1687 = vunpack.c.h.b16 %v270
  %v1688 = vunpack.c.l.b16 %v271
  %v1689 = vunpack.c.h.b16 %v271
  %v1690 = vunpack.c.l.b16 %v272
  %v1691 = vunpack.c.h.b16 %v272
  %v1692 = vunpack.c.l.b16 %v273
  %v1693 = vunpack.c.h.b16 %v273
  %v1694 = vunpack.c.l.b16 %v274
  %v1695 = vunpack.c.h.b16 %v274
  %v1696 = vunpack.c.l.b16 %v275
  %v1697 = vunpack.c.h.b16 %v275
  %v1698 = vunpack.c.l.b16 %v276
  %v1699 = vunpack.c.h.b16 %v276
  %v1700 = vunpack.c.l.b16 %v277
  %v1701 = vunpack.c.h.b16 %v277
  %v1702 = vunpack.c.l.b16 %v278
  %v1703 = vunpack.c.h.b16 %v278
  %v1704 = vunpack.c.l.b16 %v279
  %v1705 = vunpack.c.h.b16 %v279
  %v1706 = vunpack.c.l.b16 %v280
  %v1707 = vunpack.c.h.b16 %v280
  %v1708 = vunpack.c.l.b16 %v281
  %v1709 = vunpack.c.h.b16 %v281
  %v1710 = vunpack.c.l.b16 %v282
  %v1711 = vunpack.c.h.b16 %v282
  %v1712 = vunpack.c.l.b16 %v283
  %v1713 = vunpack.c.h.b16 %v283
  %v1714 = vunpack.c.l.b16 %v284
  %v1715 = vunpack.c.h.b16 %v284
  %v1716 = vunpack.c.l.b16 %v285
  %v1717 = vunpack.c.h.b16 %v285
  %v1718 = vunpack.c.l.b16 %v286
  %v1719 = vunpack.c.h.b16 %v286
  %v1720 = vunpack.c.l.b16 %v287
  %v1721 = vunpack.c.h.b16 %v287
  %v1722 = vunpack.c.l.b16 %v288
  %v1723 = vunpack.c.h.b16 %v288
  %v1724 = vunpack.c.l.b16 %v289
  %v1725 = vunpack.c.h.b16 %v289
  %v1726 = vunpack.c.l.b16 %v290
  %v1727 = vunpack.c.h.b16 %v290
  %v1728 = vunpack.c.l.b16 %v291
  %v1729 = vunpack.c.h.b16 %v291
  %v1730 = vunpack.c.l.b16 %v292
  %v1731 = vunpack.c.h.b16 %v292
  %v1732 = vunpack.c.l.b16 %v293
  %v1733 = vunpack.c.h.b16 %v293
  %v1734 = vunpack.c.l.b16 %v294
  %v1735 = vunpack.c.h.b16 %v294
  %v1736 = vunpack.c.l.b16 %v295
  %v1737 = vunpack.c.h.b16 %v295
  %v1738 = vunpack.c.l.b16 %v296
  %v1739 = vunpack.c.h.b16 %v296
  %v1740 = vunpack.c.l.b16 %v297
  %v1741 = vunpack.c.h.b16 %v297
  %v1742 = vunpack.c.l.b16 %v298
  %v1743 = vunpack.c.h.b16 %v298
  %v1744 = vunpack.c.l.b16 %v299
  %v1745 = vunpack.c.h.b16 %v299
  %v1746 = vunpack.c.l.b16 %v300
  %v1747 = vunpack.c.h.b16 %v300
  %v1748 = vunpack.c.l.b16 %v301
  %v1749 = vunpack.c.h.b16 %v301
  %v1750 = vunpack.c.l.b16 %v302
  %v1751 = vunpack.c.h.b16 %v302
  %v1752 = vunpack.c.l.b16 %v303
  %v1753 = vunpack.c.h.b16 %v303
  %v1754 = vunpack.c.l.b16 %v304
  %v1755 = vunpack.c.h.b16 %v304
  %v1756 = vunpack.c.l.b16 %v305
  %v1757 = vunpack.c.h.b16 %v305
  %v1758 = vunpack.c.l.b16 %v306
  %v1759 = vunpack.c.h.b16 %v306
  %v1760 = vunpack.c.l.b16 %v307
  %v1761 = vunpack.c.h.b16 %v307
  %v1762 = vunpack.c.l.b16 %v308
  %v1763 = vunpack.c.h.b16 %v308
  %v1764 = vunpack.c.l.b16 %v309
  %v1765 = vunpack.c.h.b16 %v309
  %v1766 = vunpack.c.l.b16 %v310
  %v1767 = vunpack.c.h.b16 %v310
  %v1768 = vunpack.c.l.b16 %v311
  %v1769 = vunpack.c.h.b16 %v311
  %v1770 = vunpack.c.l.b16 %v312
  %v1771 = vunpack.c.h.b16 %v312
  %v1772 = vunpack.c.l.b16 %v313
  %v1773 = vunpack.c.h.b16 %v313
  %v1774 = vunpack.c.l.b16 %v314
  %v1775 = vunpack.c.h.b16 %v314
  %v1776 = vunpack.c.l.b16 %v315
  %v1777 = vunpack.c.h.b16 %v315
  %v1778 = vunpack.c.l.b16 %v316
  %v1779 = vunpack.c.h.b16 %v316
  %v1780 = vunpack.c.l.b16 %v317
  %v1781 = vunpack.c.h.b16 %v317
  %v1782 = vunpack.c.l.b16 %v318
  %v1783 = vunpack.c.h.b16 %v318
  %v1784 = vunpack.c.l.b16 %v319
  %v1785 = vunpack.c.h.b16 %v319
  %v1786 = vunpack.c.l.b16 %v320
  %v1787 = vunpack.c.h.b16 %v320
  %v1788 = vunpack.c.l.b16 %v321
  %v1789 = vunpack.c.h.b16 %v321
  %v1790 = vunpack.c.l.b16 %v322
  %v1791 = vunpack.c.h.b16 %v322
  %v1792 = vunpack.c.l.b16 %v323
  %v1793 = vunpack.c.h.b16 %v323
  %v1794 = vunpack.c.l.b16 %v324
  %v1795 = vunpack.c.h.b16 %v324
  %v1796 = vunpack.c.l.b16 %v325
  %v1797 = vunpack.c.h.b16 %v325
  %v1798 = vunpack.c.l.b16 %v326
  %v1799 = vunpack.c.h.b16 %v326
  %v1800 = vunpack.c.l.b16 %v327
  %v1801 = vunpack.c.h.b16 %v327
  %v1802 = vunpack.c.l.b16 %v328
  %v1803 = vunpack.c.h.b16 %v328
  %v1804 = vunpack.c.l.b16 %v329
  %v1805 = vunpack.c.h.b16 %v329
  %v1806 = vunpack.c.l.b16 %v330
  %v1807 = vunpack.c.h.b16 %v330
  %v1808 = vunpack.c.l.b16 %v331
  %v1809 = vunpack.c.h.b16 %v331
  %v1810 = vunpack.c.l.b16 %v332
  %v1811 = vunpack.c.h.b16 %v332
  %v1812 = vunpack.c.l.b16 %v333
  %v1813 = vunpack.c.h.b16 %v333
  %v1814 = vunpack.c.l.b16 %v334
  %v1815 = vunpack.c.h.b16 %v334
  %v1816 = vunpack.c.l.b16 %v335
  %v1817 = vunpack.c.h.b16 %v335
  %v1818 = vunpack.c.l.b16 %v336
  %v1819 = vunpack.c.h.b16 %v336
  %v1820 = vunpack.c.l.b16 %v337
  %v1821 = vunpack.c.h.b16 %v337
  %v1822 = vunpack.c.l.b16 %v338
  %v1823 = vunpack.c.h.b16 %v338
  %v1824 = vunpack.c.l.b16 %v339
  %v1825 = vunpack.c.h.b16 %v339
  %v1826 = vunpack.c.l.b16 %v340
  %v1827 = vunpack.c.h.b16 %v340
  %v1828 = vunpack.c.l.b16 %v341
  %v1829 = vunpack.c.h.b16 %v341
  %v1830 = vunpack.c.l.b16 %v342
  %v1831 = vunpack.c.h.b16 %v342
  %v1832 = vunpack.c.l.b16 %v343
  %v1833 = vunpack.c.h.b16 %v343
  %v1834 = vunpack.c.l.b16 %v344
  %v1835 = vunpack.c.h.b16 %v344
  %v1836 = vunpack.c.l.b16 %v345
  %v1837 = vunpack.c.h.b16 %v345
  %v1838 = vunpack.c.l.b16 %v346
  %v1839 = vunpack.c.h.b16 %v346
  %v1840 = vunpack.c.l.b16 %v347
  %v1841 = vunpack.c.h.b16 %v347
  %v1842 = vunpack.c.l.b16 %v348
  %v1843 = vunpack.c.h.b16 %v348
  %v1844 = vunpack.c.l.b16 %v349
  %v1845 = vunpack.c.h.b16 %v349
  %v1846 = vunpack.c.l.b16 %v350
  %v1847 = vunpack.c.h.b16 %v350
  %v1848 = vunpack.c.l.b16 %v351
  %v1849 = vunpack.c.h.b16 %v351
  %v1850 = vunpack.c.l.b16 %v352
  %v1851 = vunpack.c.h.b16 %v352
  %v1852 = vunpack.c.l.b16 %v353
  %v1853 = vunpack.c.h.b16 %v353
  %v1854 = vunpack.c.l.b16 %v354
  %v1855 = vunpack.c.h.b16 %v354
  %v1856 = vunpack.c.l.b16 %v355
  %v1857 = vunpack.c.h.b16 %v355
  %v1858 = vunpack.c.l.b16 %v356
  %v1859 = vunpack.c.h.b16 %v356
  %v1860 = vunpack.c.l.b16 %v357
  %v1861 = vunpack.c.h.b16 %v357
  %v1862 = vunpack.c.l.b16 %v358
  %v1863 = vunpack.c.h.b16 %v358
  %v1864 = vunpack.c.l.b16 %v359
  %v1865 = vunpack.c.h.b16 %v359
  %v1866 = vunpack.c.l.b16 %v360
  %v1867 = vunpack.c.h.b16 %v360
  %v1868 = vunpack.c.l.b16 %v361
  %v1869 = vunpack.c.h.b16 %v361
  %v1870 = vunpack.c.l.b16 %v362
  %v1871 = vunpack.c.h.b16 %v362
  %v1872 = vunpack.c.l.b16 %v363
  %v1873 = vunpack.c.h.b16 %v363
  %v1874 = vunpack.c.l.b16 %v364
  %v1875 = vunpack.c.h.b16 %v364
  %v1876 = vunpack.c.l.b16 %v365
  %v1877 = vunpack.c.h.b16 %v365
  %v1878 = vunpack.c.l.b16 %v366
  %v1879 = vunpack.c.h.b16 %v366
  %v1880 = vunpack.c.l.b16 %v367
  %v1881 = vunpack.c.h.b16 %v367
  %v1882 = vunpack.c.l.b16 %v368
  %v1883 = vunpack.c.h.b16 %v368
  %v1884 = vunpack.c.l.b16 %v369
  %v1885 = vunpack.c.h.b16 %v369
  %v1886 = vunpack.c.l.b16 %v370
  %v1887 = vunpack.c.h.b16 %v370
  %v1888 = vunpack.c.l.b16 %v371
  %v1889 = vunpack.c.h.b16 %v371
  %v1890 = vunpack.c.l.b16 %v372
  %v1891 = vunpack.c.h.b16 %v372
  %v1892 = vunpack.c.l.b16 %v373
  %v1893 = vunpack.c.h.b16 %v373
  %v1894 = vunpack.c.l.b16 %v374
  %v1895 = vunpack.c.h.b16 %v374
  %v1896 = vunpack.c.l.b16 %v375
  %v1897 = vunpack.c.h.b16 %v375
  %v1898 = vunpack.c.l.b16 %v376
  %v1899 = vunpack.c.h.b16 %v376
  %v1900 = vunpack.c.l.b16 %v377
  %v1901 = vunpack.c.h.b16 %v377
  %v1902 = vunpack.c.l.b16 %v378
  %v1903 = vunpack.c.h.b16 %v378
  %v1904 = vunpack.c.l.b16 %v379
  %v1905 = vunpack.c.h.b16 %v379
  %v1906 = vunpack.c.l.b16 %v380
  %v1907 = vunpack.c.h.b16 %v380
  %v1908 = vunpack.c.l.b16 %v381
  %v1909 = vunpack.c.h.b16 %v381
  %v1910 = vunpack.c.l.b16 %v382
  %v1911 = vunpack.c.h.b16 %v382
  %v1912 = vunpack.c.l.b16 %v383
  %v1913 = vunpack.c.h.b16 %v383
  %v1914 = vunpack.c.l.b16 %v384
  %v1915 = vunpack.c.h.b16 %v384
  %v1916 = vunpack.c.l.b16 %v385
  %v1917 = vunpack.c.h.b16 %v385
  %v1918 = vunpack.c.l.b16 %v386
  %v1919 = vunpack.c.h.b16 %v386
  %v1920 = vunpack.c.l.b16 %v387
  %v1921 = vunpack.c.h.b16 %v387
  %v1922 = vunpack.c.l.b16 %v388
  %v1923 = vunpack.c.h.b16 %v388
  %v1924 = vunpack.c.l.b16 %v389
  %v1925 = vunpack.c.h.b16 %v389
  %v1926 = vunpack.c.l.b16 %v390
  %v1927 = vunpack.c.h.b16 %v390
  %v1928 = vunpack.c.l.b16 %v391
  %v1929 = vunpack.c.h.b16 %v391
  %v1930 = vunpack.c.l.b16 %v392
  %v1931 = vunpack.c.h.b16 %v392
  %v1932 = vunpack.c.l.b16 %v393
  %v1933 = vunpack.c.h.b16 %v393
  %v1934 = vunpack.c.l.b16 %v394
  %v1935 = vunpack.c.h.b16 %v394
  %v1936 = vunpack.c.l.b16 %v395
  %v1937 = vunpack.c.h.b16 %v395
  %v1938 = vunpack.c.l.b16 %v396
  %v1939 = vunpack.c.h.b16 %v396
  %v1940 = vunpack.c.l.b16 %v397
  %v1941 = vunpack.c.h.b16 %v397
  %v1942 = vunpack.c.l.b16 %v398
  %v1943 = vunpack.c.h.b16 %v398
  %v1944 = vunpack.c.l.b16 %v399
  %v1945 = vunpack.c.h.b16 %v399
  %v1946 = vunpack.c.l.b16 %v400
  %v1947 = vunpack.c.h.b16 %v400
  %v1948 = vunpack.c.l.b16 %v401
  %v1949 = vunpack.c.h.b16 %v401
  %v1950 = vunpack.c.l.b16 %v402
  %v1951 = vunpack.c.h.b16 %v402
  %v1952 = vunpack.c.l.b16 %v403
  %v1953 = vunpack.c.h.b16 %v403
  %v1954 = vunpack.c.l.b16 %v404
  %v1955 = vunpack.c.h.b16 %v404
  %v1956 = vunpack.c.l.b16 %v405
  %v1957 = vunpack.c.h.b16 %v405
  %v1958 = vunpack.c.l.b16 %v406
  %v1959 = vunpack.c.h.b16 %v406
  %v1960 = vunpack.c.l.b16 %v407
  %v1961 = vunpack.c.h.b16 %v407
  %v1962 = vunpack.c.l.b16 %v408
  %v1963 = vunpack.c.h.b16 %v408
  %v1964 = vunpack.c.l.b16 %v409
  %v1965 = vunpack.c.h.b16 %v409
  %v1966 = vunpack.c.l.b16 %v410
  %v1967 = vunpack.c.h.b16 %v410
  %v1968 = vunpack.c.l.b16 %v411
  %v1969 = vunpack.c.h.b16 %v411
  %v1970 = vunpack.c.l.b16 %v412
  %v1971 = vunpack.c.h.b16 %v412
  %v1972 = vunpack.c.l.b16 %v413
  %v1973 = vunpack.c.h.b16 %v413
  %v1974 = vunpack.c.l.b16 %v414
  %v1975 = vunpack.c.h.b16 %v414
  %v1976 = vunpack.c.l.b16 %v415
  %v1977 = vunpack.c.h.b16 %v415
  %v1978 = vunpack.c.l.b16 %v416
  %v1979 = vunpack.c.h.b16 %v416
  %v1980 = vunpack.c.l.b16 %v417
  %v1981 = vunpack.c.h.b16 %v417
  %v1982 = vunpack.c.l.b16 %v418
  %v1983 = vunpack.c.h.b16 %v418
  %v1984 = vunpack.c.l.b16 %v419
  %v1985 = vunpack.c.h.b16 %v419
  %v1986 = vunpack.c.l.b16 %v420
  %v1987 = vunpack.c.h.b16 %v420
  %v1988 = vunpack.c.l.b16 %v421
  %v1989 = vunpack.c.h.b16 %v421
  %v1990 = vunpack.c.l.b16 %v422
  %v1991 = vunpack.c.h.b16 %v422
  %v1992 = vunpack.c.l.b16 %v423
  %v1993 = vunpack.c.h.b16 %v423
  %v1994 = vunpack.c.l.b16 %v424
  %v1995 = vunpack.c.h.b16 %v424
  %v1996 = vunpack.c.l.b16 %v425
  %v1997 = vunpack.c.h.b16 %v425
  %v1998 = vunpack.c.l.b16 %v426
  %v1999 = vunpack.c.h.b16 %v426
  %v2000 = vunpack.c.l.b16 %v427
  %v2001 = vunpack.c.h.b16 %v427
  %v2002 = vunpack.c.l.b16 %v428
  %v2003 = vunpack.c.h.b16 %v428
  %v2004 = vunpack.c.l.b16 %v429
  %v2005 = vunpack.c.h.b16 %v429
  %v2006 = vunpack.c.l.b16 %v430
  %v2007 = vunpack.c.h.b16 %v430
  %v2008 = vunpack.c.l.b16 %v431
  %v2009 = vunpack.c.h.b16 %v431
  %v2010 = vunpack.c.l.b16 %v432
  %v2011 = vunpack.c.h.b16 %v432
  %v2012 = vunpack.c.l.b16 %v433
  %v2013 = vunpack.c.h.b16 %v433
  %v2014 = vunpack.c.l.b16 %v434
  %v2015 = vunpack.c.h.b16 %v434
  %v2016 = vunpack.c.l.b16 %v435
  %v2017 = vunpack.c.h.b16 %v435
  %v2018 = vunpack.c.l.b16 %v436
  %v2019 = vunpack.c.h.b16 %v436
  %v2020 = vunpack.c.l.b16 %v437
  %v2021 = vunpack.c.h.b16 %v437
  %v2022 = vunpack.c.l.b16 %v438
  %v2023 = vunpack.c.h.b16 %v438
  %v2024 = vunpack.c.l.b16 %v439
  %v2025 = vunpack.c.h.b16 %v439
  %v2026 = vunpack.c.l.b16 %v440
  %v2027 = vunpack.c.h.b16 %v440
  %v2028 = vunpack.c.l.b16 %v441
  %v2029 = vunpack.c.h.b16 %v441
  %v2030 = vunpack.c.l.b16 %v442
  %v2031 = vunpack.c.h.b16 %v442
  %v2032 = vunpack.c.l.b16 %v443
  %v2033 = vunpack.c.h.b16 %v443
  %v2034 = vunpack.c.l.b16 %v444
  %v2035 = vunpack.c.h.b16 %v444
  %v2036 = vunpack.c.l.b16 %v445
  %v2037 = vunpack.c.h.b16 %v445
  %v2038 = vunpack.c.l.b16 %v446
  %v2039 = vunpack.c.h.b16 %v446
  %v2040 = vunpack.c.l.b16 %v447
  %v2041 = vunpack.c.h.b16 %v447
  %v2042 = vunpack.c.l.b16 %v448
  %v2043 = vunpack.c.h.b16 %v448
  %v2044 = vunpack.c.l.b16 %v449
  %v2045 = vunpack.c.h.b16 %v449
  %v2046 = vunpack.c.l.b16 %v450
  %v2047 = vunpack.c.h.b16 %v450
  %v2048 = vunpack.c.l.b16 %v451
  %v2049 = vunpack.c.h.b16 %v451
  %v2050 = vunpack.c.l.b16 %v452
  %v2051 = vunpack.c.h.b16 %v452
  %v2052 = vunpack.c.l.b16 %v453
  %v2053 = vunpack.c.h.b16 %v453
  %v2054 = vunpack.c.l.b16 %v454
  %v2055 = vunpack.c.h.b16 %v454
  %v2056 = vunpack.c.l.b16 %v455
  %v2057 = vunpack.c.h.b16 %v455
  %v2058 = vunpack.c.l.b16 %v456
  %v2059 = vunpack.c.h.b16 %v456
  %v2060 = vunpack.c.l.b16 %v457
  %v2061 = vunpack.c.h.b16 %v457
  %v2062 = vunpack.c.l.b16 %v458
  %v2063 = vunpack.c.h.b16 %v458
  %v2064 = vunpack.c.l.b16 %v459
  %v2065 = vunpack.c.h.b16 %v459
  %v2066 = vunpack.c.l.b16 %v460
  %v2067 = vunpack.c.h.b16 %v460
  %v2068 = vunpack.c.l.b16 %v461
  %v2069 = vunpack.c.h.b16 %v461
  %v2070 = vunpack.c.l.b16 %v462
  %v2071 = vunpack.c.h.b16 %v462
  %v2072 = vunpack.c.l.b16 %v463
  %v2073 = vunpack.c.h.b16 %v463
  %v2074 = vunpack.c.l.b16 %v464
  %v2075 = vunpack.c.h.b16 %v464
  %v2076 = vunpack.c.l.b16 %v465
  %v2077 = vunpack.c.h.b16 %v465
  %v2078 = vunpack.c.l.b16 %v466
  %v2079 = vunpack.c.h.b16 %v466
  %v2080 = vunpack.c.l.b16 %v467
  %v2081 = vunpack.c.h.b16 %v467
  %v2082 = vunpack.c.l.b16 %v468
  %v2083 = vunpack.c.h.b16 %v468
  %v2084 = vunpack.c.l.b16 %v469
  %v2085 = vunpack.c.h.b16 %v469
  %v2086 = vunpack.c.l.b16 %v470
  %v2087 = vunpack.c.h.b16 %v470
  %v2088 = vunpack.c.l.b16 %v471
  %v2089 = vunpack.c.h.b16 %v471
  %v2090 = vunpack.c.l.b16 %v472
  %v2091 = vunpack.c.h.b16 %v472
  %v2092 = vunpack.c.l.b16 %v473
  %v2093 = vunpack.c.h.b16 %v473
  %v2094 = vunpack.c.l.b16 %v474
  %v2095 = vunpack.c.h.b16 %v474
  %v2096 = vunpack.c.l.b16 %v475
  %v2097 = vunpack.c.h.b16 %v475
  %v2098 = vunpack.c.l.b16 %v476
  %v2099 = vunpack.c.h.b16 %v476
  %v2100 = vunpack.c.l.b16 %v477
  %v2101 = vunpack.c.h.b16 %v477
  %v2102 = vunpack.c.l.b16 %v478
  %v2103 = vunpack.c.h.b16 %v478
  %v2104 = vunpack.c.l.b16 %v479
  %v2105 = vunpack.c.h.b16 %v479
  %v2106 = vunpack.c.l.b16 %v480
  %v2107 = vunpack.c.h.b16 %v480
  %v2108 = vunpack.c.l.b16 %v481
  %v2109 = vunpack.c.h.b16 %v481
  %v2110 = vunpack.c.l.b16 %v482
  %v2111 = vunpack.c.h.b16 %v482
  %v2112 = vunpack.c.l.b16 %v483
  %v2113 = vunpack.c.h.b16 %v483
  %v2114 = vunpack.c.l.b16 %v484
  %v2115 = vunpack.c.h.b16 %v484
  %v2116 = vunpack.c.l.b16 %v485
  %v2117 = vunpack.c.h.b16 %v485
  %v2118 = vunpack.c.l.b16 %v486
  %v2119 = vunpack.c.h.b16 %v486
  %v2120 = vunpack.c.l.b16 %v487
  %v2121 = vunpack.c.h.b16 %v487
  %v2122 = vunpack.c.l.b16 %v488
  %v2123 = vunpack.c.h.b16 %v488
  %v2124 = vunpack.c.l.b16 %v489
  %v2125 = vunpack.c.h.b16 %v489
  %v2126 = vunpack.c.l.b16 %v490
  %v2127 = vunpack.c.h.b16 %v490
  %v2128 = vunpack.c.l.b16 %v491
  %v2129 = vunpack.c.h.b16 %v491
  %v2130 = vunpack.c.l.b16 %v492
  %v2131 = vunpack.c.h.b16 %v492
  %v2132 = vunpack.c.l.b16 %v493
  %v2133 = vunpack.c.h.b16 %v493
  %v2134 = vunpack.c.l.b16 %v494
  %v2135 = vunpack.c.h.b16 %v494
  %v2136 = vunpack.c.l.b16 %v495
  %v2137 = vunpack.c.h.b16 %v495
  %v2138 = vunpack.c.l.b16 %v496
  %v2139 = vunpack.c.h.b16 %v496
  %v2140 = vunpack.c.l.b16 %v497
  %v2141 = vunpack.c.h.b16 %v497
  %v2142 = vunpack.c.l.b16 %v498
  %v2143 = vunpack.c.h.b16 %v498
  %v2144 = vunpack.c.l.b16 %v499
  %v2145 = vunpack.c.h.b16 %v499
  %v2146 = vunpack.c.l.b16 %v500
  %v2147 = vunpack.c.h.b16 %v500
  %v2148 = vunpack.c.l.b16 %v501
  %v2149 = vunpack.c.h.b16 %v501
  %v2150 = vunpack.c.l.b16 %v502
  %v2151 = vunpack.c.h.b16 %v502
  %v2152 = vunpack.c.l.b16 %v503
  %v2153 = vunpack.c.h.b16 %v503
  %v2154 = vunpack.c.l.b16 %v504
  %v2155 = vunpack.c.h.b16 %v504
  %v2156 = vunpack.c.l.b16 %v505
  %v2157 = vunpack.c.h.b16 %v505
  %v2158 = vunpack.c.l.b16 %v506
  %v2159 = vunpack.c.h.b16 %v506
  %v2160 = vunpack.c.l.b16 %v507
  %v2161 = vunpack.c.h.b16 %v507
  %v2162 = vunpack.c.l.b16 %v508
  %v2163 = vunpack.c.h.b16 %v508
  %v2164 = vunpack.c.l.b16 %v509
  %v2165 = vunpack.c.h.b16 %v509
  %v2166 = vunpack.c.l.b16 %v510
  %v2167 = vunpack.c.h.b16 %v510
  %v2168 = vunpack.c.l.b16 %v511
  %v2169 = vunpack.c.h.b16 %v511
  %v2170 = vunpack.c.l.b16 %v512
  %v2171 = vunpack.c.h.b16 %v512
  %v2172 = vunpack.c.l.b16 %v513
  %v2173 = vunpack.c.h.b16 %v513
  %v2174 = vunpack.c.l.b16 %v514
  %v2175 = vunpack.c.h.b16 %v514
  %v2176 = vunpack.c.l.b16 %v515
  %v2177 = vunpack.c.h.b16 %v515
  %v2178 = vunpack.c.l.b16 %v516
  %v2179 = vunpack.c.h.b16 %v516
  %v2180 = vunpack.c.l.b16 %v517
  %v2181 = vunpack.c.h.b16 %v517
  %v2182 = vunpack.c.l.b16 %v518
  %v2183 = vunpack.c.h.b16 %v518
  %v2184 = vunpack.c.l.b16 %v519
  %v2185 = vunpack.c.h.b16 %v519
  %v2186 = vunpack.c.l.b16 %v520
  %v2187 = vunpack.c.h.b16 %v520
  %v2188 = vunpack.c.l.b16 %v521
  %v2189 = vunpack.c.h.b16 %v521
  %v2190 = vunpack.c.l.b16 %v522
  %v2191 = vunpack.c.h.b16 %v522
  %v2192 = vunpack.c.l.b16 %v523
  %v2193 = vunpack.c.h.b16 %v523
  %v2194 = vunpack.c.l.b16 %v524
  %v2195 = vunpack.c.h.b16 %v524
  %v2196 = vunpack.c.l.b16 %v525
  %v2197 = vunpack.c.h.b16 %v525
  %v2198 = vunpack.c.l.b16 %v526
  %v2199 = vunpack.c.h.b16 %v526
  %v2200 = vunpack.c.l.b16 %v527
  %v2201 = vunpack.c.h.b16 %v527
  %v2202 = vpack.c.b16 %v1182, %v1178
  %v2203 = vpack.c.b16 %v1183, %v1179
  %v2204 = vpack.c.b16 %v1184, %v1180
  %v2205 = vpack.c.b16 %v1185, %v1181
  %v2206 = vpack.c.b16 %v1190, %v1186
  %v2207 = vpack.c.b16 %v1191, %v1187
  %v2208 = vpack.c.b16 %v1192, %v1188
  %v2209 = vpack.c.b16 %v1193, %v1189
  %v2210 = vpack.c.b16 %v1198, %v1194
  %v2211 = vpack.c.b16 %v1199, %v1195
  %v2212 = vpack.c.b16 %v1200, %v1196
  %v2213 = vpack.c.b16 %v1201, %v1197
  %v2214 = vpack.c.b16 %v1206, %v1202
  %v2215 = vpack.c.b16 %v1207, %v1203
  %v2216 = vpack.c.b16 %v1208, %v1204
  %v2217 = vpack.c.b16 %v1209, %v1205
  %v2218 = vpack.c.b16 %v1214, %v1210
  %v2219 = vpack.c.b16 %v1215, %v1211
  %v2220 = vpack.c.b16 %v1216, %v1212
  %v2221 = vpack.c.b16 %v1217, %v1213
  %v2222 = vpack.c.b16 %v1222, %v1218
  %v2223 = vpack.c.b16 %v1223, %v1219
  %v2224 = vpack.c.b16 %v1224, %v1220
  %v2225 = vpack.c.b16 %v1225, %v1221
  %v2226 = vpack.c.b16 %v1230, %v1226
  %v2227 = vpack.c.b16 %v1231, %v1227
  %v2228 = vpack.c.b16 %v1232, %v1228
  %v2229 = vpack.c.b16 %v1233, %v1229
  %v2230 = vpack.c.b16 %v1238, %v1234
  %v2231 = vpack.c.b16 %v1239, %v1235
  %v2232 = vpack.c.b16 %v1240, %v1236
  %v2233 = vpack.c.b16 %v1241, %v1237
  %v2234 = vpack.c.b16 %v1246, %v1242
  %v2235 = vpack.c.b16 %v1247, %v1243
  %v2236 = vpack.c.b16 %v1248, %v1244
  %v2237 = vpack.c.b16 %v1249, %v1245
  %v2238 = vpack.c.b16 %v1254, %v1250
  %v2239 = vpack.c.b16 %v1255, %v1251
  %v2240 = vpack.c.b16 %v1256, %v1252
  %v2241 = vpack.c.b16 %v1257, %v1253
  %v2242 = vpack.c.b16 %v1262, %v1258
  %v2243 = vpack.c.b16 %v1263, %v1259
  %v2244 = vpack.c.b16 %v1264, %v1260
  %v2245 = vpack.c.b16 %v1265, %v1261
  %v2246 = vpack.c.b16 %v1270, %v1266
  %v2247 = vpack.c.b16 %v1271, %v1267
  %v2248 = vpack.c.b16 %v1272, %v1268
  %v2249 = vpack.c.b16 %v1273, %v1269
  %v2250 = vpack.c.b16 %v1278, %v1274
  %v2251 = vpack.c.b16 %v1279, %v1275
  %v2252 = vpack.c.b16 %v1280, %v1276
  %v2253 = vpack.c.b16 %v1281, %v1277
  %v2254 = vpack.c.b16 %v1286, %v1282
  %v2255 = vpack.c.b16 %v1287, %v1283
  %v2256 = vpack.c.b16 %v1288, %v1284
  %v2257 = vpack.c.b16 %v1289, %v1285
  %v2258 = vpack.c.b16 %v1294, %v1290
  %v2259 = vpack.c.b16 %v1295, %v1291
  %v2260 = vpack.c.b16 %v1296, %v1292
  %v2261 = vpack.c.b16 %v1297, %v1293
  %v2262 = vpack.c.b16 %v1302, %v1298
  %v2263 = vpack.c.b16 %v1303, %v1299
  %v2264 = vpack.c.b16 %v1304, %v1300
  %v2265 = vpack.c.b16 %v1305, %v1301
  %v2266 = vpack.c.b16 %v1310, %v1306
  %v2267 = vpack.c.b16 %v1311, %v1307
  %v2268 = vpack.c.b16 %v1312, %v1308
  %v2269 = vpack.c.b16 %v1313, %v1309
  %v2270 = vpack.c.b16 %v1318, %v1314
  %v2271 = vpack.c.b16 %v1319, %v1315
  %v2272 = vpack.c.b16 %v1320, %v1316
  %v2273 = vpack.c.b16 %v1321, %v1317
  %v2274 = vpack.c.b16 %v1326, %v1322
  %v2275 = vpack.c.b16 %v1327, %v1323
  %v2276 = vpack.c.b16 %v1328, %v1324
  %v2277 = vpack.c.b16 %v1329, %v1325
  %v2278 = vpack.c.b16 %v1334, %v1330
  %v2279 = vpack.c.b16 %v1335, %v1331
  %v2280 = vpack.c.b16 %v1336, %v1332
  %v2281 = vpack.c.b16 %v1337, %v1333
  %v2282 = vpack.c.b16 %v1342, %v1338
  %v2283 = vpack.c.b16 %v1343, %v1339
  %v2284 = vpack.c.b16 %v1344, %v1340
  %v2285 = vpack.c.b16 %v1345, %v1341
  %v2286 = vpack.c.b16 %v1350, %v1346
  %v2287 = vpack.c.b16 %v1351, %v1347
  %v2288 = vpack.c.b16 %v1352, %v1348
  %v2289 = vpack.c.b16 %v1353, %v1349
  %v2290 = vpack.c.b16 %v1358, %v1354
  %v2291 = vpack.c.b16 %v1359, %v1355
  %v2292 = vpack.c.b16 %v1360, %v1356
  %v2293 = vpack.c.b16 %v1361, %v1357
  %v2294 = vpack.c.b16 %v1366, %v1362
  %v2295 = vpack.c.b16 %v1367, %v1363
  %v2296 = vpack.c.b16 %v1368, %v1364
  %v2297 = vpack.c.b16 %v1369, %v1365
  %v2298 = vpack.c.b16 %v1374, %v1370
  %v2299 = vpack.c.b16 %v1375, %v1371
  %v2300 = vpack.c.b16 %v1376, %v1372
  %v2301 = vpack.c.b16 %v1377, %v1373
  %v2302 = vpack.c.b16 %v1382, %v1378
  %v2303 = vpack.c.b16 %v1383, %v1379
  %v2304 = vpack.c.b16 %v1384, %v1380
  %v2305 = vpack.c.b16 %v1385, %v1381
  %v2306 = vpack.c.b16 %v1390, %v1386
  %v2307 = vpack.c.b16 %v1391, %v1387
  %v2308 = vpack.c.b16 %v1392, %v1388
  %v2309 = vpack.c.b16 %v1393, %v1389
  %v2310 = vpack.c.b16 %v1398, %v1394
  %v2311 = vpack.c.b16 %v1399, %v1395
  %v2312 = vpack.c.b16 %v1400, %v1396
  %v2313 = vpack.c.b16 %v1401, %v1397
  %v2314 = vpack.c.b16 %v1406, %v1402
  %v2315 = vpack.c.b16 %v1407, %v1403
  %v2316 = vpack.c.b16 %v1408, %v1404
  %v2317 = vpack.c.b16 %v1409, %v1405
  %v2318 = vpack.c.b16 %v1414, %v1410
  %v2319 = vpack.c.b16 %v1415, %v1411
  %v2320 = vpack.c.b16 %v1416, %v1412
  %v2321 = vpack.c.b16 %v1417, %v1413
  %v2322 = vpack.c.b16 %v1422, %v1418
  %v2323 = vpack.c.b16 %v1423, %v1419
  %v2324 = vpack.c.b16 %v1424, %v1420
  %v2325 = vpack.c.b16 %v1425, %v1421
  %v2326 = vpack.c.b16 %v1430, %v1426
  %v2327 = vpack.c.b16 %v1431, %v1427
  %v2328 = vpack.c.b16 %v1432, %v1428
  %v2329 = vpack.c.b16 %v1433, %v1429
  %v2330 = vpack.c.b16 %v1438, %v1434
  %v2331 = vpack.c.b16 %v1439, %v1435
  %v2332 = vpack.c.b16 %v1440, %v1436
  %v2333 = vpack.c.b16 %v1441, %v1437
  %v2334 = vpack.c.b16 %v1446, %v1442
  %v2335 = vpack.c.b16 %v1447, %v1443
  %v2336 = vpack.c.b16 %v1448, %v1444
  %v2337 = vpack.c.b16 %v1449, %v1445
  %v2338 = vpack.c.b16 %v1454, %v1450
  %v2339 = vpack.c.b16 %v1455, %v1451
  %v2340 = vpack.c.b16 %v1456, %v1452
  %v2341 = vpack.c.b16 %v1457, %v1453
  %v2342 = vpack.c.b16 %v1462, %v1458
  %v2343 = vpack.c.b16 %v1463, %v1459
  %v2344 = vpack.c.b16 %v1464, %v1460
  %v2345 = vpack.c.b16 %v1465, %v1461
  %v2346 = vpack.c.b16 %v1470, %v1466
  %v2347 = vpack.c.b16 %v1471, %v1467
  %v2348 = vpack.c.b16 %v1472, %v1468
  %v2349 = vpack.c.b16 %v1473, %v1469
  %v2350 = vpack.c.b16 %v1478, %v1474
  %v2351 = vpack.c.b16 %v1479, %v1475
  %v2352 = vpack.c.b16 %v1480, %v1476
  %v2353 = vpack.c.b16 %v1481, %v1477
  %v2354 = vpack.c.b16 %v1486, %v1482
  %v2355 = vpack.c.b16 %v1487, %v1483
  %v2356 = vpack.c.b16 %v1488, %v1484
  %v2357 = vpack.c.b16 %v1489, %v1485
  %v2358 = vpack.c.b16 %v1494, %v1490
  %v2359 = vpack.c.b16 %v1495, %v1491
  %v2360 = vpack.c.b16 %v1496, %v1492
  %v2361 = vpack.c.b16 %v1497, %v1493
  %v2362 = vpack.c.b16 %v1502, %v1498
  %v2363 = vpack.c.b16 %v1503, %v1499
  %v2364 = vpack.c.b16 %v1504, %v1500
  %v2365 = vpack.c.b16 %v1505, %v1501
  %v2366 = vpack.c.b16 %v1510, %v1506
  %v2367 = vpack.c.b16 %v1511, %v1507
  %v2368 = vpack.c.b16 %v1512, %v1508
  %v2369 = vpack.c.b16 %v1513, %v1509
  %v2370 = vpack.c.b16 %v1518, %v1514
  %v2371 = vpack.c.b16 %v1519, %v1515
  %v2372 = vpack.c.b16 %v1520, %v1516
  %v2373 = vpack.c.b16 %v1521, %v1517
  %v2374 = vpack.c.b16 %v1526, %v1522
  %v2375 = vpack.c.b16 %v1527, %v1523
  %v2376 = vpack.c.b16 %v1528, %v1524
  %v2377 = vpack.c.b16 %v1529, %v1525
  %v2378 = vpack.c.b16 %v1534, %v1530
  %v2379 = vpack.c.b16 %v1535, %v1531
  %v2380 = vpack.c.b16 %v1536, %v1532
  %v2381 = vpack.c.b16 %v1537, %v1533
  %v2382 = vpack.c.b16 %v1542, %v1538
  %v2383 = vpack.c.b16 %v1543, %v1539
  %v2384 = vpack.c.b16 %v1544, %v1540
  %v2385 = vpack.c.b16 %v1545, %v1541
  %v2386 = vpack.c.b16 %v1550, %v1546
  %v2387 = vpack.c.b16 %v1551, %v1547
  %v2388 = vpack.c.b16 %v1552, %v1548
  %v2389 = vpack.c.b16 %v1553, %v1549
  %v2390 = vpack.c.b16 %v1558, %v1554
  %v2391 = vpack.c.b16 %v1559, %v1555
  %v2392 = vpack.c.b16 %v1560, %v1556
  %v2393 = vpack.c.b16 %v1561, %v1557
  %v2394 = vpack.c.b16 %v1566, %v1562
  %v2395 = vpack.c.b16 %v1567, %v1563
  %v2396 = vpack.c.b16 %v1568, %v1564
  %v2397 = vpack.c.b16 %v1569, %v1565
  %v2398 = vpack.c.b16 %v1574, %v1570
  %v2399 = vpack.c.b16 %v1575, %v1571
  %v2400 = vpack.c.b16 %v1576, %v1572
  %v2401 = vpack.c.b16 %v1577, %v1573
  %v2402 = vpack.c.b16 %v1582, %v1578
  %v2403 = vpack.c.b16 %v1583, %v1579
  %v2404 = vpack.c.b16 %v1584, %v1580
  %v2405 = vpack.c.b16 %v1585, %v1581
  %v2406 = vpack.c.b16 %v1590, %v1586
  %v2407 = vpack.c.b16 %v1591, %v1587
  %v2408 = vpack.c.b16 %v1592, %v1588
  %v2409 = vpack.c.b16 %v1593, %v1589
  %v2410 = vpack.c.b16 %v1598, %v1594
  %v2411 = vpack.c.b16 %v1599, %v1595
  %v2412 = vpack.c.b16 %v1600, %v1596
  %v2413 = vpack.c.b16 %v1601, %v1597
  %v2414 = vpack.c.b16 %v1606, %v1602
  %v2415 = vpack.c.b16 %v1607, %v1603
  %v2416 = vpack.c.b16 %v1608, %v1604
  %v2417 = vpack.c.b16 %v1609, %v1605
  %v2418 = vpack.c.b16 %v1614, %v1610
  %v2419 = vpack.c.b16 %v1615, %v1611
  %v2420 = vpack.c.b16 %v1616, %v1612
  %v2421 = vpack.c.b16 %v1617, %v1613
  %v2422 = vpack.c.b16 %v1622, %v1618
  %v2423 = vpack.c.b16 %v1623, %v1619
  %v2424 = vpack.c.b16 %v1624, %v1620
  %v2425 = vpack.c.b16 %v1625, %v1621
  %v2426 = vpack.c.b16 %v1630, %v1626
  %v2427 = vpack.c.b16 %v1631, %v1627
  %v2428 = vpack.c.b16 %v1632, %v1628
  %v2429 = vpack.c.b16 %v1633, %v1629
  %v2430 = vpack.c.b16 %v1638, %v1634
  %v2431 = vpack.c.b16 %v1639, %v1635
  %v2432 = vpack.c.b16 %v1640, %v1636
  %v2433 = vpack.c.b16 %v1641, %v1637
  %v2434 = vpack.c.b16 %v1646, %v1642
  %v2435 = vpack.c.b16 %v1647, %v1643
  %v2436 = vpack.c.b16 %v1648, %v1644
  %v2437 = vpack.c.b16 %v1649, %v1645
  %v2438 = vpack.c.b16 %v1654, %v1650
  %v2439 = vpack.c.b16 %v1655, %v1651
  %v2440 = vpack.c.b16 %v1656, %v1652
  %v2441 = vpack.c.b16 %v1657, %v1653
  %v2442 = vpack.c.b16 %v1662, %v1658
  %v2443 = vpack.c.b16 %v1663, %v1659
  %v2444 = vpack.c.b16 %v1664, %v1660
  %v2445 = vpack.c.b16 %v1665, %v1661
  %v2446 = vpack.c.b16 %v1670, %v1666
  %v2447 = vpack.c.b16 %v1671, %v1667
  %v2448 = vpack.c.b16 %v1672, %v1668
  %v2449 = vpack.c.b16 %v1673, %v1669
  %v2450 = vpack.c.b16 %v1678, %v1674
  %v2451 = vpack.c.b16 %v1679, %v1675
  %v2452 = vpack.c.b16 %v1680, %v1676
  %v2453 = vpack.c.b16 %v1681, %v1677
  %v2454 = vpack.c.b16 %v1686, %v1682
  %v2455 = vpack.c.b16 %v1687, %v1683
  %v2456 = vpack.c.b16 %v1688, %v1684
  %v2457 = vpack.c.b16 %v1689, %v1685
  %v2458 = vpack.c.b16 %v1694, %v1690
  %v2459 = vpack.c.b16 %v1695, %v1691
  %v2460 = vpack.c.b16 %v1696, %v1692
  %v2461 = vpack.c.b16 %v1697, %v1693
  %v2462 = vpack.c.b16 %v1702, %v1698
  %v2463 = vpack.c.b16 %v1703, %v1699
  %v2464 = vpack.c.b16 %v1704, %v1700
  %v2465 = vpack.c.b16 %v1705, %v1701
  %v2466 = vpack.c.b16 %v1710, %v1706
  %v2467 = vpack.c.b16 %v1711, %v1707
  %v2468 = vpack.c.b16 %v1712, %v1708
  %v2469 = vpack.c.b16 %v1713, %v1709
  %v2470 = vpack.c.b16 %v1718, %v1714
  %v2471 = vpack.c.b16 %v1719, %v1715
  %v2472 = vpack.c.b16 %v1720, %v1716
  %v2473 = vpack.c.b16 %v1721, %v1717
  %v2474 = vpack.c.b16 %v1726, %v1722
  %v2475 = vpack.c.b16 %v1727, %v1723
  %v2476 = vpack.c.b16 %v1728, %v1724
  %v2477 = vpack.c.b16 %v1729, %v1725
  %v2478 = vpack.c.b16 %v1734, %v1730
  %v2479 = vpack.c.b16 %v1735, %v1731
  %v2480 = vpack.c.b16 %v1736, %v1732
  %v2481 = vpack.c.b16 %v1737, %v1733
  %v2482 = vpack.c.b16 %v1742, %v1738
  %v2483 = vpack.c.b16 %v1743, %v1739
  %v2484 = vpack.c.b16 %v1744, %v1740
  %v2485 = vpack.c.b16 %v1745, %v1741
  %v2486 = vpack.c.b16 %v1750, %v1746
  %v2487 = vpack.c.b16 %v1751, %v1747
  %v2488 = vpack.c.b16 %v1752, %v1748
  %v2489 = vpack.c.b16 %v1753, %v1749
  %v2490 = vpack.c.b16 %v1758, %v1754
  %v2491 = vpack.c.b16 %v1759, %v1755
  %v2492 = vpack.c.b16 %v1760, %v1756
  %v2493 = vpack.c.b16 %v1761, %v1757
  %v2494 = vpack.c.b16 %v1766, %v1762
  %v2495 = vpack.c.b16 %v1767, %v1763
  %v2496 = vpack.c.b16 %v1768, %v1764
  %v2497 = vpack.c.b16 %v1769, %v1765
  %v2498 = vpack.c.b16 %v1774, %v1770
  %v2499 = vpack.c.b16 %v1775, %v1771
  %v2500 = vpack.c.b16 %v1776, %v1772
  %v2501 = vpack.c.b16 %v1777, %v1773
  %v2502 = vpack.c.b16 %v1782, %v1778
  %v2503 = vpack.c.b16 %v1783, %v1779
  %v2504 = vpack.c.b16 %v1784, %v1780
  %v2505 = vpack.c.b16 %v1785, %v1781
  %v2506 = vpack.c.b16 %v1790, %v1786
  %v2507 = vpack.c.b16 %v1791, %v1787
  %v2508 = vpack.c.b16 %v1792, %v1788
  %v2509 = vpack.c.b16 %v1793, %v1789
  %v2510 = vpack.c.b16 %v1798, %v1794
  %v2511 = vpack.c.b16 %v1799, %v1795
  %v2512 = vpack.c.b16 %v1800, %v1796
  %v2513 = vpack.c.b16 %v1801, %v1797
  %v2514 = vpack.c.b16 %v1806, %v1802
  %v2515 = vpack.c.b16 %v1807, %v1803
  %v2516 = vpack.c.b16 %v1808, %v1804
  %v2517 = vpack.c.b16 %v1809, %v1805
  %v2518 = vpack.c.b16 %v1814, %v1810
  %v2519 = vpack.c.b16 %v1815, %v1811
  %v2520 = vpack.c.b16 %v1816, %v1812
  %v2521 = vpack.c.b16 %v1817, %v1813
  %v2522 = vpack.c.b16 %v1822, %v1818
  %v2523 = vpack.c.b16 %v1823, %v1819
  %v2524 = vpack.c.b16 %v1824, %v1820
  %v2525 = vpack.c.b16 %v1825, %v1821
  %v2526 = vpack.c.b16 %v1830, %v1826
  %v2527 = vpack.c.b16 %v1831, %v1827
  %v2528 = vpack.c.b16 %v1832, %v1828
  %v2529 = vpack.c.b16 %v1833, %v1829
  %v2530 = vpack.c.b16 %v1838, %v1834
  %v2531 = vpack.c.b16 %v1839, %v1835
  %v2532 = vpack.c.b16 %v1840, %v1836
  %v2533 = vpack.c.b16 %v1841, %v1837
  %v2534 = vpack.c.b16 %v1846, %v1842
  %v2535 = vpack.c.b16 %v1847, %v1843
  %v2536 = vpack.c.b16 %v1848, %v1844
  %v2537 = vpack.c.b16 %v1849, %v1845
  %v2538 = vpack.c.b16 %v1854, %v1850
  %v2539 = vpack.c.b16 %v1855, %v1851
  %v2540 = vpack.c.b16 %v1856, %v1852
  %v2541 = vpack.c.b16 %v1857, %v1853
  %v2542 = vpack.c.b16 %v1862, %v1858
  %v2543 = vpack.c.b16 %v1863, %v1859
  %v2544 = vpack.c.b16 %v1864, %v1860
  %v2545 = vpack.c.b16 %v1865, %v1861
  %v2546 = vpack.c.b16 %v1870, %v1866
  %v2547 = vpack.c.b16 %v1871, %v1867
  %v2548 = vpack.c.b16 %v1872, %v1868
  %v2549 = vpack.c.b16 %v1873, %v1869
  %v2550 = vpack.c.b16 %v1878, %v1874
  %v2551 = vpack.c.b16 %v1879, %v1875
  %v2552 = vpack.c.b16 %v1880, %v1876
  %v2553 = vpack.c.b16 %v1881, %v1877
  %v2554 = vpack.c.b16 %v1886, %v1882
  %v2555 = vpack.c.b16 %v1887, %v1883
  %v2556 = vpack.c.b16 %v1888, %v1884
  %v2557 = vpack.c.b16 %v1889, %v1885
  %v2558 = vpack.c.b16 %v1894, %v1890
  %v2559 = vpack.c.b16 %v1895, %v1891
  %v2560 = vpack.c.b16 %v1896, %v1892
  %v2561 = vpack.c.b16 %v1897, %v1893
  %v2562 = vpack.c.b16 %v1902, %v1898
  %v2563 = vpack.c.b16 %v1903, %v1899
  %v2564 = vpack.c.b16 %v1904, %v1900
  %v2565 = vpack.c.b16 %v1905, %v1901
  %v2566 = vpack.c.b16 %v1910, %v1906
  %v2567 = vpack.c.b16 %v1911, %v1907
  %v2568 = vpack.c.b16 %v1912, %v1908
  %v2569 = vpack.c.b16 %v1913, %v1909
  %v2570 = vpack.c.b16 %v1918, %v1914
  %v2571 = vpack.c.b16 %v1919, %v1915
  %v2572 = vpack.c.b16 %v1920, %v1916
  %v2573 = vpack.c.b16 %v1921, %v1917
  %v2574 = vpack.c.b16 %v1926, %v1922
  %v2575 = vpack.c.b16 %v1927, %v1923
  %v2576 = vpack.c.b16 %v1928, %v1924
  %v2577 = vpack.c.b16 %v1929, %v1925
  %v2578 = vpack.c.b16 %v1934, %v1930
  %v2579 = vpack.c.b16 %v1935, %v1931
  %v2580 = vpack.c.b16 %v1936, %v1932
  %v2581 = vpack.c.b16 %v1937, %v1933
  %v2582 = vpack.c.b16 %v1942, %v1938
  %v2583 = vpack.c.b16 %v1943, %v1939
  %v2584 = vpack.c.b16 %v1944, %v1940
  %v2585 = vpack.c.b16 %v1945, %v1941
  %v2586 = vpack.c.b16 %v1950, %v1946
  %v2587 = vpack.c.b16 %v1951, %v1947
  %v2588 = vpack.c.b16 %v1952, %v1948
  %v2589 = vpack.c.b16 %v1953, %v1949
  %v2590 = vpack.c.b16 %v1958, %v1954
  %v2591 = vpack.c.b16 %v1959, %v1955
  %v2592 = vpack.c.b16 %v1960, %v1956
  %v2593 = vpack.c.b16 %v1961, %v1957
  %v2594 = vpack.c.b16 %v1966, %v1962
  %v2595 = vpack.c.b16 %v1967, %v1963
  %v2596 = vpack.c.b16 %v1968, %v1964
  %v2597 = vpack.c.b16 %v1969, %v1965
  %v2598 = vpack.c.b16 %v1974, %v1970
  %v2599 = vpack.c.b16 %v1975, %v1971
  %v2600 = vpack.c.b16 %v1976, %v1972
  %v2601 = vpack.c.b16 %v1977, %v1973
  %v2602 = vpack.c.b16 %v1982, %v1978
  %v2603 = vpack.c.b16 %v1983, %v1979
  %v2604 = vpack.c.b16 %v1984, %v1980
  %v2605 = vpack.c.b16 %v1985, %v1981
  %v2606 = vpack.c.b16 %v1990, %v1986
  %v2607 = vpack.c.b16 %v1991, %v1987
  %v2608 = vpack.c.b16 %v1992, %v1988
  %v2609 = vpack.c.b16 %v1993, %v1989
  %v2610 = vpack.c.b16 %v1998, %v1994
  %v2611 = vpack.c.b16 %v1999, %v1995
  %v2612 = vpack.c.b16 %v2000, %v1996
  %v2613 = vpack.c.b16 %v2001, %v1997
  %v2614 = vpack.c.b16 %v2006, %v2002
  %v2615 = vpack.c.b16 %v2007, %v2003
  %v2616 = vpack.c.b16 %v2008, %v2004
  %v2617 = vpack.c.b16 %v2009, %v2005
  %v2618 = vpack.c.b16 %v2014, %v2010
  %v2619 = vpack.c.b16 %v2015, %v2011
  %v2620 = vpack.c.b16 %v2016, %v2012
  %v2621 = vpack.c.b16 %v2017, %v2013
  %v2622 = vpack.c.b16 %v2022, %v2018
  %v2623 = vpack.c.b16 %v2023, %v2019
  %v2624 = vpack.c.b16 %v2024, %v2020
  %v2625 = vpack.c.b16 %v2025, %v2021
  %v2626 = vpack.c.b16 %v2030, %v2026
  %v2627 = vpack.c.b16 %v2031, %v2027
  %v2628 = vpack.c.b16 %v2032, %v2028
  %v2629 = vpack.c.b16 %v2033, %v2029
  %v2630 = vpack.c.b16 %v2038, %v2034
  %v2631 = vpack.c.b16 %v2039, %v2035
  %v2632 = vpack.c.b16 %v2040, %v2036
  %v2633 = vpack.c.b16 %v2041, %v2037
  %v2634 = vpack.c.b16 %v2046, %v2042
  %v2635 = vpack.c.b16 %v2047, %v2043
  %v2636 = vpack.c.b16 %v2048, %v2044
  %v2637 = vpack.c.b16 %v2049, %v2045
  %v2638 = vpack.c.b16 %v2054, %v2050
  %v2639 = vpack.c.b16 %v2055, %v2051
  %v2640 = vpack.c.b16 %v2056, %v2052
  %v2641 = vpack.c.b16 %v2057, %v2053
  %v2642 = vpack.c.b16 %v2062, %v2058
  %v2643 = vpack.c.b16 %v2063, %v2059
  %v2644 = vpack.c.b16 %v2064, %v2060
  %v2645 = vpack.c.b16 %v2065, %v2061
  %v2646 = vpack.c.b16 %v2070, %v2066
  %v2647 = vpack.c.b16 %v2071, %v2067
  %v2648 = vpack.c.b16 %v2072, %v2068
  %v2649 = vpack.c.b16 %v2073, %v2069
  %v2650 = vpack.c.b16 %v2078, %v2074
  %v2651 = vpack.c.b16 %v2079, %v2075
  %v2652 = vpack.c.b16 %v2080, %v2076
  %v2653 = vpack.c.b16 %v2081, %v2077
  %v2654 = vpack.c.b16 %v2086, %v2082
  %v2655 = vpack.c.b16 %v2087, %v2083
  %v2656 = vpack.c.b16 %v2088, %v2084
  %v2657 = vpack.c.b16 %v2089, %v2085
  %v2658 = vpack.c.b16 %v2094, %v2090
  %v2659 = vpack.c.b16 %v2095, %v2091
  %v2660 = vpack.c.b16 %v2096, %v2092
  %v2661 = vpack.c.b16 %v2097, %v2093
  %v2662 = vpack.c.b16 %v2102, %v2098
  %v2663 = vpack.c.b16 %v2103, %v2099
  %v2664 = vpack.c.b16 %v2104, %v2100
  %v2665 = vpack.c.b16 %v2105, %v2101
  %v2666 = vpack.c.b16 %v2110, %v2106
  %v2667 = vpack.c.b16 %v2111, %v2107
  %v2668 = vpack.c.b16 %v2112, %v2108
  %v2669 = vpack.c.b16 %v2113, %v2109
  %v2670 = vpack.c.b16 %v2118, %v2114
  %v2671 = vpack.c.b16 %v2119, %v2115
  %v2672 = vpack.c.b16 %v2120, %v2116
  %v2673 = vpack.c.b16 %v2121, %v2117
  %v2674 = vpack.c.b16 %v2126, %v2122
  %v2675 = vpack.c.b16 %v2127, %v2123
  %v2676 = vpack.c.b16 %v2128, %v2124
  %v2677 = vpack.c.b16 %v2129, %v2125
  %v2678 = vpack.c.b16 %v2134, %v2130
  %v2679 = vpack.c.b16 %v2135, %v2131
  %v2680 = vpack.c.b16 %v2136, %v2132
  %v2681 = vpack.c.b16 %v2137, %v2133
  %v2682 = vpack.c.b16 %v2142, %v2138
  %v2683 = vpack.c.b16 %v2143, %v2139
  %v2684 = vpack.c.b16 %v2144, %v2140
  %v2685 = vpack.c.b16 %v2145, %v2141
  %v2686 = vpack.c.b16 %v2150, %v2146
  %v2687 = vpack.c.b16 %v2151, %v2147
  %v2688 = vpack.c.b16 %v2152, %v2148
  %v2689 = vpack.c.b16 %v2153, %v2149
  %v2690 = vpack.c.b16 %v2158, %v2154
  %v2691 = vpack.c.b16 %v2159, %v2155
  %v2692 = vpack.c.b16 %v2160, %v2156
  %v2693 = vpack.c.b16 %v2161, %v2157
  %v2694 = vpack.c.b16 %v2166, %v2162
  %v2695 = vpack.c.b16 %v2167, %v2163
  %v2696 = vpack.c.b16 %v2168, %v2164
  %v2697 = vpack.c.b16 %v2169, %v2165
  %v2698 = vpack.c.b16 %v2174, %v2170
  %v2699 = vpack.c.b16 %v2175, %v2171
  %v2700 = vpack.c.b16 %v2176, %v2172
  %v2701 = vpack.c.b16 %v2177, %v2173
  %v2702 = vpack.c.b16 %v2182, %v2178
  %v2703 = vpack.c.b16 %v2183, %v2179
  %v2704 = vpack.c.b16 %v2184, %v2180
  %v2705 = vpack.c.b16 %v2185, %v2181
  %v2706 = vpack.c.b16 %v2190, %v2186
  %v2707 = vpack.c.b16 %v2191, %v2187
  %v2708 = vpack.c.b16 %v2192, %v2188
  %v2709 = vpack.c.b16 %v2193, %v2189
  %v2710 = vpack.c.b16 %v2198, %v2194
  %v2711 = vpack.c.b16 %v2199, %v2195
  %v2712 = vpack.c.b16 %v2200, %v2196
  %v2713 = vpack.c.b16 %v2201, %v2197
  %3226 = vmatprep.subr.bf16.mxu0 %v2203
  %3227 = vmatpush1.bf16.msra.mxu0 %v2202
  %3228 = vmatprep.subr.bf16.mxu0 %v2207
  %3229 = vmatpush1.bf16.msra.mxu0 %v2206
  %3230 = vmatprep.subr.bf16.mxu0 %v2211
  %3231 = vmatpush1.bf16.msra.mxu0 %v2210
  %3232 = vmatprep.subr.bf16.mxu0 %v2215
  %3233 = vmatpush1.bf16.msra.mxu0 %v2214
  %3234 = vmatprep.subr.bf16.mxu0 %v2219
  %3235 = vmatpush1.bf16.msra.mxu0 %v2218
  %3236 = vmatprep.subr.bf16.mxu0 %v2223
  %3237 = vmatpush1.bf16.msra.mxu0 %v2222
  %3238 = vmatprep.subr.bf16.mxu0 %v2227
  %3239 = vmatpush1.bf16.msra.mxu0 %v2226
  %3240 = vmatprep.subr.bf16.mxu0 %v2231
  %3241 = vmatpush1.bf16.msra.mxu0 %v2230
  %3242 = vmatprep.subr.bf16.mxu0 %v2235
  %3243 = vmatpush1.bf16.msra.mxu0 %v2234
  %3244 = vmatprep.subr.bf16.mxu0 %v2239
  %3245 = vmatpush1.bf16.msra.mxu0 %v2238
  %3246 = vmatprep.subr.bf16.mxu0 %v2243
  %3247 = vmatpush1.bf16.msra.mxu0 %v2242
  %3248 = vmatprep.subr.bf16.mxu0 %v2247
  %3249 = vmatpush1.bf16.msra.mxu0 %v2246
  %3250 = vmatprep.subr.bf16.mxu0 %v2251
  %3251 = vmatpush1.bf16.msra.mxu0 %v2250
  %3252 = vmatprep.subr.bf16.mxu0 %v2255
  %3253 = vmatpush1.bf16.msra.mxu0 %v2254
  %3254 = vmatprep.subr.bf16.mxu0 %v2259
  %3255 = vmatpush1.bf16.msra.mxu0 %v2258
  %3256 = vmatprep.subr.bf16.mxu0 %v2263
  %3257 = vmatpush1.bf16.msra.mxu0 %v2262
  %3258 = vmatprep.mubr.bf16.mxu0 %v589
  %3259 = vmatmul.mubr.bf16.gmra.mrb[0].mxu0 %v575
  %v3260 = vpop.f32.mrb[0].mxu0
  %v3261 = vadd.f32 %v533, %v3260
  %v3262 = vpop.f32.mrb[0].mxu0
  %v3263 = vadd.f32 %v537, %v3262
  %v3264 = vpop.f32.mrb[0].mxu0
  %v3265 = vpop.f32.mrb[0].mxu0
  %3266 = vdwg.mxu0
  %3267 = vmatprep.subr.bf16.mxu0 %v2267
  %3268 = vmatpush1.bf16.msra.mxu0 %v2266
  %3269 = vmatprep.subr.bf16.mxu0 %v2271
  %3270 = vmatpush1.bf16.msra.mxu0 %v2270
  %3271 = vmatprep.subr.bf16.mxu0 %v2275
  %3272 = vmatpush1.bf16.msra.mxu0 %v2274
  %3273 = vmatprep.subr.bf16.mxu0 %v2279
  %3274 = vmatpush1.bf16.msra.mxu0 %v2278
  %3275 = vmatprep.subr.bf16.mxu0 %v2283
  %3276 = vmatpush1.bf16.msra.mxu0 %v2282
  %3277 = vmatprep.subr.bf16.mxu0 %v2287
  %3278 = vmatpush1.bf16.msra.mxu0 %v2286
  %3279 = vmatprep.subr.bf16.mxu0 %v2291
  %3280 = vmatpush1.bf16.msra.mxu0 %v2290
  %3281 = vmatprep.subr.bf16.mxu0 %v2295
  %3282 = vmatpush1.bf16.msra.mxu0 %v2294
  %3283 = vmatprep.subr.bf16.mxu0 %v2299
  %3284 = vmatpush1.bf16.msra.mxu0 %v2298
  %3285 = vmatprep.subr.bf16.mxu0 %v2303
  %3286 = vmatpush1.bf16.msra.mxu0 %v2302
  %3287 = vmatprep.subr.bf16.mxu0 %v2307
  %3288 = vmatpush1.bf16.msra.mxu0 %v2306
  %3289 = vmatprep.subr.bf16.mxu0 %v2311
  %3290 = vmatpush1.bf16.msra.mxu0 %v2310
  %3291 = vmatprep.subr.bf16.mxu0 %v2315
  %3292 = vmatpush1.bf16.msra.mxu0 %v2314
  %3293 = vmatprep.subr.bf16.mxu0 %v2319
  %3294 = vmatpush1.bf16.msra.mxu0 %v2318
  %3295 = vmatprep.subr.bf16.mxu0 %v2323
  %3296 = vmatpush1.bf16.msra.mxu0 %v2322
  %3297 = vmatprep.subr.bf16.mxu0 %v2327
  %3298 = vmatpush1.bf16.msra.mxu0 %v2326
  %3299 = vmatprep.mubr.bf16.mxu0 %v599
  %3300 = vmatmul.mubr.bf16.gmra.mrb[0].mxu0 %v597
  %v3301 = vpop.f32.mrb[0].mxu0
  %v3302 = vadd.f32 %v3261, %v3301
  %v3303 = vpop.f32.mrb[0].mxu0
  %v3304 = vadd.f32 %v3263, %v3303
  %v3305 = vpop.f32.mrb[0].mxu0
  %v3306 = vpop.f32.mrb[0].mxu0
  %3307 = vdwg.mxu0
  %3308 = vmatprep.subr.bf16.mxu0 %v2331
  %3309 = vmatpush1.bf16.msra.mxu0 %v2330
  %3310 = vmatprep.subr.bf16.mxu0 %v2335
  %3311 = vmatpush1.bf16.msra.mxu0 %v2334
  %3312 = vmatprep.subr.bf16.mxu0 %v2339
  %3313 = vmatpush1.bf16.msra.mxu0 %v2338
  %3314 = vmatprep.subr.bf16.mxu0 %v2343
  %3315 = vmatpush1.bf16.msra.mxu0 %v2342
  %3316 = vmatprep.subr.bf16.mxu0 %v2347
  %3317 = vmatpush1.bf16.msra.mxu0 %v2346
  %3318 = vmatprep.subr.bf16.mxu0 %v2351
  %3319 = vmatpush1.bf16.msra.mxu0 %v2350
  %3320 = vmatprep.subr.bf16.mxu0 %v2355
  %3321 = vmatpush1.bf16.msra.mxu0 %v2354
  %3322 = vmatprep.subr.bf16.mxu0 %v2359
  %3323 = vmatpush1.bf16.msra.mxu0 %v2358
  %3324 = vmatprep.subr.bf16.mxu0 %v2363
  %3325 = vmatpush1.bf16.msra.mxu0 %v2362
  %3326 = vmatprep.subr.bf16.mxu0 %v2367
  %3327 = vmatpush1.bf16.msra.mxu0 %v2366
  %3328 = vmatprep.subr.bf16.mxu0 %v2371
  %3329 = vmatpush1.bf16.msra.mxu0 %v2370
  %3330 = vmatprep.subr.bf16.mxu0 %v2375
  %3331 = vmatpush1.bf16.msra.mxu0 %v2374
  %3332 = vmatprep.subr.bf16.mxu0 %v2379
  %3333 = vmatpush1.bf16.msra.mxu0 %v2378
  %3334 = vmatprep.subr.bf16.mxu0 %v2383
  %3335 = vmatpush1.bf16.msra.mxu0 %v2382
  %3336 = vmatprep.subr.bf16.mxu0 %v2387
  %3337 = vmatpush1.bf16.msra.mxu0 %v2386
  %3338 = vmatprep.subr.bf16.mxu0 %v2391
  %3339 = vmatpush1.bf16.msra.mxu0 %v2390
  %3340 = vmatprep.mubr.bf16.mxu0 %v596
  %3341 = vmatmul.mubr.bf16.gmra.mrb[0].mxu0 %v582
  %v3342 = vpop.f32.mrb[0].mxu0
  %v3343 = vadd.f32 %v3302, %v3342
  %v3344 = vpop.f32.mrb[0].mxu0
  %v3345 = vadd.f32 %v3304, %v3344
  %v3346 = vpop.f32.mrb[0].mxu0
  %v3347 = vpop.f32.mrb[0].mxu0
  %3348 = vdwg.mxu0
  %3349 = vmatprep.subr.bf16.mxu0 %v2395
  %3350 = vmatpush1.bf16.msra.mxu0 %v2394
  %3351 = vmatprep.subr.bf16.mxu0 %v2399
  %3352 = vmatpush1.bf16.msra.mxu0 %v2398
  %3353 = vmatprep.subr.bf16.mxu0 %v2403
  %3354 = vmatpush1.bf16.msra.mxu0 %v2402
  %3355 = vmatprep.subr.bf16.mxu0 %v2407
  %3356 = vmatpush1.bf16.msra.mxu0 %v2406
  %3357 = vmatprep.subr.bf16.mxu0 %v2411
  %3358 = vmatpush1.bf16.msra.mxu0 %v2410
  %3359 = vmatprep.subr.bf16.mxu0 %v2415
  %3360 = vmatpush1.bf16.msra.mxu0 %v2414
  %3361 = vmatprep.subr.bf16.mxu0 %v2419
  %3362 = vmatpush1.bf16.msra.mxu0 %v2418
  %3363 = vmatprep.subr.bf16.mxu0 %v2423
  %3364 = vmatpush1.bf16.msra.mxu0 %v2422
  %3365 = vmatprep.subr.bf16.mxu0 %v2427
  %3366 = vmatpush1.bf16.msra.mxu0 %v2426
  %3367 = vmatprep.subr.bf16.mxu0 %v2431
  %3368 = vmatpush1.bf16.msra.mxu0 %v2430
  %3369 = vmatprep.subr.bf16.mxu0 %v2435
  %3370 = vmatpush1.bf16.msra.mxu0 %v2434
  %3371 = vmatprep.subr.bf16.mxu0 %v2439
  %3372 = vmatpush1.bf16.msra.mxu0 %v2438
  %3373 = vmatprep.subr.bf16.mxu0 %v2443
  %3374 = vmatpush1.bf16.msra.mxu0 %v2442
  %3375 = vmatprep.subr.bf16.mxu0 %v2447
  %3376 = vmatpush1.bf16.msra.mxu0 %v2446
  %3377 = vmatprep.subr.bf16.mxu0 %v2451
  %3378 = vmatpush1.bf16.msra.mxu0 %v2450
  %3379 = vmatprep.subr.bf16.mxu0 %v2455
  %3380 = vmatpush1.bf16.msra.mxu0 %v2454
  %3381 = vmatprep.mubr.bf16.mxu0 %v600
  %3382 = vmatmul.mubr.bf16.gmra.mrb[0].mxu0 %v598
  %v3383 = vpop.f32.mrb[0].mxu0
  %v3384 = vadd.f32 %v3343, %v3383
  %v3385 = vpop.f32.mrb[0].mxu0
  %v3386 = vadd.f32 %v3345, %v3385
  %v3387 = vpop.f32.mrb[0].mxu0
  %v3388 = vpop.f32.mrb[0].mxu0
  %3389 = vdwg.mxu0
  %3390 = vmatprep.subr.bf16.mxu0 %v2459
  %3391 = vmatpush1.bf16.msra.mxu0 %v2458
  %3392 = vmatprep.subr.bf16.mxu0 %v2463
  %3393 = vmatpush1.bf16.msra.mxu0 %v2462
  %3394 = vmatprep.subr.bf16.mxu0 %v2467
  %3395 = vmatpush1.bf16.msra.mxu0 %v2466
  %3396 = vmatprep.subr.bf16.mxu0 %v2471
  %3397 = vmatpush1.bf16.msra.mxu0 %v2470
  %3398 = vmatprep.subr.bf16.mxu0 %v2475
  %3399 = vmatpush1.bf16.msra.mxu0 %v2474
  %3400 = vmatprep.subr.bf16.mxu0 %v2479
  %3401 = vmatpush1.bf16.msra.mxu0 %v2478
  %3402 = vmatprep.subr.bf16.mxu0 %v2483
  %3403 = vmatpush1.bf16.msra.mxu0 %v2482
  %3404 = vmatprep.subr.bf16.mxu0 %v2487
  %3405 = vmatpush1.bf16.msra.mxu0 %v2486
  %3406 = vmatprep.subr.bf16.mxu0 %v2491
  %3407 = vmatpush1.bf16.msra.mxu0 %v2490
  %3408 = vmatprep.subr.bf16.mxu0 %v2495
  %3409 = vmatpush1.bf16.msra.mxu0 %v2494
  %3410 = vmatprep.subr.bf16.mxu0 %v2499
  %3411 = vmatpush1.bf16.msra.mxu0 %v2498
  %3412 = vmatprep.subr.bf16.mxu0 %v2503
  %3413 = vmatpush1.bf16.msra.mxu0 %v2502
  %3414 = vmatprep.subr.bf16.mxu0 %v2507
  %3415 = vmatpush1.bf16.msra.mxu0 %v2506
  %3416 = vmatprep.subr.bf16.mxu0 %v2511
  %3417 = vmatpush1.bf16.msra.mxu0 %v2510
  %3418 = vmatprep.subr.bf16.mxu0 %v2515
  %3419 = vmatpush1.bf16.msra.mxu0 %v2514
  %3420 = vmatprep.subr.bf16.mxu0 %v2519
  %3421 = vmatpush1.bf16.msra.mxu0 %v2518
  %3422 = vmatprep.mubr.bf16.mxu0 %v638
  %3423 = vmatmul.mubr.bf16.gmra.mrb[0].mxu0 %v624
  %v3424 = vpop.f32.mrb[0].mxu0
  %v3425 = vadd.f32 %v3384, %v3424
  %v3426 = vpop.f32.mrb[0].mxu0
  %v3427 = vadd.f32 %v3386, %v3426
  %v3428 = vpop.f32.mrb[0].mxu0
  %v3429 = vpop.f32.mrb[0].mxu0
  %3430 = vdwg.mxu0
  %3431 = vmatprep.subr.bf16.mxu0 %v2523
  %3432 = vmatpush1.bf16.msra.mxu0 %v2522
  %3433 = vmatprep.subr.bf16.mxu0 %v2527
  %3434 = vmatpush1.bf16.msra.mxu0 %v2526
  %3435 = vmatprep.subr.bf16.mxu0 %v2531
  %3436 = vmatpush1.bf16.msra.mxu0 %v2530
  %3437 = vmatprep.subr.bf16.mxu0 %v2535
  %3438 = vmatpush1.bf16.msra.mxu0 %v2534
  %3439 = vmatprep.subr.bf16.mxu0 %v2539
  %3440 = vmatpush1.bf16.msra.mxu0 %v2538
  %3441 = vmatprep.subr.bf16.mxu0 %v2543
  %3442 = vmatpush1.bf16.msra.mxu0 %v2542
  %3443 = vmatprep.subr.bf16.mxu0 %v2547
  %3444 = vmatpush1.bf16.msra.mxu0 %v2546
  %3445 = vmatprep.subr.bf16.mxu0 %v2551
  %3446 = vmatpush1.bf16.msra.mxu0 %v2550
  %3447 = vmatprep.subr.bf16.mxu0 %v2555
  %3448 = vmatpush1.bf16.msra.mxu0 %v2554
  %3449 = vmatprep.subr.bf16.mxu0 %v2559
  %3450 = vmatpush1.bf16.msra.mxu0 %v2558
  %3451 = vmatprep.subr.bf16.mxu0 %v2563
  %3452 = vmatpush1.bf16.msra.mxu0 %v2562
  %3453 = vmatprep.subr.bf16.mxu0 %v2567
  %3454 = vmatpush1.bf16.msra.mxu0 %v2566
  %3455 = vmatprep.subr.bf16.mxu0 %v2571
  %3456 = vmatpush1.bf16.msra.mxu0 %v2570
  %3457 = vmatprep.subr.bf16.mxu0 %v2575
  %3458 = vmatpush1.bf16.msra.mxu0 %v2574
  %3459 = vmatprep.subr.bf16.mxu0 %v2579
  %3460 = vmatpush1.bf16.msra.mxu0 %v2578
  %3461 = vmatprep.subr.bf16.mxu0 %v2583
  %3462 = vmatpush1.bf16.msra.mxu0 %v2582
  %3463 = vmatprep.mubr.bf16.mxu0 %v648
  %3464 = vmatmul.mubr.bf16.gmra.mrb[0].mxu0 %v646
  %v3465 = vpop.f32.mrb[0].mxu0
  %v3466 = vadd.f32 %v3425, %v3465
  %v3467 = vpop.f32.mrb[0].mxu0
  %v3468 = vadd.f32 %v3427, %v3467
  %v3469 = vpop.f32.mrb[0].mxu0
  %v3470 = vpop.f32.mrb[0].mxu0
  %3471 = vdwg.mxu0
  %3472 = vmatprep.subr.bf16.mxu0 %v2587
  %3473 = vmatpush1.bf16.msra.mxu0 %v2586
  %3474 = vmatprep.subr.bf16.mxu0 %v2591
  %3475 = vmatpush1.bf16.msra.mxu0 %v2590
  %3476 = vmatprep.subr.bf16.mxu0 %v2595
  %3477 = vmatpush1.bf16.msra.mxu0 %v2594
  %3478 = vmatprep.subr.bf16.mxu0 %v2599
  %3479 = vmatpush1.bf16.msra.mxu0 %v2598
  %3480 = vmatprep.subr.bf16.mxu0 %v2603
  %3481 = vmatpush1.bf16.msra.mxu0 %v2602
  %3482 = vmatprep.subr.bf16.mxu0 %v2607
  %3483 = vmatpush1.bf16.msra.mxu0 %v2606
  %3484 = vmatprep.subr.bf16.mxu0 %v2611
  %3485 = vmatpush1.bf16.msra.mxu0 %v2610
  %3486 = vmatprep.subr.bf16.mxu0 %v2615
  %3487 = vmatpush1.bf16.msra.mxu0 %v2614
  %3488 = vmatprep.subr.bf16.mxu0 %v2619
  %3489 = vmatpush1.bf16.msra.mxu0 %v2618
  %3490 = vmatprep.subr.bf16.mxu0 %v2623
  %3491 = vmatpush1.bf16.msra.mxu0 %v2622
  %3492 = vmatprep.subr.bf16.mxu0 %v2627
  %3493 = vmatpush1.bf16.msra.mxu0 %v2626
  %3494 = vmatprep.subr.bf16.mxu0 %v2631
  %3495 = vmatpush1.bf16.msra.mxu0 %v2630
  %3496 = vmatprep.subr.bf16.mxu0 %v2635
  %3497 = vmatpush1.bf16.msra.mxu0 %v2634
  %3498 = vmatprep.subr.bf16.mxu0 %v2639
  %3499 = vmatpush1.bf16.msra.mxu0 %v2638
  %3500 = vmatprep.subr.bf16.mxu0 %v2643
  %3501 = vmatpush1.bf16.msra.mxu0 %v2642
  %3502 = vmatprep.subr.bf16.mxu0 %v2647
  %3503 = vmatpush1.bf16.msra.mxu0 %v2646
  %3504 = vmatprep.mubr.bf16.mxu0 %v645
  %3505 = vmatmul.mubr.bf16.gmra.mrb[0].mxu0 %v631
  %v3506 = vpop.f32.mrb[0].mxu0
  %v3507 = vadd.f32 %v3466, %v3506
  %v3508 = vpop.f32.mrb[0].mxu0
  %v3509 = vadd.f32 %v3468, %v3508
  %v3510 = vpop.f32.mrb[0].mxu0
  %v3511 = vpop.f32.mrb[0].mxu0
  %3512 = vdwg.mxu0
  %3513 = vmatprep.subr.bf16.mxu0 %v2651
  %3514 = vmatpush1.bf16.msra.mxu0 %v2650
  %3515 = vmatprep.subr.bf16.mxu0 %v2655
  %3516 = vmatpush1.bf16.msra.mxu0 %v2654
  %3517 = vmatprep.subr.bf16.mxu0 %v2659
  %3518 = vmatpush1.bf16.msra.mxu0 %v2658
  %3519 = vmatprep.subr.bf16.mxu0 %v2663
  %3520 = vmatpush1.bf16.msra.mxu0 %v2662
  %3521 = vmatprep.subr.bf16.mxu0 %v2667
  %3522 = vmatpush1.bf16.msra.mxu0 %v2666
  %3523 = vmatprep.subr.bf16.mxu0 %v2671
  %3524 = vmatpush1.bf16.msra.mxu0 %v2670
  %3525 = vmatprep.subr.bf16.mxu0 %v2675
  %3526 = vmatpush1.bf16.msra.mxu0 %v2674
  %3527 = vmatprep.subr.bf16.mxu0 %v2679
  %3528 = vmatpush1.bf16.msra.mxu0 %v2678
  %3529 = vmatprep.subr.bf16.mxu0 %v2683
  %3530 = vmatpush1.bf16.msra.mxu0 %v2682
  %3531 = vmatprep.subr.bf16.mxu0 %v2687
  %3532 = vmatpush1.bf16.msra.mxu0 %v2686
  %3533 = vmatprep.subr.bf16.mxu0 %v2691
  %3534 = vmatpush1.bf16.msra.mxu0 %v2690
  %3535 = vmatprep.subr.bf16.mxu0 %v2695
  %3536 = vmatpush1.bf16.msra.mxu0 %v2694
  %3537 = vmatprep.subr.bf16.mxu0 %v2699
  %3538 = vmatpush1.bf16.msra.mxu0 %v2698
  %3539 = vmatprep.subr.bf16.mxu0 %v2703
  %3540 = vmatpush1.bf16.msra.mxu0 %v2702
  %3541 = vmatprep.subr.bf16.mxu0 %v2707
  %3542 = vmatpush1.bf16.msra.mxu0 %v2706
  %3543 = vmatprep.subr.bf16.mxu0 %v2711
  %3544 = vmatpush1.bf16.msra.mxu0 %v2710
  %3545 = vmatprep.mubr.bf16.mxu0 %v649
  %3546 = vmatmul.mubr.bf16.gmra.mrb[0].mxu0 %v647
  %v3547 = vpop.f32.mrb[0].mxu0
  %v3548 = vadd.f32 %v3507, %v3547
  %v3549 = vpop.f32.mrb[0].mxu0
  %v3550 = vadd.f32 %v3509, %v3549
  %v3551 = vpop.f32.mrb[0].mxu0
  %v3552 = vpop.f32.mrb[0].mxu0
  %3553 = vdwg.mxu0
  %3554 = vmatprep.subr.bf16.mxu0 %v2205
  %3555 = vmatpush1.bf16.msra.mxu0 %v2204
  %3556 = vmatprep.subr.bf16.mxu0 %v2209
  %3557 = vmatpush1.bf16.msra.mxu0 %v2208
  %3558 = vmatprep.subr.bf16.mxu0 %v2213
  %3559 = vmatpush1.bf16.msra.mxu0 %v2212
  %3560 = vmatprep.subr.bf16.mxu0 %v2217
  %3561 = vmatpush1.bf16.msra.mxu0 %v2216
  %3562 = vmatprep.subr.bf16.mxu0 %v2221
  %3563 = vmatpush1.bf16.msra.mxu0 %v2220
  %3564 = vmatprep.subr.bf16.mxu0 %v2225
  %3565 = vmatpush1.bf16.msra.mxu0 %v2224
  %3566 = vmatprep.subr.bf16.mxu0 %v2229
  %3567 = vmatpush1.bf16.msra.mxu0 %v2228
  %3568 = vmatprep.subr.bf16.mxu0 %v2233
  %3569 = vmatpush1.bf16.msra.mxu0 %v2232
  %3570 = vmatprep.subr.bf16.mxu0 %v2237
  %3571 = vmatpush1.bf16.msra.mxu0 %v2236
  %3572 = vmatprep.subr.bf16.mxu0 %v2241
  %3573 = vmatpush1.bf16.msra.mxu0 %v2240
  %3574 = vmatprep.subr.bf16.mxu0 %v2245
  %3575 = vmatpush1.bf16.msra.mxu0 %v2244
  %3576 = vmatprep.subr.bf16.mxu0 %v2249
  %3577 = vmatpush1.bf16.msra.mxu0 %v2248
  %3578 = vmatprep.subr.bf16.mxu0 %v2253
  %3579 = vmatpush1.bf16.msra.mxu0 %v2252
  %3580 = vmatprep.subr.bf16.mxu0 %v2257
  %3581 = vmatpush1.bf16.msra.mxu0 %v2256
  %3582 = vmatprep.subr.bf16.mxu0 %v2261
  %3583 = vmatpush1.bf16.msra.mxu0 %v2260
  %3584 = vmatprep.subr.bf16.mxu0 %v2265
  %3585 = vmatpush1.bf16.msra.mxu0 %v2264
  %3586 = vmatprep.mubr.bf16.mxu0 %v589
  %3587 = vmatmul.mubr.bf16.gmra.mrb[0].mxu0 %v575
  %v3588 = vpop.f32.mrb[0].mxu0
  %v3589 = vadd.f32 %v541, %v3588
  %v3590 = vpop.f32.mrb[0].mxu0
  %v3591 = vadd.f32 %v545, %v3590
  %v3592 = vpop.f32.mrb[0].mxu0
  %v3593 = vpop.f32.mrb[0].mxu0
  %3594 = vdwg.mxu0
  %3595 = vmatprep.subr.bf16.mxu0 %v2269
  %3596 = vmatpush1.bf16.msra.mxu0 %v2268
  %3597 = vmatprep.subr.bf16.mxu0 %v2273
  %3598 = vmatpush1.bf16.msra.mxu0 %v2272
  %3599 = vmatprep.subr.bf16.mxu0 %v2277
  %3600 = vmatpush1.bf16.msra.mxu0 %v2276
  %3601 = vmatprep.subr.bf16.mxu0 %v2281
  %3602 = vmatpush1.bf16.msra.mxu0 %v2280
  %3603 = vmatprep.subr.bf16.mxu0 %v2285
  %3604 = vmatpush1.bf16.msra.mxu0 %v2284
  %3605 = vmatprep.subr.bf16.mxu0 %v2289
  %3606 = vmatpush1.bf16.msra.mxu0 %v2288
  %3607 = vmatprep.subr.bf16.mxu0 %v2293
  %3608 = vmatpush1.bf16.msra.mxu0 %v2292
  %3609 = vmatprep.subr.bf16.mxu0 %v2297
  %3610 = vmatpush1.bf16.msra.mxu0 %v2296
  %3611 = vmatprep.subr.bf16.mxu0 %v2301
  %3612 = vmatpush1.bf16.msra.mxu0 %v2300
  %3613 = vmatprep.subr.bf16.mxu0 %v2305
  %3614 = vmatpush1.bf16.msra.mxu0 %v2304
  %3615 = vmatprep.subr.bf16.mxu0 %v2309
  %3616 = vmatpush1.bf16.msra.mxu0 %v2308
  %3617 = vmatprep.subr.bf16.mxu0 %v2313
  %3618 = vmatpush1.bf16.msra.mxu0 %v2312
  %3619 = vmatprep.subr.bf16.mxu0 %v2317
  %3620 = vmatpush1.bf16.msra.mxu0 %v2316
  %3621 = vmatprep.subr.bf16.mxu0 %v2321
  %3622 = vmatpush1.bf16.msra.mxu0 %v2320
  %3623 = vmatprep.subr.bf16.mxu0 %v2325
  %3624 = vmatpush1.bf16.msra.mxu0 %v2324
  %3625 = vmatprep.subr.bf16.mxu0 %v2329
  %3626 = vmatpush1.bf16.msra.mxu0 %v2328
  %3627 = vmatprep.mubr.bf16.mxu0 %v599
  %3628 = vmatmul.mubr.bf16.gmra.mrb[0].mxu0 %v597
  %v3629 = vpop.f32.mrb[0].mxu0
  %v3630 = vadd.f32 %v3589, %v3629
  %v3631 = vpop.f32.mrb[0].mxu0
  %v3632 = vadd.f32 %v3591, %v3631
  %v3633 = vpop.f32.mrb[0].mxu0
  %v3634 = vpop.f32.mrb[0].mxu0
  %3635 = vdwg.mxu0
  %3636 = vmatprep.subr.bf16.mxu0 %v2333
  %3637 = vmatpush1.bf16.msra.mxu0 %v2332
  %3638 = vmatprep.subr.bf16.mxu0 %v2337
  %3639 = vmatpush1.bf16.msra.mxu0 %v2336
  %3640 = vmatprep.subr.bf16.mxu0 %v2341
  %3641 = vmatpush1.bf16.msra.mxu0 %v2340
  %3642 = vmatprep.subr.bf16.mxu0 %v2345
  %3643 = vmatpush1.bf16.msra.mxu0 %v2344
  %3644 = vmatprep.subr.bf16.mxu0 %v2349
  %3645 = vmatpush1.bf16.msra.mxu0 %v2348
  %3646 = vmatprep.subr.bf16.mxu0 %v2353
  %3647 = vmatpush1.bf16.msra.mxu0 %v2352
  %3648 = vmatprep.subr.bf16.mxu0 %v2357
  %3649 = vmatpush1.bf16.msra.mxu0 %v2356
  %3650 = vmatprep.subr.bf16.mxu0 %v2361
  %3651 = vmatpush1.bf16.msra.mxu0 %v2360
  %3652 = vmatprep.subr.bf16.mxu0 %v2365
  %3653 = vmatpush1.bf16.msra.mxu0 %v2364
  %3654 = vmatprep.subr.bf16.mxu0 %v2369
  %3655 = vmatpush1.bf16.msra.mxu0 %v2368
  %3656 = vmatprep.subr.bf16.mxu0 %v2373
  %3657 = vmatpush1.bf16.msra.mxu0 %v2372
  %3658 = vmatprep.subr.bf16.mxu0 %v2377
  %3659 = vmatpush1.bf16.msra.mxu0 %v2376
  %3660 = vmatprep.subr.bf16.mxu0 %v2381
  %3661 = vmatpush1.bf16.msra.mxu0 %v2380
  %3662 = vmatprep.subr.bf16.mxu0 %v2385
  %3663 = vmatpush1.bf16.msra.mxu0 %v2384
  %3664 = vmatprep.subr.bf16.mxu0 %v2389
  %3665 = vmatpush1.bf16.msra.mxu0 %v2388
  %3666 = vmatprep.subr.bf16.mxu0 %v2393
  %3667 = vmatpush1.bf16.msra.mxu0 %v2392
  %3668 = vmatprep.mubr.bf16.mxu0 %v596
  %3669 = vmatmul.mubr.bf16.gmra.mrb[0].mxu0 %v582
  %v3670 = vpop.f32.mrb[0].mxu0
  %v3671 = vadd.f32 %v3630, %v3670
  %v3672 = vpop.f32.mrb[0].mxu0
  %v3673 = vadd.f32 %v3632, %v3672
  %v3674 = vpop.f32.mrb[0].mxu0
  %v3675 = vpop.f32.mrb[0].mxu0
  %3676 = vdwg.mxu0
  %3677 = vmatprep.subr.bf16.mxu0 %v2397
  %3678 = vmatpush1.bf16.msra.mxu0 %v2396
  %3679 = vmatprep.subr.bf16.mxu0 %v2401
  %3680 = vmatpush1.bf16.msra.mxu0 %v2400
  %3681 = vmatprep.subr.bf16.mxu0 %v2405
  %3682 = vmatpush1.bf16.msra.mxu0 %v2404
  %3683 = vmatprep.subr.bf16.mxu0 %v2409
  %3684 = vmatpush1.bf16.msra.mxu0 %v2408
  %3685 = vmatprep.subr.bf16.mxu0 %v2413
  %3686 = vmatpush1.bf16.msra.mxu0 %v2412
  %3687 = vmatprep.subr.bf16.mxu0 %v2417
  %3688 = vmatpush1.bf16.msra.mxu0 %v2416
  %3689 = vmatprep.subr.bf16.mxu0 %v2421
  %3690 = vmatpush1.bf16.msra.mxu0 %v2420
  %3691 = vmatprep.subr.bf16.mxu0 %v2425
  %3692 = vmatpush1.bf16.msra.mxu0 %v2424
  %3693 = vmatprep.subr.bf16.mxu0 %v2429
  %3694 = vmatpush1.bf16.msra.mxu0 %v2428
  %3695 = vmatprep.subr.bf16.mxu0 %v2433
  %3696 = vmatpush1.bf16.msra.mxu0 %v2432
  %3697 = vmatprep.subr.bf16.mxu0 %v2437
  %3698 = vmatpush1.bf16.msra.mxu0 %v2436
  %3699 = vmatprep.subr.bf16.mxu0 %v2441
  %3700 = vmatpush1.bf16.msra.mxu0 %v2440
  %3701 = vmatprep.subr.bf16.mxu0 %v2445
  %3702 = vmatpush1.bf16.msra.mxu0 %v2444
  %3703 = vmatprep.subr.bf16.mxu0 %v2449
  %3704 = vmatpush1.bf16.msra.mxu0 %v2448
  %3705 = vmatprep.subr.bf16.mxu0 %v2453
  %3706 = vmatpush1.bf16.msra.mxu0 %v2452
  %3707 = vmatprep.subr.bf16.mxu0 %v2457
  %3708 = vmatpush1.bf16.msra.mxu0 %v2456
  %3709 = vmatprep.mubr.bf16.mxu0 %v600
  %3710 = vmatmul.mubr.bf16.gmra.mrb[0].mxu0 %v598
  %v3711 = vpop.f32.mrb[0].mxu0
  %v3712 = vadd.f32 %v3671, %v3711
  %v3713 = vpop.f32.mrb[0].mxu0
  %v3714 = vadd.f32 %v3673, %v3713
  %v3715 = vpop.f32.mrb[0].mxu0
  %v3716 = vpop.f32.mrb[0].mxu0
  %3717 = vdwg.mxu0
  %3718 = vmatprep.subr.bf16.mxu0 %v2461
  %3719 = vmatpush1.bf16.msra.mxu0 %v2460
  %3720 = vmatprep.subr.bf16.mxu0 %v2465
  %3721 = vmatpush1.bf16.msra.mxu0 %v2464
  %3722 = vmatprep.subr.bf16.mxu0 %v2469
  %3723 = vmatpush1.bf16.msra.mxu0 %v2468
  %3724 = vmatprep.subr.bf16.mxu0 %v2473
  %3725 = vmatpush1.bf16.msra.mxu0 %v2472
  %3726 = vmatprep.subr.bf16.mxu0 %v2477
  %3727 = vmatpush1.bf16.msra.mxu0 %v2476
  %3728 = vmatprep.subr.bf16.mxu0 %v2481
  %3729 = vmatpush1.bf16.msra.mxu0 %v2480
  %3730 = vmatprep.subr.bf16.mxu0 %v2485
  %3731 = vmatpush1.bf16.msra.mxu0 %v2484
  %3732 = vmatprep.subr.bf16.mxu0 %v2489
  %3733 = vmatpush1.bf16.msra.mxu0 %v2488
  %3734 = vmatprep.subr.bf16.mxu0 %v2493
  %3735 = vmatpush1.bf16.msra.mxu0 %v2492
  %3736 = vmatprep.subr.bf16.mxu0 %v2497
  %3737 = vmatpush1.bf16.msra.mxu0 %v2496
  %3738 = vmatprep.subr.bf16.mxu0 %v2501
  %3739 = vmatpush1.bf16.msra.mxu0 %v2500
  %3740 = vmatprep.subr.bf16.mxu0 %v2505
  %3741 = vmatpush1.bf16.msra.mxu0 %v2504
  %3742 = vmatprep.subr.bf16.mxu0 %v2509
  %3743 = vmatpush1.bf16.msra.mxu0 %v2508
  %3744 = vmatprep.subr.bf16.mxu0 %v2513
  %3745 = vmatpush1.bf16.msra.mxu0 %v2512
  %3746 = vmatprep.subr.bf16.mxu0 %v2517
  %3747 = vmatpush1.bf16.msra.mxu0 %v2516
  %3748 = vmatprep.subr.bf16.mxu0 %v2521
  %3749 = vmatpush1.bf16.msra.mxu0 %v2520
  %3750 = vmatprep.mubr.bf16.mxu0 %v638
  %3751 = vmatmul.mubr.bf16.gmra.mrb[0].mxu0 %v624
  %v3752 = vpop.f32.mrb[0].mxu0
  %v3753 = vadd.f32 %v3712, %v3752
  %v3754 = vpop.f32.mrb[0].mxu0
  %v3755 = vadd.f32 %v3714, %v3754
  %v3756 = vpop.f32.mrb[0].mxu0
  %v3757 = vpop.f32.mrb[0].mxu0
  %3758 = vdwg.mxu0
  %3759 = vmatprep.subr.bf16.mxu0 %v2525
  %3760 = vmatpush1.bf16.msra.mxu0 %v2524
  %3761 = vmatprep.subr.bf16.mxu0 %v2529
  %3762 = vmatpush1.bf16.msra.mxu0 %v2528
  %3763 = vmatprep.subr.bf16.mxu0 %v2533
  %3764 = vmatpush1.bf16.msra.mxu0 %v2532
  %3765 = vmatprep.subr.bf16.mxu0 %v2537
  %3766 = vmatpush1.bf16.msra.mxu0 %v2536
  %3767 = vmatprep.subr.bf16.mxu0 %v2541
  %3768 = vmatpush1.bf16.msra.mxu0 %v2540
  %3769 = vmatprep.subr.bf16.mxu0 %v2545
  %3770 = vmatpush1.bf16.msra.mxu0 %v2544
  %3771 = vmatprep.subr.bf16.mxu0 %v2549
  %3772 = vmatpush1.bf16.msra.mxu0 %v2548
  %3773 = vmatprep.subr.bf16.mxu0 %v2553
  %3774 = vmatpush1.bf16.msra.mxu0 %v2552
  %3775 = vmatprep.subr.bf16.mxu0 %v2557
  %3776 = vmatpush1.bf16.msra.mxu0 %v2556
  %3777 = vmatprep.subr.bf16.mxu0 %v2561
  %3778 = vmatpush1.bf16.msra.mxu0 %v2560
  %3779 = vmatprep.subr.bf16.mxu0 %v2565
  %3780 = vmatpush1.bf16.msra.mxu0 %v2564
  %3781 = vmatprep.subr.bf16.mxu0 %v2569
  %3782 = vmatpush1.bf16.msra.mxu0 %v2568
  %3783 = vmatprep.subr.bf16.mxu0 %v2573
  %3784 = vmatpush1.bf16.msra.mxu0 %v2572
  %3785 = vmatprep.subr.bf16.mxu0 %v2577
  %3786 = vmatpush1.bf16.msra.mxu0 %v2576
  %3787 = vmatprep.subr.bf16.mxu0 %v2581
  %3788 = vmatpush1.bf16.msra.mxu0 %v2580
  %3789 = vmatprep.subr.bf16.mxu0 %v2585
  %3790 = vmatpush1.bf16.msra.mxu0 %v2584
  %3791 = vmatprep.mubr.bf16.mxu0 %v648
  %3792 = vmatmul.mubr.bf16.gmra.mrb[0].mxu0 %v646
  %v3793 = vpop.f32.mrb[0].mxu0
  %v3794 = vadd.f32 %v3753, %v3793
  %v3795 = vpop.f32.mrb[0].mxu0
  %v3796 = vadd.f32 %v3755, %v3795
  %v3797 = vpop.f32.mrb[0].mxu0
  %v3798 = vpop.f32.mrb[0].mxu0
  %3799 = vdwg.mxu0
  %3800 = vmatprep.subr.bf16.mxu0 %v2589
  %3801 = vmatpush1.bf16.msra.mxu0 %v2588
  %3802 = vmatprep.subr.bf16.mxu0 %v2593
  %3803 = vmatpush1.bf16.msra.mxu0 %v2592
  %3804 = vmatprep.subr.bf16.mxu0 %v2597
  %3805 = vmatpush1.bf16.msra.mxu0 %v2596
  %3806 = vmatprep.subr.bf16.mxu0 %v2601
  %3807 = vmatpush1.bf16.msra.mxu0 %v2600
  %3808 = vmatprep.subr.bf16.mxu0 %v2605
  %3809 = vmatpush1.bf16.msra.mxu0 %v2604
  %3810 = vmatprep.subr.bf16.mxu0 %v2609
  %3811 = vmatpush1.bf16.msra.mxu0 %v2608
  %3812 = vmatprep.subr.bf16.mxu0 %v2613
  %3813 = vmatpush1.bf16.msra.mxu0 %v2612
  %3814 = vmatprep.subr.bf16.mxu0 %v2617
  %3815 = vmatpush1.bf16.msra.mxu0 %v2616
  %3816 = vmatprep.subr.bf16.mxu0 %v2621
  %3817 = vmatpush1.bf16.msra.mxu0 %v2620
  %3818 = vmatprep.subr.bf16.mxu0 %v2625
  %3819 = vmatpush1.bf16.msra.mxu0 %v2624
  %3820 = vmatprep.subr.bf16.mxu0 %v2629
  %3821 = vmatpush1.bf16.msra.mxu0 %v2628
  %3822 = vmatprep.subr.bf16.mxu0 %v2633
  %3823 = vmatpush1.bf16.msra.mxu0 %v2632
  %3824 = vmatprep.subr.bf16.mxu0 %v2637
  %3825 = vmatpush1.bf16.msra.mxu0 %v2636
  %3826 = vmatprep.subr.bf16.mxu0 %v2641
  %3827 = vmatpush1.bf16.msra.mxu0 %v2640
  %3828 = vmatprep.subr.bf16.mxu0 %v2645
  %3829 = vmatpush1.bf16.msra.mxu0 %v2644
  %3830 = vmatprep.subr.bf16.mxu0 %v2649
  %3831 = vmatpush1.bf16.msra.mxu0 %v2648
  %3832 = vmatprep.mubr.bf16.mxu0 %v645
  %3833 = vmatmul.mubr.bf16.gmra.mrb[0].mxu0 %v631
  %v3834 = vpop.f32.mrb[0].mxu0
  %v3835 = vadd.f32 %v3794, %v3834
  %v3836 = vpop.f32.mrb[0].mxu0
  %v3837 = vadd.f32 %v3796, %v3836
  %v3838 = vpop.f32.mrb[0].mxu0
  %v3839 = vpop.f32.mrb[0].mxu0
  %3840 = vdwg.mxu0
  %3841 = vmatprep.subr.bf16.mxu0 %v2653
  %3842 = vmatpush1.bf16.msra.mxu0 %v2652
  %3843 = vmatprep.subr.bf16.mxu0 %v2657
  %3844 = vmatpush1.bf16.msra.mxu0 %v2656
  %3845 = vmatprep.subr.bf16.mxu0 %v2661
  %3846 = vmatpush1.bf16.msra.mxu0 %v2660
  %3847 = vmatprep.subr.bf16.mxu0 %v2665
  %3848 = vmatpush1.bf16.msra.mxu0 %v2664
  %3849 = vmatprep.subr.bf16.mxu0 %v2669
  %3850 = vmatpush1.bf16.msra.mxu0 %v2668
  %3851 = vmatprep.subr.bf16.mxu0 %v2673
  %3852 = vmatpush1.bf16.msra.mxu0 %v2672
  %3853 = vmatprep.subr.bf16.mxu0 %v2677
  %3854 = vmatpush1.bf16.msra.mxu0 %v2676
  %3855 = vmatprep.subr.bf16.mxu0 %v2681
  %3856 = vmatpush1.bf16.msra.mxu0 %v2680
  %3857 = vmatprep.subr.bf16.mxu0 %v2685
  %3858 = vmatpush1.bf16.msra.mxu0 %v2684
  %3859 = vmatprep.subr.bf16.mxu0 %v2689
  %3860 = vmatpush1.bf16.msra.mxu0 %v2688
  %3861 = vmatprep.subr.bf16.mxu0 %v2693
  %3862 = vmatpush1.bf16.msra.mxu0 %v2692
  %3863 = vmatprep.subr.bf16.mxu0 %v2697
  %3864 = vmatpush1.bf16.msra.mxu0 %v2696
  %3865 = vmatprep.subr.bf16.mxu0 %v2701
  %3866 = vmatpush1.bf16.msra.mxu0 %v2700
  %3867 = vmatprep.subr.bf16.mxu0 %v2705
  %3868 = vmatpush1.bf16.msra.mxu0 %v2704
  %3869 = vmatprep.subr.bf16.mxu0 %v2709
  %3870 = vmatpush1.bf16.msra.mxu0 %v2708
  %3871 = vmatprep.subr.bf16.mxu0 %v2713
  %3872 = vmatpush1.bf16.msra.mxu0 %v2712
  %3873 = vmatprep.mubr.bf16.mxu0 %v649
  %3874 = vmatmul.mubr.bf16.gmra.mrb[0].mxu0 %v647
  %v3875 = vpop.f32.mrb[0].mxu0
  %v3876 = vadd.f32 %v3835, %v3875
  %v3877 = vpop.f32.mrb[0].mxu0
  %v3878 = vadd.f32 %v3837, %v3877
  %v3879 = vpop.f32.mrb[0].mxu0
  %v3880 = vpop.f32.mrb[0].mxu0
  %3881 = vdwg.mxu0
  %v3882 = vmax.f32 %v3548, 0.0
  %v3883 = vmax.f32 %v3550, 0.0
  %v3884 = vmax.f32 %v3876, 0.0
  %v3885 = vmax.f32 %v3878, 0.0
  %v3886 = vpack.c.bf16 %v3882, %v3882
  %v3887 = vpack.c.bf16 %v3883, %v3883
  %v3888 = vpack.c.bf16 %v3884, %v3884
  %v3889 = vpack.c.bf16 %v3885, %v3885
  %v3894 = vcombine.low %v3886, %v3887
  %v3895 = vcombine.low %v3888, %v3889
  %v3897 = vunpack.c.l.s4 1966171168
  %v3898 = vunpack.c.0.s8 %v3897
  %v3899 = vlaneseq
  %v3900 = vshrl.u32 %v3899, 7
  %v3901 = vsub.s32 %v3898, %v3900
  %v3902 = vrot.slane %v3894, %v3901
  %v3904 = vunpack.c.l.s4 1966171168
  %v3905 = vunpack.c.0.s8 %v3904
  %v3906 = vlaneseq
  %v3907 = vshrl.u32 %v3906, 7
  %v3908 = vsub.s32 %v3905, %v3907
  %v3909 = vrot.slane %v3895, %v3908
  %v3910 = vcombine.low %v3902, %v3909
  %v3912 = vunpack.c.l.s4 1966171168
  %v3913 = vunpack.c.0.s8 %v3912
  %v3914 = vlaneseq
  %v3915 = vshrl.u32 %v3914, 7
  %v3916 = vsub.s32 %v3913, %v3915
  %v3917 = vrot.slane %v3910, %v3916
  %3919 = vst [vmem:[%s3] sm:$0xf] %v3917
  // Predicated region
  $region14: #{net_forward.8} parent=0 // pred_check
    _
  $region15: #{net_forward.8} parent=0 // pred_check_branch
    %3921 = sbr.rel (0) target = $region17
  $region16: #{net_forward.8} parent=0 // pred_region
    _
  $region17: #{net_forward.8} parent=0 // pred_fallthru
    _
  // Predicated region
  $region18: #{net_forward.8} parent=0 // pred_check
    _
  $region19: #{net_forward.8} parent=0 // pred_check_branch
    %3923 = sbr.rel (0) target = $region21
  $region20: #{net_forward.8} parent=0 // pred_region
    _
  $region21: #{net_forward.8} parent=0 // pred_fallthru
    _

</llo_original>
